<compile_context>
chip_gen: v7x
topology: tpu7x:2x2x1
jax: 0.10.0
libtpu: 0.0.40
codegen_flags: <defaults>
</compile_context>

<pallas_src>
import functools

import jax
import jax.numpy as jnp
from jax.experimental import pallas as pl
from jax.experimental.pallas import tpu as pltpu


def _round_up(x, m):
    return ((x + m - 1) // m) * m


_HALO = 4   # receptive field of the 4-conv stack (1 column per conv, per side)


def _head_kernel(xw_ref,
                 w0_ref, b0_ref, g0_ref, be0_ref,
                 w1_ref, b1_ref, g1_ref, be1_ref,
                 w2_ref, b2_ref, g2_ref, be2_ref,
                 wc_ref, bc_ref,
                 o_ref,
                 *, eps, seq_len, tile_t, relu_flag):
    """Whole Head stack on one time tile.

    xw_ref  : (1, Cin, tile_t + 2*_HALO) input window (compute dtype)
    w*_ref  : (3, Cout, Cin) conv taps (compute dtype, VMEM-resident)
    b*/g*/be*_ref : (Cout, 1) f32 bias / LN gamma / LN beta
    o_ref   : (output_dim, tile_t) f32 logits tile
    """
    cd = w1_ref.dtype
    # Global time position of window column 0 (window starts _HALO columns
    # before this tile's first output column).
    t0 = pl.program_id(0) * tile_t - _HALO

    def conv3(h, w_ref, b_ref):
        # k=3 conv as 3 accumulated MXU matmuls over shifted views of the
        # VMEM-resident activation; f32 accumulation on the MXU.
        acc = jnp.dot(w_ref[0], h[:, :-2], preferred_element_type=jnp.float32)
        acc = acc + jnp.dot(w_ref[1], h[:, 1:-1],
                            preferred_element_type=jnp.float32)
        acc = acc + jnp.dot(w_ref[2], h[:, 2:],
                            preferred_element_type=jnp.float32)
        return acc + b_ref[...]                          # (Cout, width - 2)

    def ln_relu_mask(y, g_ref, be_ref, layer):
        # LayerNorm over channels (sublane axis) in f32; rsqrt -> EUP slot.
        mu = jnp.mean(y, axis=0, keepdims=True)
        res = y - mu
        var = jnp.mean(res * res, axis=0, keepdims=True)
        y = res * jax.lax.rsqrt(var + eps)
        y = y * g_ref[...] + be_ref[...]
        y = jnp.maximum(y, 0.0)
        # Columns whose global position is outside [0, seq_len) must read as
        # zero for the next conv (that conv's zero padding at the edges).
        pos = t0 + (layer + 1) + jax.lax.broadcasted_iota(
            jnp.int32, (1, y.shape[1]), 1)
        valid = jnp.logical_and(pos >= 0, pos < seq_len)
        return jnp.where(valid, y, 0.0).astype(cd)

    h = xw_ref[0]                                         # (Cin, tile_t + 8)
    h = ln_relu_mask(conv3(h, w0_ref, b0_ref), g0_ref, be0_ref, 0)
    h = ln_relu_mask(conv3(h, w1_ref, b1_ref), g1_ref, be1_ref, 1)
    h = ln_relu_mask(conv3(h, w2_ref, b2_ref), g2_ref, be2_ref, 2)
    y = conv3(h, wc_ref, bc_ref)                          # (out_dim, tile_t)
    if relu_flag:
        y = jnp.maximum(y, 0.0)
    o_ref[...] = y.astype(o_ref.dtype)


def prepare_head_params(params, compute_dtype=jnp.bfloat16):
    """One-time parameter prep (hoisted out of the per-forward path).

    Conv weights (Cout, Cin, 3) -> (3, Cout, Cin) in the MXU compute dtype;
    bias / LN gamma / LN beta -> (Cout, 1) f32 columns (lane-broadcast).
    """
    def taps(w):
        return jnp.transpose(jnp.asarray(w), (2, 0, 1)).astype(compute_dtype)

    def col(v):
        return jnp.asarray(v, jnp.float32).reshape(-1, 1)

    prep = []
    for i in range(3):
        prep += [taps(params[f"w{i}"]), col(params[f"b{i}"]),
                 col(params[f"g{i}"]), col(params[f"beta{i}"])]
    prep += [taps(params["wc"]), col(params["bc"])]
    return tuple(prep)


def _const_spec(shape):
    # Constant index_map -> the parameter stays resident in VMEM across steps.
    return pl.BlockSpec(shape, lambda tt: (0,) * len(shape))


@functools.partial(jax.jit, static_argnames=("relu_flag", "eps", "tile_t"))
def head_forward(x, prep, *, relu_flag, eps=1e-5, tile_t=1024):
    """Pallas equivalent of Head.forward.  x: (B, input_dim, T) -> (T, output_dim)."""
    (w0, b0, g0, be0, w1, b1, g1, be1, w2, b2, g2, be2, wc, bc) = prep
    cd = w1.dtype
    out_dim = wc.shape[1]

    # Only batch element 0 reaches the output (`classifier(x)[0].T`) and the
    # stack has no cross-batch interaction, so only process that element.
    x0 = x[0]
    cin, seq_len = x0.shape

    # Lane-dense time tiles (multiples of 128).  Prefer >= 2 grid steps when
    # the sequence allows it (both v7x TensorCores get work); tile_t=1024
    # keeps per-step VMEM well under the 16 MiB v5e scoped default.
    t_t = min(tile_t, _round_up(seq_len, 128))
    if _round_up(seq_len, t_t) == t_t and t_t >= 256:
        t_t = _round_up(t_t // 2, 128)
    t_pad = _round_up(seq_len, t_t)
    n_tiles = t_pad // t_t
    win = t_t + 2 * _HALO

    # Zero-pad (covers the conv zero padding at both sequence edges plus the
    # lane padding of the last tile) and cut ONE overlapping window per tile.
    # Only the small Cin-channel raw input is duplicated by 2*_HALO columns;
    # the 256-channel activations never leave VMEM inside the kernel.
    xpad = jnp.pad(x0, ((0, 0), (_HALO, t_pad - seq_len + _HALO))).astype(cd)
    xw = jnp.stack(
        [jax.lax.slice_in_dim(xpad, i * t_t, i * t_t + win, axis=1)
         for i in range(n_tiles)], axis=0)                # (n_tiles, Cin, win)

    kernel = functools.partial(_head_kernel, eps=eps, seq_len=seq_len,
                               tile_t=t_t, relu_flag=relu_flag)

    in_specs = [pl.BlockSpec((1, cin, win), lambda tt: (tt, 0, 0))]
    in_specs += [_const_spec(p.shape) for p in prep]

    logits = pl.pallas_call(
        kernel,
        out_shape=jax.ShapeDtypeStruct((out_dim, t_pad), jnp.float32),
        grid=(n_tiles,),
        in_specs=in_specs,
        out_specs=pl.BlockSpec((out_dim, t_t), lambda tt: (0, tt)),
        compiler_params=pltpu.CompilerParams(
            dimension_semantics=("parallel",)),
    )(xw, *prep)

    return logits[:, :seq_len].T                          # (T, output_dim)


if __name__ == "__main__":
    B, input_dim, T, output_dim = 2, 32, 16, 8
    hidden = 256                      # hard-coded inside the PyTorch Head
    relu_flag = True
    eps = 1e-5

    key = jax.random.PRNGKey(0)
    keys = jax.random.split(key, 16)

    def conv_init(k, cout, cin):
        kw, kb = jax.random.split(k)
        scale = 1.0 / jnp.sqrt(cin * 3.0)
        w = scale * jax.random.normal(kw, (cout, cin, 3), dtype=jnp.float32)
        b = scale * jax.random.normal(kb, (cout,), dtype=jnp.float32)
        return w, b

    params = {}
    cins = [input_dim, hidden, hidden]
    for i in range(3):
        w, b = conv_init(keys[i], hidden, cins[i])
        params[f"w{i}"], params[f"b{i}"] = w, b
        params[f"g{i}"] = 1.0 + 0.1 * jax.random.normal(
            keys[4 + i], (1, hidden, 1), dtype=jnp.float32)
        params[f"beta{i}"] = 0.1 * jax.random.normal(
            keys[7 + i], (1, hidden, 1), dtype=jnp.float32)
    params["wc"], params["bc"] = conv_init(keys[3], output_dim, hidden)

    x = jax.random.normal(keys[10], (B, input_dim, T), dtype=jnp.float32)

    # ---------- plain-JAX reference (same math as the PyTorch module) -------
    def ref_conv(h, w, b):
        y = jax.lax.conv_general_dilated(
            h, w, window_strides=(1,), padding=[(1, 1)],
            dimension_numbers=("NCH", "OIH", "NCH"),
            precision=jax.lax.Precision.HIGHEST)
        return y + b.reshape(1, -1, 1)

    def ref_ln(h, g, bt):
        mu = jnp.mean(h, axis=1, keepdims=True)
        res = h - mu
        sigma = jnp.mean(res * res, axis=1, keepdims=True)
        return res / jnp.sqrt(sigma + eps) * g + bt

    h = x
    for i in range(3):
        h = jax.nn.relu(ref_ln(ref_conv(h, params[f"w{i}"], params[f"b{i}"]),
                               params[f"g{i}"], params[f"beta{i}"]))
    ref = ref_conv(h, params["wc"], params["bc"])[0].T
    if relu_flag:
        ref = jax.nn.relu(ref)

    # 1) f32-compute path: tight check against the f32 reference.
    prep_f32 = prepare_head_params(params, compute_dtype=jnp.float32)
    out_f32 = jax.block_until_ready(
        head_forward(x, prep_f32, relu_flag=relu_flag, eps=eps))
    assert out_f32.shape == ref.shape == (T, output_dim)
    err32 = float(jnp.max(jnp.abs(out_f32 - ref)))
    assert jnp.allclose(out_f32, ref, atol=2e-3, rtol=2e-3), \
        f"f32 path max abs err {err32}"

    # 2) bf16-MXU path (production default): f32 accum + f32 LayerNorm stats.
    prep_bf16 = prepare_head_params(params, compute_dtype=jnp.bfloat16)
    out_bf16 = jax.block_until_ready(
        head_forward(x, prep_bf16, relu_flag=relu_flag, eps=eps))
    assert out_bf16.shape == (T, output_dim)
    err16 = float(jnp.max(jnp.abs(out_bf16 - ref)))
    assert jnp.allclose(out_bf16, ref, atol=6e-2, rtol=6e-2), \
        f"bf16 path max abs err {err16}"

    print("KERNEL_OK")
</pallas_src>

<mosaic_0001>
module attributes {stable_mosaic.version = 11 : i64} {
  func.func @_head_kernel(%arg0: i32, %arg1: memref<1x32x136xf32, #tpu.memory_space<vmem>>, %arg2: memref<3x256x32xf32, #tpu.memory_space<vmem>>, %arg3: memref<256x1xf32, #tpu.memory_space<vmem>>, %arg4: memref<256x1xf32, #tpu.memory_space<vmem>>, %arg5: memref<256x1xf32, #tpu.memory_space<vmem>>, %arg6: memref<3x256x256xf32, #tpu.memory_space<vmem>>, %arg7: memref<256x1xf32, #tpu.memory_space<vmem>>, %arg8: memref<256x1xf32, #tpu.memory_space<vmem>>, %arg9: memref<256x1xf32, #tpu.memory_space<vmem>>, %arg10: memref<3x256x256xf32, #tpu.memory_space<vmem>>, %arg11: memref<256x1xf32, #tpu.memory_space<vmem>>, %arg12: memref<256x1xf32, #tpu.memory_space<vmem>>, %arg13: memref<256x1xf32, #tpu.memory_space<vmem>>, %arg14: memref<3x8x256xf32, #tpu.memory_space<vmem>>, %arg15: memref<8x1xf32, #tpu.memory_space<vmem>>, %arg16: memref<8x128xf32, #tpu.memory_space<vmem>>) attributes {dimension_semantics = [#tpu.dimension_semantics<parallel>], iteration_bounds = array<i64: 1>, scalar_prefetch = 0 : i64, scratch_operands = 0 : i64, tpu.core_type = #tpu.core_type<tc>, window_params = [{transform_indices = @transform_0, window_bounds = array<i64: 1, 32, 136>}, {pipeline_mode = #tpu.pipeline_mode<synchronous>, transform_indices = @transform_1, window_bounds = array<i64: 3, 256, 32>}, {pipeline_mode = #tpu.pipeline_mode<synchronous>, transform_indices = @transform_2, window_bounds = array<i64: 256, 1>}, {pipeline_mode = #tpu.pipeline_mode<synchronous>, transform_indices = @transform_3, window_bounds = array<i64: 256, 1>}, {pipeline_mode = #tpu.pipeline_mode<synchronous>, transform_indices = @transform_4, window_bounds = array<i64: 256, 1>}, {pipeline_mode = #tpu.pipeline_mode<synchronous>, transform_indices = @transform_5, window_bounds = array<i64: 3, 256, 256>}, {pipeline_mode = #tpu.pipeline_mode<synchronous>, transform_indices = @transform_6, window_bounds = array<i64: 256, 1>}, {pipeline_mode = #tpu.pipeline_mode<synchronous>, transform_indices = @transform_7, window_bounds = array<i64: 256, 1>}, {pipeline_mode = #tpu.pipeline_mode<synchronous>, transform_indices = @transform_8, window_bounds = array<i64: 256, 1>}, {pipeline_mode = #tpu.pipeline_mode<synchronous>, transform_indices = @transform_9, window_bounds = array<i64: 3, 256, 256>}, {pipeline_mode = #tpu.pipeline_mode<synchronous>, transform_indices = @transform_10, window_bounds = array<i64: 256, 1>}, {pipeline_mode = #tpu.pipeline_mode<synchronous>, transform_indices = @transform_11, window_bounds = array<i64: 256, 1>}, {pipeline_mode = #tpu.pipeline_mode<synchronous>, transform_indices = @transform_12, window_bounds = array<i64: 256, 1>}, {pipeline_mode = #tpu.pipeline_mode<synchronous>, transform_indices = @transform_13, window_bounds = array<i64: 3, 8, 256>}, {pipeline_mode = #tpu.pipeline_mode<synchronous>, transform_indices = @transform_14, window_bounds = array<i64: 8, 1>}, {transform_indices = @transform_15, window_bounds = array<i64: 8, 128>}]} {
    %c128_i32 = arith.constant 128 : i32
    %0 = arith.muli %arg0, %c128_i32 : i32
    %c4_i32 = arith.constant 4 : i32
    %1 = arith.subi %0, %c4_i32 : i32
    %c0 = arith.constant 0 : index
    %c0_0 = arith.constant 0 : index
    %c0_1 = arith.constant 0 : index
    %2 = vector.load %arg1[%c0, %c0_0, %c0_1] : memref<1x32x136xf32, #tpu.memory_space<vmem>>, vector<1x32x136xf32>
    %3 = vector.shape_cast %2 : vector<1x32x136xf32> to vector<32x136xf32>
    %c0_2 = arith.constant 0 : index
    %c0_3 = arith.constant 0 : index
    %c0_4 = arith.constant 0 : index
    %4 = vector.load %arg2[%c0_2, %c0_3, %c0_4] : memref<3x256x32xf32, #tpu.memory_space<vmem>>, vector<1x256x32xf32>
    %5 = vector.shape_cast %4 : vector<1x256x32xf32> to vector<256x32xf32>
    %6 = vector.extract_strided_slice %3 {offsets = [0, 0], sizes = [32, 134], strides = [1, 1]} : vector<32x136xf32> to vector<32x134xf32>
    %cst = arith.constant dense<0.000000e+00> : vector<256x134xf32>
    %7 = tpu.matmul %5, %6, %cst {dimension_numbers = #tpu.dot_dimension_numbers<[1], [0], [0], [1], [0, 0, 1, 1], [], []>} : vector<256x32xf32>, vector<32x134xf32>, vector<256x134xf32> -> vector<256x134xf32>
    %c1 = arith.constant 1 : index
    %c0_5 = arith.constant 0 : index
    %c0_6 = arith.constant 0 : index
    %8 = vector.load %arg2[%c1, %c0_5, %c0_6] : memref<3x256x32xf32, #tpu.memory_space<vmem>>, vector<1x256x32xf32>
    %9 = vector.shape_cast %8 : vector<1x256x32xf32> to vector<256x32xf32>
    %10 = vector.extract_strided_slice %3 {offsets = [0, 1], sizes = [32, 134], strides = [1, 1]} : vector<32x136xf32> to vector<32x134xf32>
    %cst_7 = arith.constant dense<0.000000e+00> : vector<256x134xf32>
    %11 = tpu.matmul %9, %10, %cst_7 {dimension_numbers = #tpu.dot_dimension_numbers<[1], [0], [0], [1], [0, 0, 1, 1], [], []>} : vector<256x32xf32>, vector<32x134xf32>, vector<256x134xf32> -> vector<256x134xf32>
    %12 = arith.addf %7, %11 : vector<256x134xf32>
    %c2 = arith.constant 2 : index
    %c0_8 = arith.constant 0 : index
    %c0_9 = arith.constant 0 : index
    %13 = vector.load %arg2[%c2, %c0_8, %c0_9] : memref<3x256x32xf32, #tpu.memory_space<vmem>>, vector<1x256x32xf32>
    %14 = vector.shape_cast %13 : vector<1x256x32xf32> to vector<256x32xf32>
    %15 = vector.extract_strided_slice %3 {offsets = [0, 2], sizes = [32, 134], strides = [1, 1]} : vector<32x136xf32> to vector<32x134xf32>
    %cst_10 = arith.constant dense<0.000000e+00> : vector<256x134xf32>
    %16 = tpu.matmul %14, %15, %cst_10 {dimension_numbers = #tpu.dot_dimension_numbers<[1], [0], [0], [1], [0, 0, 1, 1], [], []>} : vector<256x32xf32>, vector<32x134xf32>, vector<256x134xf32> -> vector<256x134xf32>
    %17 = arith.addf %12, %16 : vector<256x134xf32>
    %c0_11 = arith.constant 0 : index
    %c0_12 = arith.constant 0 : index
    %18 = vector.load %arg3[%c0_11, %c0_12] : memref<256x1xf32, #tpu.memory_space<vmem>>, vector<256x1xf32>
    %19 = vector.broadcast %18 : vector<256x1xf32> to vector<256x134xf32>
    %20 = arith.addf %17, %19 : vector<256x134xf32>
    %cst_13 = arith.constant dense<0.000000e+00> : vector<134xf32>
    %21 = vector.multi_reduction <add>, %20, %cst_13 [0] : vector<256x134xf32> to vector<134xf32>
    %22 = vector.shape_cast %21 : vector<134xf32> to vector<1x134xf32>
    %cst_14 = arith.constant 2.560000e+02 : f32
    %23 = vector.broadcast %cst_14 : f32 to vector<1x134xf32>
    %24 = arith.divf %22, %23 : vector<1x134xf32>
    %25 = vector.broadcast %24 : vector<1x134xf32> to vector<256x134xf32>
    %26 = arith.subf %20, %25 : vector<256x134xf32>
    %27 = arith.mulf %26, %26 : vector<256x134xf32>
    %cst_15 = arith.constant dense<0.000000e+00> : vector<134xf32>
    %28 = vector.multi_reduction <add>, %27, %cst_15 [0] : vector<256x134xf32> to vector<134xf32>
    %29 = vector.shape_cast %28 : vector<134xf32> to vector<1x134xf32>
    %cst_16 = arith.constant 2.560000e+02 : f32
    %30 = vector.broadcast %cst_16 : f32 to vector<1x134xf32>
    %31 = arith.divf %29, %30 : vector<1x134xf32>
    %cst_17 = arith.constant 9.99999974E-6 : f32
    %32 = vector.broadcast %cst_17 : f32 to vector<1x134xf32>
    %33 = arith.addf %31, %32 : vector<1x134xf32>
    %34 = math.rsqrt %33 : vector<1x134xf32>
    %35 = vector.broadcast %34 : vector<1x134xf32> to vector<256x134xf32>
    %36 = arith.mulf %26, %35 : vector<256x134xf32>
    %c0_18 = arith.constant 0 : index
    %c0_19 = arith.constant 0 : index
    %37 = vector.load %arg4[%c0_18, %c0_19] : memref<256x1xf32, #tpu.memory_space<vmem>>, vector<256x1xf32>
    %38 = vector.broadcast %37 : vector<256x1xf32> to vector<256x134xf32>
    %39 = arith.mulf %36, %38 : vector<256x134xf32>
    %c0_20 = arith.constant 0 : index
    %c0_21 = arith.constant 0 : index
    %40 = vector.load %arg5[%c0_20, %c0_21] : memref<256x1xf32, #tpu.memory_space<vmem>>, vector<256x1xf32>
    %41 = vector.broadcast %40 : vector<256x1xf32> to vector<256x134xf32>
    %42 = arith.addf %39, %41 : vector<256x134xf32>
    %cst_22 = arith.constant 0.000000e+00 : f32
    %43 = vector.broadcast %cst_22 : f32 to vector<256x134xf32>
    %44 = arith.maximumf %42, %43 : vector<256x134xf32>
    %c1_i32 = arith.constant 1 : i32
    %45 = arith.addi %1, %c1_i32 : i32
    %46 = tpu.iota {dimensions = array<i32: 1>} : vector<1x134xi32>
    %47 = vector.broadcast %45 : i32 to vector<1x134xi32>
    %48 = arith.addi %47, %46 : vector<1x134xi32>
    %c0_i32 = arith.constant 0 : i32
    %49 = vector.broadcast %c0_i32 : i32 to vector<1x134xi32>
    %50 = arith.cmpi sge, %48, %49 : vector<1x134xi32>
    %c16_i32 = arith.constant 16 : i32
    %51 = vector.broadcast %c16_i32 : i32 to vector<1x134xi32>
    %52 = arith.cmpi slt, %48, %51 : vector<1x134xi32>
    %53 = arith.andi %50, %52 : vector<1x134xi1>
    %cst_23 = arith.constant 0.000000e+00 : f32
    %54 = vector.shape_cast %53 : vector<1x134xi1> to vector<1x134xi1>
    %55 = vector.broadcast %54 : vector<1x134xi1> to vector<256x134xi1>
    %56 = vector.broadcast %cst_23 : f32 to vector<256x134xf32>
    %57 = arith.select %55, %44, %56 : vector<256x134xi1>, vector<256x134xf32>
    %c0_24 = arith.constant 0 : index
    %c0_25 = arith.constant 0 : index
    %c0_26 = arith.constant 0 : index
    %58 = vector.load %arg6[%c0_24, %c0_25, %c0_26] : memref<3x256x256xf32, #tpu.memory_space<vmem>>, vector<1x256x256xf32>
    %59 = vector.shape_cast %58 : vector<1x256x256xf32> to vector<256x256xf32>
    %60 = vector.extract_strided_slice %57 {offsets = [0, 0], sizes = [256, 132], strides = [1, 1]} : vector<256x134xf32> to vector<256x132xf32>
    %cst_27 = arith.constant dense<0.000000e+00> : vector<256x132xf32>
    %61 = tpu.matmul %59, %60, %cst_27 {dimension_numbers = #tpu.dot_dimension_numbers<[1], [0], [0], [1], [0, 0, 1, 1], [], []>} : vector<256x256xf32>, vector<256x132xf32>, vector<256x132xf32> -> vector<256x132xf32>
    %c1_28 = arith.constant 1 : index
    %c0_29 = arith.constant 0 : index
    %c0_30 = arith.constant 0 : index
    %62 = vector.load %arg6[%c1_28, %c0_29, %c0_30] : memref<3x256x256xf32, #tpu.memory_space<vmem>>, vector<1x256x256xf32>
    %63 = vector.shape_cast %62 : vector<1x256x256xf32> to vector<256x256xf32>
    %64 = vector.extract_strided_slice %57 {offsets = [0, 1], sizes = [256, 132], strides = [1, 1]} : vector<256x134xf32> to vector<256x132xf32>
    %cst_31 = arith.constant dense<0.000000e+00> : vector<256x132xf32>
    %65 = tpu.matmul %63, %64, %cst_31 {dimension_numbers = #tpu.dot_dimension_numbers<[1], [0], [0], [1], [0, 0, 1, 1], [], []>} : vector<256x256xf32>, vector<256x132xf32>, vector<256x132xf32> -> vector<256x132xf32>
    %66 = arith.addf %61, %65 : vector<256x132xf32>
    %c2_32 = arith.constant 2 : index
    %c0_33 = arith.constant 0 : index
    %c0_34 = arith.constant 0 : index
    %67 = vector.load %arg6[%c2_32, %c0_33, %c0_34] : memref<3x256x256xf32, #tpu.memory_space<vmem>>, vector<1x256x256xf32>
    %68 = vector.shape_cast %67 : vector<1x256x256xf32> to vector<256x256xf32>
    %69 = vector.extract_strided_slice %57 {offsets = [0, 2], sizes = [256, 132], strides = [1, 1]} : vector<256x134xf32> to vector<256x132xf32>
    %cst_35 = arith.constant dense<0.000000e+00> : vector<256x132xf32>
    %70 = tpu.matmul %68, %69, %cst_35 {dimension_numbers = #tpu.dot_dimension_numbers<[1], [0], [0], [1], [0, 0, 1, 1], [], []>} : vector<256x256xf32>, vector<256x132xf32>, vector<256x132xf32> -> vector<256x132xf32>
    %71 = arith.addf %66, %70 : vector<256x132xf32>
    %c0_36 = arith.constant 0 : index
    %c0_37 = arith.constant 0 : index
    %72 = vector.load %arg7[%c0_36, %c0_37] : memref<256x1xf32, #tpu.memory_space<vmem>>, vector<256x1xf32>
    %73 = vector.broadcast %72 : vector<256x1xf32> to vector<256x132xf32>
    %74 = arith.addf %71, %73 : vector<256x132xf32>
    %cst_38 = arith.constant dense<0.000000e+00> : vector<132xf32>
    %75 = vector.multi_reduction <add>, %74, %cst_38 [0] : vector<256x132xf32> to vector<132xf32>
    %76 = vector.shape_cast %75 : vector<132xf32> to vector<1x132xf32>
    %cst_39 = arith.constant 2.560000e+02 : f32
    %77 = vector.broadcast %cst_39 : f32 to vector<1x132xf32>
    %78 = arith.divf %76, %77 : vector<1x132xf32>
    %79 = vector.broadcast %78 : vector<1x132xf32> to vector<256x132xf32>
    %80 = arith.subf %74, %79 : vector<256x132xf32>
    %81 = arith.mulf %80, %80 : vector<256x132xf32>
    %cst_40 = arith.constant dense<0.000000e+00> : vector<132xf32>
    %82 = vector.multi_reduction <add>, %81, %cst_40 [0] : vector<256x132xf32> to vector<132xf32>
    %83 = vector.shape_cast %82 : vector<132xf32> to vector<1x132xf32>
    %cst_41 = arith.constant 2.560000e+02 : f32
    %84 = vector.broadcast %cst_41 : f32 to vector<1x132xf32>
    %85 = arith.divf %83, %84 : vector<1x132xf32>
    %cst_42 = arith.constant 9.99999974E-6 : f32
    %86 = vector.broadcast %cst_42 : f32 to vector<1x132xf32>
    %87 = arith.addf %85, %86 : vector<1x132xf32>
    %88 = math.rsqrt %87 : vector<1x132xf32>
    %89 = vector.broadcast %88 : vector<1x132xf32> to vector<256x132xf32>
    %90 = arith.mulf %80, %89 : vector<256x132xf32>
    %c0_43 = arith.constant 0 : index
    %c0_44 = arith.constant 0 : index
    %91 = vector.load %arg8[%c0_43, %c0_44] : memref<256x1xf32, #tpu.memory_space<vmem>>, vector<256x1xf32>
    %92 = vector.broadcast %91 : vector<256x1xf32> to vector<256x132xf32>
    %93 = arith.mulf %90, %92 : vector<256x132xf32>
    %c0_45 = arith.constant 0 : index
    %c0_46 = arith.constant 0 : index
    %94 = vector.load %arg9[%c0_45, %c0_46] : memref<256x1xf32, #tpu.memory_space<vmem>>, vector<256x1xf32>
    %95 = vector.broadcast %94 : vector<256x1xf32> to vector<256x132xf32>
    %96 = arith.addf %93, %95 : vector<256x132xf32>
    %cst_47 = arith.constant 0.000000e+00 : f32
    %97 = vector.broadcast %cst_47 : f32 to vector<256x132xf32>
    %98 = arith.maximumf %96, %97 : vector<256x132xf32>
    %c2_i32 = arith.constant 2 : i32
    %99 = arith.addi %1, %c2_i32 : i32
    %100 = tpu.iota {dimensions = array<i32: 1>} : vector<1x132xi32>
    %101 = vector.broadcast %99 : i32 to vector<1x132xi32>
    %102 = arith.addi %101, %100 : vector<1x132xi32>
    %c0_i32_48 = arith.constant 0 : i32
    %103 = vector.broadcast %c0_i32_48 : i32 to vector<1x132xi32>
    %104 = arith.cmpi sge, %102, %103 : vector<1x132xi32>
    %c16_i32_49 = arith.constant 16 : i32
    %105 = vector.broadcast %c16_i32_49 : i32 to vector<1x132xi32>
    %106 = arith.cmpi slt, %102, %105 : vector<1x132xi32>
    %107 = arith.andi %104, %106 : vector<1x132xi1>
    %cst_50 = arith.constant 0.000000e+00 : f32
    %108 = vector.shape_cast %107 : vector<1x132xi1> to vector<1x132xi1>
    %109 = vector.broadcast %108 : vector<1x132xi1> to vector<256x132xi1>
    %110 = vector.broadcast %cst_50 : f32 to vector<256x132xf32>
    %111 = arith.select %109, %98, %110 : vector<256x132xi1>, vector<256x132xf32>
    %c0_51 = arith.constant 0 : index
    %c0_52 = arith.constant 0 : index
    %c0_53 = arith.constant 0 : index
    %112 = vector.load %arg10[%c0_51, %c0_52, %c0_53] : memref<3x256x256xf32, #tpu.memory_space<vmem>>, vector<1x256x256xf32>
    %113 = vector.shape_cast %112 : vector<1x256x256xf32> to vector<256x256xf32>
    %114 = vector.extract_strided_slice %111 {offsets = [0, 0], sizes = [256, 130], strides = [1, 1]} : vector<256x132xf32> to vector<256x130xf32>
    %cst_54 = arith.constant dense<0.000000e+00> : vector<256x130xf32>
    %115 = tpu.matmul %113, %114, %cst_54 {dimension_numbers = #tpu.dot_dimension_numbers<[1], [0], [0], [1], [0, 0, 1, 1], [], []>} : vector<256x256xf32>, vector<256x130xf32>, vector<256x130xf32> -> vector<256x130xf32>
    %c1_55 = arith.constant 1 : index
    %c0_56 = arith.constant 0 : index
    %c0_57 = arith.constant 0 : index
    %116 = vector.load %arg10[%c1_55, %c0_56, %c0_57] : memref<3x256x256xf32, #tpu.memory_space<vmem>>, vector<1x256x256xf32>
    %117 = vector.shape_cast %116 : vector<1x256x256xf32> to vector<256x256xf32>
    %118 = vector.extract_strided_slice %111 {offsets = [0, 1], sizes = [256, 130], strides = [1, 1]} : vector<256x132xf32> to vector<256x130xf32>
    %cst_58 = arith.constant dense<0.000000e+00> : vector<256x130xf32>
    %119 = tpu.matmul %117, %118, %cst_58 {dimension_numbers = #tpu.dot_dimension_numbers<[1], [0], [0], [1], [0, 0, 1, 1], [], []>} : vector<256x256xf32>, vector<256x130xf32>, vector<256x130xf32> -> vector<256x130xf32>
    %120 = arith.addf %115, %119 : vector<256x130xf32>
    %c2_59 = arith.constant 2 : index
    %c0_60 = arith.constant 0 : index
    %c0_61 = arith.constant 0 : index
    %121 = vector.load %arg10[%c2_59, %c0_60, %c0_61] : memref<3x256x256xf32, #tpu.memory_space<vmem>>, vector<1x256x256xf32>
    %122 = vector.shape_cast %121 : vector<1x256x256xf32> to vector<256x256xf32>
    %123 = vector.extract_strided_slice %111 {offsets = [0, 2], sizes = [256, 130], strides = [1, 1]} : vector<256x132xf32> to vector<256x130xf32>
    %cst_62 = arith.constant dense<0.000000e+00> : vector<256x130xf32>
    %124 = tpu.matmul %122, %123, %cst_62 {dimension_numbers = #tpu.dot_dimension_numbers<[1], [0], [0], [1], [0, 0, 1, 1], [], []>} : vector<256x256xf32>, vector<256x130xf32>, vector<256x130xf32> -> vector<256x130xf32>
    %125 = arith.addf %120, %124 : vector<256x130xf32>
    %c0_63 = arith.constant 0 : index
    %c0_64 = arith.constant 0 : index
    %126 = vector.load %arg11[%c0_63, %c0_64] : memref<256x1xf32, #tpu.memory_space<vmem>>, vector<256x1xf32>
    %127 = vector.broadcast %126 : vector<256x1xf32> to vector<256x130xf32>
    %128 = arith.addf %125, %127 : vector<256x130xf32>
    %cst_65 = arith.constant dense<0.000000e+00> : vector<130xf32>
    %129 = vector.multi_reduction <add>, %128, %cst_65 [0] : vector<256x130xf32> to vector<130xf32>
    %130 = vector.shape_cast %129 : vector<130xf32> to vector<1x130xf32>
    %cst_66 = arith.constant 2.560000e+02 : f32
    %131 = vector.broadcast %cst_66 : f32 to vector<1x130xf32>
    %132 = arith.divf %130, %131 : vector<1x130xf32>
    %133 = vector.broadcast %132 : vector<1x130xf32> to vector<256x130xf32>
    %134 = arith.subf %128, %133 : vector<256x130xf32>
    %135 = arith.mulf %134, %134 : vector<256x130xf32>
    %cst_67 = arith.constant dense<0.000000e+00> : vector<130xf32>
    %136 = vector.multi_reduction <add>, %135, %cst_67 [0] : vector<256x130xf32> to vector<130xf32>
    %137 = vector.shape_cast %136 : vector<130xf32> to vector<1x130xf32>
    %cst_68 = arith.constant 2.560000e+02 : f32
    %138 = vector.broadcast %cst_68 : f32 to vector<1x130xf32>
    %139 = arith.divf %137, %138 : vector<1x130xf32>
    %cst_69 = arith.constant 9.99999974E-6 : f32
    %140 = vector.broadcast %cst_69 : f32 to vector<1x130xf32>
    %141 = arith.addf %139, %140 : vector<1x130xf32>
    %142 = math.rsqrt %141 : vector<1x130xf32>
    %143 = vector.broadcast %142 : vector<1x130xf32> to vector<256x130xf32>
    %144 = arith.mulf %134, %143 : vector<256x130xf32>
    %c0_70 = arith.constant 0 : index
    %c0_71 = arith.constant 0 : index
    %145 = vector.load %arg12[%c0_70, %c0_71] : memref<256x1xf32, #tpu.memory_space<vmem>>, vector<256x1xf32>
    %146 = vector.broadcast %145 : vector<256x1xf32> to vector<256x130xf32>
    %147 = arith.mulf %144, %146 : vector<256x130xf32>
    %c0_72 = arith.constant 0 : index
    %c0_73 = arith.constant 0 : index
    %148 = vector.load %arg13[%c0_72, %c0_73] : memref<256x1xf32, #tpu.memory_space<vmem>>, vector<256x1xf32>
    %149 = vector.broadcast %148 : vector<256x1xf32> to vector<256x130xf32>
    %150 = arith.addf %147, %149 : vector<256x130xf32>
    %cst_74 = arith.constant 0.000000e+00 : f32
    %151 = vector.broadcast %cst_74 : f32 to vector<256x130xf32>
    %152 = arith.maximumf %150, %151 : vector<256x130xf32>
    %c3_i32 = arith.constant 3 : i32
    %153 = arith.addi %1, %c3_i32 : i32
    %154 = tpu.iota {dimensions = array<i32: 1>} : vector<1x130xi32>
    %155 = vector.broadcast %153 : i32 to vector<1x130xi32>
    %156 = arith.addi %155, %154 : vector<1x130xi32>
    %c0_i32_75 = arith.constant 0 : i32
    %157 = vector.broadcast %c0_i32_75 : i32 to vector<1x130xi32>
    %158 = arith.cmpi sge, %156, %157 : vector<1x130xi32>
    %c16_i32_76 = arith.constant 16 : i32
    %159 = vector.broadcast %c16_i32_76 : i32 to vector<1x130xi32>
    %160 = arith.cmpi slt, %156, %159 : vector<1x130xi32>
    %161 = arith.andi %158, %160 : vector<1x130xi1>
    %cst_77 = arith.constant 0.000000e+00 : f32
    %162 = vector.shape_cast %161 : vector<1x130xi1> to vector<1x130xi1>
    %163 = vector.broadcast %162 : vector<1x130xi1> to vector<256x130xi1>
    %164 = vector.broadcast %cst_77 : f32 to vector<256x130xf32>
    %165 = arith.select %163, %152, %164 : vector<256x130xi1>, vector<256x130xf32>
    %c0_78 = arith.constant 0 : index
    %c0_79 = arith.constant 0 : index
    %c0_80 = arith.constant 0 : index
    %166 = vector.load %arg14[%c0_78, %c0_79, %c0_80] : memref<3x8x256xf32, #tpu.memory_space<vmem>>, vector<1x8x256xf32>
    %167 = vector.shape_cast %166 : vector<1x8x256xf32> to vector<8x256xf32>
    %168 = vector.extract_strided_slice %165 {offsets = [0, 0], sizes = [256, 128], strides = [1, 1]} : vector<256x130xf32> to vector<256x128xf32>
    %cst_81 = arith.constant dense<0.000000e+00> : vector<8x128xf32>
    %169 = tpu.matmul %167, %168, %cst_81 {dimension_numbers = #tpu.dot_dimension_numbers<[1], [0], [0], [1], [0, 0, 1, 1], [], []>} : vector<8x256xf32>, vector<256x128xf32>, vector<8x128xf32> -> vector<8x128xf32>
    %c1_82 = arith.constant 1 : index
    %c0_83 = arith.constant 0 : index
    %c0_84 = arith.constant 0 : index
    %170 = vector.load %arg14[%c1_82, %c0_83, %c0_84] : memref<3x8x256xf32, #tpu.memory_space<vmem>>, vector<1x8x256xf32>
    %171 = vector.shape_cast %170 : vector<1x8x256xf32> to vector<8x256xf32>
    %172 = vector.extract_strided_slice %165 {offsets = [0, 1], sizes = [256, 128], strides = [1, 1]} : vector<256x130xf32> to vector<256x128xf32>
    %cst_85 = arith.constant dense<0.000000e+00> : vector<8x128xf32>
    %173 = tpu.matmul %171, %172, %cst_85 {dimension_numbers = #tpu.dot_dimension_numbers<[1], [0], [0], [1], [0, 0, 1, 1], [], []>} : vector<8x256xf32>, vector<256x128xf32>, vector<8x128xf32> -> vector<8x128xf32>
    %174 = arith.addf %169, %173 : vector<8x128xf32>
    %c2_86 = arith.constant 2 : index
    %c0_87 = arith.constant 0 : index
    %c0_88 = arith.constant 0 : index
    %175 = vector.load %arg14[%c2_86, %c0_87, %c0_88] : memref<3x8x256xf32, #tpu.memory_space<vmem>>, vector<1x8x256xf32>
    %176 = vector.shape_cast %175 : vector<1x8x256xf32> to vector<8x256xf32>
    %177 = vector.extract_strided_slice %165 {offsets = [0, 2], sizes = [256, 128], strides = [1, 1]} : vector<256x130xf32> to vector<256x128xf32>
    %cst_89 = arith.constant dense<0.000000e+00> : vector<8x128xf32>
    %178 = tpu.matmul %176, %177, %cst_89 {dimension_numbers = #tpu.dot_dimension_numbers<[1], [0], [0], [1], [0, 0, 1, 1], [], []>} : vector<8x256xf32>, vector<256x128xf32>, vector<8x128xf32> -> vector<8x128xf32>
    %179 = arith.addf %174, %178 : vector<8x128xf32>
    %c0_90 = arith.constant 0 : index
    %c0_91 = arith.constant 0 : index
    %180 = vector.load %arg15[%c0_90, %c0_91] : memref<8x1xf32, #tpu.memory_space<vmem>>, vector<8x1xf32>
    %181 = vector.broadcast %180 : vector<8x1xf32> to vector<8x128xf32>
    %182 = arith.addf %179, %181 : vector<8x128xf32>
    %cst_92 = arith.constant 0.000000e+00 : f32
    %183 = vector.broadcast %cst_92 : f32 to vector<8x128xf32>
    %184 = arith.maximumf %182, %183 : vector<8x128xf32>
    %c0_93 = arith.constant 0 : index
    %c0_94 = arith.constant 0 : index
    %185 = vector.load %arg16[%c0_93, %c0_94] : memref<8x128xf32, #tpu.memory_space<vmem>>, vector<8x128xf32>
    tpu.vector_store %arg16[%c0_93, %c0_94], %184 {strides = array<i32>} : memref<8x128xf32, #tpu.memory_space<vmem>>, vector<8x128xf32>,
    return
  }
  func.func @transform_0(%arg0: i32) -> (i32, i32, i32) {
    %c0_i32 = arith.constant 0 : i32
    %c0_i32_0 = arith.constant 0 : i32
    %c0_i32_1 = arith.constant 0 : i32
    return %arg0, %c0_i32, %c0_i32_0 : i32, i32, i32
  }
  func.func @transform_1(%arg0: i32) -> (i32, i32, i32) {
    %c0_i32 = arith.constant 0 : i32
    %c0_i32_0 = arith.constant 0 : i32
    %c0_i32_1 = arith.constant 0 : i32
    %c0_i32_2 = arith.constant 0 : i32
    return %c0_i32, %c0_i32_0, %c0_i32_1 : i32, i32, i32
  }
  func.func @transform_2(%arg0: i32) -> (i32, i32) {
    %c0_i32 = arith.constant 0 : i32
    %c0_i32_0 = arith.constant 0 : i32
    %c0_i32_1 = arith.constant 0 : i32
    return %c0_i32, %c0_i32_0 : i32, i32
  }
  func.func @transform_3(%arg0: i32) -> (i32, i32) {
    %c0_i32 = arith.constant 0 : i32
    %c0_i32_0 = arith.constant 0 : i32
    %c0_i32_1 = arith.constant 0 : i32
    return %c0_i32, %c0_i32_0 : i32, i32
  }
  func.func @transform_4(%arg0: i32) -> (i32, i32) {
    %c0_i32 = arith.constant 0 : i32
    %c0_i32_0 = arith.constant 0 : i32
    %c0_i32_1 = arith.constant 0 : i32
    return %c0_i32, %c0_i32_0 : i32, i32
  }
  func.func @transform_5(%arg0: i32) -> (i32, i32, i32) {
    %c0_i32 = arith.constant 0 : i32
    %c0_i32_0 = arith.constant 0 : i32
    %c0_i32_1 = arith.constant 0 : i32
    %c0_i32_2 = arith.constant 0 : i32
    return %c0_i32, %c0_i32_0, %c0_i32_1 : i32, i32, i32
  }
  func.func @transform_6(%arg0: i32) -> (i32, i32) {
    %c0_i32 = arith.constant 0 : i32
    %c0_i32_0 = arith.constant 0 : i32
    %c0_i32_1 = arith.constant 0 : i32
    return %c0_i32, %c0_i32_0 : i32, i32
  }
  func.func @transform_7(%arg0: i32) -> (i32, i32) {
    %c0_i32 = arith.constant 0 : i32
    %c0_i32_0 = arith.constant 0 : i32
    %c0_i32_1 = arith.constant 0 : i32
    return %c0_i32, %c0_i32_0 : i32, i32
  }
  func.func @transform_8(%arg0: i32) -> (i32, i32) {
    %c0_i32 = arith.constant 0 : i32
    %c0_i32_0 = arith.constant 0 : i32
    %c0_i32_1 = arith.constant 0 : i32
    return %c0_i32, %c0_i32_0 : i32, i32
  }
  func.func @transform_9(%arg0: i32) -> (i32, i32, i32) {
    %c0_i32 = arith.constant 0 : i32
    %c0_i32_0 = arith.constant 0 : i32
    %c0_i32_1 = arith.constant 0 : i32
    %c0_i32_2 = arith.constant 0 : i32
    return %c0_i32, %c0_i32_0, %c0_i32_1 : i32, i32, i32
  }
  func.func @transform_10(%arg0: i32) -> (i32, i32) {
    %c0_i32 = arith.constant 0 : i32
    %c0_i32_0 = arith.constant 0 : i32
    %c0_i32_1 = arith.constant 0 : i32
    return %c0_i32, %c0_i32_0 : i32, i32
  }
  func.func @transform_11(%arg0: i32) -> (i32, i32) {
    %c0_i32 = arith.constant 0 : i32
    %c0_i32_0 = arith.constant 0 : i32
    %c0_i32_1 = arith.constant 0 : i32
    return %c0_i32, %c0_i32_0 : i32, i32
  }
  func.func @transform_12(%arg0: i32) -> (i32, i32) {
    %c0_i32 = arith.constant 0 : i32
    %c0_i32_0 = arith.constant 0 : i32
    %c0_i32_1 = arith.constant 0 : i32
    return %c0_i32, %c0_i32_0 : i32, i32
  }
  func.func @transform_13(%arg0: i32) -> (i32, i32, i32) {
    %c0_i32 = arith.constant 0 : i32
    %c0_i32_0 = arith.constant 0 : i32
    %c0_i32_1 = arith.constant 0 : i32
    %c0_i32_2 = arith.constant 0 : i32
    return %c0_i32, %c0_i32_0, %c0_i32_1 : i32, i32, i32
  }
  func.func @transform_14(%arg0: i32) -> (i32, i32) {
    %c0_i32 = arith.constant 0 : i32
    %c0_i32_0 = arith.constant 0 : i32
    %c0_i32_1 = arith.constant 0 : i32
    return %c0_i32, %c0_i32_0 : i32, i32
  }
  func.func @transform_15(%arg0: i32) -> (i32, i32) {
    %c0_i32 = arith.constant 0 : i32
    %c0_i32_0 = arith.constant 0 : i32
    return %c0_i32, %arg0 : i32, i32
  }
}

</mosaic_0001>

<llo_original>
// kernel: head_forward.1
$region0: #{head_forward.1}
  #allocation0 [shape = 'u32[]', space=smem, size = 0x4, offset = 0x4, fixed_abs, tag = 'smem constant byte address 0x4 - core index']
  #allocation1 [shape = 'u32[144,128]{1,0:T(1,128)}', space=vmem, size = 0x12000, scoped, tag = 'internal scratch']
  %s0 = inlined_call_operand.vmem [shape: f32[1,32,136], index: 0, kind: input, shape index: {}]
  %s1 = inlined_call_operand.vmem [shape: f32[3,256,32], index: 1, kind: input, shape index: {}]
  %s2 = inlined_call_operand.vmem [shape: f32[256,1], index: 2, kind: input, shape index: {}]
  %s3 = inlined_call_operand.vmem [shape: f32[256,1], index: 3, kind: input, shape index: {}]
  %s4 = inlined_call_operand.vmem [shape: f32[256,1], index: 4, kind: input, shape index: {}]
  %s5 = inlined_call_operand.vmem [shape: f32[3,256,256], index: 5, kind: input, shape index: {}]
  %s6 = inlined_call_operand.vmem [shape: f32[256,1], index: 6, kind: input, shape index: {}]
  %s7 = inlined_call_operand.vmem [shape: f32[256,1], index: 7, kind: input, shape index: {}]
  %s8 = inlined_call_operand.vmem [shape: f32[256,1], index: 8, kind: input, shape index: {}]
  %s9 = inlined_call_operand.vmem [shape: f32[3,256,256], index: 9, kind: input, shape index: {}]
  %s10 = inlined_call_operand.vmem [shape: f32[256,1], index: 10, kind: input, shape index: {}]
  %s11 = inlined_call_operand.vmem [shape: f32[256,1], index: 11, kind: input, shape index: {}]
  %s12 = inlined_call_operand.vmem [shape: f32[256,1], index: 12, kind: input, shape index: {}]
  %s13 = inlined_call_operand.vmem [shape: f32[3,8,256], index: 13, kind: input, shape index: {}]
  %s14 = inlined_call_operand.vmem [shape: f32[8,1], index: 14, kind: input, shape index: {}]
  %s15 = inlined_call_operand.vmem [shape: f32[8,128], index: 15, kind: output, shape index: {}]
  %s16 = sld [smem:[#allocation0]]
  $region70: #{head_forward.1} parent=0
    _
  %s18 = ssub.s32 1, %s16
  %s19 = scalar_select 0, %s18, %s16
  // Predicated region
  $region2: #{head_forward.1} parent=0 // pred_check
    _
  $region3: #{head_forward.1} parent=0 // pred_check_branch
    %21 = sbr.rel (0) target = $region5
  $region4: #{head_forward.1} parent=0 // pred_region
    _
  $region5: #{head_forward.1} parent=0 // pred_fallthru
    _
  // Predicated region
  $region6: #{head_forward.1} parent=0 // pred_check
    _
  $region7: #{head_forward.1} parent=0 // pred_check_branch
    %23 = sbr.rel (0) target = $region9
  $region8: #{head_forward.1} parent=0 // pred_region
    _
  $region9: #{head_forward.1} parent=0 // pred_fallthru
    _
  // Predicated region
  $region10: #{head_forward.1} parent=0 // pred_check
    _
  $region11: #{head_forward.1} parent=0 // pred_check_branch
    %25 = sbr.rel (0) target = $region13
  $region12: #{head_forward.1} parent=0 // pred_region
    _
  $region13: #{head_forward.1} parent=0 // pred_fallthru
    _
  // Predicated region
  $region14: #{head_forward.1} parent=0 // pred_check
    _
  $region15: #{head_forward.1} parent=0 // pred_check_branch
    %27 = sbr.rel (0) target = $region17
  $region16: #{head_forward.1} parent=0 // pred_region
    _
  $region17: #{head_forward.1} parent=0 // pred_fallthru
    _
  // Predicated region
  $region18: #{head_forward.1} parent=0 // pred_check
    _
  $region19: #{head_forward.1} parent=0 // pred_check_branch
    %29 = sbr.rel (0) target = $region21
  $region20: #{head_forward.1} parent=0 // pred_region
    _
  $region21: #{head_forward.1} parent=0 // pred_fallthru
    _
  // Predicated region
  $region22: #{head_forward.1} parent=0 // pred_check
    _
  $region23: #{head_forward.1} parent=0 // pred_check_branch
    %31 = sbr.rel (0) target = $region25
  $region24: #{head_forward.1} parent=0 // pred_region
    _
  $region25: #{head_forward.1} parent=0 // pred_fallthru
    _
  // Predicated region
  $region26: #{head_forward.1} parent=0 // pred_check
    _
  $region27: #{head_forward.1} parent=0 // pred_check_branch
    %33 = sbr.rel (0) target = $region29
  $region28: #{head_forward.1} parent=0 // pred_region
    _
  $region29: #{head_forward.1} parent=0 // pred_fallthru
    _
  // Predicated region
  $region30: #{head_forward.1} parent=0 // pred_check
    _
  $region31: #{head_forward.1} parent=0 // pred_check_branch
    %35 = sbr.rel (0) target = $region33
  $region32: #{head_forward.1} parent=0 // pred_region
    _
  $region33: #{head_forward.1} parent=0 // pred_fallthru
    _
  // Predicated region
  $region34: #{head_forward.1} parent=0 // pred_check
    _
  $region35: #{head_forward.1} parent=0 // pred_check_branch
    %37 = sbr.rel (0) target = $region37
  $region36: #{head_forward.1} parent=0 // pred_region
    _
  $region37: #{head_forward.1} parent=0 // pred_fallthru
    _
  // Predicated region
  $region38: #{head_forward.1} parent=0 // pred_check
    _
  $region39: #{head_forward.1} parent=0 // pred_check_branch
    %39 = sbr.rel (0) target = $region41
  $region40: #{head_forward.1} parent=0 // pred_region
    _
  $region41: #{head_forward.1} parent=0 // pred_fallthru
    _
  // Predicated region
  $region42: #{head_forward.1} parent=0 // pred_check
    _
  $region43: #{head_forward.1} parent=0 // pred_check_branch
    %41 = sbr.rel (0) target = $region45
  $region44: #{head_forward.1} parent=0 // pred_region
    _
  $region45: #{head_forward.1} parent=0 // pred_fallthru
    _
  // Predicated region
  $region46: #{head_forward.1} parent=0 // pred_check
    _
  $region47: #{head_forward.1} parent=0 // pred_check_branch
    %43 = sbr.rel (0) target = $region49
  $region48: #{head_forward.1} parent=0 // pred_region
    _
  $region49: #{head_forward.1} parent=0 // pred_fallthru
    _
  // Predicated region
  $region50: #{head_forward.1} parent=0 // pred_check
    _
  $region51: #{head_forward.1} parent=0 // pred_check_branch
    %45 = sbr.rel (0) target = $region53
  $region52: #{head_forward.1} parent=0 // pred_region
    _
  $region53: #{head_forward.1} parent=0 // pred_fallthru
    _
  // Predicated region
  $region54: #{head_forward.1} parent=0 // pred_check
    _
  $region55: #{head_forward.1} parent=0 // pred_check_branch
    %47 = sbr.rel (0) target = $region57
  $region56: #{head_forward.1} parent=0 // pred_region
    _
  $region57: #{head_forward.1} parent=0 // pred_fallthru
    _
  // Predicated region
  $region58: #{head_forward.1} parent=0 // pred_check
    _
  $region59: #{head_forward.1} parent=0 // pred_check_branch
    %49 = sbr.rel (0) target = $region61
  $region60: #{head_forward.1} parent=0 // pred_region
    _
  $region61: #{head_forward.1} parent=0 // pred_fallthru
    _
  %s50 = smul.u32 0, 128
  %v51 = vld [vmem:[%s0] sm:$0xff]
  %v52 = vld [vmem:[%s0 + $0x8] sm:$0xff]
  %v53 = vld [vmem:[%s0 + $0x10] sm:$0xff]
  %v54 = vld [vmem:[%s0 + $0x18] sm:$0xff]
  %v55 = vld [vmem:[%s0 + $0x20] sm:$0xff]
  %v56 = vld [vmem:[%s0 + $0x28] sm:$0xff]
  %v57 = vld [vmem:[%s0 + $0x30] sm:$0xff]
  %v58 = vld [vmem:[%s0 + $0x38] sm:$0xff]
  %v59 = vld [vmem:[%s1] sm:$0xff]
  %v60 = vld [vmem:[%s1 + $0x8] sm:$0xff]
  %v61 = vld [vmem:[%s1 + $0x10] sm:$0xff]
  %v62 = vld [vmem:[%s1 + $0x18] sm:$0xff]
  %v63 = vld [vmem:[%s1 + $0x20] sm:$0xff]
  %v64 = vld [vmem:[%s1 + $0x28] sm:$0xff]
  %v65 = vld [vmem:[%s1 + $0x30] sm:$0xff]
  %v66 = vld [vmem:[%s1 + $0x38] sm:$0xff]
  %v67 = vld [vmem:[%s1 + $0x40] sm:$0xff]
  %v68 = vld [vmem:[%s1 + $0x48] sm:$0xff]
  %v69 = vld [vmem:[%s1 + $0x50] sm:$0xff]
  %v70 = vld [vmem:[%s1 + $0x58] sm:$0xff]
  %v71 = vld [vmem:[%s1 + $0x60] sm:$0xff]
  %v72 = vld [vmem:[%s1 + $0x68] sm:$0xff]
  %v73 = vld [vmem:[%s1 + $0x70] sm:$0xff]
  %v74 = vld [vmem:[%s1 + $0x78] sm:$0xff]
  %v75 = vld [vmem:[%s1 + $0x80] sm:$0xff]
  %v76 = vld [vmem:[%s1 + $0x88] sm:$0xff]
  %v77 = vld [vmem:[%s1 + $0x90] sm:$0xff]
  %v78 = vld [vmem:[%s1 + $0x98] sm:$0xff]
  %v79 = vld [vmem:[%s1 + $0xa0] sm:$0xff]
  %v80 = vld [vmem:[%s1 + $0xa8] sm:$0xff]
  %v81 = vld [vmem:[%s1 + $0xb0] sm:$0xff]
  %v82 = vld [vmem:[%s1 + $0xb8] sm:$0xff]
  %v83 = vld [vmem:[%s1 + $0xc0] sm:$0xff]
  %v84 = vld [vmem:[%s1 + $0xc8] sm:$0xff]
  %v85 = vld [vmem:[%s1 + $0xd0] sm:$0xff]
  %v86 = vld [vmem:[%s1 + $0xd8] sm:$0xff]
  %v87 = vld [vmem:[%s1 + $0xe0] sm:$0xff]
  %v88 = vld [vmem:[%s1 + $0xe8] sm:$0xff]
  %v89 = vld [vmem:[%s1 + $0xf0] sm:$0xff]
  %v90 = vld [vmem:[%s1 + $0xf8] sm:$0xff]
  %s91 = scalar_lea.vmem %s1, 256
  %v92 = vld [vmem:[%s91] sm:$0xff]
  %v93 = vld [vmem:[%s91 + $0x8] sm:$0xff]
  %v94 = vld [vmem:[%s91 + $0x10] sm:$0xff]
  %v95 = vld [vmem:[%s91 + $0x18] sm:$0xff]
  %v96 = vld [vmem:[%s91 + $0x20] sm:$0xff]
  %v97 = vld [vmem:[%s91 + $0x28] sm:$0xff]
  %v98 = vld [vmem:[%s91 + $0x30] sm:$0xff]
  %v99 = vld [vmem:[%s91 + $0x38] sm:$0xff]
  %v100 = vld [vmem:[%s91 + $0x40] sm:$0xff]
  %v101 = vld [vmem:[%s91 + $0x48] sm:$0xff]
  %v102 = vld [vmem:[%s91 + $0x50] sm:$0xff]
  %v103 = vld [vmem:[%s91 + $0x58] sm:$0xff]
  %v104 = vld [vmem:[%s91 + $0x60] sm:$0xff]
  %v105 = vld [vmem:[%s91 + $0x68] sm:$0xff]
  %v106 = vld [vmem:[%s91 + $0x70] sm:$0xff]
  %v107 = vld [vmem:[%s91 + $0x78] sm:$0xff]
  %v108 = vld [vmem:[%s91 + $0x80] sm:$0xff]
  %v109 = vld [vmem:[%s91 + $0x88] sm:$0xff]
  %v110 = vld [vmem:[%s91 + $0x90] sm:$0xff]
  %v111 = vld [vmem:[%s91 + $0x98] sm:$0xff]
  %v112 = vld [vmem:[%s91 + $0xa0] sm:$0xff]
  %v113 = vld [vmem:[%s91 + $0xa8] sm:$0xff]
  %v114 = vld [vmem:[%s91 + $0xb0] sm:$0xff]
  %v115 = vld [vmem:[%s91 + $0xb8] sm:$0xff]
  %v116 = vld [vmem:[%s91 + $0xc0] sm:$0xff]
  %v117 = vld [vmem:[%s91 + $0xc8] sm:$0xff]
  %v118 = vld [vmem:[%s91 + $0xd0] sm:$0xff]
  %v119 = vld [vmem:[%s91 + $0xd8] sm:$0xff]
  %v120 = vld [vmem:[%s91 + $0xe0] sm:$0xff]
  %v121 = vld [vmem:[%s91 + $0xe8] sm:$0xff]
  %v122 = vld [vmem:[%s91 + $0xf0] sm:$0xff]
  %v123 = vld [vmem:[%s91 + $0xf8] sm:$0xff]
  %132 = vrot.lane.b32.xlu0 %v51, 127
  %v133 = vpop.permute.xlu0 %132
  %134 = vrot.lane.b32.xlu0 %v52, 127
  %v135 = vpop.permute.xlu0 %134
  %136 = vrot.lane.b32.xlu0 %v53, 127
  %v137 = vpop.permute.xlu0 %136
  %138 = vrot.lane.b32.xlu0 %v54, 127
  %v139 = vpop.permute.xlu0 %138
  %140 = vrot.lane.b32.xlu0 %v55, 127
  %v141 = vpop.permute.xlu0 %140
  %142 = vrot.lane.b32.xlu0 %v56, 127
  %v143 = vpop.permute.xlu0 %142
  %144 = vrot.lane.b32.xlu0 %v57, 127
  %v145 = vpop.permute.xlu0 %144
  %146 = vrot.lane.b32.xlu0 %v58, 127
  %v147 = vpop.permute.xlu0 %146
  %vm148 = vcmask 1039360
  %v149 = vsel %vm148, %v133, %v135
  %v150 = vsel %vm148, %v137, %v139
  %v151 = vsel %vm148, %v141, %v143
  %v152 = vsel %vm148, %v145, %v147
  %vm161 = vcmask 261120
  %v163 = vsel %vm161, %v92, 0
  %v166 = vsel %vm161, %v93, 0
  %v169 = vsel %vm161, %v94, 0
  %v172 = vsel %vm161, %v95, 0
  %v175 = vsel %vm161, %v96, 0
  %v178 = vsel %vm161, %v97, 0
  %v181 = vsel %vm161, %v98, 0
  %v184 = vsel %vm161, %v99, 0
  %v187 = vsel %vm161, %v100, 0
  %v190 = vsel %vm161, %v101, 0
  %v193 = vsel %vm161, %v102, 0
  %v196 = vsel %vm161, %v103, 0
  %v199 = vsel %vm161, %v104, 0
  %v202 = vsel %vm161, %v105, 0
  %v205 = vsel %vm161, %v106, 0
  %v208 = vsel %vm161, %v107, 0
  %v211 = vsel %vm161, %v108, 0
  %v214 = vsel %vm161, %v109, 0
  %v217 = vsel %vm161, %v110, 0
  %v220 = vsel %vm161, %v111, 0
  %v223 = vsel %vm161, %v112, 0
  %v226 = vsel %vm161, %v113, 0
  %v229 = vsel %vm161, %v114, 0
  %v232 = vsel %vm161, %v115, 0
  %v235 = vsel %vm161, %v116, 0
  %v238 = vsel %vm161, %v117, 0
  %v241 = vsel %vm161, %v118, 0
  %v244 = vsel %vm161, %v119, 0
  %v247 = vsel %vm161, %v120, 0
  %v250 = vsel %vm161, %v121, 0
  %v253 = vsel %vm161, %v122, 0
  %v256 = vsel %vm161, %v123, 0
  %258 = vmatprep.subr.mxu0 %v135
  %259 = vmatpush1.msra.mxu0 %v149
  %260 = vmatprep.subr.mxu0 %v139
  %261 = vmatpush1.msra.mxu0 %v150
  %262 = vmatprep.subr.mxu0 %v143
  %263 = vmatpush1.msra.mxu0 %v151
  %264 = vmatprep.subr.mxu0 %v147
  %265 = vmatpush1.msra.mxu0 %v152
  %266 = vmatprep.subr.mxu0 0.0
  %267 = vmatpush1.msra.mxu0 0.0
  %268 = vmatprep.subr.mxu0 0.0
  %269 = vmatpush1.msra.mxu0 0.0
  %270 = vmatprep.subr.mxu0 0.0
  %271 = vmatpush1.msra.mxu0 0.0
  %272 = vmatprep.subr.mxu0 0.0
  %273 = vmatpush1.msra.mxu0 0.0
  %274 = vmatprep.subr.mxu0 0.0
  %275 = vmatpush1.msra.mxu0 0.0
  %276 = vmatprep.subr.mxu0 0.0
  %277 = vmatpush1.msra.mxu0 0.0
  %278 = vmatprep.subr.mxu0 0.0
  %279 = vmatpush1.msra.mxu0 0.0
  %280 = vmatprep.subr.mxu0 0.0
  %281 = vmatpush1.msra.mxu0 0.0
  %282 = vmatprep.subr.mxu0 0.0
  %283 = vmatpush1.msra.mxu0 0.0
  %284 = vmatprep.subr.mxu0 0.0
  %285 = vmatpush1.msra.mxu0 0.0
  %286 = vmatprep.subr.mxu0 0.0
  %287 = vmatpush1.msra.mxu0 0.0
  %288 = vmatprep.subr.mxu0 0.0
  %289 = vmatpush1.msra.mxu0 0.0
  %290 = vmatprep.subr.mxu0 0.0
  %291 = vmatpush1.msra.mxu0 0.0
  %292 = vmatprep.subr.mxu0 0.0
  %293 = vmatpush1.msra.mxu0 0.0
  %294 = vmatprep.subr.mxu0 0.0
  %295 = vmatpush1.msra.mxu0 0.0
  %296 = vmatprep.subr.mxu0 0.0
  %297 = vmatpush1.msra.mxu0 0.0
  %298 = vmatprep.subr.mxu0 0.0
  %299 = vmatpush1.msra.mxu0 0.0
  %300 = vmatprep.subr.mxu0 0.0
  %301 = vmatpush1.msra.mxu0 0.0
  %302 = vmatprep.subr.mxu0 0.0
  %303 = vmatpush1.msra.mxu0 0.0
  %304 = vmatprep.subr.mxu0 0.0
  %305 = vmatpush1.msra.mxu0 0.0
  %306 = vmatprep.subr.mxu0 0.0
  %307 = vmatpush1.msra.mxu0 0.0
  %308 = vmatprep.subr.mxu0 0.0
  %309 = vmatpush1.msra.mxu0 0.0
  %310 = vmatprep.subr.mxu0 0.0
  %311 = vmatpush1.msra.mxu0 0.0
  %312 = vmatprep.subr.mxu0 0.0
  %313 = vmatpush1.msra.mxu0 0.0
  %314 = vmatprep.subr.mxu0 0.0
  %315 = vmatpush1.msra.mxu0 0.0
  %316 = vmatprep.subr.mxu0 0.0
  %317 = vmatpush1.msra.mxu0 0.0
  %318 = vmatprep.subr.mxu0 0.0
  %319 = vmatpush1.msra.mxu0 0.0
  %320 = vmatprep.subr.mxu0 0.0
  %321 = vmatpush1.msra.mxu0 0.0
  %322 = vmatprep.mubr.f32.mxu0 0.0
  %323 = vmatmul.mubr.f32.gmra.mrb[0].mxu0 %v163
  %v324 = vpop.f32.mrb[0].mxu0
  %v325 = vadd.f32 0.0, %v324
  %v326 = vpop.f32.mrb[0].mxu0
  %v327 = vadd.f32 0.0, %v326
  %328 = vmatprep.mubr.f32.mxu0 0.0
  %329 = vmatmul.mubr.f32.gmra.mrb[0].mxu0 %v166
  %v330 = vpop.f32.mrb[0].mxu0
  %v331 = vadd.f32 0.0, %v330
  %v332 = vpop.f32.mrb[0].mxu0
  %v333 = vadd.f32 0.0, %v332
  %334 = vmatprep.mubr.f32.mxu0 0.0
  %335 = vmatmul.mubr.f32.gmra.mrb[0].mxu0 %v169
  %v336 = vpop.f32.mrb[0].mxu0
  %v337 = vadd.f32 0.0, %v336
  %v338 = vpop.f32.mrb[0].mxu0
  %v339 = vadd.f32 0.0, %v338
  %340 = vmatprep.mubr.f32.mxu0 0.0
  %341 = vmatmul.mubr.f32.gmra.mrb[0].mxu0 %v172
  %v342 = vpop.f32.mrb[0].mxu0
  %v343 = vadd.f32 0.0, %v342
  %v344 = vpop.f32.mrb[0].mxu0
  %v345 = vadd.f32 0.0, %v344
  %346 = vmatprep.mubr.f32.mxu0 0.0
  %347 = vmatmul.mubr.f32.gmra.mrb[0].mxu0 %v175
  %v348 = vpop.f32.mrb[0].mxu0
  %v349 = vadd.f32 0.0, %v348
  %v350 = vpop.f32.mrb[0].mxu0
  %v351 = vadd.f32 0.0, %v350
  %352 = vmatprep.mubr.f32.mxu0 0.0
  %353 = vmatmul.mubr.f32.gmra.mrb[0].mxu0 %v178
  %v354 = vpop.f32.mrb[0].mxu0
  %v355 = vadd.f32 0.0, %v354
  %v356 = vpop.f32.mrb[0].mxu0
  %v357 = vadd.f32 0.0, %v356
  %358 = vmatprep.mubr.f32.mxu0 0.0
  %359 = vmatmul.mubr.f32.gmra.mrb[0].mxu0 %v181
  %v360 = vpop.f32.mrb[0].mxu0
  %v361 = vadd.f32 0.0, %v360
  %v362 = vpop.f32.mrb[0].mxu0
  %v363 = vadd.f32 0.0, %v362
  %364 = vmatprep.mubr.f32.mxu0 0.0
  %365 = vmatmul.mubr.f32.gmra.mrb[0].mxu0 %v184
  %v366 = vpop.f32.mrb[0].mxu0
  %v367 = vadd.f32 0.0, %v366
  %v368 = vpop.f32.mrb[0].mxu0
  %v369 = vadd.f32 0.0, %v368
  %370 = vmatprep.mubr.f32.mxu0 0.0
  %371 = vmatmul.mubr.f32.gmra.mrb[0].mxu0 %v187
  %v372 = vpop.f32.mrb[0].mxu0
  %v373 = vadd.f32 0.0, %v372
  %v374 = vpop.f32.mrb[0].mxu0
  %v375 = vadd.f32 0.0, %v374
  %376 = vmatprep.mubr.f32.mxu0 0.0
  %377 = vmatmul.mubr.f32.gmra.mrb[0].mxu0 %v190
  %v378 = vpop.f32.mrb[0].mxu0
  %v379 = vadd.f32 0.0, %v378
  %v380 = vpop.f32.mrb[0].mxu0
  %v381 = vadd.f32 0.0, %v380
  %382 = vmatprep.mubr.f32.mxu0 0.0
  %383 = vmatmul.mubr.f32.gmra.mrb[0].mxu0 %v193
  %v384 = vpop.f32.mrb[0].mxu0
  %v385 = vadd.f32 0.0, %v384
  %v386 = vpop.f32.mrb[0].mxu0
  %v387 = vadd.f32 0.0, %v386
  %388 = vmatprep.mubr.f32.mxu0 0.0
  %389 = vmatmul.mubr.f32.gmra.mrb[0].mxu0 %v196
  %v390 = vpop.f32.mrb[0].mxu0
  %v391 = vadd.f32 0.0, %v390
  %v392 = vpop.f32.mrb[0].mxu0
  %v393 = vadd.f32 0.0, %v392
  %394 = vmatprep.mubr.f32.mxu0 0.0
  %395 = vmatmul.mubr.f32.gmra.mrb[0].mxu0 %v199
  %v396 = vpop.f32.mrb[0].mxu0
  %v397 = vadd.f32 0.0, %v396
  %v398 = vpop.f32.mrb[0].mxu0
  %v399 = vadd.f32 0.0, %v398
  %400 = vmatprep.mubr.f32.mxu0 0.0
  %401 = vmatmul.mubr.f32.gmra.mrb[0].mxu0 %v202
  %v402 = vpop.f32.mrb[0].mxu0
  %v403 = vadd.f32 0.0, %v402
  %v404 = vpop.f32.mrb[0].mxu0
  %v405 = vadd.f32 0.0, %v404
  %406 = vmatprep.mubr.f32.mxu0 0.0
  %407 = vmatmul.mubr.f32.gmra.mrb[0].mxu0 %v205
  %v408 = vpop.f32.mrb[0].mxu0
  %v409 = vadd.f32 0.0, %v408
  %v410 = vpop.f32.mrb[0].mxu0
  %v411 = vadd.f32 0.0, %v410
  %412 = vmatprep.mubr.f32.mxu0 0.0
  %413 = vmatmul.mubr.f32.gmra.mrb[0].mxu0 %v208
  %v414 = vpop.f32.mrb[0].mxu0
  %v415 = vadd.f32 0.0, %v414
  %v416 = vpop.f32.mrb[0].mxu0
  %v417 = vadd.f32 0.0, %v416
  %418 = vmatprep.mubr.f32.mxu0 0.0
  %419 = vmatmul.mubr.f32.gmra.mrb[0].mxu0 %v211
  %v420 = vpop.f32.mrb[0].mxu0
  %v421 = vadd.f32 0.0, %v420
  %v422 = vpop.f32.mrb[0].mxu0
  %v423 = vadd.f32 0.0, %v422
  %424 = vmatprep.mubr.f32.mxu0 0.0
  %425 = vmatmul.mubr.f32.gmra.mrb[0].mxu0 %v214
  %v426 = vpop.f32.mrb[0].mxu0
  %v427 = vadd.f32 0.0, %v426
  %v428 = vpop.f32.mrb[0].mxu0
  %v429 = vadd.f32 0.0, %v428
  %430 = vmatprep.mubr.f32.mxu0 0.0
  %431 = vmatmul.mubr.f32.gmra.mrb[0].mxu0 %v217
  %v432 = vpop.f32.mrb[0].mxu0
  %v433 = vadd.f32 0.0, %v432
  %v434 = vpop.f32.mrb[0].mxu0
  %v435 = vadd.f32 0.0, %v434
  %436 = vmatprep.mubr.f32.mxu0 0.0
  %437 = vmatmul.mubr.f32.gmra.mrb[0].mxu0 %v220
  %v438 = vpop.f32.mrb[0].mxu0
  %v439 = vadd.f32 0.0, %v438
  %v440 = vpop.f32.mrb[0].mxu0
  %v441 = vadd.f32 0.0, %v440
  %442 = vmatprep.mubr.f32.mxu0 0.0
  %443 = vmatmul.mubr.f32.gmra.mrb[0].mxu0 %v223
  %v444 = vpop.f32.mrb[0].mxu0
  %v445 = vadd.f32 0.0, %v444
  %v446 = vpop.f32.mrb[0].mxu0
  %v447 = vadd.f32 0.0, %v446
  %448 = vmatprep.mubr.f32.mxu0 0.0
  %449 = vmatmul.mubr.f32.gmra.mrb[0].mxu0 %v226
  %v450 = vpop.f32.mrb[0].mxu0
  %v451 = vadd.f32 0.0, %v450
  %v452 = vpop.f32.mrb[0].mxu0
  %v453 = vadd.f32 0.0, %v452
  %454 = vmatprep.mubr.f32.mxu0 0.0
  %455 = vmatmul.mubr.f32.gmra.mrb[0].mxu0 %v229
  %v456 = vpop.f32.mrb[0].mxu0
  %v457 = vadd.f32 0.0, %v456
  %v458 = vpop.f32.mrb[0].mxu0
  %v459 = vadd.f32 0.0, %v458
  %460 = vmatprep.mubr.f32.mxu0 0.0
  %461 = vmatmul.mubr.f32.gmra.mrb[0].mxu0 %v232
  %v462 = vpop.f32.mrb[0].mxu0
  %v463 = vadd.f32 0.0, %v462
  %v464 = vpop.f32.mrb[0].mxu0
  %v465 = vadd.f32 0.0, %v464
  %466 = vmatprep.mubr.f32.mxu0 0.0
  %467 = vmatmul.mubr.f32.gmra.mrb[0].mxu0 %v235
  %v468 = vpop.f32.mrb[0].mxu0
  %v469 = vadd.f32 0.0, %v468
  %v470 = vpop.f32.mrb[0].mxu0
  %v471 = vadd.f32 0.0, %v470
  %472 = vmatprep.mubr.f32.mxu0 0.0
  %473 = vmatmul.mubr.f32.gmra.mrb[0].mxu0 %v238
  %v474 = vpop.f32.mrb[0].mxu0
  %v475 = vadd.f32 0.0, %v474
  %v476 = vpop.f32.mrb[0].mxu0
  %v477 = vadd.f32 0.0, %v476
  %478 = vmatprep.mubr.f32.mxu0 0.0
  %479 = vmatmul.mubr.f32.gmra.mrb[0].mxu0 %v241
  %v480 = vpop.f32.mrb[0].mxu0
  %v481 = vadd.f32 0.0, %v480
  %v482 = vpop.f32.mrb[0].mxu0
  %v483 = vadd.f32 0.0, %v482
  %484 = vmatprep.mubr.f32.mxu0 0.0
  %485 = vmatmul.mubr.f32.gmra.mrb[0].mxu0 %v244
  %v486 = vpop.f32.mrb[0].mxu0
  %v487 = vadd.f32 0.0, %v486
  %v488 = vpop.f32.mrb[0].mxu0
  %v489 = vadd.f32 0.0, %v488
  %490 = vmatprep.mubr.f32.mxu0 0.0
  %491 = vmatmul.mubr.f32.gmra.mrb[0].mxu0 %v247
  %v492 = vpop.f32.mrb[0].mxu0
  %v493 = vadd.f32 0.0, %v492
  %v494 = vpop.f32.mrb[0].mxu0
  %v495 = vadd.f32 0.0, %v494
  %496 = vmatprep.mubr.f32.mxu0 0.0
  %497 = vmatmul.mubr.f32.gmra.mrb[0].mxu0 %v250
  %v498 = vpop.f32.mrb[0].mxu0
  %v499 = vadd.f32 0.0, %v498
  %v500 = vpop.f32.mrb[0].mxu0
  %v501 = vadd.f32 0.0, %v500
  %502 = vmatprep.mubr.f32.mxu0 0.0
  %503 = vmatmul.mubr.f32.gmra.mrb[0].mxu0 %v253
  %v504 = vpop.f32.mrb[0].mxu0
  %v505 = vadd.f32 0.0, %v504
  %v506 = vpop.f32.mrb[0].mxu0
  %v507 = vadd.f32 0.0, %v506
  %508 = vmatprep.mubr.f32.mxu0 0.0
  %509 = vmatmul.mubr.f32.gmra.mrb[0].mxu0 %v256
  %v510 = vpop.f32.mrb[0].mxu0
  %v511 = vadd.f32 0.0, %v510
  %v512 = vpop.f32.mrb[0].mxu0
  %v513 = vadd.f32 0.0, %v512
  %514 = vdwg.mxu0
  %v516 = vsel %vm161, %v59, 0
  %v519 = vsel %vm161, %v60, 0
  %v522 = vsel %vm161, %v61, 0
  %v525 = vsel %vm161, %v62, 0
  %v528 = vsel %vm161, %v63, 0
  %v531 = vsel %vm161, %v64, 0
  %v534 = vsel %vm161, %v65, 0
  %v537 = vsel %vm161, %v66, 0
  %v540 = vsel %vm161, %v67, 0
  %v543 = vsel %vm161, %v68, 0
  %v546 = vsel %vm161, %v69, 0
  %v549 = vsel %vm161, %v70, 0
  %v552 = vsel %vm161, %v71, 0
  %v555 = vsel %vm161, %v72, 0
  %v558 = vsel %vm161, %v73, 0
  %v561 = vsel %vm161, %v74, 0
  %v564 = vsel %vm161, %v75, 0
  %v567 = vsel %vm161, %v76, 0
  %v570 = vsel %vm161, %v77, 0
  %v573 = vsel %vm161, %v78, 0
  %v576 = vsel %vm161, %v79, 0
  %v579 = vsel %vm161, %v80, 0
  %v582 = vsel %vm161, %v81, 0
  %v585 = vsel %vm161, %v82, 0
  %v588 = vsel %vm161, %v83, 0
  %v591 = vsel %vm161, %v84, 0
  %v594 = vsel %vm161, %v85, 0
  %v597 = vsel %vm161, %v86, 0
  %v600 = vsel %vm161, %v87, 0
  %v603 = vsel %vm161, %v88, 0
  %v606 = vsel %vm161, %v89, 0
  %v609 = vsel %vm161, %v90, 0
  %611 = vmatprep.subr.mxu0 %v52
  %612 = vmatpush1.msra.mxu0 %v51
  %613 = vmatprep.subr.mxu0 %v54
  %614 = vmatpush1.msra.mxu0 %v53
  %615 = vmatprep.subr.mxu0 %v56
  %616 = vmatpush1.msra.mxu0 %v55
  %617 = vmatprep.subr.mxu0 %v58
  %618 = vmatpush1.msra.mxu0 %v57
  %619 = vmatprep.subr.mxu0 0.0
  %620 = vmatpush1.msra.mxu0 0.0
  %621 = vmatprep.subr.mxu0 0.0
  %622 = vmatpush1.msra.mxu0 0.0
  %623 = vmatprep.subr.mxu0 0.0
  %624 = vmatpush1.msra.mxu0 0.0
  %625 = vmatprep.subr.mxu0 0.0
  %626 = vmatpush1.msra.mxu0 0.0
  %627 = vmatprep.subr.mxu0 0.0
  %628 = vmatpush1.msra.mxu0 0.0
  %629 = vmatprep.subr.mxu0 0.0
  %630 = vmatpush1.msra.mxu0 0.0
  %631 = vmatprep.subr.mxu0 0.0
  %632 = vmatpush1.msra.mxu0 0.0
  %633 = vmatprep.subr.mxu0 0.0
  %634 = vmatpush1.msra.mxu0 0.0
  %635 = vmatprep.subr.mxu0 0.0
  %636 = vmatpush1.msra.mxu0 0.0
  %637 = vmatprep.subr.mxu0 0.0
  %638 = vmatpush1.msra.mxu0 0.0
  %639 = vmatprep.subr.mxu0 0.0
  %640 = vmatpush1.msra.mxu0 0.0
  %641 = vmatprep.subr.mxu0 0.0
  %642 = vmatpush1.msra.mxu0 0.0
  %643 = vmatprep.subr.mxu0 0.0
  %644 = vmatpush1.msra.mxu0 0.0
  %645 = vmatprep.subr.mxu0 0.0
  %646 = vmatpush1.msra.mxu0 0.0
  %647 = vmatprep.subr.mxu0 0.0
  %648 = vmatpush1.msra.mxu0 0.0
  %649 = vmatprep.subr.mxu0 0.0
  %650 = vmatpush1.msra.mxu0 0.0
  %651 = vmatprep.subr.mxu0 0.0
  %652 = vmatpush1.msra.mxu0 0.0
  %653 = vmatprep.subr.mxu0 0.0
  %654 = vmatpush1.msra.mxu0 0.0
  %655 = vmatprep.subr.mxu0 0.0
  %656 = vmatpush1.msra.mxu0 0.0
  %657 = vmatprep.subr.mxu0 0.0
  %658 = vmatpush1.msra.mxu0 0.0
  %659 = vmatprep.subr.mxu0 0.0
  %660 = vmatpush1.msra.mxu0 0.0
  %661 = vmatprep.subr.mxu0 0.0
  %662 = vmatpush1.msra.mxu0 0.0
  %663 = vmatprep.subr.mxu0 0.0
  %664 = vmatpush1.msra.mxu0 0.0
  %665 = vmatprep.subr.mxu0 0.0
  %666 = vmatpush1.msra.mxu0 0.0
  %667 = vmatprep.subr.mxu0 0.0
  %668 = vmatpush1.msra.mxu0 0.0
  %669 = vmatprep.subr.mxu0 0.0
  %670 = vmatpush1.msra.mxu0 0.0
  %671 = vmatprep.subr.mxu0 0.0
  %672 = vmatpush1.msra.mxu0 0.0
  %673 = vmatprep.subr.mxu0 0.0
  %674 = vmatpush1.msra.mxu0 0.0
  %675 = vmatprep.mubr.f32.mxu0 0.0
  %676 = vmatmul.mubr.f32.gmra.mrb[0].mxu0 %v516
  %v677 = vpop.f32.mrb[0].mxu0
  %v678 = vadd.f32 %v325, %v677
  %v679 = vpop.f32.mrb[0].mxu0
  %v680 = vadd.f32 %v327, %v679
  %681 = vmatprep.mubr.f32.mxu0 0.0
  %682 = vmatmul.mubr.f32.gmra.mrb[0].mxu0 %v519
  %v683 = vpop.f32.mrb[0].mxu0
  %v684 = vadd.f32 %v331, %v683
  %v685 = vpop.f32.mrb[0].mxu0
  %v686 = vadd.f32 %v333, %v685
  %687 = vmatprep.mubr.f32.mxu0 0.0
  %688 = vmatmul.mubr.f32.gmra.mrb[0].mxu0 %v522
  %v689 = vpop.f32.mrb[0].mxu0
  %v690 = vadd.f32 %v337, %v689
  %v691 = vpop.f32.mrb[0].mxu0
  %v692 = vadd.f32 %v339, %v691
  %693 = vmatprep.mubr.f32.mxu0 0.0
  %694 = vmatmul.mubr.f32.gmra.mrb[0].mxu0 %v525
  %v695 = vpop.f32.mrb[0].mxu0
  %v696 = vadd.f32 %v343, %v695
  %v697 = vpop.f32.mrb[0].mxu0
  %v698 = vadd.f32 %v345, %v697
  %699 = vmatprep.mubr.f32.mxu0 0.0
  %700 = vmatmul.mubr.f32.gmra.mrb[0].mxu0 %v528
  %v701 = vpop.f32.mrb[0].mxu0
  %v702 = vadd.f32 %v349, %v701
  %v703 = vpop.f32.mrb[0].mxu0
  %v704 = vadd.f32 %v351, %v703
  %705 = vmatprep.mubr.f32.mxu0 0.0
  %706 = vmatmul.mubr.f32.gmra.mrb[0].mxu0 %v531
  %v707 = vpop.f32.mrb[0].mxu0
  %v708 = vadd.f32 %v355, %v707
  %v709 = vpop.f32.mrb[0].mxu0
  %v710 = vadd.f32 %v357, %v709
  %711 = vmatprep.mubr.f32.mxu0 0.0
  %712 = vmatmul.mubr.f32.gmra.mrb[0].mxu0 %v534
  %v713 = vpop.f32.mrb[0].mxu0
  %v714 = vadd.f32 %v361, %v713
  %v715 = vpop.f32.mrb[0].mxu0
  %v716 = vadd.f32 %v363, %v715
  %717 = vmatprep.mubr.f32.mxu0 0.0
  %718 = vmatmul.mubr.f32.gmra.mrb[0].mxu0 %v537
  %v719 = vpop.f32.mrb[0].mxu0
  %v720 = vadd.f32 %v367, %v719
  %v721 = vpop.f32.mrb[0].mxu0
  %v722 = vadd.f32 %v369, %v721
  %723 = vmatprep.mubr.f32.mxu0 0.0
  %724 = vmatmul.mubr.f32.gmra.mrb[0].mxu0 %v540
  %v725 = vpop.f32.mrb[0].mxu0
  %v726 = vadd.f32 %v373, %v725
  %v727 = vpop.f32.mrb[0].mxu0
  %v728 = vadd.f32 %v375, %v727
  %729 = vmatprep.mubr.f32.mxu0 0.0
  %730 = vmatmul.mubr.f32.gmra.mrb[0].mxu0 %v543
  %v731 = vpop.f32.mrb[0].mxu0
  %v732 = vadd.f32 %v379, %v731
  %v733 = vpop.f32.mrb[0].mxu0
  %v734 = vadd.f32 %v381, %v733
  %735 = vmatprep.mubr.f32.mxu0 0.0
  %736 = vmatmul.mubr.f32.gmra.mrb[0].mxu0 %v546
  %v737 = vpop.f32.mrb[0].mxu0
  %v738 = vadd.f32 %v385, %v737
  %v739 = vpop.f32.mrb[0].mxu0
  %v740 = vadd.f32 %v387, %v739
  %741 = vmatprep.mubr.f32.mxu0 0.0
  %742 = vmatmul.mubr.f32.gmra.mrb[0].mxu0 %v549
  %v743 = vpop.f32.mrb[0].mxu0
  %v744 = vadd.f32 %v391, %v743
  %v745 = vpop.f32.mrb[0].mxu0
  %v746 = vadd.f32 %v393, %v745
  %747 = vmatprep.mubr.f32.mxu0 0.0
  %748 = vmatmul.mubr.f32.gmra.mrb[0].mxu0 %v552
  %v749 = vpop.f32.mrb[0].mxu0
  %v750 = vadd.f32 %v397, %v749
  %v751 = vpop.f32.mrb[0].mxu0
  %v752 = vadd.f32 %v399, %v751
  %753 = vmatprep.mubr.f32.mxu0 0.0
  %754 = vmatmul.mubr.f32.gmra.mrb[0].mxu0 %v555
  %v755 = vpop.f32.mrb[0].mxu0
  %v756 = vadd.f32 %v403, %v755
  %v757 = vpop.f32.mrb[0].mxu0
  %v758 = vadd.f32 %v405, %v757
  %759 = vmatprep.mubr.f32.mxu0 0.0
  %760 = vmatmul.mubr.f32.gmra.mrb[0].mxu0 %v558
  %v761 = vpop.f32.mrb[0].mxu0
  %v762 = vadd.f32 %v409, %v761
  %v763 = vpop.f32.mrb[0].mxu0
  %v764 = vadd.f32 %v411, %v763
  %765 = vmatprep.mubr.f32.mxu0 0.0
  %766 = vmatmul.mubr.f32.gmra.mrb[0].mxu0 %v561
  %v767 = vpop.f32.mrb[0].mxu0
  %v768 = vadd.f32 %v415, %v767
  %v769 = vpop.f32.mrb[0].mxu0
  %v770 = vadd.f32 %v417, %v769
  %771 = vmatprep.mubr.f32.mxu0 0.0
  %772 = vmatmul.mubr.f32.gmra.mrb[0].mxu0 %v564
  %v773 = vpop.f32.mrb[0].mxu0
  %v774 = vadd.f32 %v421, %v773
  %v775 = vpop.f32.mrb[0].mxu0
  %v776 = vadd.f32 %v423, %v775
  %777 = vmatprep.mubr.f32.mxu0 0.0
  %778 = vmatmul.mubr.f32.gmra.mrb[0].mxu0 %v567
  %v779 = vpop.f32.mrb[0].mxu0
  %v780 = vadd.f32 %v427, %v779
  %v781 = vpop.f32.mrb[0].mxu0
  %v782 = vadd.f32 %v429, %v781
  %783 = vmatprep.mubr.f32.mxu0 0.0
  %784 = vmatmul.mubr.f32.gmra.mrb[0].mxu0 %v570
  %v785 = vpop.f32.mrb[0].mxu0
  %v786 = vadd.f32 %v433, %v785
  %v787 = vpop.f32.mrb[0].mxu0
  %v788 = vadd.f32 %v435, %v787
  %789 = vmatprep.mubr.f32.mxu0 0.0
  %790 = vmatmul.mubr.f32.gmra.mrb[0].mxu0 %v573
  %v791 = vpop.f32.mrb[0].mxu0
  %v792 = vadd.f32 %v439, %v791
  %v793 = vpop.f32.mrb[0].mxu0
  %v794 = vadd.f32 %v441, %v793
  %795 = vmatprep.mubr.f32.mxu0 0.0
  %796 = vmatmul.mubr.f32.gmra.mrb[0].mxu0 %v576
  %v797 = vpop.f32.mrb[0].mxu0
  %v798 = vadd.f32 %v445, %v797
  %v799 = vpop.f32.mrb[0].mxu0
  %v800 = vadd.f32 %v447, %v799
  %801 = vmatprep.mubr.f32.mxu0 0.0
  %802 = vmatmul.mubr.f32.gmra.mrb[0].mxu0 %v579
  %v803 = vpop.f32.mrb[0].mxu0
  %v804 = vadd.f32 %v451, %v803
  %v805 = vpop.f32.mrb[0].mxu0
  %v806 = vadd.f32 %v453, %v805
  %807 = vmatprep.mubr.f32.mxu0 0.0
  %808 = vmatmul.mubr.f32.gmra.mrb[0].mxu0 %v582
  %v809 = vpop.f32.mrb[0].mxu0
  %v810 = vadd.f32 %v457, %v809
  %v811 = vpop.f32.mrb[0].mxu0
  %v812 = vadd.f32 %v459, %v811
  %813 = vmatprep.mubr.f32.mxu0 0.0
  %814 = vmatmul.mubr.f32.gmra.mrb[0].mxu0 %v585
  %v815 = vpop.f32.mrb[0].mxu0
  %v816 = vadd.f32 %v463, %v815
  %v817 = vpop.f32.mrb[0].mxu0
  %v818 = vadd.f32 %v465, %v817
  %819 = vmatprep.mubr.f32.mxu0 0.0
  %820 = vmatmul.mubr.f32.gmra.mrb[0].mxu0 %v588
  %v821 = vpop.f32.mrb[0].mxu0
  %v822 = vadd.f32 %v469, %v821
  %v823 = vpop.f32.mrb[0].mxu0
  %v824 = vadd.f32 %v471, %v823
  %825 = vmatprep.mubr.f32.mxu0 0.0
  %826 = vmatmul.mubr.f32.gmra.mrb[0].mxu0 %v591
  %v827 = vpop.f32.mrb[0].mxu0
  %v828 = vadd.f32 %v475, %v827
  %v829 = vpop.f32.mrb[0].mxu0
  %v830 = vadd.f32 %v477, %v829
  %831 = vmatprep.mubr.f32.mxu0 0.0
  %832 = vmatmul.mubr.f32.gmra.mrb[0].mxu0 %v594
  %v833 = vpop.f32.mrb[0].mxu0
  %v834 = vadd.f32 %v481, %v833
  %v835 = vpop.f32.mrb[0].mxu0
  %v836 = vadd.f32 %v483, %v835
  %837 = vmatprep.mubr.f32.mxu0 0.0
  %838 = vmatmul.mubr.f32.gmra.mrb[0].mxu0 %v597
  %v839 = vpop.f32.mrb[0].mxu0
  %v840 = vadd.f32 %v487, %v839
  %v841 = vpop.f32.mrb[0].mxu0
  %v842 = vadd.f32 %v489, %v841
  %843 = vmatprep.mubr.f32.mxu0 0.0
  %844 = vmatmul.mubr.f32.gmra.mrb[0].mxu0 %v600
  %v845 = vpop.f32.mrb[0].mxu0
  %v846 = vadd.f32 %v493, %v845
  %v847 = vpop.f32.mrb[0].mxu0
  %v848 = vadd.f32 %v495, %v847
  %849 = vmatprep.mubr.f32.mxu0 0.0
  %850 = vmatmul.mubr.f32.gmra.mrb[0].mxu0 %v603
  %v851 = vpop.f32.mrb[0].mxu0
  %v852 = vadd.f32 %v499, %v851
  %v853 = vpop.f32.mrb[0].mxu0
  %v854 = vadd.f32 %v501, %v853
  %855 = vmatprep.mubr.f32.mxu0 0.0
  %856 = vmatmul.mubr.f32.gmra.mrb[0].mxu0 %v606
  %v857 = vpop.f32.mrb[0].mxu0
  %v858 = vadd.f32 %v505, %v857
  %v859 = vpop.f32.mrb[0].mxu0
  %v860 = vadd.f32 %v507, %v859
  %861 = vmatprep.mubr.f32.mxu0 0.0
  %862 = vmatmul.mubr.f32.gmra.mrb[0].mxu0 %v609
  %v863 = vpop.f32.mrb[0].mxu0
  %v864 = vadd.f32 %v511, %v863
  %v865 = vpop.f32.mrb[0].mxu0
  %v866 = vadd.f32 %v513, %v865
  %867 = vdwg.mxu0
  %s868 = scalar_lea.vmem %s1, 512
  %v869 = vld [vmem:[%s868] sm:$0xff]
  %v870 = vld [vmem:[%s868 + $0x8] sm:$0xff]
  %v871 = vld [vmem:[%s868 + $0x10] sm:$0xff]
  %v872 = vld [vmem:[%s868 + $0x18] sm:$0xff]
  %v873 = vld [vmem:[%s868 + $0x20] sm:$0xff]
  %v874 = vld [vmem:[%s868 + $0x28] sm:$0xff]
  %v875 = vld [vmem:[%s868 + $0x30] sm:$0xff]
  %v876 = vld [vmem:[%s868 + $0x38] sm:$0xff]
  %v877 = vld [vmem:[%s868 + $0x40] sm:$0xff]
  %v878 = vld [vmem:[%s868 + $0x48] sm:$0xff]
  %v879 = vld [vmem:[%s868 + $0x50] sm:$0xff]
  %v880 = vld [vmem:[%s868 + $0x58] sm:$0xff]
  %v881 = vld [vmem:[%s868 + $0x60] sm:$0xff]
  %v882 = vld [vmem:[%s868 + $0x68] sm:$0xff]
  %v883 = vld [vmem:[%s868 + $0x70] sm:$0xff]
  %v884 = vld [vmem:[%s868 + $0x78] sm:$0xff]
  %v885 = vld [vmem:[%s868 + $0x80] sm:$0xff]
  %v886 = vld [vmem:[%s868 + $0x88] sm:$0xff]
  %v887 = vld [vmem:[%s868 + $0x90] sm:$0xff]
  %v888 = vld [vmem:[%s868 + $0x98] sm:$0xff]
  %v889 = vld [vmem:[%s868 + $0xa0] sm:$0xff]
  %v890 = vld [vmem:[%s868 + $0xa8] sm:$0xff]
  %v891 = vld [vmem:[%s868 + $0xb0] sm:$0xff]
  %v892 = vld [vmem:[%s868 + $0xb8] sm:$0xff]
  %v893 = vld [vmem:[%s868 + $0xc0] sm:$0xff]
  %v894 = vld [vmem:[%s868 + $0xc8] sm:$0xff]
  %v895 = vld [vmem:[%s868 + $0xd0] sm:$0xff]
  %v896 = vld [vmem:[%s868 + $0xd8] sm:$0xff]
  %v897 = vld [vmem:[%s868 + $0xe0] sm:$0xff]
  %v898 = vld [vmem:[%s868 + $0xe8] sm:$0xff]
  %v899 = vld [vmem:[%s868 + $0xf0] sm:$0xff]
  %v900 = vld [vmem:[%s868 + $0xf8] sm:$0xff]
  %901 = vrot.lane.b32.xlu0 %v51, 126
  %v902 = vpop.permute.xlu0 %901
  %903 = vrot.lane.b32.xlu0 %v52, 126
  %v904 = vpop.permute.xlu0 %903
  %905 = vrot.lane.b32.xlu0 %v53, 126
  %v906 = vpop.permute.xlu0 %905
  %907 = vrot.lane.b32.xlu0 %v54, 126
  %v908 = vpop.permute.xlu0 %907
  %909 = vrot.lane.b32.xlu0 %v55, 126
  %v910 = vpop.permute.xlu0 %909
  %911 = vrot.lane.b32.xlu0 %v56, 126
  %v912 = vpop.permute.xlu0 %911
  %913 = vrot.lane.b32.xlu0 %v57, 126
  %v914 = vpop.permute.xlu0 %913
  %915 = vrot.lane.b32.xlu0 %v58, 126
  %v916 = vpop.permute.xlu0 %915
  %vm917 = vcmask 1031168
  %v918 = vsel %vm917, %v902, %v904
  %v919 = vsel %vm917, %v906, %v908
  %v920 = vsel %vm917, %v910, %v912
  %v921 = vsel %vm917, %v914, %v916
  %v931 = vsel %vm161, %v869, 0
  %v934 = vsel %vm161, %v870, 0
  %v937 = vsel %vm161, %v871, 0
  %v940 = vsel %vm161, %v872, 0
  %v943 = vsel %vm161, %v873, 0
  %v946 = vsel %vm161, %v874, 0
  %v949 = vsel %vm161, %v875, 0
  %v952 = vsel %vm161, %v876, 0
  %v955 = vsel %vm161, %v877, 0
  %v958 = vsel %vm161, %v878, 0
  %v961 = vsel %vm161, %v879, 0
  %v964 = vsel %vm161, %v880, 0
  %v967 = vsel %vm161, %v881, 0
  %v970 = vsel %vm161, %v882, 0
  %v973 = vsel %vm161, %v883, 0
  %v976 = vsel %vm161, %v884, 0
  %v979 = vsel %vm161, %v885, 0
  %v982 = vsel %vm161, %v886, 0
  %v985 = vsel %vm161, %v887, 0
  %v988 = vsel %vm161, %v888, 0
  %v991 = vsel %vm161, %v889, 0
  %v994 = vsel %vm161, %v890, 0
  %v997 = vsel %vm161, %v891, 0
  %v1000 = vsel %vm161, %v892, 0
  %v1003 = vsel %vm161, %v893, 0
  %v1006 = vsel %vm161, %v894, 0
  %v1009 = vsel %vm161, %v895, 0
  %v1012 = vsel %vm161, %v896, 0
  %v1015 = vsel %vm161, %v897, 0
  %v1018 = vsel %vm161, %v898, 0
  %v1021 = vsel %vm161, %v899, 0
  %v1024 = vsel %vm161, %v900, 0
  %1026 = vmatprep.subr.mxu0 %v904
  %1027 = vmatpush1.msra.mxu0 %v918
  %1028 = vmatprep.subr.mxu0 %v908
  %1029 = vmatpush1.msra.mxu0 %v919
  %1030 = vmatprep.subr.mxu0 %v912
  %1031 = vmatpush1.msra.mxu0 %v920
  %1032 = vmatprep.subr.mxu0 %v916
  %1033 = vmatpush1.msra.mxu0 %v921
  %1034 = vmatprep.subr.mxu0 0.0
  %1035 = vmatpush1.msra.mxu0 0.0
  %1036 = vmatprep.subr.mxu0 0.0
  %1037 = vmatpush1.msra.mxu0 0.0
  %1038 = vmatprep.subr.mxu0 0.0
  %1039 = vmatpush1.msra.mxu0 0.0
  %1040 = vmatprep.subr.mxu0 0.0
  %1041 = vmatpush1.msra.mxu0 0.0
  %1042 = vmatprep.subr.mxu0 0.0
  %1043 = vmatpush1.msra.mxu0 0.0
  %1044 = vmatprep.subr.mxu0 0.0
  %1045 = vmatpush1.msra.mxu0 0.0
  %1046 = vmatprep.subr.mxu0 0.0
  %1047 = vmatpush1.msra.mxu0 0.0
  %1048 = vmatprep.subr.mxu0 0.0
  %1049 = vmatpush1.msra.mxu0 0.0
  %1050 = vmatprep.subr.mxu0 0.0
  %1051 = vmatpush1.msra.mxu0 0.0
  %1052 = vmatprep.subr.mxu0 0.0
  %1053 = vmatpush1.msra.mxu0 0.0
  %1054 = vmatprep.subr.mxu0 0.0
  %1055 = vmatpush1.msra.mxu0 0.0
  %1056 = vmatprep.subr.mxu0 0.0
  %1057 = vmatpush1.msra.mxu0 0.0
  %1058 = vmatprep.subr.mxu0 0.0
  %1059 = vmatpush1.msra.mxu0 0.0
  %1060 = vmatprep.subr.mxu0 0.0
  %1061 = vmatpush1.msra.mxu0 0.0
  %1062 = vmatprep.subr.mxu0 0.0
  %1063 = vmatpush1.msra.mxu0 0.0
  %1064 = vmatprep.subr.mxu0 0.0
  %1065 = vmatpush1.msra.mxu0 0.0
  %1066 = vmatprep.subr.mxu0 0.0
  %1067 = vmatpush1.msra.mxu0 0.0
  %1068 = vmatprep.subr.mxu0 0.0
  %1069 = vmatpush1.msra.mxu0 0.0
  %1070 = vmatprep.subr.mxu0 0.0
  %1071 = vmatpush1.msra.mxu0 0.0
  %1072 = vmatprep.subr.mxu0 0.0
  %1073 = vmatpush1.msra.mxu0 0.0
  %1074 = vmatprep.subr.mxu0 0.0
  %1075 = vmatpush1.msra.mxu0 0.0
  %1076 = vmatprep.subr.mxu0 0.0
  %1077 = vmatpush1.msra.mxu0 0.0
  %1078 = vmatprep.subr.mxu0 0.0
  %1079 = vmatpush1.msra.mxu0 0.0
  %1080 = vmatprep.subr.mxu0 0.0
  %1081 = vmatpush1.msra.mxu0 0.0
  %1082 = vmatprep.subr.mxu0 0.0
  %1083 = vmatpush1.msra.mxu0 0.0
  %1084 = vmatprep.subr.mxu0 0.0
  %1085 = vmatpush1.msra.mxu0 0.0
  %1086 = vmatprep.subr.mxu0 0.0
  %1087 = vmatpush1.msra.mxu0 0.0
  %1088 = vmatprep.subr.mxu0 0.0
  %1089 = vmatpush1.msra.mxu0 0.0
  %1090 = vmatprep.mubr.f32.mxu0 0.0
  %1091 = vmatmul.mubr.f32.gmra.mrb[0].mxu0 %v931
  %v1092 = vpop.f32.mrb[0].mxu0
  %v1093 = vadd.f32 0.0, %v1092
  %v1094 = vpop.f32.mrb[0].mxu0
  %v1095 = vadd.f32 0.0, %v1094
  %1096 = vmatprep.mubr.f32.mxu0 0.0
  %1097 = vmatmul.mubr.f32.gmra.mrb[0].mxu0 %v934
  %v1098 = vpop.f32.mrb[0].mxu0
  %v1099 = vadd.f32 0.0, %v1098
  %v1100 = vpop.f32.mrb[0].mxu0
  %v1101 = vadd.f32 0.0, %v1100
  %1102 = vmatprep.mubr.f32.mxu0 0.0
  %1103 = vmatmul.mubr.f32.gmra.mrb[0].mxu0 %v937
  %v1104 = vpop.f32.mrb[0].mxu0
  %v1105 = vadd.f32 0.0, %v1104
  %v1106 = vpop.f32.mrb[0].mxu0
  %v1107 = vadd.f32 0.0, %v1106
  %1108 = vmatprep.mubr.f32.mxu0 0.0
  %1109 = vmatmul.mubr.f32.gmra.mrb[0].mxu0 %v940
  %v1110 = vpop.f32.mrb[0].mxu0
  %v1111 = vadd.f32 0.0, %v1110
  %v1112 = vpop.f32.mrb[0].mxu0
  %v1113 = vadd.f32 0.0, %v1112
  %1114 = vmatprep.mubr.f32.mxu0 0.0
  %1115 = vmatmul.mubr.f32.gmra.mrb[0].mxu0 %v943
  %v1116 = vpop.f32.mrb[0].mxu0
  %v1117 = vadd.f32 0.0, %v1116
  %v1118 = vpop.f32.mrb[0].mxu0
  %v1119 = vadd.f32 0.0, %v1118
  %1120 = vmatprep.mubr.f32.mxu0 0.0
  %1121 = vmatmul.mubr.f32.gmra.mrb[0].mxu0 %v946
  %v1122 = vpop.f32.mrb[0].mxu0
  %v1123 = vadd.f32 0.0, %v1122
  %v1124 = vpop.f32.mrb[0].mxu0
  %v1125 = vadd.f32 0.0, %v1124
  %1126 = vmatprep.mubr.f32.mxu0 0.0
  %1127 = vmatmul.mubr.f32.gmra.mrb[0].mxu0 %v949
  %v1128 = vpop.f32.mrb[0].mxu0
  %v1129 = vadd.f32 0.0, %v1128
  %v1130 = vpop.f32.mrb[0].mxu0
  %v1131 = vadd.f32 0.0, %v1130
  %1132 = vmatprep.mubr.f32.mxu0 0.0
  %1133 = vmatmul.mubr.f32.gmra.mrb[0].mxu0 %v952
  %v1134 = vpop.f32.mrb[0].mxu0
  %v1135 = vadd.f32 0.0, %v1134
  %v1136 = vpop.f32.mrb[0].mxu0
  %v1137 = vadd.f32 0.0, %v1136
  %1138 = vmatprep.mubr.f32.mxu0 0.0
  %1139 = vmatmul.mubr.f32.gmra.mrb[0].mxu0 %v955
  %v1140 = vpop.f32.mrb[0].mxu0
  %v1141 = vadd.f32 0.0, %v1140
  %v1142 = vpop.f32.mrb[0].mxu0
  %v1143 = vadd.f32 0.0, %v1142
  %1144 = vmatprep.mubr.f32.mxu0 0.0
  %1145 = vmatmul.mubr.f32.gmra.mrb[0].mxu0 %v958
  %v1146 = vpop.f32.mrb[0].mxu0
  %v1147 = vadd.f32 0.0, %v1146
  %v1148 = vpop.f32.mrb[0].mxu0
  %v1149 = vadd.f32 0.0, %v1148
  %1150 = vmatprep.mubr.f32.mxu0 0.0
  %1151 = vmatmul.mubr.f32.gmra.mrb[0].mxu0 %v961
  %v1152 = vpop.f32.mrb[0].mxu0
  %v1153 = vadd.f32 0.0, %v1152
  %v1154 = vpop.f32.mrb[0].mxu0
  %v1155 = vadd.f32 0.0, %v1154
  %1156 = vmatprep.mubr.f32.mxu0 0.0
  %1157 = vmatmul.mubr.f32.gmra.mrb[0].mxu0 %v964
  %v1158 = vpop.f32.mrb[0].mxu0
  %v1159 = vadd.f32 0.0, %v1158
  %v1160 = vpop.f32.mrb[0].mxu0
  %v1161 = vadd.f32 0.0, %v1160
  %1162 = vmatprep.mubr.f32.mxu0 0.0
  %1163 = vmatmul.mubr.f32.gmra.mrb[0].mxu0 %v967
  %v1164 = vpop.f32.mrb[0].mxu0
  %v1165 = vadd.f32 0.0, %v1164
  %v1166 = vpop.f32.mrb[0].mxu0
  %v1167 = vadd.f32 0.0, %v1166
  %1168 = vmatprep.mubr.f32.mxu0 0.0
  %1169 = vmatmul.mubr.f32.gmra.mrb[0].mxu0 %v970
  %v1170 = vpop.f32.mrb[0].mxu0
  %v1171 = vadd.f32 0.0, %v1170
  %v1172 = vpop.f32.mrb[0].mxu0
  %v1173 = vadd.f32 0.0, %v1172
  %1174 = vmatprep.mubr.f32.mxu0 0.0
  %1175 = vmatmul.mubr.f32.gmra.mrb[0].mxu0 %v973
  %v1176 = vpop.f32.mrb[0].mxu0
  %v1177 = vadd.f32 0.0, %v1176
  %v1178 = vpop.f32.mrb[0].mxu0
  %v1179 = vadd.f32 0.0, %v1178
  %1180 = vmatprep.mubr.f32.mxu0 0.0
  %1181 = vmatmul.mubr.f32.gmra.mrb[0].mxu0 %v976
  %v1182 = vpop.f32.mrb[0].mxu0
  %v1183 = vadd.f32 0.0, %v1182
  %v1184 = vpop.f32.mrb[0].mxu0
  %v1185 = vadd.f32 0.0, %v1184
  %1186 = vmatprep.mubr.f32.mxu0 0.0
  %1187 = vmatmul.mubr.f32.gmra.mrb[0].mxu0 %v979
  %v1188 = vpop.f32.mrb[0].mxu0
  %v1189 = vadd.f32 0.0, %v1188
  %v1190 = vpop.f32.mrb[0].mxu0
  %v1191 = vadd.f32 0.0, %v1190
  %1192 = vmatprep.mubr.f32.mxu0 0.0
  %1193 = vmatmul.mubr.f32.gmra.mrb[0].mxu0 %v982
  %v1194 = vpop.f32.mrb[0].mxu0
  %v1195 = vadd.f32 0.0, %v1194
  %v1196 = vpop.f32.mrb[0].mxu0
  %v1197 = vadd.f32 0.0, %v1196
  %1198 = vmatprep.mubr.f32.mxu0 0.0
  %1199 = vmatmul.mubr.f32.gmra.mrb[0].mxu0 %v985
  %v1200 = vpop.f32.mrb[0].mxu0
  %v1201 = vadd.f32 0.0, %v1200
  %v1202 = vpop.f32.mrb[0].mxu0
  %v1203 = vadd.f32 0.0, %v1202
  %1204 = vmatprep.mubr.f32.mxu0 0.0
  %1205 = vmatmul.mubr.f32.gmra.mrb[0].mxu0 %v988
  %v1206 = vpop.f32.mrb[0].mxu0
  %v1207 = vadd.f32 0.0, %v1206
  %v1208 = vpop.f32.mrb[0].mxu0
  %v1209 = vadd.f32 0.0, %v1208
  %1210 = vmatprep.mubr.f32.mxu0 0.0
  %1211 = vmatmul.mubr.f32.gmra.mrb[0].mxu0 %v991
  %v1212 = vpop.f32.mrb[0].mxu0
  %v1213 = vadd.f32 0.0, %v1212
  %v1214 = vpop.f32.mrb[0].mxu0
  %v1215 = vadd.f32 0.0, %v1214
  %1216 = vmatprep.mubr.f32.mxu0 0.0
  %1217 = vmatmul.mubr.f32.gmra.mrb[0].mxu0 %v994
  %v1218 = vpop.f32.mrb[0].mxu0
  %v1219 = vadd.f32 0.0, %v1218
  %v1220 = vpop.f32.mrb[0].mxu0
  %v1221 = vadd.f32 0.0, %v1220
  %1222 = vmatprep.mubr.f32.mxu0 0.0
  %1223 = vmatmul.mubr.f32.gmra.mrb[0].mxu0 %v997
  %v1224 = vpop.f32.mrb[0].mxu0
  %v1225 = vadd.f32 0.0, %v1224
  %v1226 = vpop.f32.mrb[0].mxu0
  %v1227 = vadd.f32 0.0, %v1226
  %1228 = vmatprep.mubr.f32.mxu0 0.0
  %1229 = vmatmul.mubr.f32.gmra.mrb[0].mxu0 %v1000
  %v1230 = vpop.f32.mrb[0].mxu0
  %v1231 = vadd.f32 0.0, %v1230
  %v1232 = vpop.f32.mrb[0].mxu0
  %v1233 = vadd.f32 0.0, %v1232
  %1234 = vmatprep.mubr.f32.mxu0 0.0
  %1235 = vmatmul.mubr.f32.gmra.mrb[0].mxu0 %v1003
  %v1236 = vpop.f32.mrb[0].mxu0
  %v1237 = vadd.f32 0.0, %v1236
  %v1238 = vpop.f32.mrb[0].mxu0
  %v1239 = vadd.f32 0.0, %v1238
  %1240 = vmatprep.mubr.f32.mxu0 0.0
  %1241 = vmatmul.mubr.f32.gmra.mrb[0].mxu0 %v1006
  %v1242 = vpop.f32.mrb[0].mxu0
  %v1243 = vadd.f32 0.0, %v1242
  %v1244 = vpop.f32.mrb[0].mxu0
  %v1245 = vadd.f32 0.0, %v1244
  %1246 = vmatprep.mubr.f32.mxu0 0.0
  %1247 = vmatmul.mubr.f32.gmra.mrb[0].mxu0 %v1009
  %v1248 = vpop.f32.mrb[0].mxu0
  %v1249 = vadd.f32 0.0, %v1248
  %v1250 = vpop.f32.mrb[0].mxu0
  %v1251 = vadd.f32 0.0, %v1250
  %1252 = vmatprep.mubr.f32.mxu0 0.0
  %1253 = vmatmul.mubr.f32.gmra.mrb[0].mxu0 %v1012
  %v1254 = vpop.f32.mrb[0].mxu0
  %v1255 = vadd.f32 0.0, %v1254
  %v1256 = vpop.f32.mrb[0].mxu0
  %v1257 = vadd.f32 0.0, %v1256
  %1258 = vmatprep.mubr.f32.mxu0 0.0
  %1259 = vmatmul.mubr.f32.gmra.mrb[0].mxu0 %v1015
  %v1260 = vpop.f32.mrb[0].mxu0
  %v1261 = vadd.f32 0.0, %v1260
  %v1262 = vpop.f32.mrb[0].mxu0
  %v1263 = vadd.f32 0.0, %v1262
  %1264 = vmatprep.mubr.f32.mxu0 0.0
  %1265 = vmatmul.mubr.f32.gmra.mrb[0].mxu0 %v1018
  %v1266 = vpop.f32.mrb[0].mxu0
  %v1267 = vadd.f32 0.0, %v1266
  %v1268 = vpop.f32.mrb[0].mxu0
  %v1269 = vadd.f32 0.0, %v1268
  %1270 = vmatprep.mubr.f32.mxu0 0.0
  %1271 = vmatmul.mubr.f32.gmra.mrb[0].mxu0 %v1021
  %v1272 = vpop.f32.mrb[0].mxu0
  %v1273 = vadd.f32 0.0, %v1272
  %v1274 = vpop.f32.mrb[0].mxu0
  %v1275 = vadd.f32 0.0, %v1274
  %1276 = vmatprep.mubr.f32.mxu0 0.0
  %1277 = vmatmul.mubr.f32.gmra.mrb[0].mxu0 %v1024
  %v1278 = vpop.f32.mrb[0].mxu0
  %v1279 = vadd.f32 0.0, %v1278
  %v1280 = vpop.f32.mrb[0].mxu0
  %v1281 = vadd.f32 0.0, %v1280
  %1282 = vdwg.mxu0
  %v1283 = vadd.f32 %v678, %v1093
  %v1284 = vadd.f32 %v680, %v1095
  %v1285 = vadd.f32 %v684, %v1099
  %v1286 = vadd.f32 %v686, %v1101
  %v1287 = vadd.f32 %v690, %v1105
  %v1288 = vadd.f32 %v692, %v1107
  %v1289 = vadd.f32 %v696, %v1111
  %v1290 = vadd.f32 %v698, %v1113
  %v1291 = vadd.f32 %v702, %v1117
  %v1292 = vadd.f32 %v704, %v1119
  %v1293 = vadd.f32 %v708, %v1123
  %v1294 = vadd.f32 %v710, %v1125
  %v1295 = vadd.f32 %v714, %v1129
  %v1296 = vadd.f32 %v716, %v1131
  %v1297 = vadd.f32 %v720, %v1135
  %v1298 = vadd.f32 %v722, %v1137
  %v1299 = vadd.f32 %v726, %v1141
  %v1300 = vadd.f32 %v728, %v1143
  %v1301 = vadd.f32 %v732, %v1147
  %v1302 = vadd.f32 %v734, %v1149
  %v1303 = vadd.f32 %v738, %v1153
  %v1304 = vadd.f32 %v740, %v1155
  %v1305 = vadd.f32 %v744, %v1159
  %v1306 = vadd.f32 %v746, %v1161
  %v1307 = vadd.f32 %v750, %v1165
  %v1308 = vadd.f32 %v752, %v1167
  %v1309 = vadd.f32 %v756, %v1171
  %v1310 = vadd.f32 %v758, %v1173
  %v1311 = vadd.f32 %v762, %v1177
  %v1312 = vadd.f32 %v764, %v1179
  %v1313 = vadd.f32 %v768, %v1183
  %v1314 = vadd.f32 %v770, %v1185
  %v1315 = vadd.f32 %v774, %v1189
  %v1316 = vadd.f32 %v776, %v1191
  %v1317 = vadd.f32 %v780, %v1195
  %v1318 = vadd.f32 %v782, %v1197
  %v1319 = vadd.f32 %v786, %v1201
  %v1320 = vadd.f32 %v788, %v1203
  %v1321 = vadd.f32 %v792, %v1207
  %v1322 = vadd.f32 %v794, %v1209
  %v1323 = vadd.f32 %v798, %v1213
  %v1324 = vadd.f32 %v800, %v1215
  %v1325 = vadd.f32 %v804, %v1219
  %v1326 = vadd.f32 %v806, %v1221
  %v1327 = vadd.f32 %v810, %v1225
  %v1328 = vadd.f32 %v812, %v1227
  %v1329 = vadd.f32 %v816, %v1231
  %v1330 = vadd.f32 %v818, %v1233
  %v1331 = vadd.f32 %v822, %v1237
  %v1332 = vadd.f32 %v824, %v1239
  %v1333 = vadd.f32 %v828, %v1243
  %v1334 = vadd.f32 %v830, %v1245
  %v1335 = vadd.f32 %v834, %v1249
  %v1336 = vadd.f32 %v836, %v1251
  %v1337 = vadd.f32 %v840, %v1255
  %v1338 = vadd.f32 %v842, %v1257
  %v1339 = vadd.f32 %v846, %v1261
  %v1340 = vadd.f32 %v848, %v1263
  %v1341 = vadd.f32 %v852, %v1267
  %v1342 = vadd.f32 %v854, %v1269
  %v1343 = vadd.f32 %v858, %v1273
  %v1344 = vadd.f32 %v860, %v1275
  %v1345 = vadd.f32 %v864, %v1279
  %v1346 = vadd.f32 %v866, %v1281
  %v1347 = vld [vmem:[%s2] sm:$0xff]
  %v1348 = vld [vmem:[%s2 + $0x8] sm:$0xff]
  %v1349 = vld [vmem:[%s2 + $0x10] sm:$0xff]
  %v1350 = vld [vmem:[%s2 + $0x18] sm:$0xff]
  %v1351 = vld [vmem:[%s2 + $0x20] sm:$0xff]
  %v1352 = vld [vmem:[%s2 + $0x28] sm:$0xff]
  %v1353 = vld [vmem:[%s2 + $0x30] sm:$0xff]
  %v1354 = vld [vmem:[%s2 + $0x38] sm:$0xff]
  %v1355 = vld [vmem:[%s2 + $0x40] sm:$0xff]
  %v1356 = vld [vmem:[%s2 + $0x48] sm:$0xff]
  %v1357 = vld [vmem:[%s2 + $0x50] sm:$0xff]
  %v1358 = vld [vmem:[%s2 + $0x58] sm:$0xff]
  %v1359 = vld [vmem:[%s2 + $0x60] sm:$0xff]
  %v1360 = vld [vmem:[%s2 + $0x68] sm:$0xff]
  %v1361 = vld [vmem:[%s2 + $0x70] sm:$0xff]
  %v1362 = vld [vmem:[%s2 + $0x78] sm:$0xff]
  %v1363 = vld [vmem:[%s2 + $0x80] sm:$0xff]
  %v1364 = vld [vmem:[%s2 + $0x88] sm:$0xff]
  %v1365 = vld [vmem:[%s2 + $0x90] sm:$0xff]
  %v1366 = vld [vmem:[%s2 + $0x98] sm:$0xff]
  %v1367 = vld [vmem:[%s2 + $0xa0] sm:$0xff]
  %v1368 = vld [vmem:[%s2 + $0xa8] sm:$0xff]
  %v1369 = vld [vmem:[%s2 + $0xb0] sm:$0xff]
  %v1370 = vld [vmem:[%s2 + $0xb8] sm:$0xff]
  %v1371 = vld [vmem:[%s2 + $0xc0] sm:$0xff]
  %v1372 = vld [vmem:[%s2 + $0xc8] sm:$0xff]
  %v1373 = vld [vmem:[%s2 + $0xd0] sm:$0xff]
  %v1374 = vld [vmem:[%s2 + $0xd8] sm:$0xff]
  %v1375 = vld [vmem:[%s2 + $0xe0] sm:$0xff]
  %v1376 = vld [vmem:[%s2 + $0xe8] sm:$0xff]
  %v1377 = vld [vmem:[%s2 + $0xf0] sm:$0xff]
  %v1378 = vld [vmem:[%s2 + $0xf8] sm:$0xff]
  %1380 = vset.pattern.permute.xlu0 0
  %1381 = vperm.xlu0 %1380, %v1347
  %v1382 = vpop.permute.xlu0 %1381
  %1385 = vset.pattern.permute.xlu0 0
  %1386 = vperm.xlu0 %1385, %v1348
  %v1387 = vpop.permute.xlu0 %1386
  %1390 = vset.pattern.permute.xlu0 0
  %1391 = vperm.xlu0 %1390, %v1349
  %v1392 = vpop.permute.xlu0 %1391
  %1395 = vset.pattern.permute.xlu0 0
  %1396 = vperm.xlu0 %1395, %v1350
  %v1397 = vpop.permute.xlu0 %1396
  %1400 = vset.pattern.permute.xlu0 0
  %1401 = vperm.xlu0 %1400, %v1351
  %v1402 = vpop.permute.xlu0 %1401
  %1405 = vset.pattern.permute.xlu0 0
  %1406 = vperm.xlu0 %1405, %v1352
  %v1407 = vpop.permute.xlu0 %1406
  %1410 = vset.pattern.permute.xlu0 0
  %1411 = vperm.xlu0 %1410, %v1353
  %v1412 = vpop.permute.xlu0 %1411
  %1415 = vset.pattern.permute.xlu0 0
  %1416 = vperm.xlu0 %1415, %v1354
  %v1417 = vpop.permute.xlu0 %1416
  %1420 = vset.pattern.permute.xlu0 0
  %1421 = vperm.xlu0 %1420, %v1355
  %v1422 = vpop.permute.xlu0 %1421
  %1425 = vset.pattern.permute.xlu0 0
  %1426 = vperm.xlu0 %1425, %v1356
  %v1427 = vpop.permute.xlu0 %1426
  %1430 = vset.pattern.permute.xlu0 0
  %1431 = vperm.xlu0 %1430, %v1357
  %v1432 = vpop.permute.xlu0 %1431
  %1435 = vset.pattern.permute.xlu0 0
  %1436 = vperm.xlu0 %1435, %v1358
  %v1437 = vpop.permute.xlu0 %1436
  %1440 = vset.pattern.permute.xlu0 0
  %1441 = vperm.xlu0 %1440, %v1359
  %v1442 = vpop.permute.xlu0 %1441
  %1445 = vset.pattern.permute.xlu0 0
  %1446 = vperm.xlu0 %1445, %v1360
  %v1447 = vpop.permute.xlu0 %1446
  %1450 = vset.pattern.permute.xlu0 0
  %1451 = vperm.xlu0 %1450, %v1361
  %v1452 = vpop.permute.xlu0 %1451
  %1455 = vset.pattern.permute.xlu0 0
  %1456 = vperm.xlu0 %1455, %v1362
  %v1457 = vpop.permute.xlu0 %1456
  %1460 = vset.pattern.permute.xlu0 0
  %1461 = vperm.xlu0 %1460, %v1363
  %v1462 = vpop.permute.xlu0 %1461
  %1465 = vset.pattern.permute.xlu0 0
  %1466 = vperm.xlu0 %1465, %v1364
  %v1467 = vpop.permute.xlu0 %1466
  %1470 = vset.pattern.permute.xlu0 0
  %1471 = vperm.xlu0 %1470, %v1365
  %v1472 = vpop.permute.xlu0 %1471
  %1475 = vset.pattern.permute.xlu0 0
  %1476 = vperm.xlu0 %1475, %v1366
  %v1477 = vpop.permute.xlu0 %1476
  %1480 = vset.pattern.permute.xlu0 0
  %1481 = vperm.xlu0 %1480, %v1367
  %v1482 = vpop.permute.xlu0 %1481
  %1485 = vset.pattern.permute.xlu0 0
  %1486 = vperm.xlu0 %1485, %v1368
  %v1487 = vpop.permute.xlu0 %1486
  %1490 = vset.pattern.permute.xlu0 0
  %1491 = vperm.xlu0 %1490, %v1369
  %v1492 = vpop.permute.xlu0 %1491
  %1495 = vset.pattern.permute.xlu0 0
  %1496 = vperm.xlu0 %1495, %v1370
  %v1497 = vpop.permute.xlu0 %1496
  %1500 = vset.pattern.permute.xlu0 0
  %1501 = vperm.xlu0 %1500, %v1371
  %v1502 = vpop.permute.xlu0 %1501
  %1505 = vset.pattern.permute.xlu0 0
  %1506 = vperm.xlu0 %1505, %v1372
  %v1507 = vpop.permute.xlu0 %1506
  %1510 = vset.pattern.permute.xlu0 0
  %1511 = vperm.xlu0 %1510, %v1373
  %v1512 = vpop.permute.xlu0 %1511
  %1515 = vset.pattern.permute.xlu0 0
  %1516 = vperm.xlu0 %1515, %v1374
  %v1517 = vpop.permute.xlu0 %1516
  %1520 = vset.pattern.permute.xlu0 0
  %1521 = vperm.xlu0 %1520, %v1375
  %v1522 = vpop.permute.xlu0 %1521
  %1525 = vset.pattern.permute.xlu0 0
  %1526 = vperm.xlu0 %1525, %v1376
  %v1527 = vpop.permute.xlu0 %1526
  %1530 = vset.pattern.permute.xlu0 0
  %1531 = vperm.xlu0 %1530, %v1377
  %v1532 = vpop.permute.xlu0 %1531
  %1535 = vset.pattern.permute.xlu0 0
  %1536 = vperm.xlu0 %1535, %v1378
  %v1537 = vpop.permute.xlu0 %1536
  %v1539 = vadd.f32 %v1283, %v1382
  %v1540 = vadd.f32 %v1284, %v1382
  %v1541 = vadd.f32 %v1285, %v1387
  %v1542 = vadd.f32 %v1286, %v1387
  %v1543 = vadd.f32 %v1287, %v1392
  %v1544 = vadd.f32 %v1288, %v1392
  %v1545 = vadd.f32 %v1289, %v1397
  %v1546 = vadd.f32 %v1290, %v1397
  %v1547 = vadd.f32 %v1291, %v1402
  %v1548 = vadd.f32 %v1292, %v1402
  %v1549 = vadd.f32 %v1293, %v1407
  %v1550 = vadd.f32 %v1294, %v1407
  %v1551 = vadd.f32 %v1295, %v1412
  %v1552 = vadd.f32 %v1296, %v1412
  %v1553 = vadd.f32 %v1297, %v1417
  %v1554 = vadd.f32 %v1298, %v1417
  %v1555 = vadd.f32 %v1299, %v1422
  %v1556 = vadd.f32 %v1300, %v1422
  %v1557 = vadd.f32 %v1301, %v1427
  %v1558 = vadd.f32 %v1302, %v1427
  %v1559 = vadd.f32 %v1303, %v1432
  %v1560 = vadd.f32 %v1304, %v1432
  %v1561 = vadd.f32 %v1305, %v1437
  %v1562 = vadd.f32 %v1306, %v1437
  %v1563 = vadd.f32 %v1307, %v1442
  %v1564 = vadd.f32 %v1308, %v1442
  %v1565 = vadd.f32 %v1309, %v1447
  %v1566 = vadd.f32 %v1310, %v1447
  %v1567 = vadd.f32 %v1311, %v1452
  %v1568 = vadd.f32 %v1312, %v1452
  %v1569 = vadd.f32 %v1313, %v1457
  %v1570 = vadd.f32 %v1314, %v1457
  %v1571 = vadd.f32 %v1315, %v1462
  %v1572 = vadd.f32 %v1316, %v1462
  %v1573 = vadd.f32 %v1317, %v1467
  %v1574 = vadd.f32 %v1318, %v1467
  %v1575 = vadd.f32 %v1319, %v1472
  %v1576 = vadd.f32 %v1320, %v1472
  %v1577 = vadd.f32 %v1321, %v1477
  %v1578 = vadd.f32 %v1322, %v1477
  %v1579 = vadd.f32 %v1323, %v1482
  %v1580 = vadd.f32 %v1324, %v1482
  %v1581 = vadd.f32 %v1325, %v1487
  %v1582 = vadd.f32 %v1326, %v1487
  %v1583 = vadd.f32 %v1327, %v1492
  %v1584 = vadd.f32 %v1328, %v1492
  %v1585 = vadd.f32 %v1329, %v1497
  %v1586 = vadd.f32 %v1330, %v1497
  %v1587 = vadd.f32 %v1331, %v1502
  %v1588 = vadd.f32 %v1332, %v1502
  %v1589 = vadd.f32 %v1333, %v1507
  %v1590 = vadd.f32 %v1334, %v1507
  %v1591 = vadd.f32 %v1335, %v1512
  %v1592 = vadd.f32 %v1336, %v1512
  %v1593 = vadd.f32 %v1337, %v1517
  %v1594 = vadd.f32 %v1338, %v1517
  %v1595 = vadd.f32 %v1339, %v1522
  %v1596 = vadd.f32 %v1340, %v1522
  %v1597 = vadd.f32 %v1341, %v1527
  %v1598 = vadd.f32 %v1342, %v1527
  %v1599 = vadd.f32 %v1343, %v1532
  %v1600 = vadd.f32 %v1344, %v1532
  %v1601 = vadd.f32 %v1345, %v1537
  %v1602 = vadd.f32 %v1346, %v1537
  %v1603 = vadd.f32 %v1539, %v1541
  %v1604 = vadd.f32 %v1603, %v1543
  %v1605 = vadd.f32 %v1604, %v1545
  %v1606 = vadd.f32 %v1605, %v1547
  %v1607 = vadd.f32 %v1606, %v1549
  %v1608 = vadd.f32 %v1607, %v1551
  %v1609 = vadd.f32 %v1608, %v1553
  %v1610 = vadd.f32 %v1609, %v1555
  %v1611 = vadd.f32 %v1610, %v1557
  %v1612 = vadd.f32 %v1611, %v1559
  %v1613 = vadd.f32 %v1612, %v1561
  %v1614 = vadd.f32 %v1613, %v1563
  %v1615 = vadd.f32 %v1614, %v1565
  %v1616 = vadd.f32 %v1615, %v1567
  %v1617 = vadd.f32 %v1616, %v1569
  %v1618 = vadd.f32 %v1617, %v1571
  %v1619 = vadd.f32 %v1618, %v1573
  %v1620 = vadd.f32 %v1619, %v1575
  %v1621 = vadd.f32 %v1620, %v1577
  %v1622 = vadd.f32 %v1621, %v1579
  %v1623 = vadd.f32 %v1622, %v1581
  %v1624 = vadd.f32 %v1623, %v1583
  %v1625 = vadd.f32 %v1624, %v1585
  %v1626 = vadd.f32 %v1625, %v1587
  %v1627 = vadd.f32 %v1626, %v1589
  %v1628 = vadd.f32 %v1627, %v1591
  %v1629 = vadd.f32 %v1628, %v1593
  %v1630 = vadd.f32 %v1629, %v1595
  %v1631 = vadd.f32 %v1630, %v1597
  %v1632 = vadd.f32 %v1631, %v1599
  %v1633 = vadd.f32 %v1632, %v1601
  %v1634 = vrot.slane %v1633, 4
  %v1635 = vadd.f32 %v1633, %v1634
  %v1636 = vrot.slane %v1635, 2
  %v1637 = vadd.f32 %v1635, %v1636
  %v1638 = vrot.slane %v1637, 1
  %v1639 = vadd.f32 %v1637, %v1638
  %vm1640 = vcmask 48128
  %v1641 = vsel %vm1640, %v1540, 0.0
  %v1642 = vsel %vm1640, %v1542, 0.0
  %v1643 = vadd.f32 %v1641, %v1642
  %v1644 = vsel %vm1640, %v1544, 0.0
  %v1645 = vadd.f32 %v1643, %v1644
  %v1646 = vsel %vm1640, %v1546, 0.0
  %v1647 = vadd.f32 %v1645, %v1646
  %v1648 = vsel %vm1640, %v1548, 0.0
  %v1649 = vadd.f32 %v1647, %v1648
  %v1650 = vsel %vm1640, %v1550, 0.0
  %v1651 = vadd.f32 %v1649, %v1650
  %v1652 = vsel %vm1640, %v1552, 0.0
  %v1653 = vadd.f32 %v1651, %v1652
  %v1654 = vsel %vm1640, %v1554, 0.0
  %v1655 = vadd.f32 %v1653, %v1654
  %v1656 = vsel %vm1640, %v1556, 0.0
  %v1657 = vadd.f32 %v1655, %v1656
  %v1658 = vsel %vm1640, %v1558, 0.0
  %v1659 = vadd.f32 %v1657, %v1658
  %v1660 = vsel %vm1640, %v1560, 0.0
  %v1661 = vadd.f32 %v1659, %v1660
  %v1662 = vsel %vm1640, %v1562, 0.0
  %v1663 = vadd.f32 %v1661, %v1662
  %v1664 = vsel %vm1640, %v1564, 0.0
  %v1665 = vadd.f32 %v1663, %v1664
  %v1666 = vsel %vm1640, %v1566, 0.0
  %v1667 = vadd.f32 %v1665, %v1666
  %v1668 = vsel %vm1640, %v1568, 0.0
  %v1669 = vadd.f32 %v1667, %v1668
  %v1670 = vsel %vm1640, %v1570, 0.0
  %v1671 = vadd.f32 %v1669, %v1670
  %v1672 = vsel %vm1640, %v1572, 0.0
  %v1673 = vadd.f32 %v1671, %v1672
  %v1674 = vsel %vm1640, %v1574, 0.0
  %v1675 = vadd.f32 %v1673, %v1674
  %v1676 = vsel %vm1640, %v1576, 0.0
  %v1677 = vadd.f32 %v1675, %v1676
  %v1678 = vsel %vm1640, %v1578, 0.0
  %v1679 = vadd.f32 %v1677, %v1678
  %v1680 = vsel %vm1640, %v1580, 0.0
  %v1681 = vadd.f32 %v1679, %v1680
  %v1682 = vsel %vm1640, %v1582, 0.0
  %v1683 = vadd.f32 %v1681, %v1682
  %v1684 = vsel %vm1640, %v1584, 0.0
  %v1685 = vadd.f32 %v1683, %v1684
  %v1686 = vsel %vm1640, %v1586, 0.0
  %v1687 = vadd.f32 %v1685, %v1686
  %v1688 = vsel %vm1640, %v1588, 0.0
  %v1689 = vadd.f32 %v1687, %v1688
  %v1690 = vsel %vm1640, %v1590, 0.0
  %v1691 = vadd.f32 %v1689, %v1690
  %v1692 = vsel %vm1640, %v1592, 0.0
  %v1693 = vadd.f32 %v1691, %v1692
  %v1694 = vsel %vm1640, %v1594, 0.0
  %v1695 = vadd.f32 %v1693, %v1694
  %v1696 = vsel %vm1640, %v1596, 0.0
  %v1697 = vadd.f32 %v1695, %v1696
  %v1698 = vsel %vm1640, %v1598, 0.0
  %v1699 = vadd.f32 %v1697, %v1698
  %v1700 = vsel %vm1640, %v1600, 0.0
  %v1701 = vadd.f32 %v1699, %v1700
  %v1702 = vsel %vm1640, %v1602, 0.0
  %v1703 = vadd.f32 %v1701, %v1702
  %v1704 = vrot.slane %v1703, 4
  %v1705 = vadd.f32 %v1703, %v1704
  %v1706 = vrot.slane %v1705, 2
  %v1707 = vadd.f32 %v1705, %v1706
  %v1708 = vrot.slane %v1707, 1
  %v1709 = vadd.f32 %v1707, %v1708
  %v1710 = vrcp.pop 256.0
  %v1711 = vmul.f32 %v1639, %v1710
  %v1712 = vmul.f32 %v1709, %v1710
  %v1713 = vsub.f32 %v1539, %v1711
  %v1714 = vsub.f32 %v1540, %v1712
  %v1715 = vsub.f32 %v1541, %v1711
  %v1716 = vsub.f32 %v1542, %v1712
  %v1717 = vsub.f32 %v1543, %v1711
  %v1718 = vsub.f32 %v1544, %v1712
  %v1719 = vsub.f32 %v1545, %v1711
  %v1720 = vsub.f32 %v1546, %v1712
  %v1721 = vsub.f32 %v1547, %v1711
  %v1722 = vsub.f32 %v1548, %v1712
  %v1723 = vsub.f32 %v1549, %v1711
  %v1724 = vsub.f32 %v1550, %v1712
  %v1725 = vsub.f32 %v1551, %v1711
  %v1726 = vsub.f32 %v1552, %v1712
  %v1727 = vsub.f32 %v1553, %v1711
  %v1728 = vsub.f32 %v1554, %v1712
  %v1729 = vsub.f32 %v1555, %v1711
  %v1730 = vsub.f32 %v1556, %v1712
  %v1731 = vsub.f32 %v1557, %v1711
  %v1732 = vsub.f32 %v1558, %v1712
  %v1733 = vsub.f32 %v1559, %v1711
  %v1734 = vsub.f32 %v1560, %v1712
  %v1735 = vsub.f32 %v1561, %v1711
  %v1736 = vsub.f32 %v1562, %v1712
  %v1737 = vsub.f32 %v1563, %v1711
  %v1738 = vsub.f32 %v1564, %v1712
  %v1739 = vsub.f32 %v1565, %v1711
  %v1740 = vsub.f32 %v1566, %v1712
  %v1741 = vsub.f32 %v1567, %v1711
  %v1742 = vsub.f32 %v1568, %v1712
  %v1743 = vsub.f32 %v1569, %v1711
  %v1744 = vsub.f32 %v1570, %v1712
  %v1745 = vsub.f32 %v1571, %v1711
  %v1746 = vsub.f32 %v1572, %v1712
  %v1747 = vsub.f32 %v1573, %v1711
  %v1748 = vsub.f32 %v1574, %v1712
  %v1749 = vsub.f32 %v1575, %v1711
  %v1750 = vsub.f32 %v1576, %v1712
  %v1751 = vsub.f32 %v1577, %v1711
  %v1752 = vsub.f32 %v1578, %v1712
  %v1753 = vsub.f32 %v1579, %v1711
  %v1754 = vsub.f32 %v1580, %v1712
  %v1755 = vsub.f32 %v1581, %v1711
  %v1756 = vsub.f32 %v1582, %v1712
  %v1757 = vsub.f32 %v1583, %v1711
  %v1758 = vsub.f32 %v1584, %v1712
  %v1759 = vsub.f32 %v1585, %v1711
  %v1760 = vsub.f32 %v1586, %v1712
  %v1761 = vsub.f32 %v1587, %v1711
  %v1762 = vsub.f32 %v1588, %v1712
  %v1763 = vsub.f32 %v1589, %v1711
  %v1764 = vsub.f32 %v1590, %v1712
  %v1765 = vsub.f32 %v1591, %v1711
  %v1766 = vsub.f32 %v1592, %v1712
  %v1767 = vsub.f32 %v1593, %v1711
  %v1768 = vsub.f32 %v1594, %v1712
  %v1769 = vsub.f32 %v1595, %v1711
  %v1770 = vsub.f32 %v1596, %v1712
  %v1771 = vsub.f32 %v1597, %v1711
  %v1772 = vsub.f32 %v1598, %v1712
  %v1773 = vsub.f32 %v1599, %v1711
  %v1774 = vsub.f32 %v1600, %v1712
  %v1775 = vsub.f32 %v1601, %v1711
  %v1776 = vsub.f32 %v1602, %v1712
  %v1777 = vmul.f32 %v1713, %v1713
  %v1778 = vmul.f32 %v1714, %v1714
  %v1779 = vmul.f32 %v1715, %v1715
  %v1780 = vmul.f32 %v1716, %v1716
  %v1781 = vmul.f32 %v1717, %v1717
  %v1782 = vmul.f32 %v1718, %v1718
  %v1783 = vmul.f32 %v1719, %v1719
  %v1784 = vmul.f32 %v1720, %v1720
  %v1785 = vmul.f32 %v1721, %v1721
  %v1786 = vmul.f32 %v1722, %v1722
  %v1787 = vmul.f32 %v1723, %v1723
  %v1788 = vmul.f32 %v1724, %v1724
  %v1789 = vmul.f32 %v1725, %v1725
  %v1790 = vmul.f32 %v1726, %v1726
  %v1791 = vmul.f32 %v1727, %v1727
  %v1792 = vmul.f32 %v1728, %v1728
  %v1793 = vmul.f32 %v1729, %v1729
  %v1794 = vmul.f32 %v1730, %v1730
  %v1795 = vmul.f32 %v1731, %v1731
  %v1796 = vmul.f32 %v1732, %v1732
  %v1797 = vmul.f32 %v1733, %v1733
  %v1798 = vmul.f32 %v1734, %v1734
  %v1799 = vmul.f32 %v1735, %v1735
  %v1800 = vmul.f32 %v1736, %v1736
  %v1801 = vmul.f32 %v1737, %v1737
  %v1802 = vmul.f32 %v1738, %v1738
  %v1803 = vmul.f32 %v1739, %v1739
  %v1804 = vmul.f32 %v1740, %v1740
  %v1805 = vmul.f32 %v1741, %v1741
  %v1806 = vmul.f32 %v1742, %v1742
  %v1807 = vmul.f32 %v1743, %v1743
  %v1808 = vmul.f32 %v1744, %v1744
  %v1809 = vmul.f32 %v1745, %v1745
  %v1810 = vmul.f32 %v1746, %v1746
  %v1811 = vmul.f32 %v1747, %v1747
  %v1812 = vmul.f32 %v1748, %v1748
  %v1813 = vmul.f32 %v1749, %v1749
  %v1814 = vmul.f32 %v1750, %v1750
  %v1815 = vmul.f32 %v1751, %v1751
  %v1816 = vmul.f32 %v1752, %v1752
  %v1817 = vmul.f32 %v1753, %v1753
  %v1818 = vmul.f32 %v1754, %v1754
  %v1819 = vmul.f32 %v1755, %v1755
  %v1820 = vmul.f32 %v1756, %v1756
  %v1821 = vmul.f32 %v1757, %v1757
  %v1822 = vmul.f32 %v1758, %v1758
  %v1823 = vmul.f32 %v1759, %v1759
  %v1824 = vmul.f32 %v1760, %v1760
  %v1825 = vmul.f32 %v1761, %v1761
  %v1826 = vmul.f32 %v1762, %v1762
  %v1827 = vmul.f32 %v1763, %v1763
  %v1828 = vmul.f32 %v1764, %v1764
  %v1829 = vmul.f32 %v1765, %v1765
  %v1830 = vmul.f32 %v1766, %v1766
  %v1831 = vmul.f32 %v1767, %v1767
  %v1832 = vmul.f32 %v1768, %v1768
  %v1833 = vmul.f32 %v1769, %v1769
  %v1834 = vmul.f32 %v1770, %v1770
  %v1835 = vmul.f32 %v1771, %v1771
  %v1836 = vmul.f32 %v1772, %v1772
  %v1837 = vmul.f32 %v1773, %v1773
  %v1838 = vmul.f32 %v1774, %v1774
  %v1839 = vmul.f32 %v1775, %v1775
  %v1840 = vmul.f32 %v1776, %v1776
  %v1841 = vadd.f32 %v1777, %v1779
  %v1842 = vadd.f32 %v1841, %v1781
  %v1843 = vadd.f32 %v1842, %v1783
  %v1844 = vadd.f32 %v1843, %v1785
  %v1845 = vadd.f32 %v1844, %v1787
  %v1846 = vadd.f32 %v1845, %v1789
  %v1847 = vadd.f32 %v1846, %v1791
  %v1848 = vadd.f32 %v1847, %v1793
  %v1849 = vadd.f32 %v1848, %v1795
  %v1850 = vadd.f32 %v1849, %v1797
  %v1851 = vadd.f32 %v1850, %v1799
  %v1852 = vadd.f32 %v1851, %v1801
  %v1853 = vadd.f32 %v1852, %v1803
  %v1854 = vadd.f32 %v1853, %v1805
  %v1855 = vadd.f32 %v1854, %v1807
  %v1856 = vadd.f32 %v1855, %v1809
  %v1857 = vadd.f32 %v1856, %v1811
  %v1858 = vadd.f32 %v1857, %v1813
  %v1859 = vadd.f32 %v1858, %v1815
  %v1860 = vadd.f32 %v1859, %v1817
  %v1861 = vadd.f32 %v1860, %v1819
  %v1862 = vadd.f32 %v1861, %v1821
  %v1863 = vadd.f32 %v1862, %v1823
  %v1864 = vadd.f32 %v1863, %v1825
  %v1865 = vadd.f32 %v1864, %v1827
  %v1866 = vadd.f32 %v1865, %v1829
  %v1867 = vadd.f32 %v1866, %v1831
  %v1868 = vadd.f32 %v1867, %v1833
  %v1869 = vadd.f32 %v1868, %v1835
  %v1870 = vadd.f32 %v1869, %v1837
  %v1871 = vadd.f32 %v1870, %v1839
  %v1872 = vrot.slane %v1871, 4
  %v1873 = vadd.f32 %v1871, %v1872
  %v1874 = vrot.slane %v1873, 2
  %v1875 = vadd.f32 %v1873, %v1874
  %v1876 = vrot.slane %v1875, 1
  %v1877 = vadd.f32 %v1875, %v1876
  %v1878 = vsel %vm1640, %v1778, 0.0
  %v1879 = vsel %vm1640, %v1780, 0.0
  %v1880 = vadd.f32 %v1878, %v1879
  %v1881 = vsel %vm1640, %v1782, 0.0
  %v1882 = vadd.f32 %v1880, %v1881
  %v1883 = vsel %vm1640, %v1784, 0.0
  %v1884 = vadd.f32 %v1882, %v1883
  %v1885 = vsel %vm1640, %v1786, 0.0
  %v1886 = vadd.f32 %v1884, %v1885
  %v1887 = vsel %vm1640, %v1788, 0.0
  %v1888 = vadd.f32 %v1886, %v1887
  %v1889 = vsel %vm1640, %v1790, 0.0
  %v1890 = vadd.f32 %v1888, %v1889
  %v1891 = vsel %vm1640, %v1792, 0.0
  %v1892 = vadd.f32 %v1890, %v1891
  %v1893 = vsel %vm1640, %v1794, 0.0
  %v1894 = vadd.f32 %v1892, %v1893
  %v1895 = vsel %vm1640, %v1796, 0.0
  %v1896 = vadd.f32 %v1894, %v1895
  %v1897 = vsel %vm1640, %v1798, 0.0
  %v1898 = vadd.f32 %v1896, %v1897
  %v1899 = vsel %vm1640, %v1800, 0.0
  %v1900 = vadd.f32 %v1898, %v1899
  %v1901 = vsel %vm1640, %v1802, 0.0
  %v1902 = vadd.f32 %v1900, %v1901
  %v1903 = vsel %vm1640, %v1804, 0.0
  %v1904 = vadd.f32 %v1902, %v1903
  %v1905 = vsel %vm1640, %v1806, 0.0
  %v1906 = vadd.f32 %v1904, %v1905
  %v1907 = vsel %vm1640, %v1808, 0.0
  %v1908 = vadd.f32 %v1906, %v1907
  %v1909 = vsel %vm1640, %v1810, 0.0
  %v1910 = vadd.f32 %v1908, %v1909
  %v1911 = vsel %vm1640, %v1812, 0.0
  %v1912 = vadd.f32 %v1910, %v1911
  %v1913 = vsel %vm1640, %v1814, 0.0
  %v1914 = vadd.f32 %v1912, %v1913
  %v1915 = vsel %vm1640, %v1816, 0.0
  %v1916 = vadd.f32 %v1914, %v1915
  %v1917 = vsel %vm1640, %v1818, 0.0
  %v1918 = vadd.f32 %v1916, %v1917
  %v1919 = vsel %vm1640, %v1820, 0.0
  %v1920 = vadd.f32 %v1918, %v1919
  %v1921 = vsel %vm1640, %v1822, 0.0
  %v1922 = vadd.f32 %v1920, %v1921
  %v1923 = vsel %vm1640, %v1824, 0.0
  %v1924 = vadd.f32 %v1922, %v1923
  %v1925 = vsel %vm1640, %v1826, 0.0
  %v1926 = vadd.f32 %v1924, %v1925
  %v1927 = vsel %vm1640, %v1828, 0.0
  %v1928 = vadd.f32 %v1926, %v1927
  %v1929 = vsel %vm1640, %v1830, 0.0
  %v1930 = vadd.f32 %v1928, %v1929
  %v1931 = vsel %vm1640, %v1832, 0.0
  %v1932 = vadd.f32 %v1930, %v1931
  %v1933 = vsel %vm1640, %v1834, 0.0
  %v1934 = vadd.f32 %v1932, %v1933
  %v1935 = vsel %vm1640, %v1836, 0.0
  %v1936 = vadd.f32 %v1934, %v1935
  %v1937 = vsel %vm1640, %v1838, 0.0
  %v1938 = vadd.f32 %v1936, %v1937
  %v1939 = vsel %vm1640, %v1840, 0.0
  %v1940 = vadd.f32 %v1938, %v1939
  %v1941 = vrot.slane %v1940, 4
  %v1942 = vadd.f32 %v1940, %v1941
  %v1943 = vrot.slane %v1942, 2
  %v1944 = vadd.f32 %v1942, %v1943
  %v1945 = vrot.slane %v1944, 1
  %v1946 = vadd.f32 %v1944, %v1945
  %v1947 = vmul.f32 %v1877, %v1710
  %v1948 = vmul.f32 %v1946, %v1710
  %v1949 = vadd.f32 %v1947, 1e-05
  %v1950 = vadd.f32 %v1948, 1e-05
  %v1951 = vrsqrt.pop %v1949
  %v1952 = vrsqrt.pop %v1950
  %v1953 = vmul.f32 %v1713, %v1951
  %v1954 = vmul.f32 %v1714, %v1952
  %v1955 = vmul.f32 %v1715, %v1951
  %v1956 = vmul.f32 %v1716, %v1952
  %v1957 = vmul.f32 %v1717, %v1951
  %v1958 = vmul.f32 %v1718, %v1952
  %v1959 = vmul.f32 %v1719, %v1951
  %v1960 = vmul.f32 %v1720, %v1952
  %v1961 = vmul.f32 %v1721, %v1951
  %v1962 = vmul.f32 %v1722, %v1952
  %v1963 = vmul.f32 %v1723, %v1951
  %v1964 = vmul.f32 %v1724, %v1952
  %v1965 = vmul.f32 %v1725, %v1951
  %v1966 = vmul.f32 %v1726, %v1952
  %v1967 = vmul.f32 %v1727, %v1951
  %v1968 = vmul.f32 %v1728, %v1952
  %v1969 = vmul.f32 %v1729, %v1951
  %v1970 = vmul.f32 %v1730, %v1952
  %v1971 = vmul.f32 %v1731, %v1951
  %v1972 = vmul.f32 %v1732, %v1952
  %v1973 = vmul.f32 %v1733, %v1951
  %v1974 = vmul.f32 %v1734, %v1952
  %v1975 = vmul.f32 %v1735, %v1951
  %v1976 = vmul.f32 %v1736, %v1952
  %v1977 = vmul.f32 %v1737, %v1951
  %v1978 = vmul.f32 %v1738, %v1952
  %v1979 = vmul.f32 %v1739, %v1951
  %v1980 = vmul.f32 %v1740, %v1952
  %v1981 = vmul.f32 %v1741, %v1951
  %v1982 = vmul.f32 %v1742, %v1952
  %v1983 = vmul.f32 %v1743, %v1951
  %v1984 = vmul.f32 %v1744, %v1952
  %v1985 = vmul.f32 %v1745, %v1951
  %v1986 = vmul.f32 %v1746, %v1952
  %v1987 = vmul.f32 %v1747, %v1951
  %v1988 = vmul.f32 %v1748, %v1952
  %v1989 = vmul.f32 %v1749, %v1951
  %v1990 = vmul.f32 %v1750, %v1952
  %v1991 = vmul.f32 %v1751, %v1951
  %v1992 = vmul.f32 %v1752, %v1952
  %v1993 = vmul.f32 %v1753, %v1951
  %v1994 = vmul.f32 %v1754, %v1952
  %v1995 = vmul.f32 %v1755, %v1951
  %v1996 = vmul.f32 %v1756, %v1952
  %v1997 = vmul.f32 %v1757, %v1951
  %v1998 = vmul.f32 %v1758, %v1952
  %v1999 = vmul.f32 %v1759, %v1951
  %v2000 = vmul.f32 %v1760, %v1952
  %v2001 = vmul.f32 %v1761, %v1951
  %v2002 = vmul.f32 %v1762, %v1952
  %v2003 = vmul.f32 %v1763, %v1951
  %v2004 = vmul.f32 %v1764, %v1952
  %v2005 = vmul.f32 %v1765, %v1951
  %v2006 = vmul.f32 %v1766, %v1952
  %v2007 = vmul.f32 %v1767, %v1951
  %v2008 = vmul.f32 %v1768, %v1952
  %v2009 = vmul.f32 %v1769, %v1951
  %v2010 = vmul.f32 %v1770, %v1952
  %v2011 = vmul.f32 %v1771, %v1951
  %v2012 = vmul.f32 %v1772, %v1952
  %v2013 = vmul.f32 %v1773, %v1951
  %v2014 = vmul.f32 %v1774, %v1952
  %v2015 = vmul.f32 %v1775, %v1951
  %v2016 = vmul.f32 %v1776, %v1952
  %v2017 = vld [vmem:[%s3] sm:$0xff]
  %v2018 = vld [vmem:[%s3 + $0x8] sm:$0xff]
  %v2019 = vld [vmem:[%s3 + $0x10] sm:$0xff]
  %v2020 = vld [vmem:[%s3 + $0x18] sm:$0xff]
  %v2021 = vld [vmem:[%s3 + $0x20] sm:$0xff]
  %v2022 = vld [vmem:[%s3 + $0x28] sm:$0xff]
  %v2023 = vld [vmem:[%s3 + $0x30] sm:$0xff]
  %v2024 = vld [vmem:[%s3 + $0x38] sm:$0xff]
  %v2025 = vld [vmem:[%s3 + $0x40] sm:$0xff]
  %v2026 = vld [vmem:[%s3 + $0x48] sm:$0xff]
  %v2027 = vld [vmem:[%s3 + $0x50] sm:$0xff]
  %v2028 = vld [vmem:[%s3 + $0x58] sm:$0xff]
  %v2029 = vld [vmem:[%s3 + $0x60] sm:$0xff]
  %v2030 = vld [vmem:[%s3 + $0x68] sm:$0xff]
  %v2031 = vld [vmem:[%s3 + $0x70] sm:$0xff]
  %v2032 = vld [vmem:[%s3 + $0x78] sm:$0xff]
  %v2033 = vld [vmem:[%s3 + $0x80] sm:$0xff]
  %v2034 = vld [vmem:[%s3 + $0x88] sm:$0xff]
  %v2035 = vld [vmem:[%s3 + $0x90] sm:$0xff]
  %v2036 = vld [vmem:[%s3 + $0x98] sm:$0xff]
  %v2037 = vld [vmem:[%s3 + $0xa0] sm:$0xff]
  %v2038 = vld [vmem:[%s3 + $0xa8] sm:$0xff]
  %v2039 = vld [vmem:[%s3 + $0xb0] sm:$0xff]
  %v2040 = vld [vmem:[%s3 + $0xb8] sm:$0xff]
  %v2041 = vld [vmem:[%s3 + $0xc0] sm:$0xff]
  %v2042 = vld [vmem:[%s3 + $0xc8] sm:$0xff]
  %v2043 = vld [vmem:[%s3 + $0xd0] sm:$0xff]
  %v2044 = vld [vmem:[%s3 + $0xd8] sm:$0xff]
  %v2045 = vld [vmem:[%s3 + $0xe0] sm:$0xff]
  %v2046 = vld [vmem:[%s3 + $0xe8] sm:$0xff]
  %v2047 = vld [vmem:[%s3 + $0xf0] sm:$0xff]
  %v2048 = vld [vmem:[%s3 + $0xf8] sm:$0xff]
  %2050 = vset.pattern.permute.xlu0 0
  %2051 = vperm.xlu0 %2050, %v2017
  %v2052 = vpop.permute.xlu0 %2051
  %2055 = vset.pattern.permute.xlu0 0
  %2056 = vperm.xlu0 %2055, %v2018
  %v2057 = vpop.permute.xlu0 %2056
  %2060 = vset.pattern.permute.xlu0 0
  %2061 = vperm.xlu0 %2060, %v2019
  %v2062 = vpop.permute.xlu0 %2061
  %2065 = vset.pattern.permute.xlu0 0
  %2066 = vperm.xlu0 %2065, %v2020
  %v2067 = vpop.permute.xlu0 %2066
  %2070 = vset.pattern.permute.xlu0 0
  %2071 = vperm.xlu0 %2070, %v2021
  %v2072 = vpop.permute.xlu0 %2071
  %2075 = vset.pattern.permute.xlu0 0
  %2076 = vperm.xlu0 %2075, %v2022
  %v2077 = vpop.permute.xlu0 %2076
  %2080 = vset.pattern.permute.xlu0 0
  %2081 = vperm.xlu0 %2080, %v2023
  %v2082 = vpop.permute.xlu0 %2081
  %2085 = vset.pattern.permute.xlu0 0
  %2086 = vperm.xlu0 %2085, %v2024
  %v2087 = vpop.permute.xlu0 %2086
  %2090 = vset.pattern.permute.xlu0 0
  %2091 = vperm.xlu0 %2090, %v2025
  %v2092 = vpop.permute.xlu0 %2091
  %2095 = vset.pattern.permute.xlu0 0
  %2096 = vperm.xlu0 %2095, %v2026
  %v2097 = vpop.permute.xlu0 %2096
  %2100 = vset.pattern.permute.xlu0 0
  %2101 = vperm.xlu0 %2100, %v2027
  %v2102 = vpop.permute.xlu0 %2101
  %2105 = vset.pattern.permute.xlu0 0
  %2106 = vperm.xlu0 %2105, %v2028
  %v2107 = vpop.permute.xlu0 %2106
  %2110 = vset.pattern.permute.xlu0 0
  %2111 = vperm.xlu0 %2110, %v2029
  %v2112 = vpop.permute.xlu0 %2111
  %2115 = vset.pattern.permute.xlu0 0
  %2116 = vperm.xlu0 %2115, %v2030
  %v2117 = vpop.permute.xlu0 %2116
  %2120 = vset.pattern.permute.xlu0 0
  %2121 = vperm.xlu0 %2120, %v2031
  %v2122 = vpop.permute.xlu0 %2121
  %2125 = vset.pattern.permute.xlu0 0
  %2126 = vperm.xlu0 %2125, %v2032
  %v2127 = vpop.permute.xlu0 %2126
  %2130 = vset.pattern.permute.xlu0 0
  %2131 = vperm.xlu0 %2130, %v2033
  %v2132 = vpop.permute.xlu0 %2131
  %2135 = vset.pattern.permute.xlu0 0
  %2136 = vperm.xlu0 %2135, %v2034
  %v2137 = vpop.permute.xlu0 %2136
  %2140 = vset.pattern.permute.xlu0 0
  %2141 = vperm.xlu0 %2140, %v2035
  %v2142 = vpop.permute.xlu0 %2141
  %2145 = vset.pattern.permute.xlu0 0
  %2146 = vperm.xlu0 %2145, %v2036
  %v2147 = vpop.permute.xlu0 %2146
  %2150 = vset.pattern.permute.xlu0 0
  %2151 = vperm.xlu0 %2150, %v2037
  %v2152 = vpop.permute.xlu0 %2151
  %2155 = vset.pattern.permute.xlu0 0
  %2156 = vperm.xlu0 %2155, %v2038
  %v2157 = vpop.permute.xlu0 %2156
  %2160 = vset.pattern.permute.xlu0 0
  %2161 = vperm.xlu0 %2160, %v2039
  %v2162 = vpop.permute.xlu0 %2161
  %2165 = vset.pattern.permute.xlu0 0
  %2166 = vperm.xlu0 %2165, %v2040
  %v2167 = vpop.permute.xlu0 %2166
  %2170 = vset.pattern.permute.xlu0 0
  %2171 = vperm.xlu0 %2170, %v2041
  %v2172 = vpop.permute.xlu0 %2171
  %2175 = vset.pattern.permute.xlu0 0
  %2176 = vperm.xlu0 %2175, %v2042
  %v2177 = vpop.permute.xlu0 %2176
  %2180 = vset.pattern.permute.xlu0 0
  %2181 = vperm.xlu0 %2180, %v2043
  %v2182 = vpop.permute.xlu0 %2181
  %2185 = vset.pattern.permute.xlu0 0
  %2186 = vperm.xlu0 %2185, %v2044
  %v2187 = vpop.permute.xlu0 %2186
  %2190 = vset.pattern.permute.xlu0 0
  %2191 = vperm.xlu0 %2190, %v2045
  %v2192 = vpop.permute.xlu0 %2191
  %2195 = vset.pattern.permute.xlu0 0
  %2196 = vperm.xlu0 %2195, %v2046
  %v2197 = vpop.permute.xlu0 %2196
  %2200 = vset.pattern.permute.xlu0 0
  %2201 = vperm.xlu0 %2200, %v2047
  %v2202 = vpop.permute.xlu0 %2201
  %2205 = vset.pattern.permute.xlu0 0
  %2206 = vperm.xlu0 %2205, %v2048
  %v2207 = vpop.permute.xlu0 %2206
  %v2209 = vmul.f32 %v1953, %v2052
  %v2210 = vmul.f32 %v1954, %v2052
  %v2211 = vmul.f32 %v1955, %v2057
  %v2212 = vmul.f32 %v1956, %v2057
  %v2213 = vmul.f32 %v1957, %v2062
  %v2214 = vmul.f32 %v1958, %v2062
  %v2215 = vmul.f32 %v1959, %v2067
  %v2216 = vmul.f32 %v1960, %v2067
  %v2217 = vmul.f32 %v1961, %v2072
  %v2218 = vmul.f32 %v1962, %v2072
  %v2219 = vmul.f32 %v1963, %v2077
  %v2220 = vmul.f32 %v1964, %v2077
  %v2221 = vmul.f32 %v1965, %v2082
  %v2222 = vmul.f32 %v1966, %v2082
  %v2223 = vmul.f32 %v1967, %v2087
  %v2224 = vmul.f32 %v1968, %v2087
  %v2225 = vmul.f32 %v1969, %v2092
  %v2226 = vmul.f32 %v1970, %v2092
  %v2227 = vmul.f32 %v1971, %v2097
  %v2228 = vmul.f32 %v1972, %v2097
  %v2229 = vmul.f32 %v1973, %v2102
  %v2230 = vmul.f32 %v1974, %v2102
  %v2231 = vmul.f32 %v1975, %v2107
  %v2232 = vmul.f32 %v1976, %v2107
  %v2233 = vmul.f32 %v1977, %v2112
  %v2234 = vmul.f32 %v1978, %v2112
  %v2235 = vmul.f32 %v1979, %v2117
  %v2236 = vmul.f32 %v1980, %v2117
  %v2237 = vmul.f32 %v1981, %v2122
  %v2238 = vmul.f32 %v1982, %v2122
  %v2239 = vmul.f32 %v1983, %v2127
  %v2240 = vmul.f32 %v1984, %v2127
  %v2241 = vmul.f32 %v1985, %v2132
  %v2242 = vmul.f32 %v1986, %v2132
  %v2243 = vmul.f32 %v1987, %v2137
  %v2244 = vmul.f32 %v1988, %v2137
  %v2245 = vmul.f32 %v1989, %v2142
  %v2246 = vmul.f32 %v1990, %v2142
  %v2247 = vmul.f32 %v1991, %v2147
  %v2248 = vmul.f32 %v1992, %v2147
  %v2249 = vmul.f32 %v1993, %v2152
  %v2250 = vmul.f32 %v1994, %v2152
  %v2251 = vmul.f32 %v1995, %v2157
  %v2252 = vmul.f32 %v1996, %v2157
  %v2253 = vmul.f32 %v1997, %v2162
  %v2254 = vmul.f32 %v1998, %v2162
  %v2255 = vmul.f32 %v1999, %v2167
  %v2256 = vmul.f32 %v2000, %v2167
  %v2257 = vmul.f32 %v2001, %v2172
  %v2258 = vmul.f32 %v2002, %v2172
  %v2259 = vmul.f32 %v2003, %v2177
  %v2260 = vmul.f32 %v2004, %v2177
  %v2261 = vmul.f32 %v2005, %v2182
  %v2262 = vmul.f32 %v2006, %v2182
  %v2263 = vmul.f32 %v2007, %v2187
  %v2264 = vmul.f32 %v2008, %v2187
  %v2265 = vmul.f32 %v2009, %v2192
  %v2266 = vmul.f32 %v2010, %v2192
  %v2267 = vmul.f32 %v2011, %v2197
  %v2268 = vmul.f32 %v2012, %v2197
  %v2269 = vmul.f32 %v2013, %v2202
  %v2270 = vmul.f32 %v2014, %v2202
  %v2271 = vmul.f32 %v2015, %v2207
  %v2272 = vmul.f32 %v2016, %v2207
  %v2273 = vld [vmem:[%s4] sm:$0xff]
  %v2274 = vld [vmem:[%s4 + $0x8] sm:$0xff]
  %v2275 = vld [vmem:[%s4 + $0x10] sm:$0xff]
  %v2276 = vld [vmem:[%s4 + $0x18] sm:$0xff]
  %v2277 = vld [vmem:[%s4 + $0x20] sm:$0xff]
  %v2278 = vld [vmem:[%s4 + $0x28] sm:$0xff]
  %v2279 = vld [vmem:[%s4 + $0x30] sm:$0xff]
  %v2280 = vld [vmem:[%s4 + $0x38] sm:$0xff]
  %v2281 = vld [vmem:[%s4 + $0x40] sm:$0xff]
  %v2282 = vld [vmem:[%s4 + $0x48] sm:$0xff]
  %v2283 = vld [vmem:[%s4 + $0x50] sm:$0xff]
  %v2284 = vld [vmem:[%s4 + $0x58] sm:$0xff]
  %v2285 = vld [vmem:[%s4 + $0x60] sm:$0xff]
  %v2286 = vld [vmem:[%s4 + $0x68] sm:$0xff]
  %v2287 = vld [vmem:[%s4 + $0x70] sm:$0xff]
  %v2288 = vld [vmem:[%s4 + $0x78] sm:$0xff]
  %v2289 = vld [vmem:[%s4 + $0x80] sm:$0xff]
  %v2290 = vld [vmem:[%s4 + $0x88] sm:$0xff]
  %v2291 = vld [vmem:[%s4 + $0x90] sm:$0xff]
  %v2292 = vld [vmem:[%s4 + $0x98] sm:$0xff]
  %v2293 = vld [vmem:[%s4 + $0xa0] sm:$0xff]
  %v2294 = vld [vmem:[%s4 + $0xa8] sm:$0xff]
  %v2295 = vld [vmem:[%s4 + $0xb0] sm:$0xff]
  %v2296 = vld [vmem:[%s4 + $0xb8] sm:$0xff]
  %v2297 = vld [vmem:[%s4 + $0xc0] sm:$0xff]
  %v2298 = vld [vmem:[%s4 + $0xc8] sm:$0xff]
  %v2299 = vld [vmem:[%s4 + $0xd0] sm:$0xff]
  %v2300 = vld [vmem:[%s4 + $0xd8] sm:$0xff]
  %v2301 = vld [vmem:[%s4 + $0xe0] sm:$0xff]
  %v2302 = vld [vmem:[%s4 + $0xe8] sm:$0xff]
  %v2303 = vld [vmem:[%s4 + $0xf0] sm:$0xff]
  %v2304 = vld [vmem:[%s4 + $0xf8] sm:$0xff]
  %2306 = vset.pattern.permute.xlu0 0
  %2307 = vperm.xlu0 %2306, %v2273
  %v2308 = vpop.permute.xlu0 %2307
  %2311 = vset.pattern.permute.xlu0 0
  %2312 = vperm.xlu0 %2311, %v2274
  %v2313 = vpop.permute.xlu0 %2312
  %2316 = vset.pattern.permute.xlu0 0
  %2317 = vperm.xlu0 %2316, %v2275
  %v2318 = vpop.permute.xlu0 %2317
  %2321 = vset.pattern.permute.xlu0 0
  %2322 = vperm.xlu0 %2321, %v2276
  %v2323 = vpop.permute.xlu0 %2322
  %2326 = vset.pattern.permute.xlu0 0
  %2327 = vperm.xlu0 %2326, %v2277
  %v2328 = vpop.permute.xlu0 %2327
  %2331 = vset.pattern.permute.xlu0 0
  %2332 = vperm.xlu0 %2331, %v2278
  %v2333 = vpop.permute.xlu0 %2332
  %2336 = vset.pattern.permute.xlu0 0
  %2337 = vperm.xlu0 %2336, %v2279
  %v2338 = vpop.permute.xlu0 %2337
  %2341 = vset.pattern.permute.xlu0 0
  %2342 = vperm.xlu0 %2341, %v2280
  %v2343 = vpop.permute.xlu0 %2342
  %2346 = vset.pattern.permute.xlu0 0
  %2347 = vperm.xlu0 %2346, %v2281
  %v2348 = vpop.permute.xlu0 %2347
  %2351 = vset.pattern.permute.xlu0 0
  %2352 = vperm.xlu0 %2351, %v2282
  %v2353 = vpop.permute.xlu0 %2352
  %2356 = vset.pattern.permute.xlu0 0
  %2357 = vperm.xlu0 %2356, %v2283
  %v2358 = vpop.permute.xlu0 %2357
  %2361 = vset.pattern.permute.xlu0 0
  %2362 = vperm.xlu0 %2361, %v2284
  %v2363 = vpop.permute.xlu0 %2362
  %2366 = vset.pattern.permute.xlu0 0
  %2367 = vperm.xlu0 %2366, %v2285
  %v2368 = vpop.permute.xlu0 %2367
  %2371 = vset.pattern.permute.xlu0 0
  %2372 = vperm.xlu0 %2371, %v2286
  %v2373 = vpop.permute.xlu0 %2372
  %2376 = vset.pattern.permute.xlu0 0
  %2377 = vperm.xlu0 %2376, %v2287
  %v2378 = vpop.permute.xlu0 %2377
  %2381 = vset.pattern.permute.xlu0 0
  %2382 = vperm.xlu0 %2381, %v2288
  %v2383 = vpop.permute.xlu0 %2382
  %2386 = vset.pattern.permute.xlu0 0
  %2387 = vperm.xlu0 %2386, %v2289
  %v2388 = vpop.permute.xlu0 %2387
  %2391 = vset.pattern.permute.xlu0 0
  %2392 = vperm.xlu0 %2391, %v2290
  %v2393 = vpop.permute.xlu0 %2392
  %2396 = vset.pattern.permute.xlu0 0
  %2397 = vperm.xlu0 %2396, %v2291
  %v2398 = vpop.permute.xlu0 %2397
  %2401 = vset.pattern.permute.xlu0 0
  %2402 = vperm.xlu0 %2401, %v2292
  %v2403 = vpop.permute.xlu0 %2402
  %2406 = vset.pattern.permute.xlu0 0
  %2407 = vperm.xlu0 %2406, %v2293
  %v2408 = vpop.permute.xlu0 %2407
  %2411 = vset.pattern.permute.xlu0 0
  %2412 = vperm.xlu0 %2411, %v2294
  %v2413 = vpop.permute.xlu0 %2412
  %2416 = vset.pattern.permute.xlu0 0
  %2417 = vperm.xlu0 %2416, %v2295
  %v2418 = vpop.permute.xlu0 %2417
  %2421 = vset.pattern.permute.xlu0 0
  %2422 = vperm.xlu0 %2421, %v2296
  %v2423 = vpop.permute.xlu0 %2422
  %2426 = vset.pattern.permute.xlu0 0
  %2427 = vperm.xlu0 %2426, %v2297
  %v2428 = vpop.permute.xlu0 %2427
  %2431 = vset.pattern.permute.xlu0 0
  %2432 = vperm.xlu0 %2431, %v2298
  %v2433 = vpop.permute.xlu0 %2432
  %2436 = vset.pattern.permute.xlu0 0
  %2437 = vperm.xlu0 %2436, %v2299
  %v2438 = vpop.permute.xlu0 %2437
  %2441 = vset.pattern.permute.xlu0 0
  %2442 = vperm.xlu0 %2441, %v2300
  %v2443 = vpop.permute.xlu0 %2442
  %2446 = vset.pattern.permute.xlu0 0
  %2447 = vperm.xlu0 %2446, %v2301
  %v2448 = vpop.permute.xlu0 %2447
  %2451 = vset.pattern.permute.xlu0 0
  %2452 = vperm.xlu0 %2451, %v2302
  %v2453 = vpop.permute.xlu0 %2452
  %2456 = vset.pattern.permute.xlu0 0
  %2457 = vperm.xlu0 %2456, %v2303
  %v2458 = vpop.permute.xlu0 %2457
  %2461 = vset.pattern.permute.xlu0 0
  %2462 = vperm.xlu0 %2461, %v2304
  %v2463 = vpop.permute.xlu0 %2462
  %v2465 = vadd.f32 %v2209, %v2308
  %v2466 = vadd.f32 %v2210, %v2308
  %v2467 = vadd.f32 %v2211, %v2313
  %v2468 = vadd.f32 %v2212, %v2313
  %v2469 = vadd.f32 %v2213, %v2318
  %v2470 = vadd.f32 %v2214, %v2318
  %v2471 = vadd.f32 %v2215, %v2323
  %v2472 = vadd.f32 %v2216, %v2323
  %v2473 = vadd.f32 %v2217, %v2328
  %v2474 = vadd.f32 %v2218, %v2328
  %v2475 = vadd.f32 %v2219, %v2333
  %v2476 = vadd.f32 %v2220, %v2333
  %v2477 = vadd.f32 %v2221, %v2338
  %v2478 = vadd.f32 %v2222, %v2338
  %v2479 = vadd.f32 %v2223, %v2343
  %v2480 = vadd.f32 %v2224, %v2343
  %v2481 = vadd.f32 %v2225, %v2348
  %v2482 = vadd.f32 %v2226, %v2348
  %v2483 = vadd.f32 %v2227, %v2353
  %v2484 = vadd.f32 %v2228, %v2353
  %v2485 = vadd.f32 %v2229, %v2358
  %v2486 = vadd.f32 %v2230, %v2358
  %v2487 = vadd.f32 %v2231, %v2363
  %v2488 = vadd.f32 %v2232, %v2363
  %v2489 = vadd.f32 %v2233, %v2368
  %v2490 = vadd.f32 %v2234, %v2368
  %v2491 = vadd.f32 %v2235, %v2373
  %v2492 = vadd.f32 %v2236, %v2373
  %v2493 = vadd.f32 %v2237, %v2378
  %v2494 = vadd.f32 %v2238, %v2378
  %v2495 = vadd.f32 %v2239, %v2383
  %v2496 = vadd.f32 %v2240, %v2383
  %v2497 = vadd.f32 %v2241, %v2388
  %v2498 = vadd.f32 %v2242, %v2388
  %v2499 = vadd.f32 %v2243, %v2393
  %v2500 = vadd.f32 %v2244, %v2393
  %v2501 = vadd.f32 %v2245, %v2398
  %v2502 = vadd.f32 %v2246, %v2398
  %v2503 = vadd.f32 %v2247, %v2403
  %v2504 = vadd.f32 %v2248, %v2403
  %v2505 = vadd.f32 %v2249, %v2408
  %v2506 = vadd.f32 %v2250, %v2408
  %v2507 = vadd.f32 %v2251, %v2413
  %v2508 = vadd.f32 %v2252, %v2413
  %v2509 = vadd.f32 %v2253, %v2418
  %v2510 = vadd.f32 %v2254, %v2418
  %v2511 = vadd.f32 %v2255, %v2423
  %v2512 = vadd.f32 %v2256, %v2423
  %v2513 = vadd.f32 %v2257, %v2428
  %v2514 = vadd.f32 %v2258, %v2428
  %v2515 = vadd.f32 %v2259, %v2433
  %v2516 = vadd.f32 %v2260, %v2433
  %v2517 = vadd.f32 %v2261, %v2438
  %v2518 = vadd.f32 %v2262, %v2438
  %v2519 = vadd.f32 %v2263, %v2443
  %v2520 = vadd.f32 %v2264, %v2443
  %v2521 = vadd.f32 %v2265, %v2448
  %v2522 = vadd.f32 %v2266, %v2448
  %v2523 = vadd.f32 %v2267, %v2453
  %v2524 = vadd.f32 %v2268, %v2453
  %v2525 = vadd.f32 %v2269, %v2458
  %v2526 = vadd.f32 %v2270, %v2458
  %v2527 = vadd.f32 %v2271, %v2463
  %v2528 = vadd.f32 %v2272, %v2463
  %v2529 = vmax.f32 %v2465, 0.0
  %v2530 = vmax.f32 %v2466, 0.0
  %v2531 = vmax.f32 %v2467, 0.0
  %v2532 = vmax.f32 %v2468, 0.0
  %v2533 = vmax.f32 %v2469, 0.0
  %v2534 = vmax.f32 %v2470, 0.0
  %v2535 = vmax.f32 %v2471, 0.0
  %v2536 = vmax.f32 %v2472, 0.0
  %v2537 = vmax.f32 %v2473, 0.0
  %v2538 = vmax.f32 %v2474, 0.0
  %v2539 = vmax.f32 %v2475, 0.0
  %v2540 = vmax.f32 %v2476, 0.0
  %v2541 = vmax.f32 %v2477, 0.0
  %v2542 = vmax.f32 %v2478, 0.0
  %v2543 = vmax.f32 %v2479, 0.0
  %v2544 = vmax.f32 %v2480, 0.0
  %v2545 = vmax.f32 %v2481, 0.0
  %v2546 = vmax.f32 %v2482, 0.0
  %v2547 = vmax.f32 %v2483, 0.0
  %v2548 = vmax.f32 %v2484, 0.0
  %v2549 = vmax.f32 %v2485, 0.0
  %v2550 = vmax.f32 %v2486, 0.0
  %v2551 = vmax.f32 %v2487, 0.0
  %v2552 = vmax.f32 %v2488, 0.0
  %v2553 = vmax.f32 %v2489, 0.0
  %v2554 = vmax.f32 %v2490, 0.0
  %v2555 = vmax.f32 %v2491, 0.0
  %v2556 = vmax.f32 %v2492, 0.0
  %v2557 = vmax.f32 %v2493, 0.0
  %v2558 = vmax.f32 %v2494, 0.0
  %v2559 = vmax.f32 %v2495, 0.0
  %v2560 = vmax.f32 %v2496, 0.0
  %v2561 = vmax.f32 %v2497, 0.0
  %v2562 = vmax.f32 %v2498, 0.0
  %v2563 = vmax.f32 %v2499, 0.0
  %v2564 = vmax.f32 %v2500, 0.0
  %v2565 = vmax.f32 %v2501, 0.0
  %v2566 = vmax.f32 %v2502, 0.0
  %v2567 = vmax.f32 %v2503, 0.0
  %v2568 = vmax.f32 %v2504, 0.0
  %v2569 = vmax.f32 %v2505, 0.0
  %v2570 = vmax.f32 %v2506, 0.0
  %v2571 = vmax.f32 %v2507, 0.0
  %v2572 = vmax.f32 %v2508, 0.0
  %v2573 = vmax.f32 %v2509, 0.0
  %v2574 = vmax.f32 %v2510, 0.0
  %v2575 = vmax.f32 %v2511, 0.0
  %v2576 = vmax.f32 %v2512, 0.0
  %v2577 = vmax.f32 %v2513, 0.0
  %v2578 = vmax.f32 %v2514, 0.0
  %v2579 = vmax.f32 %v2515, 0.0
  %v2580 = vmax.f32 %v2516, 0.0
  %v2581 = vmax.f32 %v2517, 0.0
  %v2582 = vmax.f32 %v2518, 0.0
  %v2583 = vmax.f32 %v2519, 0.0
  %v2584 = vmax.f32 %v2520, 0.0
  %v2585 = vmax.f32 %v2521, 0.0
  %v2586 = vmax.f32 %v2522, 0.0
  %v2587 = vmax.f32 %v2523, 0.0
  %v2588 = vmax.f32 %v2524, 0.0
  %v2589 = vmax.f32 %v2525, 0.0
  %v2590 = vmax.f32 %v2526, 0.0
  %v2591 = vmax.f32 %v2527, 0.0
  %v2592 = vmax.f32 %v2528, 0.0
  %s2593 = sadd.s32 %s50, 4294967293
  %v2594 = vlaneseq
  %v2595 = vand.u32 %v2594, 127
  %v2596 = vadd.s32 %v2595, 128
  %v2597 = vstv %s2593
  %v2598 = vadd.s32 %v2597, %v2595
  %v2599 = vadd.s32 %v2597, %v2596
  %vm2600 = vcmp.ge.s32.totalorder %v2598, 0
  %vm2601 = vcmp.ge.s32.totalorder %v2599, 0
  %vm2602 = vcmp.lt.s32.totalorder %v2598, 16
  %vm2603 = vcmp.lt.s32.totalorder %v2599, 16
  %vm2604 = vmand %vm2600, %vm2602
  %vm2605 = vmand %vm2601, %vm2603
  %v2606 = vsel %vm2604, 1, 0
  %v2607 = vsel %vm2605, 1, 0
  %vm2608 = vcmp.eq.s32.totalorder %v2606, 1
  %vm2609 = vcmp.eq.s32.totalorder %v2607, 1
  %v2610 = vsel %vm2608, %v2529, 0.0
  %v2611 = vsel %vm2609, %v2530, 0.0
  %v2612 = vsel %vm2608, %v2531, 0.0
  %v2613 = vsel %vm2609, %v2532, 0.0
  %v2614 = vsel %vm2608, %v2533, 0.0
  %v2615 = vsel %vm2609, %v2534, 0.0
  %v2616 = vsel %vm2608, %v2535, 0.0
  %v2617 = vsel %vm2609, %v2536, 0.0
  %v2618 = vsel %vm2608, %v2537, 0.0
  %v2619 = vsel %vm2609, %v2538, 0.0
  %v2620 = vsel %vm2608, %v2539, 0.0
  %v2621 = vsel %vm2609, %v2540, 0.0
  %v2622 = vsel %vm2608, %v2541, 0.0
  %v2623 = vsel %vm2609, %v2542, 0.0
  %v2624 = vsel %vm2608, %v2543, 0.0
  %v2625 = vsel %vm2609, %v2544, 0.0
  %v2626 = vsel %vm2608, %v2545, 0.0
  %v2627 = vsel %vm2609, %v2546, 0.0
  %v2628 = vsel %vm2608, %v2547, 0.0
  %v2629 = vsel %vm2609, %v2548, 0.0
  %v2630 = vsel %vm2608, %v2549, 0.0
  %v2631 = vsel %vm2609, %v2550, 0.0
  %v2632 = vsel %vm2608, %v2551, 0.0
  %v2633 = vsel %vm2609, %v2552, 0.0
  %v2634 = vsel %vm2608, %v2553, 0.0
  %v2635 = vsel %vm2609, %v2554, 0.0
  %v2636 = vsel %vm2608, %v2555, 0.0
  %v2637 = vsel %vm2609, %v2556, 0.0
  %v2638 = vsel %vm2608, %v2557, 0.0
  %v2639 = vsel %vm2609, %v2558, 0.0
  %v2640 = vsel %vm2608, %v2559, 0.0
  %v2641 = vsel %vm2609, %v2560, 0.0
  %v2642 = vsel %vm2608, %v2561, 0.0
  %v2643 = vsel %vm2609, %v2562, 0.0
  %v2644 = vsel %vm2608, %v2563, 0.0
  %v2645 = vsel %vm2609, %v2564, 0.0
  %v2646 = vsel %vm2608, %v2565, 0.0
  %v2647 = vsel %vm2609, %v2566, 0.0
  %v2648 = vsel %vm2608, %v2567, 0.0
  %v2649 = vsel %vm2609, %v2568, 0.0
  %v2650 = vsel %vm2608, %v2569, 0.0
  %v2651 = vsel %vm2609, %v2570, 0.0
  %v2652 = vsel %vm2608, %v2571, 0.0
  %v2653 = vsel %vm2609, %v2572, 0.0
  %v2654 = vsel %vm2608, %v2573, 0.0
  %v2655 = vsel %vm2609, %v2574, 0.0
  %v2656 = vsel %vm2608, %v2575, 0.0
  %v2657 = vsel %vm2609, %v2576, 0.0
  %v2658 = vsel %vm2608, %v2577, 0.0
  %v2659 = vsel %vm2609, %v2578, 0.0
  %v2660 = vsel %vm2608, %v2579, 0.0
  %v2661 = vsel %vm2609, %v2580, 0.0
  %v2662 = vsel %vm2608, %v2581, 0.0
  %v2663 = vsel %vm2609, %v2582, 0.0
  %v2664 = vsel %vm2608, %v2583, 0.0
  %v2665 = vsel %vm2609, %v2584, 0.0
  %v2666 = vsel %vm2608, %v2585, 0.0
  %v2667 = vsel %vm2609, %v2586, 0.0
  %v2668 = vsel %vm2608, %v2587, 0.0
  %v2669 = vsel %vm2609, %v2588, 0.0
  %v2670 = vsel %vm2608, %v2589, 0.0
  %v2671 = vsel %vm2609, %v2590, 0.0
  %v2672 = vsel %vm2608, %v2591, 0.0
  %v2673 = vsel %vm2609, %v2592, 0.0
  %v2674 = vld [vmem:[%s5] sm:$0xff]
  %v2675 = vld [vmem:[%s5 + $0x8] sm:$0xff]
  %v2676 = vld [vmem:[%s5 + $0x10] sm:$0xff]
  %v2677 = vld [vmem:[%s5 + $0x18] sm:$0xff]
  %v2678 = vld [vmem:[%s5 + $0x20] sm:$0xff]
  %v2679 = vld [vmem:[%s5 + $0x28] sm:$0xff]
  %v2680 = vld [vmem:[%s5 + $0x30] sm:$0xff]
  %v2681 = vld [vmem:[%s5 + $0x38] sm:$0xff]
  %v2682 = vld [vmem:[%s5 + $0x40] sm:$0xff]
  %v2683 = vld [vmem:[%s5 + $0x48] sm:$0xff]
  %v2684 = vld [vmem:[%s5 + $0x50] sm:$0xff]
  %v2685 = vld [vmem:[%s5 + $0x58] sm:$0xff]
  %v2686 = vld [vmem:[%s5 + $0x60] sm:$0xff]
  %v2687 = vld [vmem:[%s5 + $0x68] sm:$0xff]
  %v2688 = vld [vmem:[%s5 + $0x70] sm:$0xff]
  %v2689 = vld [vmem:[%s5 + $0x78] sm:$0xff]
  %v2690 = vld [vmem:[%s5 + $0x80] sm:$0xff]
  %v2691 = vld [vmem:[%s5 + $0x88] sm:$0xff]
  %v2692 = vld [vmem:[%s5 + $0x90] sm:$0xff]
  %v2693 = vld [vmem:[%s5 + $0x98] sm:$0xff]
  %v2694 = vld [vmem:[%s5 + $0xa0] sm:$0xff]
  %v2695 = vld [vmem:[%s5 + $0xa8] sm:$0xff]
  %v2696 = vld [vmem:[%s5 + $0xb0] sm:$0xff]
  %v2697 = vld [vmem:[%s5 + $0xb8] sm:$0xff]
  %v2698 = vld [vmem:[%s5 + $0xc0] sm:$0xff]
  %v2699 = vld [vmem:[%s5 + $0xc8] sm:$0xff]
  %v2700 = vld [vmem:[%s5 + $0xd0] sm:$0xff]
  %v2701 = vld [vmem:[%s5 + $0xd8] sm:$0xff]
  %v2702 = vld [vmem:[%s5 + $0xe0] sm:$0xff]
  %v2703 = vld [vmem:[%s5 + $0xe8] sm:$0xff]
  %v2704 = vld [vmem:[%s5 + $0xf0] sm:$0xff]
  %v2705 = vld [vmem:[%s5 + $0xf8] sm:$0xff]
  %v2706 = vld [vmem:[%s5 + $0x100] sm:$0xff]
  %v2707 = vld [vmem:[%s5 + $0x108] sm:$0xff]
  %v2708 = vld [vmem:[%s5 + $0x110] sm:$0xff]
  %v2709 = vld [vmem:[%s5 + $0x118] sm:$0xff]
  %v2710 = vld [vmem:[%s5 + $0x120] sm:$0xff]
  %v2711 = vld [vmem:[%s5 + $0x128] sm:$0xff]
  %v2712 = vld [vmem:[%s5 + $0x130] sm:$0xff]
  %v2713 = vld [vmem:[%s5 + $0x138] sm:$0xff]
  %v2714 = vld [vmem:[%s5 + $0x140] sm:$0xff]
  %v2715 = vld [vmem:[%s5 + $0x148] sm:$0xff]
  %v2716 = vld [vmem:[%s5 + $0x150] sm:$0xff]
  %v2717 = vld [vmem:[%s5 + $0x158] sm:$0xff]
  %v2718 = vld [vmem:[%s5 + $0x160] sm:$0xff]
  %v2719 = vld [vmem:[%s5 + $0x168] sm:$0xff]
  %v2720 = vld [vmem:[%s5 + $0x170] sm:$0xff]
  %v2721 = vld [vmem:[%s5 + $0x178] sm:$0xff]
  %v2722 = vld [vmem:[%s5 + $0x180] sm:$0xff]
  %v2723 = vld [vmem:[%s5 + $0x188] sm:$0xff]
  %v2724 = vld [vmem:[%s5 + $0x190] sm:$0xff]
  %v2725 = vld [vmem:[%s5 + $0x198] sm:$0xff]
  %v2726 = vld [vmem:[%s5 + $0x1a0] sm:$0xff]
  %v2727 = vld [vmem:[%s5 + $0x1a8] sm:$0xff]
  %v2728 = vld [vmem:[%s5 + $0x1b0] sm:$0xff]
  %v2729 = vld [vmem:[%s5 + $0x1b8] sm:$0xff]
  %v2730 = vld [vmem:[%s5 + $0x1c0] sm:$0xff]
  %v2731 = vld [vmem:[%s5 + $0x1c8] sm:$0xff]
  %v2732 = vld [vmem:[%s5 + $0x1d0] sm:$0xff]
  %v2733 = vld [vmem:[%s5 + $0x1d8] sm:$0xff]
  %v2734 = vld [vmem:[%s5 + $0x1e0] sm:$0xff]
  %v2735 = vld [vmem:[%s5 + $0x1e8] sm:$0xff]
  %v2736 = vld [vmem:[%s5 + $0x1f0] sm:$0xff]
  %v2737 = vld [vmem:[%s5 + $0x1f8] sm:$0xff]
  %s2738 = scalar_lea.vmem %s5, 512
  %v2739 = vld [vmem:[%s2738] sm:$0xff]
  %v2740 = vld [vmem:[%s2738 + $0x8] sm:$0xff]
  %v2741 = vld [vmem:[%s2738 + $0x10] sm:$0xff]
  %v2742 = vld [vmem:[%s2738 + $0x18] sm:$0xff]
  %v2743 = vld [vmem:[%s2738 + $0x20] sm:$0xff]
  %v2744 = vld [vmem:[%s2738 + $0x28] sm:$0xff]
  %v2745 = vld [vmem:[%s2738 + $0x30] sm:$0xff]
  %v2746 = vld [vmem:[%s2738 + $0x38] sm:$0xff]
  %v2747 = vld [vmem:[%s2738 + $0x40] sm:$0xff]
  %v2748 = vld [vmem:[%s2738 + $0x48] sm:$0xff]
  %v2749 = vld [vmem:[%s2738 + $0x50] sm:$0xff]
  %v2750 = vld [vmem:[%s2738 + $0x58] sm:$0xff]
  %v2751 = vld [vmem:[%s2738 + $0x60] sm:$0xff]
  %v2752 = vld [vmem:[%s2738 + $0x68] sm:$0xff]
  %v2753 = vld [vmem:[%s2738 + $0x70] sm:$0xff]
  %v2754 = vld [vmem:[%s2738 + $0x78] sm:$0xff]
  %v2755 = vld [vmem:[%s2738 + $0x80] sm:$0xff]
  %v2756 = vld [vmem:[%s2738 + $0x88] sm:$0xff]
  %v2757 = vld [vmem:[%s2738 + $0x90] sm:$0xff]
  %v2758 = vld [vmem:[%s2738 + $0x98] sm:$0xff]
  %v2759 = vld [vmem:[%s2738 + $0xa0] sm:$0xff]
  %v2760 = vld [vmem:[%s2738 + $0xa8] sm:$0xff]
  %v2761 = vld [vmem:[%s2738 + $0xb0] sm:$0xff]
  %v2762 = vld [vmem:[%s2738 + $0xb8] sm:$0xff]
  %v2763 = vld [vmem:[%s2738 + $0xc0] sm:$0xff]
  %v2764 = vld [vmem:[%s2738 + $0xc8] sm:$0xff]
  %v2765 = vld [vmem:[%s2738 + $0xd0] sm:$0xff]
  %v2766 = vld [vmem:[%s2738 + $0xd8] sm:$0xff]
  %v2767 = vld [vmem:[%s2738 + $0xe0] sm:$0xff]
  %v2768 = vld [vmem:[%s2738 + $0xe8] sm:$0xff]
  %v2769 = vld [vmem:[%s2738 + $0xf0] sm:$0xff]
  %v2770 = vld [vmem:[%s2738 + $0xf8] sm:$0xff]
  %v2771 = vld [vmem:[%s2738 + $0x100] sm:$0xff]
  %v2772 = vld [vmem:[%s2738 + $0x108] sm:$0xff]
  %v2773 = vld [vmem:[%s2738 + $0x110] sm:$0xff]
  %v2774 = vld [vmem:[%s2738 + $0x118] sm:$0xff]
  %v2775 = vld [vmem:[%s2738 + $0x120] sm:$0xff]
  %v2776 = vld [vmem:[%s2738 + $0x128] sm:$0xff]
  %v2777 = vld [vmem:[%s2738 + $0x130] sm:$0xff]
  %v2778 = vld [vmem:[%s2738 + $0x138] sm:$0xff]
  %v2779 = vld [vmem:[%s2738 + $0x140] sm:$0xff]
  %v2780 = vld [vmem:[%s2738 + $0x148] sm:$0xff]
  %v2781 = vld [vmem:[%s2738 + $0x150] sm:$0xff]
  %v2782 = vld [vmem:[%s2738 + $0x158] sm:$0xff]
  %v2783 = vld [vmem:[%s2738 + $0x160] sm:$0xff]
  %v2784 = vld [vmem:[%s2738 + $0x168] sm:$0xff]
  %v2785 = vld [vmem:[%s2738 + $0x170] sm:$0xff]
  %v2786 = vld [vmem:[%s2738 + $0x178] sm:$0xff]
  %v2787 = vld [vmem:[%s2738 + $0x180] sm:$0xff]
  %v2788 = vld [vmem:[%s2738 + $0x188] sm:$0xff]
  %v2789 = vld [vmem:[%s2738 + $0x190] sm:$0xff]
  %v2790 = vld [vmem:[%s2738 + $0x198] sm:$0xff]
  %v2791 = vld [vmem:[%s2738 + $0x1a0] sm:$0xff]
  %v2792 = vld [vmem:[%s2738 + $0x1a8] sm:$0xff]
  %v2793 = vld [vmem:[%s2738 + $0x1b0] sm:$0xff]
  %v2794 = vld [vmem:[%s2738 + $0x1b8] sm:$0xff]
  %v2795 = vld [vmem:[%s2738 + $0x1c0] sm:$0xff]
  %v2796 = vld [vmem:[%s2738 + $0x1c8] sm:$0xff]
  %v2797 = vld [vmem:[%s2738 + $0x1d0] sm:$0xff]
  %v2798 = vld [vmem:[%s2738 + $0x1d8] sm:$0xff]
  %v2799 = vld [vmem:[%s2738 + $0x1e0] sm:$0xff]
  %v2800 = vld [vmem:[%s2738 + $0x1e8] sm:$0xff]
  %v2801 = vld [vmem:[%s2738 + $0x1f0] sm:$0xff]
  %v2802 = vld [vmem:[%s2738 + $0x1f8] sm:$0xff]
  %2867 = vrot.lane.b32.xlu0 %v2610, 127
  %v2868 = vpop.permute.xlu0 %2867
  %2869 = vrot.lane.b32.xlu0 %v2611, 127
  %v2870 = vpop.permute.xlu0 %2869
  %2871 = vrot.lane.b32.xlu0 %v2612, 127
  %v2872 = vpop.permute.xlu0 %2871
  %2873 = vrot.lane.b32.xlu0 %v2613, 127
  %v2874 = vpop.permute.xlu0 %2873
  %2875 = vrot.lane.b32.xlu0 %v2614, 127
  %v2876 = vpop.permute.xlu0 %2875
  %2877 = vrot.lane.b32.xlu0 %v2615, 127
  %v2878 = vpop.permute.xlu0 %2877
  %2879 = vrot.lane.b32.xlu0 %v2616, 127
  %v2880 = vpop.permute.xlu0 %2879
  %2881 = vrot.lane.b32.xlu0 %v2617, 127
  %v2882 = vpop.permute.xlu0 %2881
  %2883 = vrot.lane.b32.xlu0 %v2618, 127
  %v2884 = vpop.permute.xlu0 %2883
  %2885 = vrot.lane.b32.xlu0 %v2619, 127
  %v2886 = vpop.permute.xlu0 %2885
  %2887 = vrot.lane.b32.xlu0 %v2620, 127
  %v2888 = vpop.permute.xlu0 %2887
  %2889 = vrot.lane.b32.xlu0 %v2621, 127
  %v2890 = vpop.permute.xlu0 %2889
  %2891 = vrot.lane.b32.xlu0 %v2622, 127
  %v2892 = vpop.permute.xlu0 %2891
  %2893 = vrot.lane.b32.xlu0 %v2623, 127
  %v2894 = vpop.permute.xlu0 %2893
  %2895 = vrot.lane.b32.xlu0 %v2624, 127
  %v2896 = vpop.permute.xlu0 %2895
  %2897 = vrot.lane.b32.xlu0 %v2625, 127
  %v2898 = vpop.permute.xlu0 %2897
  %2899 = vrot.lane.b32.xlu0 %v2626, 127
  %v2900 = vpop.permute.xlu0 %2899
  %2901 = vrot.lane.b32.xlu0 %v2627, 127
  %v2902 = vpop.permute.xlu0 %2901
  %2903 = vrot.lane.b32.xlu0 %v2628, 127
  %v2904 = vpop.permute.xlu0 %2903
  %2905 = vrot.lane.b32.xlu0 %v2629, 127
  %v2906 = vpop.permute.xlu0 %2905
  %2907 = vrot.lane.b32.xlu0 %v2630, 127
  %v2908 = vpop.permute.xlu0 %2907
  %2909 = vrot.lane.b32.xlu0 %v2631, 127
  %v2910 = vpop.permute.xlu0 %2909
  %2911 = vrot.lane.b32.xlu0 %v2632, 127
  %v2912 = vpop.permute.xlu0 %2911
  %2913 = vrot.lane.b32.xlu0 %v2633, 127
  %v2914 = vpop.permute.xlu0 %2913
  %2915 = vrot.lane.b32.xlu0 %v2634, 127
  %v2916 = vpop.permute.xlu0 %2915
  %2917 = vrot.lane.b32.xlu0 %v2635, 127
  %v2918 = vpop.permute.xlu0 %2917
  %2919 = vrot.lane.b32.xlu0 %v2636, 127
  %v2920 = vpop.permute.xlu0 %2919
  %2921 = vrot.lane.b32.xlu0 %v2637, 127
  %v2922 = vpop.permute.xlu0 %2921
  %2923 = vrot.lane.b32.xlu0 %v2638, 127
  %v2924 = vpop.permute.xlu0 %2923
  %2925 = vrot.lane.b32.xlu0 %v2639, 127
  %v2926 = vpop.permute.xlu0 %2925
  %2927 = vrot.lane.b32.xlu0 %v2640, 127
  %v2928 = vpop.permute.xlu0 %2927
  %2929 = vrot.lane.b32.xlu0 %v2641, 127
  %v2930 = vpop.permute.xlu0 %2929
  %2931 = vrot.lane.b32.xlu0 %v2642, 127
  %v2932 = vpop.permute.xlu0 %2931
  %2933 = vrot.lane.b32.xlu0 %v2643, 127
  %v2934 = vpop.permute.xlu0 %2933
  %2935 = vrot.lane.b32.xlu0 %v2644, 127
  %v2936 = vpop.permute.xlu0 %2935
  %2937 = vrot.lane.b32.xlu0 %v2645, 127
  %v2938 = vpop.permute.xlu0 %2937
  %2939 = vrot.lane.b32.xlu0 %v2646, 127
  %v2940 = vpop.permute.xlu0 %2939
  %2941 = vrot.lane.b32.xlu0 %v2647, 127
  %v2942 = vpop.permute.xlu0 %2941
  %2943 = vrot.lane.b32.xlu0 %v2648, 127
  %v2944 = vpop.permute.xlu0 %2943
  %2945 = vrot.lane.b32.xlu0 %v2649, 127
  %v2946 = vpop.permute.xlu0 %2945
  %2947 = vrot.lane.b32.xlu0 %v2650, 127
  %v2948 = vpop.permute.xlu0 %2947
  %2949 = vrot.lane.b32.xlu0 %v2651, 127
  %v2950 = vpop.permute.xlu0 %2949
  %2951 = vrot.lane.b32.xlu0 %v2652, 127
  %v2952 = vpop.permute.xlu0 %2951
  %2953 = vrot.lane.b32.xlu0 %v2653, 127
  %v2954 = vpop.permute.xlu0 %2953
  %2955 = vrot.lane.b32.xlu0 %v2654, 127
  %v2956 = vpop.permute.xlu0 %2955
  %2957 = vrot.lane.b32.xlu0 %v2655, 127
  %v2958 = vpop.permute.xlu0 %2957
  %2959 = vrot.lane.b32.xlu0 %v2656, 127
  %v2960 = vpop.permute.xlu0 %2959
  %2961 = vrot.lane.b32.xlu0 %v2657, 127
  %v2962 = vpop.permute.xlu0 %2961
  %2963 = vrot.lane.b32.xlu0 %v2658, 127
  %v2964 = vpop.permute.xlu0 %2963
  %2965 = vrot.lane.b32.xlu0 %v2659, 127
  %v2966 = vpop.permute.xlu0 %2965
  %2967 = vrot.lane.b32.xlu0 %v2660, 127
  %v2968 = vpop.permute.xlu0 %2967
  %2969 = vrot.lane.b32.xlu0 %v2661, 127
  %v2970 = vpop.permute.xlu0 %2969
  %2971 = vrot.lane.b32.xlu0 %v2662, 127
  %v2972 = vpop.permute.xlu0 %2971
  %2973 = vrot.lane.b32.xlu0 %v2663, 127
  %v2974 = vpop.permute.xlu0 %2973
  %2975 = vrot.lane.b32.xlu0 %v2664, 127
  %v2976 = vpop.permute.xlu0 %2975
  %2977 = vrot.lane.b32.xlu0 %v2665, 127
  %v2978 = vpop.permute.xlu0 %2977
  %2979 = vrot.lane.b32.xlu0 %v2666, 127
  %v2980 = vpop.permute.xlu0 %2979
  %2981 = vrot.lane.b32.xlu0 %v2667, 127
  %v2982 = vpop.permute.xlu0 %2981
  %2983 = vrot.lane.b32.xlu0 %v2668, 127
  %v2984 = vpop.permute.xlu0 %2983
  %2985 = vrot.lane.b32.xlu0 %v2669, 127
  %v2986 = vpop.permute.xlu0 %2985
  %2987 = vrot.lane.b32.xlu0 %v2670, 127
  %v2988 = vpop.permute.xlu0 %2987
  %2989 = vrot.lane.b32.xlu0 %v2671, 127
  %v2990 = vpop.permute.xlu0 %2989
  %2991 = vrot.lane.b32.xlu0 %v2672, 127
  %v2992 = vpop.permute.xlu0 %2991
  %2993 = vrot.lane.b32.xlu0 %v2673, 127
  %v2994 = vpop.permute.xlu0 %2993
  %v2995 = vsel %vm148, %v2868, %v2870
  %v2996 = vsel %vm148, %v2872, %v2874
  %v2997 = vsel %vm148, %v2876, %v2878
  %v2998 = vsel %vm148, %v2880, %v2882
  %v2999 = vsel %vm148, %v2884, %v2886
  %v3000 = vsel %vm148, %v2888, %v2890
  %v3001 = vsel %vm148, %v2892, %v2894
  %v3002 = vsel %vm148, %v2896, %v2898
  %v3003 = vsel %vm148, %v2900, %v2902
  %v3004 = vsel %vm148, %v2904, %v2906
  %v3005 = vsel %vm148, %v2908, %v2910
  %v3006 = vsel %vm148, %v2912, %v2914
  %v3007 = vsel %vm148, %v2916, %v2918
  %v3008 = vsel %vm148, %v2920, %v2922
  %v3009 = vsel %vm148, %v2924, %v2926
  %v3010 = vsel %vm148, %v2928, %v2930
  %v3011 = vsel %vm148, %v2932, %v2934
  %v3012 = vsel %vm148, %v2936, %v2938
  %v3013 = vsel %vm148, %v2940, %v2942
  %v3014 = vsel %vm148, %v2944, %v2946
  %v3015 = vsel %vm148, %v2948, %v2950
  %v3016 = vsel %vm148, %v2952, %v2954
  %v3017 = vsel %vm148, %v2956, %v2958
  %v3018 = vsel %vm148, %v2960, %v2962
  %v3019 = vsel %vm148, %v2964, %v2966
  %v3020 = vsel %vm148, %v2968, %v2970
  %v3021 = vsel %vm148, %v2972, %v2974
  %v3022 = vsel %vm148, %v2976, %v2978
  %v3023 = vsel %vm148, %v2980, %v2982
  %v3024 = vsel %vm148, %v2984, %v2986
  %v3025 = vsel %vm148, %v2988, %v2990
  %v3026 = vsel %vm148, %v2992, %v2994
  %3091 = vmatprep.subr.mxu0 %v2870
  %3092 = vmatpush1.msra.mxu0 %v2995
  %3093 = vmatprep.subr.mxu0 %v2874
  %3094 = vmatpush1.msra.mxu0 %v2996
  %3095 = vmatprep.subr.mxu0 %v2878
  %3096 = vmatpush1.msra.mxu0 %v2997
  %3097 = vmatprep.subr.mxu0 %v2882
  %3098 = vmatpush1.msra.mxu0 %v2998
  %3099 = vmatprep.subr.mxu0 %v2886
  %3100 = vmatpush1.msra.mxu0 %v2999
  %3101 = vmatprep.subr.mxu0 %v2890
  %3102 = vmatpush1.msra.mxu0 %v3000
  %3103 = vmatprep.subr.mxu0 %v2894
  %3104 = vmatpush1.msra.mxu0 %v3001
  %3105 = vmatprep.subr.mxu0 %v2898
  %3106 = vmatpush1.msra.mxu0 %v3002
  %3107 = vmatprep.subr.mxu0 %v2902
  %3108 = vmatpush1.msra.mxu0 %v3003
  %3109 = vmatprep.subr.mxu0 %v2906
  %3110 = vmatpush1.msra.mxu0 %v3004
  %3111 = vmatprep.subr.mxu0 %v2910
  %3112 = vmatpush1.msra.mxu0 %v3005
  %3113 = vmatprep.subr.mxu0 %v2914
  %3114 = vmatpush1.msra.mxu0 %v3006
  %3115 = vmatprep.subr.mxu0 %v2918
  %3116 = vmatpush1.msra.mxu0 %v3007
  %3117 = vmatprep.subr.mxu0 %v2922
  %3118 = vmatpush1.msra.mxu0 %v3008
  %3119 = vmatprep.subr.mxu0 %v2926
  %3120 = vmatpush1.msra.mxu0 %v3009
  %3121 = vmatprep.subr.mxu0 %v2930
  %3122 = vmatpush1.msra.mxu0 %v3010
  %3123 = vmatprep.subr.mxu0 %v2934
  %3124 = vmatpush1.msra.mxu0 %v3011
  %3125 = vmatprep.subr.mxu0 %v2938
  %3126 = vmatpush1.msra.mxu0 %v3012
  %3127 = vmatprep.subr.mxu0 %v2942
  %3128 = vmatpush1.msra.mxu0 %v3013
  %3129 = vmatprep.subr.mxu0 %v2946
  %3130 = vmatpush1.msra.mxu0 %v3014
  %3131 = vmatprep.subr.mxu0 %v2950
  %3132 = vmatpush1.msra.mxu0 %v3015
  %3133 = vmatprep.subr.mxu0 %v2954
  %3134 = vmatpush1.msra.mxu0 %v3016
  %3135 = vmatprep.subr.mxu0 %v2958
  %3136 = vmatpush1.msra.mxu0 %v3017
  %3137 = vmatprep.subr.mxu0 %v2962
  %3138 = vmatpush1.msra.mxu0 %v3018
  %3139 = vmatprep.subr.mxu0 %v2966
  %3140 = vmatpush1.msra.mxu0 %v3019
  %3141 = vmatprep.subr.mxu0 %v2970
  %3142 = vmatpush1.msra.mxu0 %v3020
  %3143 = vmatprep.subr.mxu0 %v2974
  %3144 = vmatpush1.msra.mxu0 %v3021
  %3145 = vmatprep.subr.mxu0 %v2978
  %3146 = vmatpush1.msra.mxu0 %v3022
  %3147 = vmatprep.subr.mxu0 %v2982
  %3148 = vmatpush1.msra.mxu0 %v3023
  %3149 = vmatprep.subr.mxu0 %v2986
  %3150 = vmatpush1.msra.mxu0 %v3024
  %3151 = vmatprep.subr.mxu0 %v2990
  %3152 = vmatpush1.msra.mxu0 %v3025
  %3153 = vmatprep.subr.mxu0 %v2994
  %3154 = vmatpush1.msra.mxu0 %v3026
  %3155 = vmatprep.mubr.f32.mxu0 %v2740
  %3156 = vmatmul.mubr.f32.gmra.mrb[0].mxu0 %v2739
  %v3157 = vpop.f32.mrb[0].mxu0
  %v3158 = vadd.f32 0.0, %v3157
  %v3159 = vpop.f32.mrb[0].mxu0
  %v3160 = vadd.f32 0.0, %v3159
  %3161 = vmatprep.mubr.f32.mxu0 %v2742
  %3162 = vmatmul.mubr.f32.gmra.mrb[0].mxu0 %v2741
  %v3163 = vpop.f32.mrb[0].mxu0
  %v3164 = vadd.f32 0.0, %v3163
  %v3165 = vpop.f32.mrb[0].mxu0
  %v3166 = vadd.f32 0.0, %v3165
  %3167 = vmatprep.mubr.f32.mxu0 %v2744
  %3168 = vmatmul.mubr.f32.gmra.mrb[0].mxu0 %v2743
  %v3169 = vpop.f32.mrb[0].mxu0
  %v3170 = vadd.f32 0.0, %v3169
  %v3171 = vpop.f32.mrb[0].mxu0
  %v3172 = vadd.f32 0.0, %v3171
  %3173 = vmatprep.mubr.f32.mxu0 %v2746
  %3174 = vmatmul.mubr.f32.gmra.mrb[0].mxu0 %v2745
  %v3175 = vpop.f32.mrb[0].mxu0
  %v3176 = vadd.f32 0.0, %v3175
  %v3177 = vpop.f32.mrb[0].mxu0
  %v3178 = vadd.f32 0.0, %v3177
  %3179 = vmatprep.mubr.f32.mxu0 %v2748
  %3180 = vmatmul.mubr.f32.gmra.mrb[0].mxu0 %v2747
  %v3181 = vpop.f32.mrb[0].mxu0
  %v3182 = vadd.f32 0.0, %v3181
  %v3183 = vpop.f32.mrb[0].mxu0
  %v3184 = vadd.f32 0.0, %v3183
  %3185 = vmatprep.mubr.f32.mxu0 %v2750
  %3186 = vmatmul.mubr.f32.gmra.mrb[0].mxu0 %v2749
  %v3187 = vpop.f32.mrb[0].mxu0
  %v3188 = vadd.f32 0.0, %v3187
  %v3189 = vpop.f32.mrb[0].mxu0
  %v3190 = vadd.f32 0.0, %v3189
  %3191 = vmatprep.mubr.f32.mxu0 %v2752
  %3192 = vmatmul.mubr.f32.gmra.mrb[0].mxu0 %v2751
  %v3193 = vpop.f32.mrb[0].mxu0
  %v3194 = vadd.f32 0.0, %v3193
  %v3195 = vpop.f32.mrb[0].mxu0
  %v3196 = vadd.f32 0.0, %v3195
  %3197 = vmatprep.mubr.f32.mxu0 %v2754
  %3198 = vmatmul.mubr.f32.gmra.mrb[0].mxu0 %v2753
  %v3199 = vpop.f32.mrb[0].mxu0
  %v3200 = vadd.f32 0.0, %v3199
  %v3201 = vpop.f32.mrb[0].mxu0
  %v3202 = vadd.f32 0.0, %v3201
  %3203 = vmatprep.mubr.f32.mxu0 %v2756
  %3204 = vmatmul.mubr.f32.gmra.mrb[0].mxu0 %v2755
  %v3205 = vpop.f32.mrb[0].mxu0
  %v3206 = vadd.f32 0.0, %v3205
  %v3207 = vpop.f32.mrb[0].mxu0
  %v3208 = vadd.f32 0.0, %v3207
  %3209 = vmatprep.mubr.f32.mxu0 %v2758
  %3210 = vmatmul.mubr.f32.gmra.mrb[0].mxu0 %v2757
  %v3211 = vpop.f32.mrb[0].mxu0
  %v3212 = vadd.f32 0.0, %v3211
  %v3213 = vpop.f32.mrb[0].mxu0
  %v3214 = vadd.f32 0.0, %v3213
  %3215 = vmatprep.mubr.f32.mxu0 %v2760
  %3216 = vmatmul.mubr.f32.gmra.mrb[0].mxu0 %v2759
  %v3217 = vpop.f32.mrb[0].mxu0
  %v3218 = vadd.f32 0.0, %v3217
  %v3219 = vpop.f32.mrb[0].mxu0
  %v3220 = vadd.f32 0.0, %v3219
  %3221 = vmatprep.mubr.f32.mxu0 %v2762
  %3222 = vmatmul.mubr.f32.gmra.mrb[0].mxu0 %v2761
  %v3223 = vpop.f32.mrb[0].mxu0
  %v3224 = vadd.f32 0.0, %v3223
  %v3225 = vpop.f32.mrb[0].mxu0
  %v3226 = vadd.f32 0.0, %v3225
  %3227 = vmatprep.mubr.f32.mxu0 %v2764
  %3228 = vmatmul.mubr.f32.gmra.mrb[0].mxu0 %v2763
  %v3229 = vpop.f32.mrb[0].mxu0
  %v3230 = vadd.f32 0.0, %v3229
  %v3231 = vpop.f32.mrb[0].mxu0
  %v3232 = vadd.f32 0.0, %v3231
  %3233 = vmatprep.mubr.f32.mxu0 %v2766
  %3234 = vmatmul.mubr.f32.gmra.mrb[0].mxu0 %v2765
  %v3235 = vpop.f32.mrb[0].mxu0
  %v3236 = vadd.f32 0.0, %v3235
  %v3237 = vpop.f32.mrb[0].mxu0
  %v3238 = vadd.f32 0.0, %v3237
  %3239 = vmatprep.mubr.f32.mxu0 %v2768
  %3240 = vmatmul.mubr.f32.gmra.mrb[0].mxu0 %v2767
  %v3241 = vpop.f32.mrb[0].mxu0
  %v3242 = vadd.f32 0.0, %v3241
  %v3243 = vpop.f32.mrb[0].mxu0
  %v3244 = vadd.f32 0.0, %v3243
  %3245 = vmatprep.mubr.f32.mxu0 %v2770
  %3246 = vmatmul.mubr.f32.gmra.mrb[0].mxu0 %v2769
  %v3247 = vpop.f32.mrb[0].mxu0
  %v3248 = vadd.f32 0.0, %v3247
  %v3249 = vpop.f32.mrb[0].mxu0
  %v3250 = vadd.f32 0.0, %v3249
  %3251 = vmatprep.mubr.f32.mxu0 %v2772
  %3252 = vmatmul.mubr.f32.gmra.mrb[0].mxu0 %v2771
  %v3253 = vpop.f32.mrb[0].mxu0
  %v3254 = vadd.f32 0.0, %v3253
  %v3255 = vpop.f32.mrb[0].mxu0
  %v3256 = vadd.f32 0.0, %v3255
  %3257 = vmatprep.mubr.f32.mxu0 %v2774
  %3258 = vmatmul.mubr.f32.gmra.mrb[0].mxu0 %v2773
  %v3259 = vpop.f32.mrb[0].mxu0
  %v3260 = vadd.f32 0.0, %v3259
  %v3261 = vpop.f32.mrb[0].mxu0
  %v3262 = vadd.f32 0.0, %v3261
  %3263 = vmatprep.mubr.f32.mxu0 %v2776
  %3264 = vmatmul.mubr.f32.gmra.mrb[0].mxu0 %v2775
  %v3265 = vpop.f32.mrb[0].mxu0
  %v3266 = vadd.f32 0.0, %v3265
  %v3267 = vpop.f32.mrb[0].mxu0
  %v3268 = vadd.f32 0.0, %v3267
  %3269 = vmatprep.mubr.f32.mxu0 %v2778
  %3270 = vmatmul.mubr.f32.gmra.mrb[0].mxu0 %v2777
  %v3271 = vpop.f32.mrb[0].mxu0
  %v3272 = vadd.f32 0.0, %v3271
  %v3273 = vpop.f32.mrb[0].mxu0
  %v3274 = vadd.f32 0.0, %v3273
  %3275 = vmatprep.mubr.f32.mxu0 %v2780
  %3276 = vmatmul.mubr.f32.gmra.mrb[0].mxu0 %v2779
  %v3277 = vpop.f32.mrb[0].mxu0
  %v3278 = vadd.f32 0.0, %v3277
  %v3279 = vpop.f32.mrb[0].mxu0
  %v3280 = vadd.f32 0.0, %v3279
  %3281 = vmatprep.mubr.f32.mxu0 %v2782
  %3282 = vmatmul.mubr.f32.gmra.mrb[0].mxu0 %v2781
  %v3283 = vpop.f32.mrb[0].mxu0
  %v3284 = vadd.f32 0.0, %v3283
  %v3285 = vpop.f32.mrb[0].mxu0
  %v3286 = vadd.f32 0.0, %v3285
  %3287 = vmatprep.mubr.f32.mxu0 %v2784
  %3288 = vmatmul.mubr.f32.gmra.mrb[0].mxu0 %v2783
  %v3289 = vpop.f32.mrb[0].mxu0
  %v3290 = vadd.f32 0.0, %v3289
  %v3291 = vpop.f32.mrb[0].mxu0
  %v3292 = vadd.f32 0.0, %v3291
  %3293 = vmatprep.mubr.f32.mxu0 %v2786
  %3294 = vmatmul.mubr.f32.gmra.mrb[0].mxu0 %v2785
  %v3295 = vpop.f32.mrb[0].mxu0
  %v3296 = vadd.f32 0.0, %v3295
  %v3297 = vpop.f32.mrb[0].mxu0
  %v3298 = vadd.f32 0.0, %v3297
  %3299 = vmatprep.mubr.f32.mxu0 %v2788
  %3300 = vmatmul.mubr.f32.gmra.mrb[0].mxu0 %v2787
  %v3301 = vpop.f32.mrb[0].mxu0
  %v3302 = vadd.f32 0.0, %v3301
  %v3303 = vpop.f32.mrb[0].mxu0
  %v3304 = vadd.f32 0.0, %v3303
  %3305 = vmatprep.mubr.f32.mxu0 %v2790
  %3306 = vmatmul.mubr.f32.gmra.mrb[0].mxu0 %v2789
  %v3307 = vpop.f32.mrb[0].mxu0
  %v3308 = vadd.f32 0.0, %v3307
  %v3309 = vpop.f32.mrb[0].mxu0
  %v3310 = vadd.f32 0.0, %v3309
  %3311 = vmatprep.mubr.f32.mxu0 %v2792
  %3312 = vmatmul.mubr.f32.gmra.mrb[0].mxu0 %v2791
  %v3313 = vpop.f32.mrb[0].mxu0
  %v3314 = vadd.f32 0.0, %v3313
  %v3315 = vpop.f32.mrb[0].mxu0
  %v3316 = vadd.f32 0.0, %v3315
  %3317 = vmatprep.mubr.f32.mxu0 %v2794
  %3318 = vmatmul.mubr.f32.gmra.mrb[0].mxu0 %v2793
  %v3319 = vpop.f32.mrb[0].mxu0
  %v3320 = vadd.f32 0.0, %v3319
  %v3321 = vpop.f32.mrb[0].mxu0
  %v3322 = vadd.f32 0.0, %v3321
  %3323 = vmatprep.mubr.f32.mxu0 %v2796
  %3324 = vmatmul.mubr.f32.gmra.mrb[0].mxu0 %v2795
  %v3325 = vpop.f32.mrb[0].mxu0
  %v3326 = vadd.f32 0.0, %v3325
  %v3327 = vpop.f32.mrb[0].mxu0
  %v3328 = vadd.f32 0.0, %v3327
  %3329 = vmatprep.mubr.f32.mxu0 %v2798
  %3330 = vmatmul.mubr.f32.gmra.mrb[0].mxu0 %v2797
  %v3331 = vpop.f32.mrb[0].mxu0
  %v3332 = vadd.f32 0.0, %v3331
  %v3333 = vpop.f32.mrb[0].mxu0
  %v3334 = vadd.f32 0.0, %v3333
  %3335 = vmatprep.mubr.f32.mxu0 %v2800
  %3336 = vmatmul.mubr.f32.gmra.mrb[0].mxu0 %v2799
  %v3337 = vpop.f32.mrb[0].mxu0
  %v3338 = vadd.f32 0.0, %v3337
  %v3339 = vpop.f32.mrb[0].mxu0
  %v3340 = vadd.f32 0.0, %v3339
  %3341 = vmatprep.mubr.f32.mxu0 %v2802
  %3342 = vmatmul.mubr.f32.gmra.mrb[0].mxu0 %v2801
  %v3343 = vpop.f32.mrb[0].mxu0
  %v3344 = vadd.f32 0.0, %v3343
  %v3345 = vpop.f32.mrb[0].mxu0
  %v3346 = vadd.f32 0.0, %v3345
  %3347 = vdwg.mxu0
  %3348 = vmatprep.subr.mxu0 %v2611
  %3349 = vmatpush1.msra.mxu0 %v2610
  %3350 = vmatprep.subr.mxu0 %v2613
  %3351 = vmatpush1.msra.mxu0 %v2612
  %3352 = vmatprep.subr.mxu0 %v2615
  %3353 = vmatpush1.msra.mxu0 %v2614
  %3354 = vmatprep.subr.mxu0 %v2617
  %3355 = vmatpush1.msra.mxu0 %v2616
  %3356 = vmatprep.subr.mxu0 %v2619
  %3357 = vmatpush1.msra.mxu0 %v2618
  %3358 = vmatprep.subr.mxu0 %v2621
  %3359 = vmatpush1.msra.mxu0 %v2620
  %3360 = vmatprep.subr.mxu0 %v2623
  %3361 = vmatpush1.msra.mxu0 %v2622
  %3362 = vmatprep.subr.mxu0 %v2625
  %3363 = vmatpush1.msra.mxu0 %v2624
  %3364 = vmatprep.subr.mxu0 %v2627
  %3365 = vmatpush1.msra.mxu0 %v2626
  %3366 = vmatprep.subr.mxu0 %v2629
  %3367 = vmatpush1.msra.mxu0 %v2628
  %3368 = vmatprep.subr.mxu0 %v2631
  %3369 = vmatpush1.msra.mxu0 %v2630
  %3370 = vmatprep.subr.mxu0 %v2633
  %3371 = vmatpush1.msra.mxu0 %v2632
  %3372 = vmatprep.subr.mxu0 %v2635
  %3373 = vmatpush1.msra.mxu0 %v2634
  %3374 = vmatprep.subr.mxu0 %v2637
  %3375 = vmatpush1.msra.mxu0 %v2636
  %3376 = vmatprep.subr.mxu0 %v2639
  %3377 = vmatpush1.msra.mxu0 %v2638
  %3378 = vmatprep.subr.mxu0 %v2641
  %3379 = vmatpush1.msra.mxu0 %v2640
  %3380 = vmatprep.subr.mxu0 %v2643
  %3381 = vmatpush1.msra.mxu0 %v2642
  %3382 = vmatprep.subr.mxu0 %v2645
  %3383 = vmatpush1.msra.mxu0 %v2644
  %3384 = vmatprep.subr.mxu0 %v2647
  %3385 = vmatpush1.msra.mxu0 %v2646
  %3386 = vmatprep.subr.mxu0 %v2649
  %3387 = vmatpush1.msra.mxu0 %v2648
  %3388 = vmatprep.subr.mxu0 %v2651
  %3389 = vmatpush1.msra.mxu0 %v2650
  %3390 = vmatprep.subr.mxu0 %v2653
  %3391 = vmatpush1.msra.mxu0 %v2652
  %3392 = vmatprep.subr.mxu0 %v2655
  %3393 = vmatpush1.msra.mxu0 %v2654
  %3394 = vmatprep.subr.mxu0 %v2657
  %3395 = vmatpush1.msra.mxu0 %v2656
  %3396 = vmatprep.subr.mxu0 %v2659
  %3397 = vmatpush1.msra.mxu0 %v2658
  %3398 = vmatprep.subr.mxu0 %v2661
  %3399 = vmatpush1.msra.mxu0 %v2660
  %3400 = vmatprep.subr.mxu0 %v2663
  %3401 = vmatpush1.msra.mxu0 %v2662
  %3402 = vmatprep.subr.mxu0 %v2665
  %3403 = vmatpush1.msra.mxu0 %v2664
  %3404 = vmatprep.subr.mxu0 %v2667
  %3405 = vmatpush1.msra.mxu0 %v2666
  %3406 = vmatprep.subr.mxu0 %v2669
  %3407 = vmatpush1.msra.mxu0 %v2668
  %3408 = vmatprep.subr.mxu0 %v2671
  %3409 = vmatpush1.msra.mxu0 %v2670
  %3410 = vmatprep.subr.mxu0 %v2673
  %3411 = vmatpush1.msra.mxu0 %v2672
  %3412 = vmatprep.mubr.f32.mxu0 %v2675
  %3413 = vmatmul.mubr.f32.gmra.mrb[0].mxu0 %v2674
  %v3414 = vpop.f32.mrb[0].mxu0
  %v3415 = vadd.f32 %v3158, %v3414
  %v3416 = vpop.f32.mrb[0].mxu0
  %v3417 = vadd.f32 %v3160, %v3416
  %3418 = vmatprep.mubr.f32.mxu0 %v2677
  %3419 = vmatmul.mubr.f32.gmra.mrb[0].mxu0 %v2676
  %v3420 = vpop.f32.mrb[0].mxu0
  %v3421 = vadd.f32 %v3164, %v3420
  %v3422 = vpop.f32.mrb[0].mxu0
  %v3423 = vadd.f32 %v3166, %v3422
  %3424 = vmatprep.mubr.f32.mxu0 %v2679
  %3425 = vmatmul.mubr.f32.gmra.mrb[0].mxu0 %v2678
  %v3426 = vpop.f32.mrb[0].mxu0
  %v3427 = vadd.f32 %v3170, %v3426
  %v3428 = vpop.f32.mrb[0].mxu0
  %v3429 = vadd.f32 %v3172, %v3428
  %3430 = vmatprep.mubr.f32.mxu0 %v2681
  %3431 = vmatmul.mubr.f32.gmra.mrb[0].mxu0 %v2680
  %v3432 = vpop.f32.mrb[0].mxu0
  %v3433 = vadd.f32 %v3176, %v3432
  %v3434 = vpop.f32.mrb[0].mxu0
  %v3435 = vadd.f32 %v3178, %v3434
  %3436 = vmatprep.mubr.f32.mxu0 %v2683
  %3437 = vmatmul.mubr.f32.gmra.mrb[0].mxu0 %v2682
  %v3438 = vpop.f32.mrb[0].mxu0
  %v3439 = vadd.f32 %v3182, %v3438
  %v3440 = vpop.f32.mrb[0].mxu0
  %v3441 = vadd.f32 %v3184, %v3440
  %3442 = vmatprep.mubr.f32.mxu0 %v2685
  %3443 = vmatmul.mubr.f32.gmra.mrb[0].mxu0 %v2684
  %v3444 = vpop.f32.mrb[0].mxu0
  %v3445 = vadd.f32 %v3188, %v3444
  %v3446 = vpop.f32.mrb[0].mxu0
  %v3447 = vadd.f32 %v3190, %v3446
  %3448 = vmatprep.mubr.f32.mxu0 %v2687
  %3449 = vmatmul.mubr.f32.gmra.mrb[0].mxu0 %v2686
  %v3450 = vpop.f32.mrb[0].mxu0
  %v3451 = vadd.f32 %v3194, %v3450
  %v3452 = vpop.f32.mrb[0].mxu0
  %v3453 = vadd.f32 %v3196, %v3452
  %3454 = vmatprep.mubr.f32.mxu0 %v2689
  %3455 = vmatmul.mubr.f32.gmra.mrb[0].mxu0 %v2688
  %v3456 = vpop.f32.mrb[0].mxu0
  %v3457 = vadd.f32 %v3200, %v3456
  %v3458 = vpop.f32.mrb[0].mxu0
  %v3459 = vadd.f32 %v3202, %v3458
  %3460 = vmatprep.mubr.f32.mxu0 %v2691
  %3461 = vmatmul.mubr.f32.gmra.mrb[0].mxu0 %v2690
  %v3462 = vpop.f32.mrb[0].mxu0
  %v3463 = vadd.f32 %v3206, %v3462
  %v3464 = vpop.f32.mrb[0].mxu0
  %v3465 = vadd.f32 %v3208, %v3464
  %3466 = vmatprep.mubr.f32.mxu0 %v2693
  %3467 = vmatmul.mubr.f32.gmra.mrb[0].mxu0 %v2692
  %v3468 = vpop.f32.mrb[0].mxu0
  %v3469 = vadd.f32 %v3212, %v3468
  %v3470 = vpop.f32.mrb[0].mxu0
  %v3471 = vadd.f32 %v3214, %v3470
  %3472 = vmatprep.mubr.f32.mxu0 %v2695
  %3473 = vmatmul.mubr.f32.gmra.mrb[0].mxu0 %v2694
  %v3474 = vpop.f32.mrb[0].mxu0
  %v3475 = vadd.f32 %v3218, %v3474
  %v3476 = vpop.f32.mrb[0].mxu0
  %v3477 = vadd.f32 %v3220, %v3476
  %3478 = vmatprep.mubr.f32.mxu0 %v2697
  %3479 = vmatmul.mubr.f32.gmra.mrb[0].mxu0 %v2696
  %v3480 = vpop.f32.mrb[0].mxu0
  %v3481 = vadd.f32 %v3224, %v3480
  %v3482 = vpop.f32.mrb[0].mxu0
  %v3483 = vadd.f32 %v3226, %v3482
  %3484 = vmatprep.mubr.f32.mxu0 %v2699
  %3485 = vmatmul.mubr.f32.gmra.mrb[0].mxu0 %v2698
  %v3486 = vpop.f32.mrb[0].mxu0
  %v3487 = vadd.f32 %v3230, %v3486
  %v3488 = vpop.f32.mrb[0].mxu0
  %v3489 = vadd.f32 %v3232, %v3488
  %3490 = vmatprep.mubr.f32.mxu0 %v2701
  %3491 = vmatmul.mubr.f32.gmra.mrb[0].mxu0 %v2700
  %v3492 = vpop.f32.mrb[0].mxu0
  %v3493 = vadd.f32 %v3236, %v3492
  %v3494 = vpop.f32.mrb[0].mxu0
  %v3495 = vadd.f32 %v3238, %v3494
  %3496 = vmatprep.mubr.f32.mxu0 %v2703
  %3497 = vmatmul.mubr.f32.gmra.mrb[0].mxu0 %v2702
  %v3498 = vpop.f32.mrb[0].mxu0
  %v3499 = vadd.f32 %v3242, %v3498
  %v3500 = vpop.f32.mrb[0].mxu0
  %v3501 = vadd.f32 %v3244, %v3500
  %3502 = vmatprep.mubr.f32.mxu0 %v2705
  %3503 = vmatmul.mubr.f32.gmra.mrb[0].mxu0 %v2704
  %v3504 = vpop.f32.mrb[0].mxu0
  %v3505 = vadd.f32 %v3248, %v3504
  %v3506 = vpop.f32.mrb[0].mxu0
  %v3507 = vadd.f32 %v3250, %v3506
  %3508 = vmatprep.mubr.f32.mxu0 %v2707
  %3509 = vmatmul.mubr.f32.gmra.mrb[0].mxu0 %v2706
  %v3510 = vpop.f32.mrb[0].mxu0
  %v3511 = vadd.f32 %v3254, %v3510
  %v3512 = vpop.f32.mrb[0].mxu0
  %v3513 = vadd.f32 %v3256, %v3512
  %3514 = vmatprep.mubr.f32.mxu0 %v2709
  %3515 = vmatmul.mubr.f32.gmra.mrb[0].mxu0 %v2708
  %v3516 = vpop.f32.mrb[0].mxu0
  %v3517 = vadd.f32 %v3260, %v3516
  %v3518 = vpop.f32.mrb[0].mxu0
  %v3519 = vadd.f32 %v3262, %v3518
  %3520 = vmatprep.mubr.f32.mxu0 %v2711
  %3521 = vmatmul.mubr.f32.gmra.mrb[0].mxu0 %v2710
  %v3522 = vpop.f32.mrb[0].mxu0
  %v3523 = vadd.f32 %v3266, %v3522
  %v3524 = vpop.f32.mrb[0].mxu0
  %v3525 = vadd.f32 %v3268, %v3524
  %3526 = vmatprep.mubr.f32.mxu0 %v2713
  %3527 = vmatmul.mubr.f32.gmra.mrb[0].mxu0 %v2712
  %v3528 = vpop.f32.mrb[0].mxu0
  %v3529 = vadd.f32 %v3272, %v3528
  %v3530 = vpop.f32.mrb[0].mxu0
  %v3531 = vadd.f32 %v3274, %v3530
  %3532 = vmatprep.mubr.f32.mxu0 %v2715
  %3533 = vmatmul.mubr.f32.gmra.mrb[0].mxu0 %v2714
  %v3534 = vpop.f32.mrb[0].mxu0
  %v3535 = vadd.f32 %v3278, %v3534
  %v3536 = vpop.f32.mrb[0].mxu0
  %v3537 = vadd.f32 %v3280, %v3536
  %3538 = vmatprep.mubr.f32.mxu0 %v2717
  %3539 = vmatmul.mubr.f32.gmra.mrb[0].mxu0 %v2716
  %v3540 = vpop.f32.mrb[0].mxu0
  %v3541 = vadd.f32 %v3284, %v3540
  %v3542 = vpop.f32.mrb[0].mxu0
  %v3543 = vadd.f32 %v3286, %v3542
  %3544 = vmatprep.mubr.f32.mxu0 %v2719
  %3545 = vmatmul.mubr.f32.gmra.mrb[0].mxu0 %v2718
  %v3546 = vpop.f32.mrb[0].mxu0
  %v3547 = vadd.f32 %v3290, %v3546
  %v3548 = vpop.f32.mrb[0].mxu0
  %v3549 = vadd.f32 %v3292, %v3548
  %3550 = vmatprep.mubr.f32.mxu0 %v2721
  %3551 = vmatmul.mubr.f32.gmra.mrb[0].mxu0 %v2720
  %v3552 = vpop.f32.mrb[0].mxu0
  %v3553 = vadd.f32 %v3296, %v3552
  %v3554 = vpop.f32.mrb[0].mxu0
  %v3555 = vadd.f32 %v3298, %v3554
  %3556 = vmatprep.mubr.f32.mxu0 %v2723
  %3557 = vmatmul.mubr.f32.gmra.mrb[0].mxu0 %v2722
  %v3558 = vpop.f32.mrb[0].mxu0
  %v3559 = vadd.f32 %v3302, %v3558
  %v3560 = vpop.f32.mrb[0].mxu0
  %v3561 = vadd.f32 %v3304, %v3560
  %3562 = vmatprep.mubr.f32.mxu0 %v2725
  %3563 = vmatmul.mubr.f32.gmra.mrb[0].mxu0 %v2724
  %v3564 = vpop.f32.mrb[0].mxu0
  %v3565 = vadd.f32 %v3308, %v3564
  %v3566 = vpop.f32.mrb[0].mxu0
  %v3567 = vadd.f32 %v3310, %v3566
  %3568 = vmatprep.mubr.f32.mxu0 %v2727
  %3569 = vmatmul.mubr.f32.gmra.mrb[0].mxu0 %v2726
  %v3570 = vpop.f32.mrb[0].mxu0
  %v3571 = vadd.f32 %v3314, %v3570
  %v3572 = vpop.f32.mrb[0].mxu0
  %v3573 = vadd.f32 %v3316, %v3572
  %3574 = vmatprep.mubr.f32.mxu0 %v2729
  %3575 = vmatmul.mubr.f32.gmra.mrb[0].mxu0 %v2728
  %v3576 = vpop.f32.mrb[0].mxu0
  %v3577 = vadd.f32 %v3320, %v3576
  %v3578 = vpop.f32.mrb[0].mxu0
  %v3579 = vadd.f32 %v3322, %v3578
  %3580 = vmatprep.mubr.f32.mxu0 %v2731
  %3581 = vmatmul.mubr.f32.gmra.mrb[0].mxu0 %v2730
  %v3582 = vpop.f32.mrb[0].mxu0
  %v3583 = vadd.f32 %v3326, %v3582
  %v3584 = vpop.f32.mrb[0].mxu0
  %v3585 = vadd.f32 %v3328, %v3584
  %3586 = vmatprep.mubr.f32.mxu0 %v2733
  %3587 = vmatmul.mubr.f32.gmra.mrb[0].mxu0 %v2732
  %v3588 = vpop.f32.mrb[0].mxu0
  %v3589 = vadd.f32 %v3332, %v3588
  %v3590 = vpop.f32.mrb[0].mxu0
  %v3591 = vadd.f32 %v3334, %v3590
  %3592 = vmatprep.mubr.f32.mxu0 %v2735
  %3593 = vmatmul.mubr.f32.gmra.mrb[0].mxu0 %v2734
  %v3594 = vpop.f32.mrb[0].mxu0
  %v3595 = vadd.f32 %v3338, %v3594
  %v3596 = vpop.f32.mrb[0].mxu0
  %v3597 = vadd.f32 %v3340, %v3596
  %3598 = vmatprep.mubr.f32.mxu0 %v2737
  %3599 = vmatmul.mubr.f32.gmra.mrb[0].mxu0 %v2736
  %v3600 = vpop.f32.mrb[0].mxu0
  %v3601 = vadd.f32 %v3344, %v3600
  %v3602 = vpop.f32.mrb[0].mxu0
  %v3603 = vadd.f32 %v3346, %v3602
  %3604 = vdwg.mxu0
  %s3605 = scalar_lea.vmem %s5, 1024
  %v3606 = vld [vmem:[%s3605] sm:$0xff]
  %v3607 = vld [vmem:[%s3605 + $0x8] sm:$0xff]
  %v3608 = vld [vmem:[%s3605 + $0x10] sm:$0xff]
  %v3609 = vld [vmem:[%s3605 + $0x18] sm:$0xff]
  %v3610 = vld [vmem:[%s3605 + $0x20] sm:$0xff]
  %v3611 = vld [vmem:[%s3605 + $0x28] sm:$0xff]
  %v3612 = vld [vmem:[%s3605 + $0x30] sm:$0xff]
  %v3613 = vld [vmem:[%s3605 + $0x38] sm:$0xff]
  %v3614 = vld [vmem:[%s3605 + $0x40] sm:$0xff]
  %v3615 = vld [vmem:[%s3605 + $0x48] sm:$0xff]
  %v3616 = vld [vmem:[%s3605 + $0x50] sm:$0xff]
  %v3617 = vld [vmem:[%s3605 + $0x58] sm:$0xff]
  %v3618 = vld [vmem:[%s3605 + $0x60] sm:$0xff]
  %v3619 = vld [vmem:[%s3605 + $0x68] sm:$0xff]
  %v3620 = vld [vmem:[%s3605 + $0x70] sm:$0xff]
  %v3621 = vld [vmem:[%s3605 + $0x78] sm:$0xff]
  %v3622 = vld [vmem:[%s3605 + $0x80] sm:$0xff]
  %v3623 = vld [vmem:[%s3605 + $0x88] sm:$0xff]
  %v3624 = vld [vmem:[%s3605 + $0x90] sm:$0xff]
  %v3625 = vld [vmem:[%s3605 + $0x98] sm:$0xff]
  %v3626 = vld [vmem:[%s3605 + $0xa0] sm:$0xff]
  %v3627 = vld [vmem:[%s3605 + $0xa8] sm:$0xff]
  %v3628 = vld [vmem:[%s3605 + $0xb0] sm:$0xff]
  %v3629 = vld [vmem:[%s3605 + $0xb8] sm:$0xff]
  %v3630 = vld [vmem:[%s3605 + $0xc0] sm:$0xff]
  %v3631 = vld [vmem:[%s3605 + $0xc8] sm:$0xff]
  %v3632 = vld [vmem:[%s3605 + $0xd0] sm:$0xff]
  %v3633 = vld [vmem:[%s3605 + $0xd8] sm:$0xff]
  %v3634 = vld [vmem:[%s3605 + $0xe0] sm:$0xff]
  %v3635 = vld [vmem:[%s3605 + $0xe8] sm:$0xff]
  %v3636 = vld [vmem:[%s3605 + $0xf0] sm:$0xff]
  %v3637 = vld [vmem:[%s3605 + $0xf8] sm:$0xff]
  %v3638 = vld [vmem:[%s3605 + $0x100] sm:$0xff]
  %v3639 = vld [vmem:[%s3605 + $0x108] sm:$0xff]
  %v3640 = vld [vmem:[%s3605 + $0x110] sm:$0xff]
  %v3641 = vld [vmem:[%s3605 + $0x118] sm:$0xff]
  %v3642 = vld [vmem:[%s3605 + $0x120] sm:$0xff]
  %v3643 = vld [vmem:[%s3605 + $0x128] sm:$0xff]
  %v3644 = vld [vmem:[%s3605 + $0x130] sm:$0xff]
  %v3645 = vld [vmem:[%s3605 + $0x138] sm:$0xff]
  %v3646 = vld [vmem:[%s3605 + $0x140] sm:$0xff]
  %v3647 = vld [vmem:[%s3605 + $0x148] sm:$0xff]
  %v3648 = vld [vmem:[%s3605 + $0x150] sm:$0xff]
  %v3649 = vld [vmem:[%s3605 + $0x158] sm:$0xff]
  %v3650 = vld [vmem:[%s3605 + $0x160] sm:$0xff]
  %v3651 = vld [vmem:[%s3605 + $0x168] sm:$0xff]
  %v3652 = vld [vmem:[%s3605 + $0x170] sm:$0xff]
  %v3653 = vld [vmem:[%s3605 + $0x178] sm:$0xff]
  %v3654 = vld [vmem:[%s3605 + $0x180] sm:$0xff]
  %v3655 = vld [vmem:[%s3605 + $0x188] sm:$0xff]
  %v3656 = vld [vmem:[%s3605 + $0x190] sm:$0xff]
  %v3657 = vld [vmem:[%s3605 + $0x198] sm:$0xff]
  %v3658 = vld [vmem:[%s3605 + $0x1a0] sm:$0xff]
  %v3659 = vld [vmem:[%s3605 + $0x1a8] sm:$0xff]
  %v3660 = vld [vmem:[%s3605 + $0x1b0] sm:$0xff]
  %v3661 = vld [vmem:[%s3605 + $0x1b8] sm:$0xff]
  %v3662 = vld [vmem:[%s3605 + $0x1c0] sm:$0xff]
  %v3663 = vld [vmem:[%s3605 + $0x1c8] sm:$0xff]
  %v3664 = vld [vmem:[%s3605 + $0x1d0] sm:$0xff]
  %v3665 = vld [vmem:[%s3605 + $0x1d8] sm:$0xff]
  %v3666 = vld [vmem:[%s3605 + $0x1e0] sm:$0xff]
  %v3667 = vld [vmem:[%s3605 + $0x1e8] sm:$0xff]
  %v3668 = vld [vmem:[%s3605 + $0x1f0] sm:$0xff]
  %v3669 = vld [vmem:[%s3605 + $0x1f8] sm:$0xff]
  %3670 = vrot.lane.b32.xlu0 %v2610, 126
  %v3671 = vpop.permute.xlu0 %3670
  %3672 = vrot.lane.b32.xlu0 %v2611, 126
  %v3673 = vpop.permute.xlu0 %3672
  %3674 = vrot.lane.b32.xlu0 %v2612, 126
  %v3675 = vpop.permute.xlu0 %3674
  %3676 = vrot.lane.b32.xlu0 %v2613, 126
  %v3677 = vpop.permute.xlu0 %3676
  %3678 = vrot.lane.b32.xlu0 %v2614, 126
  %v3679 = vpop.permute.xlu0 %3678
  %3680 = vrot.lane.b32.xlu0 %v2615, 126
  %v3681 = vpop.permute.xlu0 %3680
  %3682 = vrot.lane.b32.xlu0 %v2616, 126
  %v3683 = vpop.permute.xlu0 %3682
  %3684 = vrot.lane.b32.xlu0 %v2617, 126
  %v3685 = vpop.permute.xlu0 %3684
  %3686 = vrot.lane.b32.xlu0 %v2618, 126
  %v3687 = vpop.permute.xlu0 %3686
  %3688 = vrot.lane.b32.xlu0 %v2619, 126
  %v3689 = vpop.permute.xlu0 %3688
  %3690 = vrot.lane.b32.xlu0 %v2620, 126
  %v3691 = vpop.permute.xlu0 %3690
  %3692 = vrot.lane.b32.xlu0 %v2621, 126
  %v3693 = vpop.permute.xlu0 %3692
  %3694 = vrot.lane.b32.xlu0 %v2622, 126
  %v3695 = vpop.permute.xlu0 %3694
  %3696 = vrot.lane.b32.xlu0 %v2623, 126
  %v3697 = vpop.permute.xlu0 %3696
  %3698 = vrot.lane.b32.xlu0 %v2624, 126
  %v3699 = vpop.permute.xlu0 %3698
  %3700 = vrot.lane.b32.xlu0 %v2625, 126
  %v3701 = vpop.permute.xlu0 %3700
  %3702 = vrot.lane.b32.xlu0 %v2626, 126
  %v3703 = vpop.permute.xlu0 %3702
  %3704 = vrot.lane.b32.xlu0 %v2627, 126
  %v3705 = vpop.permute.xlu0 %3704
  %3706 = vrot.lane.b32.xlu0 %v2628, 126
  %v3707 = vpop.permute.xlu0 %3706
  %3708 = vrot.lane.b32.xlu0 %v2629, 126
  %v3709 = vpop.permute.xlu0 %3708
  %3710 = vrot.lane.b32.xlu0 %v2630, 126
  %v3711 = vpop.permute.xlu0 %3710
  %3712 = vrot.lane.b32.xlu0 %v2631, 126
  %v3713 = vpop.permute.xlu0 %3712
  %3714 = vrot.lane.b32.xlu0 %v2632, 126
  %v3715 = vpop.permute.xlu0 %3714
  %3716 = vrot.lane.b32.xlu0 %v2633, 126
  %v3717 = vpop.permute.xlu0 %3716
  %3718 = vrot.lane.b32.xlu0 %v2634, 126
  %v3719 = vpop.permute.xlu0 %3718
  %3720 = vrot.lane.b32.xlu0 %v2635, 126
  %v3721 = vpop.permute.xlu0 %3720
  %3722 = vrot.lane.b32.xlu0 %v2636, 126
  %v3723 = vpop.permute.xlu0 %3722
  %3724 = vrot.lane.b32.xlu0 %v2637, 126
  %v3725 = vpop.permute.xlu0 %3724
  %3726 = vrot.lane.b32.xlu0 %v2638, 126
  %v3727 = vpop.permute.xlu0 %3726
  %3728 = vrot.lane.b32.xlu0 %v2639, 126
  %v3729 = vpop.permute.xlu0 %3728
  %3730 = vrot.lane.b32.xlu0 %v2640, 126
  %v3731 = vpop.permute.xlu0 %3730
  %3732 = vrot.lane.b32.xlu0 %v2641, 126
  %v3733 = vpop.permute.xlu0 %3732
  %3734 = vrot.lane.b32.xlu0 %v2642, 126
  %v3735 = vpop.permute.xlu0 %3734
  %3736 = vrot.lane.b32.xlu0 %v2643, 126
  %v3737 = vpop.permute.xlu0 %3736
  %3738 = vrot.lane.b32.xlu0 %v2644, 126
  %v3739 = vpop.permute.xlu0 %3738
  %3740 = vrot.lane.b32.xlu0 %v2645, 126
  %v3741 = vpop.permute.xlu0 %3740
  %3742 = vrot.lane.b32.xlu0 %v2646, 126
  %v3743 = vpop.permute.xlu0 %3742
  %3744 = vrot.lane.b32.xlu0 %v2647, 126
  %v3745 = vpop.permute.xlu0 %3744
  %3746 = vrot.lane.b32.xlu0 %v2648, 126
  %v3747 = vpop.permute.xlu0 %3746
  %3748 = vrot.lane.b32.xlu0 %v2649, 126
  %v3749 = vpop.permute.xlu0 %3748
  %3750 = vrot.lane.b32.xlu0 %v2650, 126
  %v3751 = vpop.permute.xlu0 %3750
  %3752 = vrot.lane.b32.xlu0 %v2651, 126
  %v3753 = vpop.permute.xlu0 %3752
  %3754 = vrot.lane.b32.xlu0 %v2652, 126
  %v3755 = vpop.permute.xlu0 %3754
  %3756 = vrot.lane.b32.xlu0 %v2653, 126
  %v3757 = vpop.permute.xlu0 %3756
  %3758 = vrot.lane.b32.xlu0 %v2654, 126
  %v3759 = vpop.permute.xlu0 %3758
  %3760 = vrot.lane.b32.xlu0 %v2655, 126
  %v3761 = vpop.permute.xlu0 %3760
  %3762 = vrot.lane.b32.xlu0 %v2656, 126
  %v3763 = vpop.permute.xlu0 %3762
  %3764 = vrot.lane.b32.xlu0 %v2657, 126
  %v3765 = vpop.permute.xlu0 %3764
  %3766 = vrot.lane.b32.xlu0 %v2658, 126
  %v3767 = vpop.permute.xlu0 %3766
  %3768 = vrot.lane.b32.xlu0 %v2659, 126
  %v3769 = vpop.permute.xlu0 %3768
  %3770 = vrot.lane.b32.xlu0 %v2660, 126
  %v3771 = vpop.permute.xlu0 %3770
  %3772 = vrot.lane.b32.xlu0 %v2661, 126
  %v3773 = vpop.permute.xlu0 %3772
  %3774 = vrot.lane.b32.xlu0 %v2662, 126
  %v3775 = vpop.permute.xlu0 %3774
  %3776 = vrot.lane.b32.xlu0 %v2663, 126
  %v3777 = vpop.permute.xlu0 %3776
  %3778 = vrot.lane.b32.xlu0 %v2664, 126
  %v3779 = vpop.permute.xlu0 %3778
  %3780 = vrot.lane.b32.xlu0 %v2665, 126
  %v3781 = vpop.permute.xlu0 %3780
  %3782 = vrot.lane.b32.xlu0 %v2666, 126
  %v3783 = vpop.permute.xlu0 %3782
  %3784 = vrot.lane.b32.xlu0 %v2667, 126
  %v3785 = vpop.permute.xlu0 %3784
  %3786 = vrot.lane.b32.xlu0 %v2668, 126
  %v3787 = vpop.permute.xlu0 %3786
  %3788 = vrot.lane.b32.xlu0 %v2669, 126
  %v3789 = vpop.permute.xlu0 %3788
  %3790 = vrot.lane.b32.xlu0 %v2670, 126
  %v3791 = vpop.permute.xlu0 %3790
  %3792 = vrot.lane.b32.xlu0 %v2671, 126
  %v3793 = vpop.permute.xlu0 %3792
  %3794 = vrot.lane.b32.xlu0 %v2672, 126
  %v3795 = vpop.permute.xlu0 %3794
  %3796 = vrot.lane.b32.xlu0 %v2673, 126
  %v3797 = vpop.permute.xlu0 %3796
  %v3798 = vsel %vm917, %v3671, %v3673
  %v3799 = vsel %vm917, %v3675, %v3677
  %v3800 = vsel %vm917, %v3679, %v3681
  %v3801 = vsel %vm917, %v3683, %v3685
  %v3802 = vsel %vm917, %v3687, %v3689
  %v3803 = vsel %vm917, %v3691, %v3693
  %v3804 = vsel %vm917, %v3695, %v3697
  %v3805 = vsel %vm917, %v3699, %v3701
  %v3806 = vsel %vm917, %v3703, %v3705
  %v3807 = vsel %vm917, %v3707, %v3709
  %v3808 = vsel %vm917, %v3711, %v3713
  %v3809 = vsel %vm917, %v3715, %v3717
  %v3810 = vsel %vm917, %v3719, %v3721
  %v3811 = vsel %vm917, %v3723, %v3725
  %v3812 = vsel %vm917, %v3727, %v3729
  %v3813 = vsel %vm917, %v3731, %v3733
  %v3814 = vsel %vm917, %v3735, %v3737
  %v3815 = vsel %vm917, %v3739, %v3741
  %v3816 = vsel %vm917, %v3743, %v3745
  %v3817 = vsel %vm917, %v3747, %v3749
  %v3818 = vsel %vm917, %v3751, %v3753
  %v3819 = vsel %vm917, %v3755, %v3757
  %v3820 = vsel %vm917, %v3759, %v3761
  %v3821 = vsel %vm917, %v3763, %v3765
  %v3822 = vsel %vm917, %v3767, %v3769
  %v3823 = vsel %vm917, %v3771, %v3773
  %v3824 = vsel %vm917, %v3775, %v3777
  %v3825 = vsel %vm917, %v3779, %v3781
  %v3826 = vsel %vm917, %v3783, %v3785
  %v3827 = vsel %vm917, %v3787, %v3789
  %v3828 = vsel %vm917, %v3791, %v3793
  %v3829 = vsel %vm917, %v3795, %v3797
  %3894 = vmatprep.subr.mxu0 %v3673
  %3895 = vmatpush1.msra.mxu0 %v3798
  %3896 = vmatprep.subr.mxu0 %v3677
  %3897 = vmatpush1.msra.mxu0 %v3799
  %3898 = vmatprep.subr.mxu0 %v3681
  %3899 = vmatpush1.msra.mxu0 %v3800
  %3900 = vmatprep.subr.mxu0 %v3685
  %3901 = vmatpush1.msra.mxu0 %v3801
  %3902 = vmatprep.subr.mxu0 %v3689
  %3903 = vmatpush1.msra.mxu0 %v3802
  %3904 = vmatprep.subr.mxu0 %v3693
  %3905 = vmatpush1.msra.mxu0 %v3803
  %3906 = vmatprep.subr.mxu0 %v3697
  %3907 = vmatpush1.msra.mxu0 %v3804
  %3908 = vmatprep.subr.mxu0 %v3701
  %3909 = vmatpush1.msra.mxu0 %v3805
  %3910 = vmatprep.subr.mxu0 %v3705
  %3911 = vmatpush1.msra.mxu0 %v3806
  %3912 = vmatprep.subr.mxu0 %v3709
  %3913 = vmatpush1.msra.mxu0 %v3807
  %3914 = vmatprep.subr.mxu0 %v3713
  %3915 = vmatpush1.msra.mxu0 %v3808
  %3916 = vmatprep.subr.mxu0 %v3717
  %3917 = vmatpush1.msra.mxu0 %v3809
  %3918 = vmatprep.subr.mxu0 %v3721
  %3919 = vmatpush1.msra.mxu0 %v3810
  %3920 = vmatprep.subr.mxu0 %v3725
  %3921 = vmatpush1.msra.mxu0 %v3811
  %3922 = vmatprep.subr.mxu0 %v3729
  %3923 = vmatpush1.msra.mxu0 %v3812
  %3924 = vmatprep.subr.mxu0 %v3733
  %3925 = vmatpush1.msra.mxu0 %v3813
  %3926 = vmatprep.subr.mxu0 %v3737
  %3927 = vmatpush1.msra.mxu0 %v3814
  %3928 = vmatprep.subr.mxu0 %v3741
  %3929 = vmatpush1.msra.mxu0 %v3815
  %3930 = vmatprep.subr.mxu0 %v3745
  %3931 = vmatpush1.msra.mxu0 %v3816
  %3932 = vmatprep.subr.mxu0 %v3749
  %3933 = vmatpush1.msra.mxu0 %v3817
  %3934 = vmatprep.subr.mxu0 %v3753
  %3935 = vmatpush1.msra.mxu0 %v3818
  %3936 = vmatprep.subr.mxu0 %v3757
  %3937 = vmatpush1.msra.mxu0 %v3819
  %3938 = vmatprep.subr.mxu0 %v3761
  %3939 = vmatpush1.msra.mxu0 %v3820
  %3940 = vmatprep.subr.mxu0 %v3765
  %3941 = vmatpush1.msra.mxu0 %v3821
  %3942 = vmatprep.subr.mxu0 %v3769
  %3943 = vmatpush1.msra.mxu0 %v3822
  %3944 = vmatprep.subr.mxu0 %v3773
  %3945 = vmatpush1.msra.mxu0 %v3823
  %3946 = vmatprep.subr.mxu0 %v3777
  %3947 = vmatpush1.msra.mxu0 %v3824
  %3948 = vmatprep.subr.mxu0 %v3781
  %3949 = vmatpush1.msra.mxu0 %v3825
  %3950 = vmatprep.subr.mxu0 %v3785
  %3951 = vmatpush1.msra.mxu0 %v3826
  %3952 = vmatprep.subr.mxu0 %v3789
  %3953 = vmatpush1.msra.mxu0 %v3827
  %3954 = vmatprep.subr.mxu0 %v3793
  %3955 = vmatpush1.msra.mxu0 %v3828
  %3956 = vmatprep.subr.mxu0 %v3797
  %3957 = vmatpush1.msra.mxu0 %v3829
  %3958 = vmatprep.mubr.f32.mxu0 %v3607
  %3959 = vmatmul.mubr.f32.gmra.mrb[0].mxu0 %v3606
  %v3960 = vpop.f32.mrb[0].mxu0
  %v3961 = vadd.f32 0.0, %v3960
  %v3962 = vpop.f32.mrb[0].mxu0
  %v3963 = vadd.f32 0.0, %v3962
  %3964 = vmatprep.mubr.f32.mxu0 %v3609
  %3965 = vmatmul.mubr.f32.gmra.mrb[0].mxu0 %v3608
  %v3966 = vpop.f32.mrb[0].mxu0
  %v3967 = vadd.f32 0.0, %v3966
  %v3968 = vpop.f32.mrb[0].mxu0
  %v3969 = vadd.f32 0.0, %v3968
  %3970 = vmatprep.mubr.f32.mxu0 %v3611
  %3971 = vmatmul.mubr.f32.gmra.mrb[0].mxu0 %v3610
  %v3972 = vpop.f32.mrb[0].mxu0
  %v3973 = vadd.f32 0.0, %v3972
  %v3974 = vpop.f32.mrb[0].mxu0
  %v3975 = vadd.f32 0.0, %v3974
  %3976 = vmatprep.mubr.f32.mxu0 %v3613
  %3977 = vmatmul.mubr.f32.gmra.mrb[0].mxu0 %v3612
  %v3978 = vpop.f32.mrb[0].mxu0
  %v3979 = vadd.f32 0.0, %v3978
  %v3980 = vpop.f32.mrb[0].mxu0
  %v3981 = vadd.f32 0.0, %v3980
  %3982 = vmatprep.mubr.f32.mxu0 %v3615
  %3983 = vmatmul.mubr.f32.gmra.mrb[0].mxu0 %v3614
  %v3984 = vpop.f32.mrb[0].mxu0
  %v3985 = vadd.f32 0.0, %v3984
  %v3986 = vpop.f32.mrb[0].mxu0
  %v3987 = vadd.f32 0.0, %v3986
  %3988 = vmatprep.mubr.f32.mxu0 %v3617
  %3989 = vmatmul.mubr.f32.gmra.mrb[0].mxu0 %v3616
  %v3990 = vpop.f32.mrb[0].mxu0
  %v3991 = vadd.f32 0.0, %v3990
  %v3992 = vpop.f32.mrb[0].mxu0
  %v3993 = vadd.f32 0.0, %v3992
  %3994 = vmatprep.mubr.f32.mxu0 %v3619
  %3995 = vmatmul.mubr.f32.gmra.mrb[0].mxu0 %v3618
  %v3996 = vpop.f32.mrb[0].mxu0
  %v3997 = vadd.f32 0.0, %v3996
  %v3998 = vpop.f32.mrb[0].mxu0
  %v3999 = vadd.f32 0.0, %v3998
  %4000 = vmatprep.mubr.f32.mxu0 %v3621
  %4001 = vmatmul.mubr.f32.gmra.mrb[0].mxu0 %v3620
  %v4002 = vpop.f32.mrb[0].mxu0
  %v4003 = vadd.f32 0.0, %v4002
  %v4004 = vpop.f32.mrb[0].mxu0
  %v4005 = vadd.f32 0.0, %v4004
  %4006 = vmatprep.mubr.f32.mxu0 %v3623
  %4007 = vmatmul.mubr.f32.gmra.mrb[0].mxu0 %v3622
  %v4008 = vpop.f32.mrb[0].mxu0
  %v4009 = vadd.f32 0.0, %v4008
  %v4010 = vpop.f32.mrb[0].mxu0
  %v4011 = vadd.f32 0.0, %v4010
  %4012 = vmatprep.mubr.f32.mxu0 %v3625
  %4013 = vmatmul.mubr.f32.gmra.mrb[0].mxu0 %v3624
  %v4014 = vpop.f32.mrb[0].mxu0
  %v4015 = vadd.f32 0.0, %v4014
  %v4016 = vpop.f32.mrb[0].mxu0
  %v4017 = vadd.f32 0.0, %v4016
  %4018 = vmatprep.mubr.f32.mxu0 %v3627
  %4019 = vmatmul.mubr.f32.gmra.mrb[0].mxu0 %v3626
  %v4020 = vpop.f32.mrb[0].mxu0
  %v4021 = vadd.f32 0.0, %v4020
  %v4022 = vpop.f32.mrb[0].mxu0
  %v4023 = vadd.f32 0.0, %v4022
  %4024 = vmatprep.mubr.f32.mxu0 %v3629
  %4025 = vmatmul.mubr.f32.gmra.mrb[0].mxu0 %v3628
  %v4026 = vpop.f32.mrb[0].mxu0
  %v4027 = vadd.f32 0.0, %v4026
  %v4028 = vpop.f32.mrb[0].mxu0
  %v4029 = vadd.f32 0.0, %v4028
  %4030 = vmatprep.mubr.f32.mxu0 %v3631
  %4031 = vmatmul.mubr.f32.gmra.mrb[0].mxu0 %v3630
  %v4032 = vpop.f32.mrb[0].mxu0
  %v4033 = vadd.f32 0.0, %v4032
  %v4034 = vpop.f32.mrb[0].mxu0
  %v4035 = vadd.f32 0.0, %v4034
  %4036 = vmatprep.mubr.f32.mxu0 %v3633
  %4037 = vmatmul.mubr.f32.gmra.mrb[0].mxu0 %v3632
  %v4038 = vpop.f32.mrb[0].mxu0
  %v4039 = vadd.f32 0.0, %v4038
  %v4040 = vpop.f32.mrb[0].mxu0
  %v4041 = vadd.f32 0.0, %v4040
  %4042 = vmatprep.mubr.f32.mxu0 %v3635
  %4043 = vmatmul.mubr.f32.gmra.mrb[0].mxu0 %v3634
  %v4044 = vpop.f32.mrb[0].mxu0
  %v4045 = vadd.f32 0.0, %v4044
  %v4046 = vpop.f32.mrb[0].mxu0
  %v4047 = vadd.f32 0.0, %v4046
  %4048 = vmatprep.mubr.f32.mxu0 %v3637
  %4049 = vmatmul.mubr.f32.gmra.mrb[0].mxu0 %v3636
  %v4050 = vpop.f32.mrb[0].mxu0
  %v4051 = vadd.f32 0.0, %v4050
  %v4052 = vpop.f32.mrb[0].mxu0
  %v4053 = vadd.f32 0.0, %v4052
  %4054 = vmatprep.mubr.f32.mxu0 %v3639
  %4055 = vmatmul.mubr.f32.gmra.mrb[0].mxu0 %v3638
  %v4056 = vpop.f32.mrb[0].mxu0
  %v4057 = vadd.f32 0.0, %v4056
  %v4058 = vpop.f32.mrb[0].mxu0
  %v4059 = vadd.f32 0.0, %v4058
  %4060 = vmatprep.mubr.f32.mxu0 %v3641
  %4061 = vmatmul.mubr.f32.gmra.mrb[0].mxu0 %v3640
  %v4062 = vpop.f32.mrb[0].mxu0
  %v4063 = vadd.f32 0.0, %v4062
  %v4064 = vpop.f32.mrb[0].mxu0
  %v4065 = vadd.f32 0.0, %v4064
  %4066 = vmatprep.mubr.f32.mxu0 %v3643
  %4067 = vmatmul.mubr.f32.gmra.mrb[0].mxu0 %v3642
  %v4068 = vpop.f32.mrb[0].mxu0
  %v4069 = vadd.f32 0.0, %v4068
  %v4070 = vpop.f32.mrb[0].mxu0
  %v4071 = vadd.f32 0.0, %v4070
  %4072 = vmatprep.mubr.f32.mxu0 %v3645
  %4073 = vmatmul.mubr.f32.gmra.mrb[0].mxu0 %v3644
  %v4074 = vpop.f32.mrb[0].mxu0
  %v4075 = vadd.f32 0.0, %v4074
  %v4076 = vpop.f32.mrb[0].mxu0
  %v4077 = vadd.f32 0.0, %v4076
  %4078 = vmatprep.mubr.f32.mxu0 %v3647
  %4079 = vmatmul.mubr.f32.gmra.mrb[0].mxu0 %v3646
  %v4080 = vpop.f32.mrb[0].mxu0
  %v4081 = vadd.f32 0.0, %v4080
  %v4082 = vpop.f32.mrb[0].mxu0
  %v4083 = vadd.f32 0.0, %v4082
  %4084 = vmatprep.mubr.f32.mxu0 %v3649
  %4085 = vmatmul.mubr.f32.gmra.mrb[0].mxu0 %v3648
  %v4086 = vpop.f32.mrb[0].mxu0
  %v4087 = vadd.f32 0.0, %v4086
  %v4088 = vpop.f32.mrb[0].mxu0
  %v4089 = vadd.f32 0.0, %v4088
  %4090 = vmatprep.mubr.f32.mxu0 %v3651
  %4091 = vmatmul.mubr.f32.gmra.mrb[0].mxu0 %v3650
  %v4092 = vpop.f32.mrb[0].mxu0
  %v4093 = vadd.f32 0.0, %v4092
  %v4094 = vpop.f32.mrb[0].mxu0
  %v4095 = vadd.f32 0.0, %v4094
  %4096 = vmatprep.mubr.f32.mxu0 %v3653
  %4097 = vmatmul.mubr.f32.gmra.mrb[0].mxu0 %v3652
  %v4098 = vpop.f32.mrb[0].mxu0
  %v4099 = vadd.f32 0.0, %v4098
  %v4100 = vpop.f32.mrb[0].mxu0
  %v4101 = vadd.f32 0.0, %v4100
  %4102 = vmatprep.mubr.f32.mxu0 %v3655
  %4103 = vmatmul.mubr.f32.gmra.mrb[0].mxu0 %v3654
  %v4104 = vpop.f32.mrb[0].mxu0
  %v4105 = vadd.f32 0.0, %v4104
  %v4106 = vpop.f32.mrb[0].mxu0
  %v4107 = vadd.f32 0.0, %v4106
  %4108 = vmatprep.mubr.f32.mxu0 %v3657
  %4109 = vmatmul.mubr.f32.gmra.mrb[0].mxu0 %v3656
  %v4110 = vpop.f32.mrb[0].mxu0
  %v4111 = vadd.f32 0.0, %v4110
  %v4112 = vpop.f32.mrb[0].mxu0
  %v4113 = vadd.f32 0.0, %v4112
  %4114 = vmatprep.mubr.f32.mxu0 %v3659
  %4115 = vmatmul.mubr.f32.gmra.mrb[0].mxu0 %v3658
  %v4116 = vpop.f32.mrb[0].mxu0
  %v4117 = vadd.f32 0.0, %v4116
  %v4118 = vpop.f32.mrb[0].mxu0
  %v4119 = vadd.f32 0.0, %v4118
  %4120 = vmatprep.mubr.f32.mxu0 %v3661
  %4121 = vmatmul.mubr.f32.gmra.mrb[0].mxu0 %v3660
  %v4122 = vpop.f32.mrb[0].mxu0
  %v4123 = vadd.f32 0.0, %v4122
  %v4124 = vpop.f32.mrb[0].mxu0
  %v4125 = vadd.f32 0.0, %v4124
  %4126 = vmatprep.mubr.f32.mxu0 %v3663
  %4127 = vmatmul.mubr.f32.gmra.mrb[0].mxu0 %v3662
  %v4128 = vpop.f32.mrb[0].mxu0
  %v4129 = vadd.f32 0.0, %v4128
  %v4130 = vpop.f32.mrb[0].mxu0
  %v4131 = vadd.f32 0.0, %v4130
  %4132 = vmatprep.mubr.f32.mxu0 %v3665
  %4133 = vmatmul.mubr.f32.gmra.mrb[0].mxu0 %v3664
  %v4134 = vpop.f32.mrb[0].mxu0
  %v4135 = vadd.f32 0.0, %v4134
  %v4136 = vpop.f32.mrb[0].mxu0
  %v4137 = vadd.f32 0.0, %v4136
  %4138 = vmatprep.mubr.f32.mxu0 %v3667
  %4139 = vmatmul.mubr.f32.gmra.mrb[0].mxu0 %v3666
  %v4140 = vpop.f32.mrb[0].mxu0
  %v4141 = vadd.f32 0.0, %v4140
  %v4142 = vpop.f32.mrb[0].mxu0
  %v4143 = vadd.f32 0.0, %v4142
  %4144 = vmatprep.mubr.f32.mxu0 %v3669
  %4145 = vmatmul.mubr.f32.gmra.mrb[0].mxu0 %v3668
  %v4146 = vpop.f32.mrb[0].mxu0
  %v4147 = vadd.f32 0.0, %v4146
  %v4148 = vpop.f32.mrb[0].mxu0
  %v4149 = vadd.f32 0.0, %v4148
  %4150 = vdwg.mxu0
  %v4151 = vadd.f32 %v3415, %v3961
  %v4152 = vadd.f32 %v3417, %v3963
  %v4153 = vadd.f32 %v3421, %v3967
  %v4154 = vadd.f32 %v3423, %v3969
  %v4155 = vadd.f32 %v3427, %v3973
  %v4156 = vadd.f32 %v3429, %v3975
  %v4157 = vadd.f32 %v3433, %v3979
  %v4158 = vadd.f32 %v3435, %v3981
  %v4159 = vadd.f32 %v3439, %v3985
  %v4160 = vadd.f32 %v3441, %v3987
  %v4161 = vadd.f32 %v3445, %v3991
  %v4162 = vadd.f32 %v3447, %v3993
  %v4163 = vadd.f32 %v3451, %v3997
  %v4164 = vadd.f32 %v3453, %v3999
  %v4165 = vadd.f32 %v3457, %v4003
  %v4166 = vadd.f32 %v3459, %v4005
  %v4167 = vadd.f32 %v3463, %v4009
  %v4168 = vadd.f32 %v3465, %v4011
  %v4169 = vadd.f32 %v3469, %v4015
  %v4170 = vadd.f32 %v3471, %v4017
  %v4171 = vadd.f32 %v3475, %v4021
  %v4172 = vadd.f32 %v3477, %v4023
  %v4173 = vadd.f32 %v3481, %v4027
  %v4174 = vadd.f32 %v3483, %v4029
  %v4175 = vadd.f32 %v3487, %v4033
  %v4176 = vadd.f32 %v3489, %v4035
  %v4177 = vadd.f32 %v3493, %v4039
  %v4178 = vadd.f32 %v3495, %v4041
  %v4179 = vadd.f32 %v3499, %v4045
  %v4180 = vadd.f32 %v3501, %v4047
  %v4181 = vadd.f32 %v3505, %v4051
  %v4182 = vadd.f32 %v3507, %v4053
  %v4183 = vadd.f32 %v3511, %v4057
  %v4184 = vadd.f32 %v3513, %v4059
  %v4185 = vadd.f32 %v3517, %v4063
  %v4186 = vadd.f32 %v3519, %v4065
  %v4187 = vadd.f32 %v3523, %v4069
  %v4188 = vadd.f32 %v3525, %v4071
  %v4189 = vadd.f32 %v3529, %v4075
  %v4190 = vadd.f32 %v3531, %v4077
  %v4191 = vadd.f32 %v3535, %v4081
  %v4192 = vadd.f32 %v3537, %v4083
  %v4193 = vadd.f32 %v3541, %v4087
  %v4194 = vadd.f32 %v3543, %v4089
  %v4195 = vadd.f32 %v3547, %v4093
  %v4196 = vadd.f32 %v3549, %v4095
  %v4197 = vadd.f32 %v3553, %v4099
  %v4198 = vadd.f32 %v3555, %v4101
  %v4199 = vadd.f32 %v3559, %v4105
  %v4200 = vadd.f32 %v3561, %v4107
  %v4201 = vadd.f32 %v3565, %v4111
  %v4202 = vadd.f32 %v3567, %v4113
  %v4203 = vadd.f32 %v3571, %v4117
  %v4204 = vadd.f32 %v3573, %v4119
  %v4205 = vadd.f32 %v3577, %v4123
  %v4206 = vadd.f32 %v3579, %v4125
  %v4207 = vadd.f32 %v3583, %v4129
  %v4208 = vadd.f32 %v3585, %v4131
  %v4209 = vadd.f32 %v3589, %v4135
  %v4210 = vadd.f32 %v3591, %v4137
  %v4211 = vadd.f32 %v3595, %v4141
  %v4212 = vadd.f32 %v3597, %v4143
  %v4213 = vadd.f32 %v3601, %v4147
  %v4214 = vadd.f32 %v3603, %v4149
  %v4215 = vld [vmem:[%s6] sm:$0xff]
  %v4216 = vld [vmem:[%s6 + $0x8] sm:$0xff]
  %v4217 = vld [vmem:[%s6 + $0x10] sm:$0xff]
  %v4218 = vld [vmem:[%s6 + $0x18] sm:$0xff]
  %v4219 = vld [vmem:[%s6 + $0x20] sm:$0xff]
  %v4220 = vld [vmem:[%s6 + $0x28] sm:$0xff]
  %v4221 = vld [vmem:[%s6 + $0x30] sm:$0xff]
  %v4222 = vld [vmem:[%s6 + $0x38] sm:$0xff]
  %v4223 = vld [vmem:[%s6 + $0x40] sm:$0xff]
  %v4224 = vld [vmem:[%s6 + $0x48] sm:$0xff]
  %v4225 = vld [vmem:[%s6 + $0x50] sm:$0xff]
  %v4226 = vld [vmem:[%s6 + $0x58] sm:$0xff]
  %v4227 = vld [vmem:[%s6 + $0x60] sm:$0xff]
  %v4228 = vld [vmem:[%s6 + $0x68] sm:$0xff]
  %v4229 = vld [vmem:[%s6 + $0x70] sm:$0xff]
  %v4230 = vld [vmem:[%s6 + $0x78] sm:$0xff]
  %v4231 = vld [vmem:[%s6 + $0x80] sm:$0xff]
  %v4232 = vld [vmem:[%s6 + $0x88] sm:$0xff]
  %v4233 = vld [vmem:[%s6 + $0x90] sm:$0xff]
  %v4234 = vld [vmem:[%s6 + $0x98] sm:$0xff]
  %v4235 = vld [vmem:[%s6 + $0xa0] sm:$0xff]
  %v4236 = vld [vmem:[%s6 + $0xa8] sm:$0xff]
  %v4237 = vld [vmem:[%s6 + $0xb0] sm:$0xff]
  %v4238 = vld [vmem:[%s6 + $0xb8] sm:$0xff]
  %v4239 = vld [vmem:[%s6 + $0xc0] sm:$0xff]
  %v4240 = vld [vmem:[%s6 + $0xc8] sm:$0xff]
  %v4241 = vld [vmem:[%s6 + $0xd0] sm:$0xff]
  %v4242 = vld [vmem:[%s6 + $0xd8] sm:$0xff]
  %v4243 = vld [vmem:[%s6 + $0xe0] sm:$0xff]
  %v4244 = vld [vmem:[%s6 + $0xe8] sm:$0xff]
  %v4245 = vld [vmem:[%s6 + $0xf0] sm:$0xff]
  %v4246 = vld [vmem:[%s6 + $0xf8] sm:$0xff]
  %4248 = vset.pattern.permute.xlu0 0
  %4249 = vperm.xlu0 %4248, %v4215
  %v4250 = vpop.permute.xlu0 %4249
  %4253 = vset.pattern.permute.xlu0 0
  %4254 = vperm.xlu0 %4253, %v4216
  %v4255 = vpop.permute.xlu0 %4254
  %4258 = vset.pattern.permute.xlu0 0
  %4259 = vperm.xlu0 %4258, %v4217
  %v4260 = vpop.permute.xlu0 %4259
  %4263 = vset.pattern.permute.xlu0 0
  %4264 = vperm.xlu0 %4263, %v4218
  %v4265 = vpop.permute.xlu0 %4264
  %4268 = vset.pattern.permute.xlu0 0
  %4269 = vperm.xlu0 %4268, %v4219
  %v4270 = vpop.permute.xlu0 %4269
  %4273 = vset.pattern.permute.xlu0 0
  %4274 = vperm.xlu0 %4273, %v4220
  %v4275 = vpop.permute.xlu0 %4274
  %4278 = vset.pattern.permute.xlu0 0
  %4279 = vperm.xlu0 %4278, %v4221
  %v4280 = vpop.permute.xlu0 %4279
  %4283 = vset.pattern.permute.xlu0 0
  %4284 = vperm.xlu0 %4283, %v4222
  %v4285 = vpop.permute.xlu0 %4284
  %4288 = vset.pattern.permute.xlu0 0
  %4289 = vperm.xlu0 %4288, %v4223
  %v4290 = vpop.permute.xlu0 %4289
  %4293 = vset.pattern.permute.xlu0 0
  %4294 = vperm.xlu0 %4293, %v4224
  %v4295 = vpop.permute.xlu0 %4294
  %4298 = vset.pattern.permute.xlu0 0
  %4299 = vperm.xlu0 %4298, %v4225
  %v4300 = vpop.permute.xlu0 %4299
  %4303 = vset.pattern.permute.xlu0 0
  %4304 = vperm.xlu0 %4303, %v4226
  %v4305 = vpop.permute.xlu0 %4304
  %4308 = vset.pattern.permute.xlu0 0
  %4309 = vperm.xlu0 %4308, %v4227
  %v4310 = vpop.permute.xlu0 %4309
  %4313 = vset.pattern.permute.xlu0 0
  %4314 = vperm.xlu0 %4313, %v4228
  %v4315 = vpop.permute.xlu0 %4314
  %4318 = vset.pattern.permute.xlu0 0
  %4319 = vperm.xlu0 %4318, %v4229
  %v4320 = vpop.permute.xlu0 %4319
  %4323 = vset.pattern.permute.xlu0 0
  %4324 = vperm.xlu0 %4323, %v4230
  %v4325 = vpop.permute.xlu0 %4324
  %4328 = vset.pattern.permute.xlu0 0
  %4329 = vperm.xlu0 %4328, %v4231
  %v4330 = vpop.permute.xlu0 %4329
  %4333 = vset.pattern.permute.xlu0 0
  %4334 = vperm.xlu0 %4333, %v4232
  %v4335 = vpop.permute.xlu0 %4334
  %4338 = vset.pattern.permute.xlu0 0
  %4339 = vperm.xlu0 %4338, %v4233
  %v4340 = vpop.permute.xlu0 %4339
  %4343 = vset.pattern.permute.xlu0 0
  %4344 = vperm.xlu0 %4343, %v4234
  %v4345 = vpop.permute.xlu0 %4344
  %4348 = vset.pattern.permute.xlu0 0
  %4349 = vperm.xlu0 %4348, %v4235
  %v4350 = vpop.permute.xlu0 %4349
  %4353 = vset.pattern.permute.xlu0 0
  %4354 = vperm.xlu0 %4353, %v4236
  %v4355 = vpop.permute.xlu0 %4354
  %4358 = vset.pattern.permute.xlu0 0
  %4359 = vperm.xlu0 %4358, %v4237
  %v4360 = vpop.permute.xlu0 %4359
  %4363 = vset.pattern.permute.xlu0 0
  %4364 = vperm.xlu0 %4363, %v4238
  %v4365 = vpop.permute.xlu0 %4364
  %4368 = vset.pattern.permute.xlu0 0
  %4369 = vperm.xlu0 %4368, %v4239
  %v4370 = vpop.permute.xlu0 %4369
  %4373 = vset.pattern.permute.xlu0 0
  %4374 = vperm.xlu0 %4373, %v4240
  %v4375 = vpop.permute.xlu0 %4374
  %4378 = vset.pattern.permute.xlu0 0
  %4379 = vperm.xlu0 %4378, %v4241
  %v4380 = vpop.permute.xlu0 %4379
  %4383 = vset.pattern.permute.xlu0 0
  %4384 = vperm.xlu0 %4383, %v4242
  %v4385 = vpop.permute.xlu0 %4384
  %4388 = vset.pattern.permute.xlu0 0
  %4389 = vperm.xlu0 %4388, %v4243
  %v4390 = vpop.permute.xlu0 %4389
  %4393 = vset.pattern.permute.xlu0 0
  %4394 = vperm.xlu0 %4393, %v4244
  %v4395 = vpop.permute.xlu0 %4394
  %4398 = vset.pattern.permute.xlu0 0
  %4399 = vperm.xlu0 %4398, %v4245
  %v4400 = vpop.permute.xlu0 %4399
  %4403 = vset.pattern.permute.xlu0 0
  %4404 = vperm.xlu0 %4403, %v4246
  %v4405 = vpop.permute.xlu0 %4404
  %v4407 = vadd.f32 %v4151, %v4250
  %v4408 = vadd.f32 %v4152, %v4250
  %v4409 = vadd.f32 %v4153, %v4255
  %v4410 = vadd.f32 %v4154, %v4255
  %v4411 = vadd.f32 %v4155, %v4260
  %v4412 = vadd.f32 %v4156, %v4260
  %v4413 = vadd.f32 %v4157, %v4265
  %v4414 = vadd.f32 %v4158, %v4265
  %v4415 = vadd.f32 %v4159, %v4270
  %v4416 = vadd.f32 %v4160, %v4270
  %v4417 = vadd.f32 %v4161, %v4275
  %v4418 = vadd.f32 %v4162, %v4275
  %v4419 = vadd.f32 %v4163, %v4280
  %v4420 = vadd.f32 %v4164, %v4280
  %v4421 = vadd.f32 %v4165, %v4285
  %v4422 = vadd.f32 %v4166, %v4285
  %v4423 = vadd.f32 %v4167, %v4290
  %v4424 = vadd.f32 %v4168, %v4290
  %v4425 = vadd.f32 %v4169, %v4295
  %v4426 = vadd.f32 %v4170, %v4295
  %v4427 = vadd.f32 %v4171, %v4300
  %v4428 = vadd.f32 %v4172, %v4300
  %v4429 = vadd.f32 %v4173, %v4305
  %v4430 = vadd.f32 %v4174, %v4305
  %v4431 = vadd.f32 %v4175, %v4310
  %v4432 = vadd.f32 %v4176, %v4310
  %v4433 = vadd.f32 %v4177, %v4315
  %v4434 = vadd.f32 %v4178, %v4315
  %v4435 = vadd.f32 %v4179, %v4320
  %v4436 = vadd.f32 %v4180, %v4320
  %v4437 = vadd.f32 %v4181, %v4325
  %v4438 = vadd.f32 %v4182, %v4325
  %v4439 = vadd.f32 %v4183, %v4330
  %v4440 = vadd.f32 %v4184, %v4330
  %v4441 = vadd.f32 %v4185, %v4335
  %v4442 = vadd.f32 %v4186, %v4335
  %v4443 = vadd.f32 %v4187, %v4340
  %v4444 = vadd.f32 %v4188, %v4340
  %v4445 = vadd.f32 %v4189, %v4345
  %v4446 = vadd.f32 %v4190, %v4345
  %v4447 = vadd.f32 %v4191, %v4350
  %v4448 = vadd.f32 %v4192, %v4350
  %v4449 = vadd.f32 %v4193, %v4355
  %v4450 = vadd.f32 %v4194, %v4355
  %v4451 = vadd.f32 %v4195, %v4360
  %v4452 = vadd.f32 %v4196, %v4360
  %v4453 = vadd.f32 %v4197, %v4365
  %v4454 = vadd.f32 %v4198, %v4365
  %v4455 = vadd.f32 %v4199, %v4370
  %v4456 = vadd.f32 %v4200, %v4370
  %v4457 = vadd.f32 %v4201, %v4375
  %v4458 = vadd.f32 %v4202, %v4375
  %v4459 = vadd.f32 %v4203, %v4380
  %v4460 = vadd.f32 %v4204, %v4380
  %v4461 = vadd.f32 %v4205, %v4385
  %v4462 = vadd.f32 %v4206, %v4385
  %v4463 = vadd.f32 %v4207, %v4390
  %v4464 = vadd.f32 %v4208, %v4390
  %v4465 = vadd.f32 %v4209, %v4395
  %v4466 = vadd.f32 %v4210, %v4395
  %v4467 = vadd.f32 %v4211, %v4400
  %v4468 = vadd.f32 %v4212, %v4400
  %v4469 = vadd.f32 %v4213, %v4405
  %v4470 = vadd.f32 %v4214, %v4405
  %v4471 = vadd.f32 %v4407, %v4409
  %v4472 = vadd.f32 %v4471, %v4411
  %v4473 = vadd.f32 %v4472, %v4413
  %v4474 = vadd.f32 %v4473, %v4415
  %v4475 = vadd.f32 %v4474, %v4417
  %v4476 = vadd.f32 %v4475, %v4419
  %v4477 = vadd.f32 %v4476, %v4421
  %v4478 = vadd.f32 %v4477, %v4423
  %v4479 = vadd.f32 %v4478, %v4425
  %v4480 = vadd.f32 %v4479, %v4427
  %v4481 = vadd.f32 %v4480, %v4429
  %v4482 = vadd.f32 %v4481, %v4431
  %v4483 = vadd.f32 %v4482, %v4433
  %v4484 = vadd.f32 %v4483, %v4435
  %v4485 = vadd.f32 %v4484, %v4437
  %v4486 = vadd.f32 %v4485, %v4439
  %v4487 = vadd.f32 %v4486, %v4441
  %v4488 = vadd.f32 %v4487, %v4443
  %v4489 = vadd.f32 %v4488, %v4445
  %v4490 = vadd.f32 %v4489, %v4447
  %v4491 = vadd.f32 %v4490, %v4449
  %v4492 = vadd.f32 %v4491, %v4451
  %v4493 = vadd.f32 %v4492, %v4453
  %v4494 = vadd.f32 %v4493, %v4455
  %v4495 = vadd.f32 %v4494, %v4457
  %v4496 = vadd.f32 %v4495, %v4459
  %v4497 = vadd.f32 %v4496, %v4461
  %v4498 = vadd.f32 %v4497, %v4463
  %v4499 = vadd.f32 %v4498, %v4465
  %v4500 = vadd.f32 %v4499, %v4467
  %v4501 = vadd.f32 %v4500, %v4469
  %v4502 = vrot.slane %v4501, 4
  %v4503 = vadd.f32 %v4501, %v4502
  %v4504 = vrot.slane %v4503, 2
  %v4505 = vadd.f32 %v4503, %v4504
  %v4506 = vrot.slane %v4505, 1
  %v4507 = vadd.f32 %v4505, %v4506
  %vm4508 = vcmask 31744
  %v4509 = vsel %vm4508, %v4408, 0.0
  %v4510 = vsel %vm4508, %v4410, 0.0
  %v4511 = vadd.f32 %v4509, %v4510
  %v4512 = vsel %vm4508, %v4412, 0.0
  %v4513 = vadd.f32 %v4511, %v4512
  %v4514 = vsel %vm4508, %v4414, 0.0
  %v4515 = vadd.f32 %v4513, %v4514
  %v4516 = vsel %vm4508, %v4416, 0.0
  %v4517 = vadd.f32 %v4515, %v4516
  %v4518 = vsel %vm4508, %v4418, 0.0
  %v4519 = vadd.f32 %v4517, %v4518
  %v4520 = vsel %vm4508, %v4420, 0.0
  %v4521 = vadd.f32 %v4519, %v4520
  %v4522 = vsel %vm4508, %v4422, 0.0
  %v4523 = vadd.f32 %v4521, %v4522
  %v4524 = vsel %vm4508, %v4424, 0.0
  %v4525 = vadd.f32 %v4523, %v4524
  %v4526 = vsel %vm4508, %v4426, 0.0
  %v4527 = vadd.f32 %v4525, %v4526
  %v4528 = vsel %vm4508, %v4428, 0.0
  %v4529 = vadd.f32 %v4527, %v4528
  %v4530 = vsel %vm4508, %v4430, 0.0
  %v4531 = vadd.f32 %v4529, %v4530
  %v4532 = vsel %vm4508, %v4432, 0.0
  %v4533 = vadd.f32 %v4531, %v4532
  %v4534 = vsel %vm4508, %v4434, 0.0
  %v4535 = vadd.f32 %v4533, %v4534
  %v4536 = vsel %vm4508, %v4436, 0.0
  %v4537 = vadd.f32 %v4535, %v4536
  %v4538 = vsel %vm4508, %v4438, 0.0
  %v4539 = vadd.f32 %v4537, %v4538
  %v4540 = vsel %vm4508, %v4440, 0.0
  %v4541 = vadd.f32 %v4539, %v4540
  %v4542 = vsel %vm4508, %v4442, 0.0
  %v4543 = vadd.f32 %v4541, %v4542
  %v4544 = vsel %vm4508, %v4444, 0.0
  %v4545 = vadd.f32 %v4543, %v4544
  %v4546 = vsel %vm4508, %v4446, 0.0
  %v4547 = vadd.f32 %v4545, %v4546
  %v4548 = vsel %vm4508, %v4448, 0.0
  %v4549 = vadd.f32 %v4547, %v4548
  %v4550 = vsel %vm4508, %v4450, 0.0
  %v4551 = vadd.f32 %v4549, %v4550
  %v4552 = vsel %vm4508, %v4452, 0.0
  %v4553 = vadd.f32 %v4551, %v4552
  %v4554 = vsel %vm4508, %v4454, 0.0
  %v4555 = vadd.f32 %v4553, %v4554
  %v4556 = vsel %vm4508, %v4456, 0.0
  %v4557 = vadd.f32 %v4555, %v4556
  %v4558 = vsel %vm4508, %v4458, 0.0
  %v4559 = vadd.f32 %v4557, %v4558
  %v4560 = vsel %vm4508, %v4460, 0.0
  %v4561 = vadd.f32 %v4559, %v4560
  %v4562 = vsel %vm4508, %v4462, 0.0
  %v4563 = vadd.f32 %v4561, %v4562
  %v4564 = vsel %vm4508, %v4464, 0.0
  %v4565 = vadd.f32 %v4563, %v4564
  %v4566 = vsel %vm4508, %v4466, 0.0
  %v4567 = vadd.f32 %v4565, %v4566
  %v4568 = vsel %vm4508, %v4468, 0.0
  %v4569 = vadd.f32 %v4567, %v4568
  %v4570 = vsel %vm4508, %v4470, 0.0
  %v4571 = vadd.f32 %v4569, %v4570
  %v4572 = vrot.slane %v4571, 4
  %v4573 = vadd.f32 %v4571, %v4572
  %v4574 = vrot.slane %v4573, 2
  %v4575 = vadd.f32 %v4573, %v4574
  %v4576 = vrot.slane %v4575, 1
  %v4577 = vadd.f32 %v4575, %v4576
  %v4578 = vmul.f32 %v4507, %v1710
  %v4579 = vmul.f32 %v4577, %v1710
  %v4580 = vsub.f32 %v4407, %v4578
  %v4581 = vsub.f32 %v4408, %v4579
  %v4582 = vsub.f32 %v4409, %v4578
  %v4583 = vsub.f32 %v4410, %v4579
  %v4584 = vsub.f32 %v4411, %v4578
  %v4585 = vsub.f32 %v4412, %v4579
  %v4586 = vsub.f32 %v4413, %v4578
  %v4587 = vsub.f32 %v4414, %v4579
  %v4588 = vsub.f32 %v4415, %v4578
  %v4589 = vsub.f32 %v4416, %v4579
  %v4590 = vsub.f32 %v4417, %v4578
  %v4591 = vsub.f32 %v4418, %v4579
  %v4592 = vsub.f32 %v4419, %v4578
  %v4593 = vsub.f32 %v4420, %v4579
  %v4594 = vsub.f32 %v4421, %v4578
  %v4595 = vsub.f32 %v4422, %v4579
  %v4596 = vsub.f32 %v4423, %v4578
  %v4597 = vsub.f32 %v4424, %v4579
  %v4598 = vsub.f32 %v4425, %v4578
  %v4599 = vsub.f32 %v4426, %v4579
  %v4600 = vsub.f32 %v4427, %v4578
  %v4601 = vsub.f32 %v4428, %v4579
  %v4602 = vsub.f32 %v4429, %v4578
  %v4603 = vsub.f32 %v4430, %v4579
  %v4604 = vsub.f32 %v4431, %v4578
  %v4605 = vsub.f32 %v4432, %v4579
  %v4606 = vsub.f32 %v4433, %v4578
  %v4607 = vsub.f32 %v4434, %v4579
  %v4608 = vsub.f32 %v4435, %v4578
  %v4609 = vsub.f32 %v4436, %v4579
  %v4610 = vsub.f32 %v4437, %v4578
  %v4611 = vsub.f32 %v4438, %v4579
  %v4612 = vsub.f32 %v4439, %v4578
  %v4613 = vsub.f32 %v4440, %v4579
  %v4614 = vsub.f32 %v4441, %v4578
  %v4615 = vsub.f32 %v4442, %v4579
  %v4616 = vsub.f32 %v4443, %v4578
  %v4617 = vsub.f32 %v4444, %v4579
  %v4618 = vsub.f32 %v4445, %v4578
  %v4619 = vsub.f32 %v4446, %v4579
  %v4620 = vsub.f32 %v4447, %v4578
  %v4621 = vsub.f32 %v4448, %v4579
  %v4622 = vsub.f32 %v4449, %v4578
  %v4623 = vsub.f32 %v4450, %v4579
  %v4624 = vsub.f32 %v4451, %v4578
  %v4625 = vsub.f32 %v4452, %v4579
  %v4626 = vsub.f32 %v4453, %v4578
  %v4627 = vsub.f32 %v4454, %v4579
  %v4628 = vsub.f32 %v4455, %v4578
  %v4629 = vsub.f32 %v4456, %v4579
  %v4630 = vsub.f32 %v4457, %v4578
  %v4631 = vsub.f32 %v4458, %v4579
  %v4632 = vsub.f32 %v4459, %v4578
  %v4633 = vsub.f32 %v4460, %v4579
  %v4634 = vsub.f32 %v4461, %v4578
  %v4635 = vsub.f32 %v4462, %v4579
  %v4636 = vsub.f32 %v4463, %v4578
  %v4637 = vsub.f32 %v4464, %v4579
  %v4638 = vsub.f32 %v4465, %v4578
  %v4639 = vsub.f32 %v4466, %v4579
  %v4640 = vsub.f32 %v4467, %v4578
  %v4641 = vsub.f32 %v4468, %v4579
  %v4642 = vsub.f32 %v4469, %v4578
  %v4643 = vsub.f32 %v4470, %v4579
  %v4644 = vmul.f32 %v4580, %v4580
  %v4645 = vmul.f32 %v4581, %v4581
  %v4646 = vmul.f32 %v4582, %v4582
  %v4647 = vmul.f32 %v4583, %v4583
  %v4648 = vmul.f32 %v4584, %v4584
  %v4649 = vmul.f32 %v4585, %v4585
  %v4650 = vmul.f32 %v4586, %v4586
  %v4651 = vmul.f32 %v4587, %v4587
  %v4652 = vmul.f32 %v4588, %v4588
  %v4653 = vmul.f32 %v4589, %v4589
  %v4654 = vmul.f32 %v4590, %v4590
  %v4655 = vmul.f32 %v4591, %v4591
  %v4656 = vmul.f32 %v4592, %v4592
  %v4657 = vmul.f32 %v4593, %v4593
  %v4658 = vmul.f32 %v4594, %v4594
  %v4659 = vmul.f32 %v4595, %v4595
  %v4660 = vmul.f32 %v4596, %v4596
  %v4661 = vmul.f32 %v4597, %v4597
  %v4662 = vmul.f32 %v4598, %v4598
  %v4663 = vmul.f32 %v4599, %v4599
  %v4664 = vmul.f32 %v4600, %v4600
  %v4665 = vmul.f32 %v4601, %v4601
  %v4666 = vmul.f32 %v4602, %v4602
  %v4667 = vmul.f32 %v4603, %v4603
  %v4668 = vmul.f32 %v4604, %v4604
  %v4669 = vmul.f32 %v4605, %v4605
  %v4670 = vmul.f32 %v4606, %v4606
  %v4671 = vmul.f32 %v4607, %v4607
  %v4672 = vmul.f32 %v4608, %v4608
  %v4673 = vmul.f32 %v4609, %v4609
  %v4674 = vmul.f32 %v4610, %v4610
  %v4675 = vmul.f32 %v4611, %v4611
  %v4676 = vmul.f32 %v4612, %v4612
  %v4677 = vmul.f32 %v4613, %v4613
  %v4678 = vmul.f32 %v4614, %v4614
  %v4679 = vmul.f32 %v4615, %v4615
  %v4680 = vmul.f32 %v4616, %v4616
  %v4681 = vmul.f32 %v4617, %v4617
  %v4682 = vmul.f32 %v4618, %v4618
  %v4683 = vmul.f32 %v4619, %v4619
  %v4684 = vmul.f32 %v4620, %v4620
  %v4685 = vmul.f32 %v4621, %v4621
  %v4686 = vmul.f32 %v4622, %v4622
  %v4687 = vmul.f32 %v4623, %v4623
  %v4688 = vmul.f32 %v4624, %v4624
  %v4689 = vmul.f32 %v4625, %v4625
  %v4690 = vmul.f32 %v4626, %v4626
  %v4691 = vmul.f32 %v4627, %v4627
  %v4692 = vmul.f32 %v4628, %v4628
  %v4693 = vmul.f32 %v4629, %v4629
  %v4694 = vmul.f32 %v4630, %v4630
  %v4695 = vmul.f32 %v4631, %v4631
  %v4696 = vmul.f32 %v4632, %v4632
  %v4697 = vmul.f32 %v4633, %v4633
  %v4698 = vmul.f32 %v4634, %v4634
  %v4699 = vmul.f32 %v4635, %v4635
  %v4700 = vmul.f32 %v4636, %v4636
  %v4701 = vmul.f32 %v4637, %v4637
  %v4702 = vmul.f32 %v4638, %v4638
  %v4703 = vmul.f32 %v4639, %v4639
  %v4704 = vmul.f32 %v4640, %v4640
  %v4705 = vmul.f32 %v4641, %v4641
  %v4706 = vmul.f32 %v4642, %v4642
  %v4707 = vmul.f32 %v4643, %v4643
  %v4708 = vadd.f32 %v4644, %v4646
  %v4709 = vadd.f32 %v4708, %v4648
  %v4710 = vadd.f32 %v4709, %v4650
  %v4711 = vadd.f32 %v4710, %v4652
  %v4712 = vadd.f32 %v4711, %v4654
  %v4713 = vadd.f32 %v4712, %v4656
  %v4714 = vadd.f32 %v4713, %v4658
  %v4715 = vadd.f32 %v4714, %v4660
  %v4716 = vadd.f32 %v4715, %v4662
  %v4717 = vadd.f32 %v4716, %v4664
  %v4718 = vadd.f32 %v4717, %v4666
  %v4719 = vadd.f32 %v4718, %v4668
  %v4720 = vadd.f32 %v4719, %v4670
  %v4721 = vadd.f32 %v4720, %v4672
  %v4722 = vadd.f32 %v4721, %v4674
  %v4723 = vadd.f32 %v4722, %v4676
  %v4724 = vadd.f32 %v4723, %v4678
  %v4725 = vadd.f32 %v4724, %v4680
  %v4726 = vadd.f32 %v4725, %v4682
  %v4727 = vadd.f32 %v4726, %v4684
  %v4728 = vadd.f32 %v4727, %v4686
  %v4729 = vadd.f32 %v4728, %v4688
  %v4730 = vadd.f32 %v4729, %v4690
  %v4731 = vadd.f32 %v4730, %v4692
  %v4732 = vadd.f32 %v4731, %v4694
  %v4733 = vadd.f32 %v4732, %v4696
  %v4734 = vadd.f32 %v4733, %v4698
  %v4735 = vadd.f32 %v4734, %v4700
  %v4736 = vadd.f32 %v4735, %v4702
  %v4737 = vadd.f32 %v4736, %v4704
  %v4738 = vadd.f32 %v4737, %v4706
  %v4739 = vrot.slane %v4738, 4
  %v4740 = vadd.f32 %v4738, %v4739
  %v4741 = vrot.slane %v4740, 2
  %v4742 = vadd.f32 %v4740, %v4741
  %v4743 = vrot.slane %v4742, 1
  %v4744 = vadd.f32 %v4742, %v4743
  %v4745 = vsel %vm4508, %v4645, 0.0
  %v4746 = vsel %vm4508, %v4647, 0.0
  %v4747 = vadd.f32 %v4745, %v4746
  %v4748 = vsel %vm4508, %v4649, 0.0
  %v4749 = vadd.f32 %v4747, %v4748
  %v4750 = vsel %vm4508, %v4651, 0.0
  %v4751 = vadd.f32 %v4749, %v4750
  %v4752 = vsel %vm4508, %v4653, 0.0
  %v4753 = vadd.f32 %v4751, %v4752
  %v4754 = vsel %vm4508, %v4655, 0.0
  %v4755 = vadd.f32 %v4753, %v4754
  %v4756 = vsel %vm4508, %v4657, 0.0
  %v4757 = vadd.f32 %v4755, %v4756
  %v4758 = vsel %vm4508, %v4659, 0.0
  %v4759 = vadd.f32 %v4757, %v4758
  %v4760 = vsel %vm4508, %v4661, 0.0
  %v4761 = vadd.f32 %v4759, %v4760
  %v4762 = vsel %vm4508, %v4663, 0.0
  %v4763 = vadd.f32 %v4761, %v4762
  %v4764 = vsel %vm4508, %v4665, 0.0
  %v4765 = vadd.f32 %v4763, %v4764
  %v4766 = vsel %vm4508, %v4667, 0.0
  %v4767 = vadd.f32 %v4765, %v4766
  %v4768 = vsel %vm4508, %v4669, 0.0
  %v4769 = vadd.f32 %v4767, %v4768
  %v4770 = vsel %vm4508, %v4671, 0.0
  %v4771 = vadd.f32 %v4769, %v4770
  %v4772 = vsel %vm4508, %v4673, 0.0
  %v4773 = vadd.f32 %v4771, %v4772
  %v4774 = vsel %vm4508, %v4675, 0.0
  %v4775 = vadd.f32 %v4773, %v4774
  %v4776 = vsel %vm4508, %v4677, 0.0
  %v4777 = vadd.f32 %v4775, %v4776
  %v4778 = vsel %vm4508, %v4679, 0.0
  %v4779 = vadd.f32 %v4777, %v4778
  %v4780 = vsel %vm4508, %v4681, 0.0
  %v4781 = vadd.f32 %v4779, %v4780
  %v4782 = vsel %vm4508, %v4683, 0.0
  %v4783 = vadd.f32 %v4781, %v4782
  %v4784 = vsel %vm4508, %v4685, 0.0
  %v4785 = vadd.f32 %v4783, %v4784
  %v4786 = vsel %vm4508, %v4687, 0.0
  %v4787 = vadd.f32 %v4785, %v4786
  %v4788 = vsel %vm4508, %v4689, 0.0
  %v4789 = vadd.f32 %v4787, %v4788
  %v4790 = vsel %vm4508, %v4691, 0.0
  %v4791 = vadd.f32 %v4789, %v4790
  %v4792 = vsel %vm4508, %v4693, 0.0
  %v4793 = vadd.f32 %v4791, %v4792
  %v4794 = vsel %vm4508, %v4695, 0.0
  %v4795 = vadd.f32 %v4793, %v4794
  %v4796 = vsel %vm4508, %v4697, 0.0
  %v4797 = vadd.f32 %v4795, %v4796
  %v4798 = vsel %vm4508, %v4699, 0.0
  %v4799 = vadd.f32 %v4797, %v4798
  %v4800 = vsel %vm4508, %v4701, 0.0
  %v4801 = vadd.f32 %v4799, %v4800
  %v4802 = vsel %vm4508, %v4703, 0.0
  %v4803 = vadd.f32 %v4801, %v4802
  %v4804 = vsel %vm4508, %v4705, 0.0
  %v4805 = vadd.f32 %v4803, %v4804
  %v4806 = vsel %vm4508, %v4707, 0.0
  %v4807 = vadd.f32 %v4805, %v4806
  %v4808 = vrot.slane %v4807, 4
  %v4809 = vadd.f32 %v4807, %v4808
  %v4810 = vrot.slane %v4809, 2
  %v4811 = vadd.f32 %v4809, %v4810
  %v4812 = vrot.slane %v4811, 1
  %v4813 = vadd.f32 %v4811, %v4812
  %v4814 = vmul.f32 %v4744, %v1710
  %v4815 = vmul.f32 %v4813, %v1710
  %v4816 = vadd.f32 %v4814, 1e-05
  %v4817 = vadd.f32 %v4815, 1e-05
  %v4818 = vrsqrt.pop %v4816
  %v4819 = vrsqrt.pop %v4817
  %v4820 = vmul.f32 %v4580, %v4818
  %v4821 = vmul.f32 %v4581, %v4819
  %v4822 = vmul.f32 %v4582, %v4818
  %v4823 = vmul.f32 %v4583, %v4819
  %v4824 = vmul.f32 %v4584, %v4818
  %v4825 = vmul.f32 %v4585, %v4819
  %v4826 = vmul.f32 %v4586, %v4818
  %v4827 = vmul.f32 %v4587, %v4819
  %v4828 = vmul.f32 %v4588, %v4818
  %v4829 = vmul.f32 %v4589, %v4819
  %v4830 = vmul.f32 %v4590, %v4818
  %v4831 = vmul.f32 %v4591, %v4819
  %v4832 = vmul.f32 %v4592, %v4818
  %v4833 = vmul.f32 %v4593, %v4819
  %v4834 = vmul.f32 %v4594, %v4818
  %v4835 = vmul.f32 %v4595, %v4819
  %v4836 = vmul.f32 %v4596, %v4818
  %v4837 = vmul.f32 %v4597, %v4819
  %v4838 = vmul.f32 %v4598, %v4818
  %v4839 = vmul.f32 %v4599, %v4819
  %v4840 = vmul.f32 %v4600, %v4818
  %v4841 = vmul.f32 %v4601, %v4819
  %v4842 = vmul.f32 %v4602, %v4818
  %v4843 = vmul.f32 %v4603, %v4819
  %v4844 = vmul.f32 %v4604, %v4818
  %v4845 = vmul.f32 %v4605, %v4819
  %v4846 = vmul.f32 %v4606, %v4818
  %v4847 = vmul.f32 %v4607, %v4819
  %v4848 = vmul.f32 %v4608, %v4818
  %v4849 = vmul.f32 %v4609, %v4819
  %v4850 = vmul.f32 %v4610, %v4818
  %v4851 = vmul.f32 %v4611, %v4819
  %v4852 = vmul.f32 %v4612, %v4818
  %v4853 = vmul.f32 %v4613, %v4819
  %v4854 = vmul.f32 %v4614, %v4818
  %v4855 = vmul.f32 %v4615, %v4819
  %v4856 = vmul.f32 %v4616, %v4818
  %v4857 = vmul.f32 %v4617, %v4819
  %v4858 = vmul.f32 %v4618, %v4818
  %v4859 = vmul.f32 %v4619, %v4819
  %v4860 = vmul.f32 %v4620, %v4818
  %v4861 = vmul.f32 %v4621, %v4819
  %v4862 = vmul.f32 %v4622, %v4818
  %v4863 = vmul.f32 %v4623, %v4819
  %v4864 = vmul.f32 %v4624, %v4818
  %v4865 = vmul.f32 %v4625, %v4819
  %v4866 = vmul.f32 %v4626, %v4818
  %v4867 = vmul.f32 %v4627, %v4819
  %v4868 = vmul.f32 %v4628, %v4818
  %v4869 = vmul.f32 %v4629, %v4819
  %v4870 = vmul.f32 %v4630, %v4818
  %v4871 = vmul.f32 %v4631, %v4819
  %v4872 = vmul.f32 %v4632, %v4818
  %v4873 = vmul.f32 %v4633, %v4819
  %v4874 = vmul.f32 %v4634, %v4818
  %v4875 = vmul.f32 %v4635, %v4819
  %v4876 = vmul.f32 %v4636, %v4818
  %v4877 = vmul.f32 %v4637, %v4819
  %v4878 = vmul.f32 %v4638, %v4818
  %v4879 = vmul.f32 %v4639, %v4819
  %v4880 = vmul.f32 %v4640, %v4818
  %v4881 = vmul.f32 %v4641, %v4819
  %v4882 = vmul.f32 %v4642, %v4818
  %v4883 = vmul.f32 %v4643, %v4819
  %v4884 = vld [vmem:[%s7] sm:$0xff]
  %v4885 = vld [vmem:[%s7 + $0x8] sm:$0xff]
  %v4886 = vld [vmem:[%s7 + $0x10] sm:$0xff]
  %v4887 = vld [vmem:[%s7 + $0x18] sm:$0xff]
  %v4888 = vld [vmem:[%s7 + $0x20] sm:$0xff]
  %v4889 = vld [vmem:[%s7 + $0x28] sm:$0xff]
  %v4890 = vld [vmem:[%s7 + $0x30] sm:$0xff]
  %v4891 = vld [vmem:[%s7 + $0x38] sm:$0xff]
  %v4892 = vld [vmem:[%s7 + $0x40] sm:$0xff]
  %v4893 = vld [vmem:[%s7 + $0x48] sm:$0xff]
  %v4894 = vld [vmem:[%s7 + $0x50] sm:$0xff]
  %v4895 = vld [vmem:[%s7 + $0x58] sm:$0xff]
  %v4896 = vld [vmem:[%s7 + $0x60] sm:$0xff]
  %v4897 = vld [vmem:[%s7 + $0x68] sm:$0xff]
  %v4898 = vld [vmem:[%s7 + $0x70] sm:$0xff]
  %v4899 = vld [vmem:[%s7 + $0x78] sm:$0xff]
  %v4900 = vld [vmem:[%s7 + $0x80] sm:$0xff]
  %v4901 = vld [vmem:[%s7 + $0x88] sm:$0xff]
  %v4902 = vld [vmem:[%s7 + $0x90] sm:$0xff]
  %v4903 = vld [vmem:[%s7 + $0x98] sm:$0xff]
  %v4904 = vld [vmem:[%s7 + $0xa0] sm:$0xff]
  %v4905 = vld [vmem:[%s7 + $0xa8] sm:$0xff]
  %v4906 = vld [vmem:[%s7 + $0xb0] sm:$0xff]
  %v4907 = vld [vmem:[%s7 + $0xb8] sm:$0xff]
  %v4908 = vld [vmem:[%s7 + $0xc0] sm:$0xff]
  %v4909 = vld [vmem:[%s7 + $0xc8] sm:$0xff]
  %v4910 = vld [vmem:[%s7 + $0xd0] sm:$0xff]
  %v4911 = vld [vmem:[%s7 + $0xd8] sm:$0xff]
  %v4912 = vld [vmem:[%s7 + $0xe0] sm:$0xff]
  %v4913 = vld [vmem:[%s7 + $0xe8] sm:$0xff]
  %v4914 = vld [vmem:[%s7 + $0xf0] sm:$0xff]
  %v4915 = vld [vmem:[%s7 + $0xf8] sm:$0xff]
  %4917 = vset.pattern.permute.xlu0 0
  %4918 = vperm.xlu0 %4917, %v4884
  %v4919 = vpop.permute.xlu0 %4918
  %4922 = vset.pattern.permute.xlu0 0
  %4923 = vperm.xlu0 %4922, %v4885
  %v4924 = vpop.permute.xlu0 %4923
  %4927 = vset.pattern.permute.xlu0 0
  %4928 = vperm.xlu0 %4927, %v4886
  %v4929 = vpop.permute.xlu0 %4928
  %4932 = vset.pattern.permute.xlu0 0
  %4933 = vperm.xlu0 %4932, %v4887
  %v4934 = vpop.permute.xlu0 %4933
  %4937 = vset.pattern.permute.xlu0 0
  %4938 = vperm.xlu0 %4937, %v4888
  %v4939 = vpop.permute.xlu0 %4938
  %4942 = vset.pattern.permute.xlu0 0
  %4943 = vperm.xlu0 %4942, %v4889
  %v4944 = vpop.permute.xlu0 %4943
  %4947 = vset.pattern.permute.xlu0 0
  %4948 = vperm.xlu0 %4947, %v4890
  %v4949 = vpop.permute.xlu0 %4948
  %4952 = vset.pattern.permute.xlu0 0
  %4953 = vperm.xlu0 %4952, %v4891
  %v4954 = vpop.permute.xlu0 %4953
  %4957 = vset.pattern.permute.xlu0 0
  %4958 = vperm.xlu0 %4957, %v4892
  %v4959 = vpop.permute.xlu0 %4958
  %4962 = vset.pattern.permute.xlu0 0
  %4963 = vperm.xlu0 %4962, %v4893
  %v4964 = vpop.permute.xlu0 %4963
  %4967 = vset.pattern.permute.xlu0 0
  %4968 = vperm.xlu0 %4967, %v4894
  %v4969 = vpop.permute.xlu0 %4968
  %4972 = vset.pattern.permute.xlu0 0
  %4973 = vperm.xlu0 %4972, %v4895
  %v4974 = vpop.permute.xlu0 %4973
  %4977 = vset.pattern.permute.xlu0 0
  %4978 = vperm.xlu0 %4977, %v4896
  %v4979 = vpop.permute.xlu0 %4978
  %4982 = vset.pattern.permute.xlu0 0
  %4983 = vperm.xlu0 %4982, %v4897
  %v4984 = vpop.permute.xlu0 %4983
  %4987 = vset.pattern.permute.xlu0 0
  %4988 = vperm.xlu0 %4987, %v4898
  %v4989 = vpop.permute.xlu0 %4988
  %4992 = vset.pattern.permute.xlu0 0
  %4993 = vperm.xlu0 %4992, %v4899
  %v4994 = vpop.permute.xlu0 %4993
  %4997 = vset.pattern.permute.xlu0 0
  %4998 = vperm.xlu0 %4997, %v4900
  %v4999 = vpop.permute.xlu0 %4998
  %5002 = vset.pattern.permute.xlu0 0
  %5003 = vperm.xlu0 %5002, %v4901
  %v5004 = vpop.permute.xlu0 %5003
  %5007 = vset.pattern.permute.xlu0 0
  %5008 = vperm.xlu0 %5007, %v4902
  %v5009 = vpop.permute.xlu0 %5008
  %5012 = vset.pattern.permute.xlu0 0
  %5013 = vperm.xlu0 %5012, %v4903
  %v5014 = vpop.permute.xlu0 %5013
  %5017 = vset.pattern.permute.xlu0 0
  %5018 = vperm.xlu0 %5017, %v4904
  %v5019 = vpop.permute.xlu0 %5018
  %5022 = vset.pattern.permute.xlu0 0
  %5023 = vperm.xlu0 %5022, %v4905
  %v5024 = vpop.permute.xlu0 %5023
  %5027 = vset.pattern.permute.xlu0 0
  %5028 = vperm.xlu0 %5027, %v4906
  %v5029 = vpop.permute.xlu0 %5028
  %5032 = vset.pattern.permute.xlu0 0
  %5033 = vperm.xlu0 %5032, %v4907
  %v5034 = vpop.permute.xlu0 %5033
  %5037 = vset.pattern.permute.xlu0 0
  %5038 = vperm.xlu0 %5037, %v4908
  %v5039 = vpop.permute.xlu0 %5038
  %5042 = vset.pattern.permute.xlu0 0
  %5043 = vperm.xlu0 %5042, %v4909
  %v5044 = vpop.permute.xlu0 %5043
  %5047 = vset.pattern.permute.xlu0 0
  %5048 = vperm.xlu0 %5047, %v4910
  %v5049 = vpop.permute.xlu0 %5048
  %5052 = vset.pattern.permute.xlu0 0
  %5053 = vperm.xlu0 %5052, %v4911
  %v5054 = vpop.permute.xlu0 %5053
  %5057 = vset.pattern.permute.xlu0 0
  %5058 = vperm.xlu0 %5057, %v4912
  %v5059 = vpop.permute.xlu0 %5058
  %5062 = vset.pattern.permute.xlu0 0
  %5063 = vperm.xlu0 %5062, %v4913
  %v5064 = vpop.permute.xlu0 %5063
  %5067 = vset.pattern.permute.xlu0 0
  %5068 = vperm.xlu0 %5067, %v4914
  %v5069 = vpop.permute.xlu0 %5068
  %5072 = vset.pattern.permute.xlu0 0
  %5073 = vperm.xlu0 %5072, %v4915
  %v5074 = vpop.permute.xlu0 %5073
  %v5076 = vmul.f32 %v4820, %v4919
  %v5077 = vmul.f32 %v4821, %v4919
  %v5078 = vmul.f32 %v4822, %v4924
  %v5079 = vmul.f32 %v4823, %v4924
  %v5080 = vmul.f32 %v4824, %v4929
  %v5081 = vmul.f32 %v4825, %v4929
  %v5082 = vmul.f32 %v4826, %v4934
  %v5083 = vmul.f32 %v4827, %v4934
  %v5084 = vmul.f32 %v4828, %v4939
  %v5085 = vmul.f32 %v4829, %v4939
  %v5086 = vmul.f32 %v4830, %v4944
  %v5087 = vmul.f32 %v4831, %v4944
  %v5088 = vmul.f32 %v4832, %v4949
  %v5089 = vmul.f32 %v4833, %v4949
  %v5090 = vmul.f32 %v4834, %v4954
  %v5091 = vmul.f32 %v4835, %v4954
  %v5092 = vmul.f32 %v4836, %v4959
  %v5093 = vmul.f32 %v4837, %v4959
  %v5094 = vmul.f32 %v4838, %v4964
  %v5095 = vmul.f32 %v4839, %v4964
  %v5096 = vmul.f32 %v4840, %v4969
  %v5097 = vmul.f32 %v4841, %v4969
  %v5098 = vmul.f32 %v4842, %v4974
  %v5099 = vmul.f32 %v4843, %v4974
  %v5100 = vmul.f32 %v4844, %v4979
  %v5101 = vmul.f32 %v4845, %v4979
  %v5102 = vmul.f32 %v4846, %v4984
  %v5103 = vmul.f32 %v4847, %v4984
  %v5104 = vmul.f32 %v4848, %v4989
  %v5105 = vmul.f32 %v4849, %v4989
  %v5106 = vmul.f32 %v4850, %v4994
  %v5107 = vmul.f32 %v4851, %v4994
  %v5108 = vmul.f32 %v4852, %v4999
  %v5109 = vmul.f32 %v4853, %v4999
  %v5110 = vmul.f32 %v4854, %v5004
  %v5111 = vmul.f32 %v4855, %v5004
  %v5112 = vmul.f32 %v4856, %v5009
  %v5113 = vmul.f32 %v4857, %v5009
  %v5114 = vmul.f32 %v4858, %v5014
  %v5115 = vmul.f32 %v4859, %v5014
  %v5116 = vmul.f32 %v4860, %v5019
  %v5117 = vmul.f32 %v4861, %v5019
  %v5118 = vmul.f32 %v4862, %v5024
  %v5119 = vmul.f32 %v4863, %v5024
  %v5120 = vmul.f32 %v4864, %v5029
  %v5121 = vmul.f32 %v4865, %v5029
  %v5122 = vmul.f32 %v4866, %v5034
  %v5123 = vmul.f32 %v4867, %v5034
  %v5124 = vmul.f32 %v4868, %v5039
  %v5125 = vmul.f32 %v4869, %v5039
  %v5126 = vmul.f32 %v4870, %v5044
  %v5127 = vmul.f32 %v4871, %v5044
  %v5128 = vmul.f32 %v4872, %v5049
  %v5129 = vmul.f32 %v4873, %v5049
  %v5130 = vmul.f32 %v4874, %v5054
  %v5131 = vmul.f32 %v4875, %v5054
  %v5132 = vmul.f32 %v4876, %v5059
  %v5133 = vmul.f32 %v4877, %v5059
  %v5134 = vmul.f32 %v4878, %v5064
  %v5135 = vmul.f32 %v4879, %v5064
  %v5136 = vmul.f32 %v4880, %v5069
  %v5137 = vmul.f32 %v4881, %v5069
  %v5138 = vmul.f32 %v4882, %v5074
  %v5139 = vmul.f32 %v4883, %v5074
  %v5140 = vld [vmem:[%s8] sm:$0xff]
  %v5141 = vld [vmem:[%s8 + $0x8] sm:$0xff]
  %v5142 = vld [vmem:[%s8 + $0x10] sm:$0xff]
  %v5143 = vld [vmem:[%s8 + $0x18] sm:$0xff]
  %v5144 = vld [vmem:[%s8 + $0x20] sm:$0xff]
  %v5145 = vld [vmem:[%s8 + $0x28] sm:$0xff]
  %v5146 = vld [vmem:[%s8 + $0x30] sm:$0xff]
  %v5147 = vld [vmem:[%s8 + $0x38] sm:$0xff]
  %v5148 = vld [vmem:[%s8 + $0x40] sm:$0xff]
  %v5149 = vld [vmem:[%s8 + $0x48] sm:$0xff]
  %v5150 = vld [vmem:[%s8 + $0x50] sm:$0xff]
  %v5151 = vld [vmem:[%s8 + $0x58] sm:$0xff]
  %v5152 = vld [vmem:[%s8 + $0x60] sm:$0xff]
  %v5153 = vld [vmem:[%s8 + $0x68] sm:$0xff]
  %v5154 = vld [vmem:[%s8 + $0x70] sm:$0xff]
  %v5155 = vld [vmem:[%s8 + $0x78] sm:$0xff]
  %v5156 = vld [vmem:[%s8 + $0x80] sm:$0xff]
  %v5157 = vld [vmem:[%s8 + $0x88] sm:$0xff]
  %v5158 = vld [vmem:[%s8 + $0x90] sm:$0xff]
  %v5159 = vld [vmem:[%s8 + $0x98] sm:$0xff]
  %v5160 = vld [vmem:[%s8 + $0xa0] sm:$0xff]
  %v5161 = vld [vmem:[%s8 + $0xa8] sm:$0xff]
  %v5162 = vld [vmem:[%s8 + $0xb0] sm:$0xff]
  %v5163 = vld [vmem:[%s8 + $0xb8] sm:$0xff]
  %v5164 = vld [vmem:[%s8 + $0xc0] sm:$0xff]
  %v5165 = vld [vmem:[%s8 + $0xc8] sm:$0xff]
  %v5166 = vld [vmem:[%s8 + $0xd0] sm:$0xff]
  %v5167 = vld [vmem:[%s8 + $0xd8] sm:$0xff]
  %v5168 = vld [vmem:[%s8 + $0xe0] sm:$0xff]
  %v5169 = vld [vmem:[%s8 + $0xe8] sm:$0xff]
  %v5170 = vld [vmem:[%s8 + $0xf0] sm:$0xff]
  %v5171 = vld [vmem:[%s8 + $0xf8] sm:$0xff]
  %5173 = vset.pattern.permute.xlu0 0
  %5174 = vperm.xlu0 %5173, %v5140
  %v5175 = vpop.permute.xlu0 %5174
  %5178 = vset.pattern.permute.xlu0 0
  %5179 = vperm.xlu0 %5178, %v5141
  %v5180 = vpop.permute.xlu0 %5179
  %5183 = vset.pattern.permute.xlu0 0
  %5184 = vperm.xlu0 %5183, %v5142
  %v5185 = vpop.permute.xlu0 %5184
  %5188 = vset.pattern.permute.xlu0 0
  %5189 = vperm.xlu0 %5188, %v5143
  %v5190 = vpop.permute.xlu0 %5189
  %5193 = vset.pattern.permute.xlu0 0
  %5194 = vperm.xlu0 %5193, %v5144
  %v5195 = vpop.permute.xlu0 %5194
  %5198 = vset.pattern.permute.xlu0 0
  %5199 = vperm.xlu0 %5198, %v5145
  %v5200 = vpop.permute.xlu0 %5199
  %5203 = vset.pattern.permute.xlu0 0
  %5204 = vperm.xlu0 %5203, %v5146
  %v5205 = vpop.permute.xlu0 %5204
  %5208 = vset.pattern.permute.xlu0 0
  %5209 = vperm.xlu0 %5208, %v5147
  %v5210 = vpop.permute.xlu0 %5209
  %5213 = vset.pattern.permute.xlu0 0
  %5214 = vperm.xlu0 %5213, %v5148
  %v5215 = vpop.permute.xlu0 %5214
  %5218 = vset.pattern.permute.xlu0 0
  %5219 = vperm.xlu0 %5218, %v5149
  %v5220 = vpop.permute.xlu0 %5219
  %5223 = vset.pattern.permute.xlu0 0
  %5224 = vperm.xlu0 %5223, %v5150
  %v5225 = vpop.permute.xlu0 %5224
  %5228 = vset.pattern.permute.xlu0 0
  %5229 = vperm.xlu0 %5228, %v5151
  %v5230 = vpop.permute.xlu0 %5229
  %5233 = vset.pattern.permute.xlu0 0
  %5234 = vperm.xlu0 %5233, %v5152
  %v5235 = vpop.permute.xlu0 %5234
  %5238 = vset.pattern.permute.xlu0 0
  %5239 = vperm.xlu0 %5238, %v5153
  %v5240 = vpop.permute.xlu0 %5239
  %5243 = vset.pattern.permute.xlu0 0
  %5244 = vperm.xlu0 %5243, %v5154
  %v5245 = vpop.permute.xlu0 %5244
  %5248 = vset.pattern.permute.xlu0 0
  %5249 = vperm.xlu0 %5248, %v5155
  %v5250 = vpop.permute.xlu0 %5249
  %5253 = vset.pattern.permute.xlu0 0
  %5254 = vperm.xlu0 %5253, %v5156
  %v5255 = vpop.permute.xlu0 %5254
  %5258 = vset.pattern.permute.xlu0 0
  %5259 = vperm.xlu0 %5258, %v5157
  %v5260 = vpop.permute.xlu0 %5259
  %5263 = vset.pattern.permute.xlu0 0
  %5264 = vperm.xlu0 %5263, %v5158
  %v5265 = vpop.permute.xlu0 %5264
  %5268 = vset.pattern.permute.xlu0 0
  %5269 = vperm.xlu0 %5268, %v5159
  %v5270 = vpop.permute.xlu0 %5269
  %5273 = vset.pattern.permute.xlu0 0
  %5274 = vperm.xlu0 %5273, %v5160
  %v5275 = vpop.permute.xlu0 %5274
  %5278 = vset.pattern.permute.xlu0 0
  %5279 = vperm.xlu0 %5278, %v5161
  %v5280 = vpop.permute.xlu0 %5279
  %5283 = vset.pattern.permute.xlu0 0
  %5284 = vperm.xlu0 %5283, %v5162
  %v5285 = vpop.permute.xlu0 %5284
  %5288 = vset.pattern.permute.xlu0 0
  %5289 = vperm.xlu0 %5288, %v5163
  %v5290 = vpop.permute.xlu0 %5289
  %5293 = vset.pattern.permute.xlu0 0
  %5294 = vperm.xlu0 %5293, %v5164
  %v5295 = vpop.permute.xlu0 %5294
  %5298 = vset.pattern.permute.xlu0 0
  %5299 = vperm.xlu0 %5298, %v5165
  %v5300 = vpop.permute.xlu0 %5299
  %5303 = vset.pattern.permute.xlu0 0
  %5304 = vperm.xlu0 %5303, %v5166
  %v5305 = vpop.permute.xlu0 %5304
  %5308 = vset.pattern.permute.xlu0 0
  %5309 = vperm.xlu0 %5308, %v5167
  %v5310 = vpop.permute.xlu0 %5309
  %5313 = vset.pattern.permute.xlu0 0
  %5314 = vperm.xlu0 %5313, %v5168
  %v5315 = vpop.permute.xlu0 %5314
  %5318 = vset.pattern.permute.xlu0 0
  %5319 = vperm.xlu0 %5318, %v5169
  %v5320 = vpop.permute.xlu0 %5319
  %5323 = vset.pattern.permute.xlu0 0
  %5324 = vperm.xlu0 %5323, %v5170
  %v5325 = vpop.permute.xlu0 %5324
  %5328 = vset.pattern.permute.xlu0 0
  %5329 = vperm.xlu0 %5328, %v5171
  %v5330 = vpop.permute.xlu0 %5329
  %v5332 = vadd.f32 %v5076, %v5175
  %v5333 = vadd.f32 %v5077, %v5175
  %v5334 = vadd.f32 %v5078, %v5180
  %v5335 = vadd.f32 %v5079, %v5180
  %v5336 = vadd.f32 %v5080, %v5185
  %v5337 = vadd.f32 %v5081, %v5185
  %v5338 = vadd.f32 %v5082, %v5190
  %v5339 = vadd.f32 %v5083, %v5190
  %v5340 = vadd.f32 %v5084, %v5195
  %v5341 = vadd.f32 %v5085, %v5195
  %v5342 = vadd.f32 %v5086, %v5200
  %v5343 = vadd.f32 %v5087, %v5200
  %v5344 = vadd.f32 %v5088, %v5205
  %v5345 = vadd.f32 %v5089, %v5205
  %v5346 = vadd.f32 %v5090, %v5210
  %v5347 = vadd.f32 %v5091, %v5210
  %v5348 = vadd.f32 %v5092, %v5215
  %v5349 = vadd.f32 %v5093, %v5215
  %v5350 = vadd.f32 %v5094, %v5220
  %v5351 = vadd.f32 %v5095, %v5220
  %v5352 = vadd.f32 %v5096, %v5225
  %v5353 = vadd.f32 %v5097, %v5225
  %v5354 = vadd.f32 %v5098, %v5230
  %v5355 = vadd.f32 %v5099, %v5230
  %v5356 = vadd.f32 %v5100, %v5235
  %v5357 = vadd.f32 %v5101, %v5235
  %v5358 = vadd.f32 %v5102, %v5240
  %v5359 = vadd.f32 %v5103, %v5240
  %v5360 = vadd.f32 %v5104, %v5245
  %v5361 = vadd.f32 %v5105, %v5245
  %v5362 = vadd.f32 %v5106, %v5250
  %v5363 = vadd.f32 %v5107, %v5250
  %v5364 = vadd.f32 %v5108, %v5255
  %v5365 = vadd.f32 %v5109, %v5255
  %v5366 = vadd.f32 %v5110, %v5260
  %v5367 = vadd.f32 %v5111, %v5260
  %v5368 = vadd.f32 %v5112, %v5265
  %v5369 = vadd.f32 %v5113, %v5265
  %v5370 = vadd.f32 %v5114, %v5270
  %v5371 = vadd.f32 %v5115, %v5270
  %v5372 = vadd.f32 %v5116, %v5275
  %v5373 = vadd.f32 %v5117, %v5275
  %v5374 = vadd.f32 %v5118, %v5280
  %v5375 = vadd.f32 %v5119, %v5280
  %v5376 = vadd.f32 %v5120, %v5285
  %v5377 = vadd.f32 %v5121, %v5285
  %v5378 = vadd.f32 %v5122, %v5290
  %v5379 = vadd.f32 %v5123, %v5290
  %v5380 = vadd.f32 %v5124, %v5295
  %v5381 = vadd.f32 %v5125, %v5295
  %v5382 = vadd.f32 %v5126, %v5300
  %v5383 = vadd.f32 %v5127, %v5300
  %v5384 = vadd.f32 %v5128, %v5305
  %v5385 = vadd.f32 %v5129, %v5305
  %v5386 = vadd.f32 %v5130, %v5310
  %v5387 = vadd.f32 %v5131, %v5310
  %v5388 = vadd.f32 %v5132, %v5315
  %v5389 = vadd.f32 %v5133, %v5315
  %v5390 = vadd.f32 %v5134, %v5320
  %v5391 = vadd.f32 %v5135, %v5320
  %v5392 = vadd.f32 %v5136, %v5325
  %v5393 = vadd.f32 %v5137, %v5325
  %v5394 = vadd.f32 %v5138, %v5330
  %v5395 = vadd.f32 %v5139, %v5330
  %v5396 = vmax.f32 %v5332, 0.0
  %v5397 = vmax.f32 %v5333, 0.0
  %v5398 = vmax.f32 %v5334, 0.0
  %v5399 = vmax.f32 %v5335, 0.0
  %v5400 = vmax.f32 %v5336, 0.0
  %v5401 = vmax.f32 %v5337, 0.0
  %v5402 = vmax.f32 %v5338, 0.0
  %v5403 = vmax.f32 %v5339, 0.0
  %v5404 = vmax.f32 %v5340, 0.0
  %v5405 = vmax.f32 %v5341, 0.0
  %v5406 = vmax.f32 %v5342, 0.0
  %v5407 = vmax.f32 %v5343, 0.0
  %v5408 = vmax.f32 %v5344, 0.0
  %v5409 = vmax.f32 %v5345, 0.0
  %v5410 = vmax.f32 %v5346, 0.0
  %v5411 = vmax.f32 %v5347, 0.0
  %v5412 = vmax.f32 %v5348, 0.0
  %v5413 = vmax.f32 %v5349, 0.0
  %v5414 = vmax.f32 %v5350, 0.0
  %v5415 = vmax.f32 %v5351, 0.0
  %v5416 = vmax.f32 %v5352, 0.0
  %v5417 = vmax.f32 %v5353, 0.0
  %v5418 = vmax.f32 %v5354, 0.0
  %v5419 = vmax.f32 %v5355, 0.0
  %v5420 = vmax.f32 %v5356, 0.0
  %v5421 = vmax.f32 %v5357, 0.0
  %v5422 = vmax.f32 %v5358, 0.0
  %v5423 = vmax.f32 %v5359, 0.0
  %v5424 = vmax.f32 %v5360, 0.0
  %v5425 = vmax.f32 %v5361, 0.0
  %v5426 = vmax.f32 %v5362, 0.0
  %v5427 = vmax.f32 %v5363, 0.0
  %v5428 = vmax.f32 %v5364, 0.0
  %v5429 = vmax.f32 %v5365, 0.0
  %v5430 = vmax.f32 %v5366, 0.0
  %v5431 = vmax.f32 %v5367, 0.0
  %v5432 = vmax.f32 %v5368, 0.0
  %v5433 = vmax.f32 %v5369, 0.0
  %v5434 = vmax.f32 %v5370, 0.0
  %v5435 = vmax.f32 %v5371, 0.0
  %v5436 = vmax.f32 %v5372, 0.0
  %v5437 = vmax.f32 %v5373, 0.0
  %v5438 = vmax.f32 %v5374, 0.0
  %v5439 = vmax.f32 %v5375, 0.0
  %v5440 = vmax.f32 %v5376, 0.0
  %v5441 = vmax.f32 %v5377, 0.0
  %v5442 = vmax.f32 %v5378, 0.0
  %v5443 = vmax.f32 %v5379, 0.0
  %v5444 = vmax.f32 %v5380, 0.0
  %v5445 = vmax.f32 %v5381, 0.0
  %v5446 = vmax.f32 %v5382, 0.0
  %v5447 = vmax.f32 %v5383, 0.0
  %v5448 = vmax.f32 %v5384, 0.0
  %v5449 = vmax.f32 %v5385, 0.0
  %v5450 = vmax.f32 %v5386, 0.0
  %v5451 = vmax.f32 %v5387, 0.0
  %v5452 = vmax.f32 %v5388, 0.0
  %v5453 = vmax.f32 %v5389, 0.0
  %v5454 = vmax.f32 %v5390, 0.0
  %v5455 = vmax.f32 %v5391, 0.0
  %v5456 = vmax.f32 %v5392, 0.0
  %v5457 = vmax.f32 %v5393, 0.0
  %v5458 = vmax.f32 %v5394, 0.0
  %v5459 = vmax.f32 %v5395, 0.0
  %s5460 = sadd.s32 %s50, 4294967294
  %v5461 = vstv %s5460
  %v5462 = vadd.s32 %v5461, %v2595
  %v5463 = vadd.s32 %v5461, %v2596
  %vm5464 = vcmp.ge.s32.totalorder %v5462, 0
  %vm5465 = vcmp.ge.s32.totalorder %v5463, 0
  %vm5466 = vcmp.lt.s32.totalorder %v5462, 16
  %vm5467 = vcmp.lt.s32.totalorder %v5463, 16
  %vm5468 = vmand %vm5464, %vm5466
  %vm5469 = vmand %vm5465, %vm5467
  %v5470 = vsel %vm5468, 1, 0
  %v5471 = vsel %vm5469, 1, 0
  %vm5472 = vcmp.eq.s32.totalorder %v5470, 1
  %vm5473 = vcmp.eq.s32.totalorder %v5471, 1
  %v5474 = vsel %vm5472, %v5396, 0.0
  %v5475 = vsel %vm5473, %v5397, 0.0
  %v5476 = vsel %vm5472, %v5398, 0.0
  %v5477 = vsel %vm5473, %v5399, 0.0
  %v5478 = vsel %vm5472, %v5400, 0.0
  %v5479 = vsel %vm5473, %v5401, 0.0
  %v5480 = vsel %vm5472, %v5402, 0.0
  %v5481 = vsel %vm5473, %v5403, 0.0
  %v5482 = vsel %vm5472, %v5404, 0.0
  %v5483 = vsel %vm5473, %v5405, 0.0
  %v5484 = vsel %vm5472, %v5406, 0.0
  %v5485 = vsel %vm5473, %v5407, 0.0
  %v5486 = vsel %vm5472, %v5408, 0.0
  %v5487 = vsel %vm5473, %v5409, 0.0
  %v5488 = vsel %vm5472, %v5410, 0.0
  %v5489 = vsel %vm5473, %v5411, 0.0
  %v5490 = vsel %vm5472, %v5412, 0.0
  %v5491 = vsel %vm5473, %v5413, 0.0
  %v5492 = vsel %vm5472, %v5414, 0.0
  %v5493 = vsel %vm5473, %v5415, 0.0
  %v5494 = vsel %vm5472, %v5416, 0.0
  %v5495 = vsel %vm5473, %v5417, 0.0
  %v5496 = vsel %vm5472, %v5418, 0.0
  %v5497 = vsel %vm5473, %v5419, 0.0
  %v5498 = vsel %vm5472, %v5420, 0.0
  %v5499 = vsel %vm5473, %v5421, 0.0
  %v5500 = vsel %vm5472, %v5422, 0.0
  %v5501 = vsel %vm5473, %v5423, 0.0
  %v5502 = vsel %vm5472, %v5424, 0.0
  %v5503 = vsel %vm5473, %v5425, 0.0
  %v5504 = vsel %vm5472, %v5426, 0.0
  %v5505 = vsel %vm5473, %v5427, 0.0
  %v5506 = vsel %vm5472, %v5428, 0.0
  %v5507 = vsel %vm5473, %v5429, 0.0
  %v5508 = vsel %vm5472, %v5430, 0.0
  %v5509 = vsel %vm5473, %v5431, 0.0
  %v5510 = vsel %vm5472, %v5432, 0.0
  %v5511 = vsel %vm5473, %v5433, 0.0
  %v5512 = vsel %vm5472, %v5434, 0.0
  %v5513 = vsel %vm5473, %v5435, 0.0
  %v5514 = vsel %vm5472, %v5436, 0.0
  %v5515 = vsel %vm5473, %v5437, 0.0
  %v5516 = vsel %vm5472, %v5438, 0.0
  %v5517 = vsel %vm5473, %v5439, 0.0
  %v5518 = vsel %vm5472, %v5440, 0.0
  %v5519 = vsel %vm5473, %v5441, 0.0
  %v5520 = vsel %vm5472, %v5442, 0.0
  %v5521 = vsel %vm5473, %v5443, 0.0
  %v5522 = vsel %vm5472, %v5444, 0.0
  %v5523 = vsel %vm5473, %v5445, 0.0
  %v5524 = vsel %vm5472, %v5446, 0.0
  %v5525 = vsel %vm5473, %v5447, 0.0
  %v5526 = vsel %vm5472, %v5448, 0.0
  %v5527 = vsel %vm5473, %v5449, 0.0
  %v5528 = vsel %vm5472, %v5450, 0.0
  %v5529 = vsel %vm5473, %v5451, 0.0
  %v5530 = vsel %vm5472, %v5452, 0.0
  %v5531 = vsel %vm5473, %v5453, 0.0
  %v5532 = vsel %vm5472, %v5454, 0.0
  %v5533 = vsel %vm5473, %v5455, 0.0
  %v5534 = vsel %vm5472, %v5456, 0.0
  %v5535 = vsel %vm5473, %v5457, 0.0
  %v5536 = vsel %vm5472, %v5458, 0.0
  %v5537 = vsel %vm5473, %v5459, 0.0
  %v5538 = vld [vmem:[%s9] sm:$0xff]
  %v5539 = vld [vmem:[%s9 + $0x8] sm:$0xff]
  %v5540 = vld [vmem:[%s9 + $0x10] sm:$0xff]
  %v5541 = vld [vmem:[%s9 + $0x18] sm:$0xff]
  %v5542 = vld [vmem:[%s9 + $0x20] sm:$0xff]
  %v5543 = vld [vmem:[%s9 + $0x28] sm:$0xff]
  %v5544 = vld [vmem:[%s9 + $0x30] sm:$0xff]
  %v5545 = vld [vmem:[%s9 + $0x38] sm:$0xff]
  %v5546 = vld [vmem:[%s9 + $0x40] sm:$0xff]
  %v5547 = vld [vmem:[%s9 + $0x48] sm:$0xff]
  %v5548 = vld [vmem:[%s9 + $0x50] sm:$0xff]
  %v5549 = vld [vmem:[%s9 + $0x58] sm:$0xff]
  %v5550 = vld [vmem:[%s9 + $0x60] sm:$0xff]
  %v5551 = vld [vmem:[%s9 + $0x68] sm:$0xff]
  %v5552 = vld [vmem:[%s9 + $0x70] sm:$0xff]
  %v5553 = vld [vmem:[%s9 + $0x78] sm:$0xff]
  %v5554 = vld [vmem:[%s9 + $0x80] sm:$0xff]
  %v5555 = vld [vmem:[%s9 + $0x88] sm:$0xff]
  %v5556 = vld [vmem:[%s9 + $0x90] sm:$0xff]
  %v5557 = vld [vmem:[%s9 + $0x98] sm:$0xff]
  %v5558 = vld [vmem:[%s9 + $0xa0] sm:$0xff]
  %v5559 = vld [vmem:[%s9 + $0xa8] sm:$0xff]
  %v5560 = vld [vmem:[%s9 + $0xb0] sm:$0xff]
  %v5561 = vld [vmem:[%s9 + $0xb8] sm:$0xff]
  %v5562 = vld [vmem:[%s9 + $0xc0] sm:$0xff]
  %v5563 = vld [vmem:[%s9 + $0xc8] sm:$0xff]
  %v5564 = vld [vmem:[%s9 + $0xd0] sm:$0xff]
  %v5565 = vld [vmem:[%s9 + $0xd8] sm:$0xff]
  %v5566 = vld [vmem:[%s9 + $0xe0] sm:$0xff]
  %v5567 = vld [vmem:[%s9 + $0xe8] sm:$0xff]
  %v5568 = vld [vmem:[%s9 + $0xf0] sm:$0xff]
  %v5569 = vld [vmem:[%s9 + $0xf8] sm:$0xff]
  %v5570 = vld [vmem:[%s9 + $0x100] sm:$0xff]
  %v5571 = vld [vmem:[%s9 + $0x108] sm:$0xff]
  %v5572 = vld [vmem:[%s9 + $0x110] sm:$0xff]
  %v5573 = vld [vmem:[%s9 + $0x118] sm:$0xff]
  %v5574 = vld [vmem:[%s9 + $0x120] sm:$0xff]
  %v5575 = vld [vmem:[%s9 + $0x128] sm:$0xff]
  %v5576 = vld [vmem:[%s9 + $0x130] sm:$0xff]
  %v5577 = vld [vmem:[%s9 + $0x138] sm:$0xff]
  %v5578 = vld [vmem:[%s9 + $0x140] sm:$0xff]
  %v5579 = vld [vmem:[%s9 + $0x148] sm:$0xff]
  %v5580 = vld [vmem:[%s9 + $0x150] sm:$0xff]
  %v5581 = vld [vmem:[%s9 + $0x158] sm:$0xff]
  %v5582 = vld [vmem:[%s9 + $0x160] sm:$0xff]
  %v5583 = vld [vmem:[%s9 + $0x168] sm:$0xff]
  %v5584 = vld [vmem:[%s9 + $0x170] sm:$0xff]
  %v5585 = vld [vmem:[%s9 + $0x178] sm:$0xff]
  %v5586 = vld [vmem:[%s9 + $0x180] sm:$0xff]
  %v5587 = vld [vmem:[%s9 + $0x188] sm:$0xff]
  %v5588 = vld [vmem:[%s9 + $0x190] sm:$0xff]
  %v5589 = vld [vmem:[%s9 + $0x198] sm:$0xff]
  %v5590 = vld [vmem:[%s9 + $0x1a0] sm:$0xff]
  %v5591 = vld [vmem:[%s9 + $0x1a8] sm:$0xff]
  %v5592 = vld [vmem:[%s9 + $0x1b0] sm:$0xff]
  %v5593 = vld [vmem:[%s9 + $0x1b8] sm:$0xff]
  %v5594 = vld [vmem:[%s9 + $0x1c0] sm:$0xff]
  %v5595 = vld [vmem:[%s9 + $0x1c8] sm:$0xff]
  %v5596 = vld [vmem:[%s9 + $0x1d0] sm:$0xff]
  %v5597 = vld [vmem:[%s9 + $0x1d8] sm:$0xff]
  %v5598 = vld [vmem:[%s9 + $0x1e0] sm:$0xff]
  %v5599 = vld [vmem:[%s9 + $0x1e8] sm:$0xff]
  %v5600 = vld [vmem:[%s9 + $0x1f0] sm:$0xff]
  %v5601 = vld [vmem:[%s9 + $0x1f8] sm:$0xff]
  %s5602 = scalar_lea.vmem %s9, 512
  %v5603 = vld [vmem:[%s5602] sm:$0xff]
  %v5604 = vld [vmem:[%s5602 + $0x8] sm:$0xff]
  %v5605 = vld [vmem:[%s5602 + $0x10] sm:$0xff]
  %v5606 = vld [vmem:[%s5602 + $0x18] sm:$0xff]
  %v5607 = vld [vmem:[%s5602 + $0x20] sm:$0xff]
  %v5608 = vld [vmem:[%s5602 + $0x28] sm:$0xff]
  %v5609 = vld [vmem:[%s5602 + $0x30] sm:$0xff]
  %v5610 = vld [vmem:[%s5602 + $0x38] sm:$0xff]
  %v5611 = vld [vmem:[%s5602 + $0x40] sm:$0xff]
  %v5612 = vld [vmem:[%s5602 + $0x48] sm:$0xff]
  %v5613 = vld [vmem:[%s5602 + $0x50] sm:$0xff]
  %v5614 = vld [vmem:[%s5602 + $0x58] sm:$0xff]
  %v5615 = vld [vmem:[%s5602 + $0x60] sm:$0xff]
  %v5616 = vld [vmem:[%s5602 + $0x68] sm:$0xff]
  %v5617 = vld [vmem:[%s5602 + $0x70] sm:$0xff]
  %v5618 = vld [vmem:[%s5602 + $0x78] sm:$0xff]
  %v5619 = vld [vmem:[%s5602 + $0x80] sm:$0xff]
  %v5620 = vld [vmem:[%s5602 + $0x88] sm:$0xff]
  %v5621 = vld [vmem:[%s5602 + $0x90] sm:$0xff]
  %v5622 = vld [vmem:[%s5602 + $0x98] sm:$0xff]
  %v5623 = vld [vmem:[%s5602 + $0xa0] sm:$0xff]
  %v5624 = vld [vmem:[%s5602 + $0xa8] sm:$0xff]
  %v5625 = vld [vmem:[%s5602 + $0xb0] sm:$0xff]
  %v5626 = vld [vmem:[%s5602 + $0xb8] sm:$0xff]
  %v5627 = vld [vmem:[%s5602 + $0xc0] sm:$0xff]
  %v5628 = vld [vmem:[%s5602 + $0xc8] sm:$0xff]
  %v5629 = vld [vmem:[%s5602 + $0xd0] sm:$0xff]
  %v5630 = vld [vmem:[%s5602 + $0xd8] sm:$0xff]
  %v5631 = vld [vmem:[%s5602 + $0xe0] sm:$0xff]
  %v5632 = vld [vmem:[%s5602 + $0xe8] sm:$0xff]
  %v5633 = vld [vmem:[%s5602 + $0xf0] sm:$0xff]
  %v5634 = vld [vmem:[%s5602 + $0xf8] sm:$0xff]
  %v5635 = vld [vmem:[%s5602 + $0x100] sm:$0xff]
  %v5636 = vld [vmem:[%s5602 + $0x108] sm:$0xff]
  %v5637 = vld [vmem:[%s5602 + $0x110] sm:$0xff]
  %v5638 = vld [vmem:[%s5602 + $0x118] sm:$0xff]
  %v5639 = vld [vmem:[%s5602 + $0x120] sm:$0xff]
  %v5640 = vld [vmem:[%s5602 + $0x128] sm:$0xff]
  %v5641 = vld [vmem:[%s5602 + $0x130] sm:$0xff]
  %v5642 = vld [vmem:[%s5602 + $0x138] sm:$0xff]
  %v5643 = vld [vmem:[%s5602 + $0x140] sm:$0xff]
  %v5644 = vld [vmem:[%s5602 + $0x148] sm:$0xff]
  %v5645 = vld [vmem:[%s5602 + $0x150] sm:$0xff]
  %v5646 = vld [vmem:[%s5602 + $0x158] sm:$0xff]
  %v5647 = vld [vmem:[%s5602 + $0x160] sm:$0xff]
  %v5648 = vld [vmem:[%s5602 + $0x168] sm:$0xff]
  %v5649 = vld [vmem:[%s5602 + $0x170] sm:$0xff]
  %v5650 = vld [vmem:[%s5602 + $0x178] sm:$0xff]
  %v5651 = vld [vmem:[%s5602 + $0x180] sm:$0xff]
  %v5652 = vld [vmem:[%s5602 + $0x188] sm:$0xff]
  %v5653 = vld [vmem:[%s5602 + $0x190] sm:$0xff]
  %v5654 = vld [vmem:[%s5602 + $0x198] sm:$0xff]
  %v5655 = vld [vmem:[%s5602 + $0x1a0] sm:$0xff]
  %v5656 = vld [vmem:[%s5602 + $0x1a8] sm:$0xff]
  %v5657 = vld [vmem:[%s5602 + $0x1b0] sm:$0xff]
  %v5658 = vld [vmem:[%s5602 + $0x1b8] sm:$0xff]
  %v5659 = vld [vmem:[%s5602 + $0x1c0] sm:$0xff]
  %v5660 = vld [vmem:[%s5602 + $0x1c8] sm:$0xff]
  %v5661 = vld [vmem:[%s5602 + $0x1d0] sm:$0xff]
  %v5662 = vld [vmem:[%s5602 + $0x1d8] sm:$0xff]
  %v5663 = vld [vmem:[%s5602 + $0x1e0] sm:$0xff]
  %v5664 = vld [vmem:[%s5602 + $0x1e8] sm:$0xff]
  %v5665 = vld [vmem:[%s5602 + $0x1f0] sm:$0xff]
  %v5666 = vld [vmem:[%s5602 + $0x1f8] sm:$0xff]
  %5731 = vrot.lane.b32.xlu0 %v5474, 127
  %v5732 = vpop.permute.xlu0 %5731
  %5733 = vrot.lane.b32.xlu0 %v5475, 127
  %v5734 = vpop.permute.xlu0 %5733
  %5735 = vrot.lane.b32.xlu0 %v5476, 127
  %v5736 = vpop.permute.xlu0 %5735
  %5737 = vrot.lane.b32.xlu0 %v5477, 127
  %v5738 = vpop.permute.xlu0 %5737
  %5739 = vrot.lane.b32.xlu0 %v5478, 127
  %v5740 = vpop.permute.xlu0 %5739
  %5741 = vrot.lane.b32.xlu0 %v5479, 127
  %v5742 = vpop.permute.xlu0 %5741
  %5743 = vrot.lane.b32.xlu0 %v5480, 127
  %v5744 = vpop.permute.xlu0 %5743
  %5745 = vrot.lane.b32.xlu0 %v5481, 127
  %v5746 = vpop.permute.xlu0 %5745
  %5747 = vrot.lane.b32.xlu0 %v5482, 127
  %v5748 = vpop.permute.xlu0 %5747
  %5749 = vrot.lane.b32.xlu0 %v5483, 127
  %v5750 = vpop.permute.xlu0 %5749
  %5751 = vrot.lane.b32.xlu0 %v5484, 127
  %v5752 = vpop.permute.xlu0 %5751
  %5753 = vrot.lane.b32.xlu0 %v5485, 127
  %v5754 = vpop.permute.xlu0 %5753
  %5755 = vrot.lane.b32.xlu0 %v5486, 127
  %v5756 = vpop.permute.xlu0 %5755
  %5757 = vrot.lane.b32.xlu0 %v5487, 127
  %v5758 = vpop.permute.xlu0 %5757
  %5759 = vrot.lane.b32.xlu0 %v5488, 127
  %v5760 = vpop.permute.xlu0 %5759
  %5761 = vrot.lane.b32.xlu0 %v5489, 127
  %v5762 = vpop.permute.xlu0 %5761
  %5763 = vrot.lane.b32.xlu0 %v5490, 127
  %v5764 = vpop.permute.xlu0 %5763
  %5765 = vrot.lane.b32.xlu0 %v5491, 127
  %v5766 = vpop.permute.xlu0 %5765
  %5767 = vrot.lane.b32.xlu0 %v5492, 127
  %v5768 = vpop.permute.xlu0 %5767
  %5769 = vrot.lane.b32.xlu0 %v5493, 127
  %v5770 = vpop.permute.xlu0 %5769
  %5771 = vrot.lane.b32.xlu0 %v5494, 127
  %v5772 = vpop.permute.xlu0 %5771
  %5773 = vrot.lane.b32.xlu0 %v5495, 127
  %v5774 = vpop.permute.xlu0 %5773
  %5775 = vrot.lane.b32.xlu0 %v5496, 127
  %v5776 = vpop.permute.xlu0 %5775
  %5777 = vrot.lane.b32.xlu0 %v5497, 127
  %v5778 = vpop.permute.xlu0 %5777
  %5779 = vrot.lane.b32.xlu0 %v5498, 127
  %v5780 = vpop.permute.xlu0 %5779
  %5781 = vrot.lane.b32.xlu0 %v5499, 127
  %v5782 = vpop.permute.xlu0 %5781
  %5783 = vrot.lane.b32.xlu0 %v5500, 127
  %v5784 = vpop.permute.xlu0 %5783
  %5785 = vrot.lane.b32.xlu0 %v5501, 127
  %v5786 = vpop.permute.xlu0 %5785
  %5787 = vrot.lane.b32.xlu0 %v5502, 127
  %v5788 = vpop.permute.xlu0 %5787
  %5789 = vrot.lane.b32.xlu0 %v5503, 127
  %v5790 = vpop.permute.xlu0 %5789
  %5791 = vrot.lane.b32.xlu0 %v5504, 127
  %v5792 = vpop.permute.xlu0 %5791
  %5793 = vrot.lane.b32.xlu0 %v5505, 127
  %v5794 = vpop.permute.xlu0 %5793
  %5795 = vrot.lane.b32.xlu0 %v5506, 127
  %v5796 = vpop.permute.xlu0 %5795
  %5797 = vrot.lane.b32.xlu0 %v5507, 127
  %v5798 = vpop.permute.xlu0 %5797
  %5799 = vrot.lane.b32.xlu0 %v5508, 127
  %v5800 = vpop.permute.xlu0 %5799
  %5801 = vrot.lane.b32.xlu0 %v5509, 127
  %v5802 = vpop.permute.xlu0 %5801
  %5803 = vrot.lane.b32.xlu0 %v5510, 127
  %v5804 = vpop.permute.xlu0 %5803
  %5805 = vrot.lane.b32.xlu0 %v5511, 127
  %v5806 = vpop.permute.xlu0 %5805
  %5807 = vrot.lane.b32.xlu0 %v5512, 127
  %v5808 = vpop.permute.xlu0 %5807
  %5809 = vrot.lane.b32.xlu0 %v5513, 127
  %v5810 = vpop.permute.xlu0 %5809
  %5811 = vrot.lane.b32.xlu0 %v5514, 127
  %v5812 = vpop.permute.xlu0 %5811
  %5813 = vrot.lane.b32.xlu0 %v5515, 127
  %v5814 = vpop.permute.xlu0 %5813
  %5815 = vrot.lane.b32.xlu0 %v5516, 127
  %v5816 = vpop.permute.xlu0 %5815
  %5817 = vrot.lane.b32.xlu0 %v5517, 127
  %v5818 = vpop.permute.xlu0 %5817
  %5819 = vrot.lane.b32.xlu0 %v5518, 127
  %v5820 = vpop.permute.xlu0 %5819
  %5821 = vrot.lane.b32.xlu0 %v5519, 127
  %v5822 = vpop.permute.xlu0 %5821
  %5823 = vrot.lane.b32.xlu0 %v5520, 127
  %v5824 = vpop.permute.xlu0 %5823
  %5825 = vrot.lane.b32.xlu0 %v5521, 127
  %v5826 = vpop.permute.xlu0 %5825
  %5827 = vrot.lane.b32.xlu0 %v5522, 127
  %v5828 = vpop.permute.xlu0 %5827
  %5829 = vrot.lane.b32.xlu0 %v5523, 127
  %v5830 = vpop.permute.xlu0 %5829
  %5831 = vrot.lane.b32.xlu0 %v5524, 127
  %v5832 = vpop.permute.xlu0 %5831
  %5833 = vrot.lane.b32.xlu0 %v5525, 127
  %v5834 = vpop.permute.xlu0 %5833
  %5835 = vrot.lane.b32.xlu0 %v5526, 127
  %v5836 = vpop.permute.xlu0 %5835
  %5837 = vrot.lane.b32.xlu0 %v5527, 127
  %v5838 = vpop.permute.xlu0 %5837
  %5839 = vrot.lane.b32.xlu0 %v5528, 127
  %v5840 = vpop.permute.xlu0 %5839
  %5841 = vrot.lane.b32.xlu0 %v5529, 127
  %v5842 = vpop.permute.xlu0 %5841
  %5843 = vrot.lane.b32.xlu0 %v5530, 127
  %v5844 = vpop.permute.xlu0 %5843
  %5845 = vrot.lane.b32.xlu0 %v5531, 127
  %v5846 = vpop.permute.xlu0 %5845
  %5847 = vrot.lane.b32.xlu0 %v5532, 127
  %v5848 = vpop.permute.xlu0 %5847
  %5849 = vrot.lane.b32.xlu0 %v5533, 127
  %v5850 = vpop.permute.xlu0 %5849
  %5851 = vrot.lane.b32.xlu0 %v5534, 127
  %v5852 = vpop.permute.xlu0 %5851
  %5853 = vrot.lane.b32.xlu0 %v5535, 127
  %v5854 = vpop.permute.xlu0 %5853
  %5855 = vrot.lane.b32.xlu0 %v5536, 127
  %v5856 = vpop.permute.xlu0 %5855
  %5857 = vrot.lane.b32.xlu0 %v5537, 127
  %v5858 = vpop.permute.xlu0 %5857
  %v5859 = vsel %vm148, %v5732, %v5734
  %v5860 = vsel %vm148, %v5736, %v5738
  %v5861 = vsel %vm148, %v5740, %v5742
  %v5862 = vsel %vm148, %v5744, %v5746
  %v5863 = vsel %vm148, %v5748, %v5750
  %v5864 = vsel %vm148, %v5752, %v5754
  %v5865 = vsel %vm148, %v5756, %v5758
  %v5866 = vsel %vm148, %v5760, %v5762
  %v5867 = vsel %vm148, %v5764, %v5766
  %v5868 = vsel %vm148, %v5768, %v5770
  %v5869 = vsel %vm148, %v5772, %v5774
  %v5870 = vsel %vm148, %v5776, %v5778
  %v5871 = vsel %vm148, %v5780, %v5782
  %v5872 = vsel %vm148, %v5784, %v5786
  %v5873 = vsel %vm148, %v5788, %v5790
  %v5874 = vsel %vm148, %v5792, %v5794
  %v5875 = vsel %vm148, %v5796, %v5798
  %v5876 = vsel %vm148, %v5800, %v5802
  %v5877 = vsel %vm148, %v5804, %v5806
  %v5878 = vsel %vm148, %v5808, %v5810
  %v5879 = vsel %vm148, %v5812, %v5814
  %v5880 = vsel %vm148, %v5816, %v5818
  %v5881 = vsel %vm148, %v5820, %v5822
  %v5882 = vsel %vm148, %v5824, %v5826
  %v5883 = vsel %vm148, %v5828, %v5830
  %v5884 = vsel %vm148, %v5832, %v5834
  %v5885 = vsel %vm148, %v5836, %v5838
  %v5886 = vsel %vm148, %v5840, %v5842
  %v5887 = vsel %vm148, %v5844, %v5846
  %v5888 = vsel %vm148, %v5848, %v5850
  %v5889 = vsel %vm148, %v5852, %v5854
  %v5890 = vsel %vm148, %v5856, %v5858
  %5955 = vmatprep.subr.mxu0 %v5734
  %5956 = vmatpush1.msra.mxu0 %v5859
  %5957 = vmatprep.subr.mxu0 %v5738
  %5958 = vmatpush1.msra.mxu0 %v5860
  %5959 = vmatprep.subr.mxu0 %v5742
  %5960 = vmatpush1.msra.mxu0 %v5861
  %5961 = vmatprep.subr.mxu0 %v5746
  %5962 = vmatpush1.msra.mxu0 %v5862
  %5963 = vmatprep.subr.mxu0 %v5750
  %5964 = vmatpush1.msra.mxu0 %v5863
  %5965 = vmatprep.subr.mxu0 %v5754
  %5966 = vmatpush1.msra.mxu0 %v5864
  %5967 = vmatprep.subr.mxu0 %v5758
  %5968 = vmatpush1.msra.mxu0 %v5865
  %5969 = vmatprep.subr.mxu0 %v5762
  %5970 = vmatpush1.msra.mxu0 %v5866
  %5971 = vmatprep.subr.mxu0 %v5766
  %5972 = vmatpush1.msra.mxu0 %v5867
  %5973 = vmatprep.subr.mxu0 %v5770
  %5974 = vmatpush1.msra.mxu0 %v5868
  %5975 = vmatprep.subr.mxu0 %v5774
  %5976 = vmatpush1.msra.mxu0 %v5869
  %5977 = vmatprep.subr.mxu0 %v5778
  %5978 = vmatpush1.msra.mxu0 %v5870
  %5979 = vmatprep.subr.mxu0 %v5782
  %5980 = vmatpush1.msra.mxu0 %v5871
  %5981 = vmatprep.subr.mxu0 %v5786
  %5982 = vmatpush1.msra.mxu0 %v5872
  %5983 = vmatprep.subr.mxu0 %v5790
  %5984 = vmatpush1.msra.mxu0 %v5873
  %5985 = vmatprep.subr.mxu0 %v5794
  %5986 = vmatpush1.msra.mxu0 %v5874
  %5987 = vmatprep.subr.mxu0 %v5798
  %5988 = vmatpush1.msra.mxu0 %v5875
  %5989 = vmatprep.subr.mxu0 %v5802
  %5990 = vmatpush1.msra.mxu0 %v5876
  %5991 = vmatprep.subr.mxu0 %v5806
  %5992 = vmatpush1.msra.mxu0 %v5877
  %5993 = vmatprep.subr.mxu0 %v5810
  %5994 = vmatpush1.msra.mxu0 %v5878
  %5995 = vmatprep.subr.mxu0 %v5814
  %5996 = vmatpush1.msra.mxu0 %v5879
  %5997 = vmatprep.subr.mxu0 %v5818
  %5998 = vmatpush1.msra.mxu0 %v5880
  %5999 = vmatprep.subr.mxu0 %v5822
  %6000 = vmatpush1.msra.mxu0 %v5881
  %6001 = vmatprep.subr.mxu0 %v5826
  %6002 = vmatpush1.msra.mxu0 %v5882
  %6003 = vmatprep.subr.mxu0 %v5830
  %6004 = vmatpush1.msra.mxu0 %v5883
  %6005 = vmatprep.subr.mxu0 %v5834
  %6006 = vmatpush1.msra.mxu0 %v5884
  %6007 = vmatprep.subr.mxu0 %v5838
  %6008 = vmatpush1.msra.mxu0 %v5885
  %6009 = vmatprep.subr.mxu0 %v5842
  %6010 = vmatpush1.msra.mxu0 %v5886
  %6011 = vmatprep.subr.mxu0 %v5846
  %6012 = vmatpush1.msra.mxu0 %v5887
  %6013 = vmatprep.subr.mxu0 %v5850
  %6014 = vmatpush1.msra.mxu0 %v5888
  %6015 = vmatprep.subr.mxu0 %v5854
  %6016 = vmatpush1.msra.mxu0 %v5889
  %6017 = vmatprep.subr.mxu0 %v5858
  %6018 = vmatpush1.msra.mxu0 %v5890
  %6019 = vmatprep.mubr.f32.mxu0 %v5604
  %6020 = vmatmul.mubr.f32.gmra.mrb[0].mxu0 %v5603
  %v6021 = vpop.f32.mrb[0].mxu0
  %v6022 = vadd.f32 0.0, %v6021
  %v6023 = vpop.f32.mrb[0].mxu0
  %v6024 = vadd.f32 0.0, %v6023
  %6025 = vmatprep.mubr.f32.mxu0 %v5606
  %6026 = vmatmul.mubr.f32.gmra.mrb[0].mxu0 %v5605
  %v6027 = vpop.f32.mrb[0].mxu0
  %v6028 = vadd.f32 0.0, %v6027
  %v6029 = vpop.f32.mrb[0].mxu0
  %v6030 = vadd.f32 0.0, %v6029
  %6031 = vmatprep.mubr.f32.mxu0 %v5608
  %6032 = vmatmul.mubr.f32.gmra.mrb[0].mxu0 %v5607
  %v6033 = vpop.f32.mrb[0].mxu0
  %v6034 = vadd.f32 0.0, %v6033
  %v6035 = vpop.f32.mrb[0].mxu0
  %v6036 = vadd.f32 0.0, %v6035
  %6037 = vmatprep.mubr.f32.mxu0 %v5610
  %6038 = vmatmul.mubr.f32.gmra.mrb[0].mxu0 %v5609
  %v6039 = vpop.f32.mrb[0].mxu0
  %v6040 = vadd.f32 0.0, %v6039
  %v6041 = vpop.f32.mrb[0].mxu0
  %v6042 = vadd.f32 0.0, %v6041
  %6043 = vmatprep.mubr.f32.mxu0 %v5612
  %6044 = vmatmul.mubr.f32.gmra.mrb[0].mxu0 %v5611
  %v6045 = vpop.f32.mrb[0].mxu0
  %v6046 = vadd.f32 0.0, %v6045
  %v6047 = vpop.f32.mrb[0].mxu0
  %v6048 = vadd.f32 0.0, %v6047
  %6049 = vmatprep.mubr.f32.mxu0 %v5614
  %6050 = vmatmul.mubr.f32.gmra.mrb[0].mxu0 %v5613
  %v6051 = vpop.f32.mrb[0].mxu0
  %v6052 = vadd.f32 0.0, %v6051
  %v6053 = vpop.f32.mrb[0].mxu0
  %v6054 = vadd.f32 0.0, %v6053
  %6055 = vmatprep.mubr.f32.mxu0 %v5616
  %6056 = vmatmul.mubr.f32.gmra.mrb[0].mxu0 %v5615
  %v6057 = vpop.f32.mrb[0].mxu0
  %v6058 = vadd.f32 0.0, %v6057
  %v6059 = vpop.f32.mrb[0].mxu0
  %v6060 = vadd.f32 0.0, %v6059
  %6061 = vmatprep.mubr.f32.mxu0 %v5618
  %6062 = vmatmul.mubr.f32.gmra.mrb[0].mxu0 %v5617
  %v6063 = vpop.f32.mrb[0].mxu0
  %v6064 = vadd.f32 0.0, %v6063
  %v6065 = vpop.f32.mrb[0].mxu0
  %v6066 = vadd.f32 0.0, %v6065
  %6067 = vmatprep.mubr.f32.mxu0 %v5620
  %6068 = vmatmul.mubr.f32.gmra.mrb[0].mxu0 %v5619
  %v6069 = vpop.f32.mrb[0].mxu0
  %v6070 = vadd.f32 0.0, %v6069
  %v6071 = vpop.f32.mrb[0].mxu0
  %v6072 = vadd.f32 0.0, %v6071
  %6073 = vmatprep.mubr.f32.mxu0 %v5622
  %6074 = vmatmul.mubr.f32.gmra.mrb[0].mxu0 %v5621
  %v6075 = vpop.f32.mrb[0].mxu0
  %v6076 = vadd.f32 0.0, %v6075
  %v6077 = vpop.f32.mrb[0].mxu0
  %v6078 = vadd.f32 0.0, %v6077
  %6079 = vmatprep.mubr.f32.mxu0 %v5624
  %6080 = vmatmul.mubr.f32.gmra.mrb[0].mxu0 %v5623
  %v6081 = vpop.f32.mrb[0].mxu0
  %v6082 = vadd.f32 0.0, %v6081
  %v6083 = vpop.f32.mrb[0].mxu0
  %v6084 = vadd.f32 0.0, %v6083
  %6085 = vmatprep.mubr.f32.mxu0 %v5626
  %6086 = vmatmul.mubr.f32.gmra.mrb[0].mxu0 %v5625
  %v6087 = vpop.f32.mrb[0].mxu0
  %v6088 = vadd.f32 0.0, %v6087
  %v6089 = vpop.f32.mrb[0].mxu0
  %v6090 = vadd.f32 0.0, %v6089
  %6091 = vmatprep.mubr.f32.mxu0 %v5628
  %6092 = vmatmul.mubr.f32.gmra.mrb[0].mxu0 %v5627
  %v6093 = vpop.f32.mrb[0].mxu0
  %v6094 = vadd.f32 0.0, %v6093
  %v6095 = vpop.f32.mrb[0].mxu0
  %v6096 = vadd.f32 0.0, %v6095
  %6097 = vmatprep.mubr.f32.mxu0 %v5630
  %6098 = vmatmul.mubr.f32.gmra.mrb[0].mxu0 %v5629
  %v6099 = vpop.f32.mrb[0].mxu0
  %v6100 = vadd.f32 0.0, %v6099
  %v6101 = vpop.f32.mrb[0].mxu0
  %v6102 = vadd.f32 0.0, %v6101
  %6103 = vmatprep.mubr.f32.mxu0 %v5632
  %6104 = vmatmul.mubr.f32.gmra.mrb[0].mxu0 %v5631
  %v6105 = vpop.f32.mrb[0].mxu0
  %v6106 = vadd.f32 0.0, %v6105
  %v6107 = vpop.f32.mrb[0].mxu0
  %v6108 = vadd.f32 0.0, %v6107
  %6109 = vmatprep.mubr.f32.mxu0 %v5634
  %6110 = vmatmul.mubr.f32.gmra.mrb[0].mxu0 %v5633
  %v6111 = vpop.f32.mrb[0].mxu0
  %v6112 = vadd.f32 0.0, %v6111
  %v6113 = vpop.f32.mrb[0].mxu0
  %v6114 = vadd.f32 0.0, %v6113
  %6115 = vmatprep.mubr.f32.mxu0 %v5636
  %6116 = vmatmul.mubr.f32.gmra.mrb[0].mxu0 %v5635
  %v6117 = vpop.f32.mrb[0].mxu0
  %v6118 = vadd.f32 0.0, %v6117
  %v6119 = vpop.f32.mrb[0].mxu0
  %v6120 = vadd.f32 0.0, %v6119
  %6121 = vmatprep.mubr.f32.mxu0 %v5638
  %6122 = vmatmul.mubr.f32.gmra.mrb[0].mxu0 %v5637
  %v6123 = vpop.f32.mrb[0].mxu0
  %v6124 = vadd.f32 0.0, %v6123
  %v6125 = vpop.f32.mrb[0].mxu0
  %v6126 = vadd.f32 0.0, %v6125
  %6127 = vmatprep.mubr.f32.mxu0 %v5640
  %6128 = vmatmul.mubr.f32.gmra.mrb[0].mxu0 %v5639
  %v6129 = vpop.f32.mrb[0].mxu0
  %v6130 = vadd.f32 0.0, %v6129
  %v6131 = vpop.f32.mrb[0].mxu0
  %v6132 = vadd.f32 0.0, %v6131
  %6133 = vmatprep.mubr.f32.mxu0 %v5642
  %6134 = vmatmul.mubr.f32.gmra.mrb[0].mxu0 %v5641
  %v6135 = vpop.f32.mrb[0].mxu0
  %v6136 = vadd.f32 0.0, %v6135
  %v6137 = vpop.f32.mrb[0].mxu0
  %v6138 = vadd.f32 0.0, %v6137
  %6139 = vmatprep.mubr.f32.mxu0 %v5644
  %6140 = vmatmul.mubr.f32.gmra.mrb[0].mxu0 %v5643
  %v6141 = vpop.f32.mrb[0].mxu0
  %v6142 = vadd.f32 0.0, %v6141
  %v6143 = vpop.f32.mrb[0].mxu0
  %v6144 = vadd.f32 0.0, %v6143
  %6145 = vmatprep.mubr.f32.mxu0 %v5646
  %6146 = vmatmul.mubr.f32.gmra.mrb[0].mxu0 %v5645
  %v6147 = vpop.f32.mrb[0].mxu0
  %v6148 = vadd.f32 0.0, %v6147
  %v6149 = vpop.f32.mrb[0].mxu0
  %v6150 = vadd.f32 0.0, %v6149
  %6151 = vmatprep.mubr.f32.mxu0 %v5648
  %6152 = vmatmul.mubr.f32.gmra.mrb[0].mxu0 %v5647
  %v6153 = vpop.f32.mrb[0].mxu0
  %v6154 = vadd.f32 0.0, %v6153
  %v6155 = vpop.f32.mrb[0].mxu0
  %v6156 = vadd.f32 0.0, %v6155
  %6157 = vmatprep.mubr.f32.mxu0 %v5650
  %6158 = vmatmul.mubr.f32.gmra.mrb[0].mxu0 %v5649
  %v6159 = vpop.f32.mrb[0].mxu0
  %v6160 = vadd.f32 0.0, %v6159
  %v6161 = vpop.f32.mrb[0].mxu0
  %v6162 = vadd.f32 0.0, %v6161
  %6163 = vmatprep.mubr.f32.mxu0 %v5652
  %6164 = vmatmul.mubr.f32.gmra.mrb[0].mxu0 %v5651
  %v6165 = vpop.f32.mrb[0].mxu0
  %v6166 = vadd.f32 0.0, %v6165
  %v6167 = vpop.f32.mrb[0].mxu0
  %v6168 = vadd.f32 0.0, %v6167
  %6169 = vmatprep.mubr.f32.mxu0 %v5654
  %6170 = vmatmul.mubr.f32.gmra.mrb[0].mxu0 %v5653
  %v6171 = vpop.f32.mrb[0].mxu0
  %v6172 = vadd.f32 0.0, %v6171
  %v6173 = vpop.f32.mrb[0].mxu0
  %v6174 = vadd.f32 0.0, %v6173
  %6175 = vmatprep.mubr.f32.mxu0 %v5656
  %6176 = vmatmul.mubr.f32.gmra.mrb[0].mxu0 %v5655
  %v6177 = vpop.f32.mrb[0].mxu0
  %v6178 = vadd.f32 0.0, %v6177
  %v6179 = vpop.f32.mrb[0].mxu0
  %v6180 = vadd.f32 0.0, %v6179
  %6181 = vmatprep.mubr.f32.mxu0 %v5658
  %6182 = vmatmul.mubr.f32.gmra.mrb[0].mxu0 %v5657
  %v6183 = vpop.f32.mrb[0].mxu0
  %v6184 = vadd.f32 0.0, %v6183
  %v6185 = vpop.f32.mrb[0].mxu0
  %v6186 = vadd.f32 0.0, %v6185
  %6187 = vmatprep.mubr.f32.mxu0 %v5660
  %6188 = vmatmul.mubr.f32.gmra.mrb[0].mxu0 %v5659
  %v6189 = vpop.f32.mrb[0].mxu0
  %v6190 = vadd.f32 0.0, %v6189
  %v6191 = vpop.f32.mrb[0].mxu0
  %v6192 = vadd.f32 0.0, %v6191
  %6193 = vmatprep.mubr.f32.mxu0 %v5662
  %6194 = vmatmul.mubr.f32.gmra.mrb[0].mxu0 %v5661
  %v6195 = vpop.f32.mrb[0].mxu0
  %v6196 = vadd.f32 0.0, %v6195
  %v6197 = vpop.f32.mrb[0].mxu0
  %v6198 = vadd.f32 0.0, %v6197
  %6199 = vmatprep.mubr.f32.mxu0 %v5664
  %6200 = vmatmul.mubr.f32.gmra.mrb[0].mxu0 %v5663
  %v6201 = vpop.f32.mrb[0].mxu0
  %v6202 = vadd.f32 0.0, %v6201
  %v6203 = vpop.f32.mrb[0].mxu0
  %v6204 = vadd.f32 0.0, %v6203
  %6205 = vmatprep.mubr.f32.mxu0 %v5666
  %6206 = vmatmul.mubr.f32.gmra.mrb[0].mxu0 %v5665
  %v6207 = vpop.f32.mrb[0].mxu0
  %v6208 = vadd.f32 0.0, %v6207
  %v6209 = vpop.f32.mrb[0].mxu0
  %v6210 = vadd.f32 0.0, %v6209
  %6211 = vdwg.mxu0
  %6212 = vmatprep.subr.mxu0 %v5475
  %6213 = vmatpush1.msra.mxu0 %v5474
  %6214 = vmatprep.subr.mxu0 %v5477
  %6215 = vmatpush1.msra.mxu0 %v5476
  %6216 = vmatprep.subr.mxu0 %v5479
  %6217 = vmatpush1.msra.mxu0 %v5478
  %6218 = vmatprep.subr.mxu0 %v5481
  %6219 = vmatpush1.msra.mxu0 %v5480
  %6220 = vmatprep.subr.mxu0 %v5483
  %6221 = vmatpush1.msra.mxu0 %v5482
  %6222 = vmatprep.subr.mxu0 %v5485
  %6223 = vmatpush1.msra.mxu0 %v5484
  %6224 = vmatprep.subr.mxu0 %v5487
  %6225 = vmatpush1.msra.mxu0 %v5486
  %6226 = vmatprep.subr.mxu0 %v5489
  %6227 = vmatpush1.msra.mxu0 %v5488
  %6228 = vmatprep.subr.mxu0 %v5491
  %6229 = vmatpush1.msra.mxu0 %v5490
  %6230 = vmatprep.subr.mxu0 %v5493
  %6231 = vmatpush1.msra.mxu0 %v5492
  %6232 = vmatprep.subr.mxu0 %v5495
  %6233 = vmatpush1.msra.mxu0 %v5494
  %6234 = vmatprep.subr.mxu0 %v5497
  %6235 = vmatpush1.msra.mxu0 %v5496
  %6236 = vmatprep.subr.mxu0 %v5499
  %6237 = vmatpush1.msra.mxu0 %v5498
  %6238 = vmatprep.subr.mxu0 %v5501
  %6239 = vmatpush1.msra.mxu0 %v5500
  %6240 = vmatprep.subr.mxu0 %v5503
  %6241 = vmatpush1.msra.mxu0 %v5502
  %6242 = vmatprep.subr.mxu0 %v5505
  %6243 = vmatpush1.msra.mxu0 %v5504
  %6244 = vmatprep.subr.mxu0 %v5507
  %6245 = vmatpush1.msra.mxu0 %v5506
  %6246 = vmatprep.subr.mxu0 %v5509
  %6247 = vmatpush1.msra.mxu0 %v5508
  %6248 = vmatprep.subr.mxu0 %v5511
  %6249 = vmatpush1.msra.mxu0 %v5510
  %6250 = vmatprep.subr.mxu0 %v5513
  %6251 = vmatpush1.msra.mxu0 %v5512
  %6252 = vmatprep.subr.mxu0 %v5515
  %6253 = vmatpush1.msra.mxu0 %v5514
  %6254 = vmatprep.subr.mxu0 %v5517
  %6255 = vmatpush1.msra.mxu0 %v5516
  %6256 = vmatprep.subr.mxu0 %v5519
  %6257 = vmatpush1.msra.mxu0 %v5518
  %6258 = vmatprep.subr.mxu0 %v5521
  %6259 = vmatpush1.msra.mxu0 %v5520
  %6260 = vmatprep.subr.mxu0 %v5523
  %6261 = vmatpush1.msra.mxu0 %v5522
  %6262 = vmatprep.subr.mxu0 %v5525
  %6263 = vmatpush1.msra.mxu0 %v5524
  %6264 = vmatprep.subr.mxu0 %v5527
  %6265 = vmatpush1.msra.mxu0 %v5526
  %6266 = vmatprep.subr.mxu0 %v5529
  %6267 = vmatpush1.msra.mxu0 %v5528
  %6268 = vmatprep.subr.mxu0 %v5531
  %6269 = vmatpush1.msra.mxu0 %v5530
  %6270 = vmatprep.subr.mxu0 %v5533
  %6271 = vmatpush1.msra.mxu0 %v5532
  %6272 = vmatprep.subr.mxu0 %v5535
  %6273 = vmatpush1.msra.mxu0 %v5534
  %6274 = vmatprep.subr.mxu0 %v5537
  %6275 = vmatpush1.msra.mxu0 %v5536
  %6276 = vmatprep.mubr.f32.mxu0 %v5539
  %6277 = vmatmul.mubr.f32.gmra.mrb[0].mxu0 %v5538
  %v6278 = vpop.f32.mrb[0].mxu0
  %v6279 = vadd.f32 %v6022, %v6278
  %v6280 = vpop.f32.mrb[0].mxu0
  %v6281 = vadd.f32 %v6024, %v6280
  %6282 = vmatprep.mubr.f32.mxu0 %v5541
  %6283 = vmatmul.mubr.f32.gmra.mrb[0].mxu0 %v5540
  %v6284 = vpop.f32.mrb[0].mxu0
  %v6285 = vadd.f32 %v6028, %v6284
  %v6286 = vpop.f32.mrb[0].mxu0
  %v6287 = vadd.f32 %v6030, %v6286
  %6288 = vmatprep.mubr.f32.mxu0 %v5543
  %6289 = vmatmul.mubr.f32.gmra.mrb[0].mxu0 %v5542
  %v6290 = vpop.f32.mrb[0].mxu0
  %v6291 = vadd.f32 %v6034, %v6290
  %v6292 = vpop.f32.mrb[0].mxu0
  %v6293 = vadd.f32 %v6036, %v6292
  %6294 = vmatprep.mubr.f32.mxu0 %v5545
  %6295 = vmatmul.mubr.f32.gmra.mrb[0].mxu0 %v5544
  %v6296 = vpop.f32.mrb[0].mxu0
  %v6297 = vadd.f32 %v6040, %v6296
  %v6298 = vpop.f32.mrb[0].mxu0
  %v6299 = vadd.f32 %v6042, %v6298
  %6300 = vmatprep.mubr.f32.mxu0 %v5547
  %6301 = vmatmul.mubr.f32.gmra.mrb[0].mxu0 %v5546
  %v6302 = vpop.f32.mrb[0].mxu0
  %v6303 = vadd.f32 %v6046, %v6302
  %v6304 = vpop.f32.mrb[0].mxu0
  %v6305 = vadd.f32 %v6048, %v6304
  %6306 = vmatprep.mubr.f32.mxu0 %v5549
  %6307 = vmatmul.mubr.f32.gmra.mrb[0].mxu0 %v5548
  %v6308 = vpop.f32.mrb[0].mxu0
  %v6309 = vadd.f32 %v6052, %v6308
  %v6310 = vpop.f32.mrb[0].mxu0
  %v6311 = vadd.f32 %v6054, %v6310
  %6312 = vmatprep.mubr.f32.mxu0 %v5551
  %6313 = vmatmul.mubr.f32.gmra.mrb[0].mxu0 %v5550
  %v6314 = vpop.f32.mrb[0].mxu0
  %v6315 = vadd.f32 %v6058, %v6314
  %v6316 = vpop.f32.mrb[0].mxu0
  %v6317 = vadd.f32 %v6060, %v6316
  %6318 = vmatprep.mubr.f32.mxu0 %v5553
  %6319 = vmatmul.mubr.f32.gmra.mrb[0].mxu0 %v5552
  %v6320 = vpop.f32.mrb[0].mxu0
  %v6321 = vadd.f32 %v6064, %v6320
  %v6322 = vpop.f32.mrb[0].mxu0
  %v6323 = vadd.f32 %v6066, %v6322
  %6324 = vmatprep.mubr.f32.mxu0 %v5555
  %6325 = vmatmul.mubr.f32.gmra.mrb[0].mxu0 %v5554
  %v6326 = vpop.f32.mrb[0].mxu0
  %v6327 = vadd.f32 %v6070, %v6326
  %v6328 = vpop.f32.mrb[0].mxu0
  %v6329 = vadd.f32 %v6072, %v6328
  %6330 = vmatprep.mubr.f32.mxu0 %v5557
  %6331 = vmatmul.mubr.f32.gmra.mrb[0].mxu0 %v5556
  %v6332 = vpop.f32.mrb[0].mxu0
  %v6333 = vadd.f32 %v6076, %v6332
  %v6334 = vpop.f32.mrb[0].mxu0
  %v6335 = vadd.f32 %v6078, %v6334
  %6336 = vmatprep.mubr.f32.mxu0 %v5559
  %6337 = vmatmul.mubr.f32.gmra.mrb[0].mxu0 %v5558
  %v6338 = vpop.f32.mrb[0].mxu0
  %v6339 = vadd.f32 %v6082, %v6338
  %v6340 = vpop.f32.mrb[0].mxu0
  %v6341 = vadd.f32 %v6084, %v6340
  %6342 = vmatprep.mubr.f32.mxu0 %v5561
  %6343 = vmatmul.mubr.f32.gmra.mrb[0].mxu0 %v5560
  %v6344 = vpop.f32.mrb[0].mxu0
  %v6345 = vadd.f32 %v6088, %v6344
  %v6346 = vpop.f32.mrb[0].mxu0
  %v6347 = vadd.f32 %v6090, %v6346
  %6348 = vmatprep.mubr.f32.mxu0 %v5563
  %6349 = vmatmul.mubr.f32.gmra.mrb[0].mxu0 %v5562
  %v6350 = vpop.f32.mrb[0].mxu0
  %v6351 = vadd.f32 %v6094, %v6350
  %v6352 = vpop.f32.mrb[0].mxu0
  %v6353 = vadd.f32 %v6096, %v6352
  %6354 = vmatprep.mubr.f32.mxu0 %v5565
  %6355 = vmatmul.mubr.f32.gmra.mrb[0].mxu0 %v5564
  %v6356 = vpop.f32.mrb[0].mxu0
  %v6357 = vadd.f32 %v6100, %v6356
  %v6358 = vpop.f32.mrb[0].mxu0
  %v6359 = vadd.f32 %v6102, %v6358
  %6360 = vmatprep.mubr.f32.mxu0 %v5567
  %6361 = vmatmul.mubr.f32.gmra.mrb[0].mxu0 %v5566
  %v6362 = vpop.f32.mrb[0].mxu0
  %v6363 = vadd.f32 %v6106, %v6362
  %v6364 = vpop.f32.mrb[0].mxu0
  %v6365 = vadd.f32 %v6108, %v6364
  %6366 = vmatprep.mubr.f32.mxu0 %v5569
  %6367 = vmatmul.mubr.f32.gmra.mrb[0].mxu0 %v5568
  %v6368 = vpop.f32.mrb[0].mxu0
  %v6369 = vadd.f32 %v6112, %v6368
  %v6370 = vpop.f32.mrb[0].mxu0
  %v6371 = vadd.f32 %v6114, %v6370
  %6372 = vmatprep.mubr.f32.mxu0 %v5571
  %6373 = vmatmul.mubr.f32.gmra.mrb[0].mxu0 %v5570
  %v6374 = vpop.f32.mrb[0].mxu0
  %v6375 = vadd.f32 %v6118, %v6374
  %v6376 = vpop.f32.mrb[0].mxu0
  %v6377 = vadd.f32 %v6120, %v6376
  %6378 = vmatprep.mubr.f32.mxu0 %v5573
  %6379 = vmatmul.mubr.f32.gmra.mrb[0].mxu0 %v5572
  %v6380 = vpop.f32.mrb[0].mxu0
  %v6381 = vadd.f32 %v6124, %v6380
  %v6382 = vpop.f32.mrb[0].mxu0
  %v6383 = vadd.f32 %v6126, %v6382
  %6384 = vmatprep.mubr.f32.mxu0 %v5575
  %6385 = vmatmul.mubr.f32.gmra.mrb[0].mxu0 %v5574
  %v6386 = vpop.f32.mrb[0].mxu0
  %v6387 = vadd.f32 %v6130, %v6386
  %v6388 = vpop.f32.mrb[0].mxu0
  %v6389 = vadd.f32 %v6132, %v6388
  %6390 = vmatprep.mubr.f32.mxu0 %v5577
  %6391 = vmatmul.mubr.f32.gmra.mrb[0].mxu0 %v5576
  %v6392 = vpop.f32.mrb[0].mxu0
  %v6393 = vadd.f32 %v6136, %v6392
  %v6394 = vpop.f32.mrb[0].mxu0
  %v6395 = vadd.f32 %v6138, %v6394
  %6396 = vmatprep.mubr.f32.mxu0 %v5579
  %6397 = vmatmul.mubr.f32.gmra.mrb[0].mxu0 %v5578
  %v6398 = vpop.f32.mrb[0].mxu0
  %v6399 = vadd.f32 %v6142, %v6398
  %v6400 = vpop.f32.mrb[0].mxu0
  %v6401 = vadd.f32 %v6144, %v6400
  %6402 = vmatprep.mubr.f32.mxu0 %v5581
  %6403 = vmatmul.mubr.f32.gmra.mrb[0].mxu0 %v5580
  %v6404 = vpop.f32.mrb[0].mxu0
  %v6405 = vadd.f32 %v6148, %v6404
  %v6406 = vpop.f32.mrb[0].mxu0
  %v6407 = vadd.f32 %v6150, %v6406
  %6408 = vmatprep.mubr.f32.mxu0 %v5583
  %6409 = vmatmul.mubr.f32.gmra.mrb[0].mxu0 %v5582
  %v6410 = vpop.f32.mrb[0].mxu0
  %v6411 = vadd.f32 %v6154, %v6410
  %v6412 = vpop.f32.mrb[0].mxu0
  %v6413 = vadd.f32 %v6156, %v6412
  %6414 = vmatprep.mubr.f32.mxu0 %v5585
  %6415 = vmatmul.mubr.f32.gmra.mrb[0].mxu0 %v5584
  %v6416 = vpop.f32.mrb[0].mxu0
  %v6417 = vadd.f32 %v6160, %v6416
  %v6418 = vpop.f32.mrb[0].mxu0
  %v6419 = vadd.f32 %v6162, %v6418
  %6420 = vmatprep.mubr.f32.mxu0 %v5587
  %6421 = vmatmul.mubr.f32.gmra.mrb[0].mxu0 %v5586
  %v6422 = vpop.f32.mrb[0].mxu0
  %v6423 = vadd.f32 %v6166, %v6422
  %v6424 = vpop.f32.mrb[0].mxu0
  %v6425 = vadd.f32 %v6168, %v6424
  %6426 = vmatprep.mubr.f32.mxu0 %v5589
  %6427 = vmatmul.mubr.f32.gmra.mrb[0].mxu0 %v5588
  %v6428 = vpop.f32.mrb[0].mxu0
  %v6429 = vadd.f32 %v6172, %v6428
  %v6430 = vpop.f32.mrb[0].mxu0
  %v6431 = vadd.f32 %v6174, %v6430
  %6432 = vmatprep.mubr.f32.mxu0 %v5591
  %6433 = vmatmul.mubr.f32.gmra.mrb[0].mxu0 %v5590
  %v6434 = vpop.f32.mrb[0].mxu0
  %v6435 = vadd.f32 %v6178, %v6434
  %v6436 = vpop.f32.mrb[0].mxu0
  %v6437 = vadd.f32 %v6180, %v6436
  %6438 = vmatprep.mubr.f32.mxu0 %v5593
  %6439 = vmatmul.mubr.f32.gmra.mrb[0].mxu0 %v5592
  %v6440 = vpop.f32.mrb[0].mxu0
  %v6441 = vadd.f32 %v6184, %v6440
  %v6442 = vpop.f32.mrb[0].mxu0
  %v6443 = vadd.f32 %v6186, %v6442
  %6444 = vmatprep.mubr.f32.mxu0 %v5595
  %6445 = vmatmul.mubr.f32.gmra.mrb[0].mxu0 %v5594
  %v6446 = vpop.f32.mrb[0].mxu0
  %v6447 = vadd.f32 %v6190, %v6446
  %v6448 = vpop.f32.mrb[0].mxu0
  %v6449 = vadd.f32 %v6192, %v6448
  %6450 = vmatprep.mubr.f32.mxu0 %v5597
  %6451 = vmatmul.mubr.f32.gmra.mrb[0].mxu0 %v5596
  %v6452 = vpop.f32.mrb[0].mxu0
  %v6453 = vadd.f32 %v6196, %v6452
  %v6454 = vpop.f32.mrb[0].mxu0
  %v6455 = vadd.f32 %v6198, %v6454
  %6456 = vmatprep.mubr.f32.mxu0 %v5599
  %6457 = vmatmul.mubr.f32.gmra.mrb[0].mxu0 %v5598
  %v6458 = vpop.f32.mrb[0].mxu0
  %v6459 = vadd.f32 %v6202, %v6458
  %v6460 = vpop.f32.mrb[0].mxu0
  %v6461 = vadd.f32 %v6204, %v6460
  %6462 = vmatprep.mubr.f32.mxu0 %v5601
  %6463 = vmatmul.mubr.f32.gmra.mrb[0].mxu0 %v5600
  %v6464 = vpop.f32.mrb[0].mxu0
  %v6465 = vadd.f32 %v6208, %v6464
  %v6466 = vpop.f32.mrb[0].mxu0
  %v6467 = vadd.f32 %v6210, %v6466
  %6468 = vdwg.mxu0
  %s6469 = scalar_lea.vmem %s9, 1024
  %v6470 = vld [vmem:[%s6469] sm:$0xff]
  %v6471 = vld [vmem:[%s6469 + $0x8] sm:$0xff]
  %v6472 = vld [vmem:[%s6469 + $0x10] sm:$0xff]
  %v6473 = vld [vmem:[%s6469 + $0x18] sm:$0xff]
  %v6474 = vld [vmem:[%s6469 + $0x20] sm:$0xff]
  %v6475 = vld [vmem:[%s6469 + $0x28] sm:$0xff]
  %v6476 = vld [vmem:[%s6469 + $0x30] sm:$0xff]
  %v6477 = vld [vmem:[%s6469 + $0x38] sm:$0xff]
  %v6478 = vld [vmem:[%s6469 + $0x40] sm:$0xff]
  %v6479 = vld [vmem:[%s6469 + $0x48] sm:$0xff]
  %v6480 = vld [vmem:[%s6469 + $0x50] sm:$0xff]
  %v6481 = vld [vmem:[%s6469 + $0x58] sm:$0xff]
  %v6482 = vld [vmem:[%s6469 + $0x60] sm:$0xff]
  %v6483 = vld [vmem:[%s6469 + $0x68] sm:$0xff]
  %v6484 = vld [vmem:[%s6469 + $0x70] sm:$0xff]
  %v6485 = vld [vmem:[%s6469 + $0x78] sm:$0xff]
  %v6486 = vld [vmem:[%s6469 + $0x80] sm:$0xff]
  %v6487 = vld [vmem:[%s6469 + $0x88] sm:$0xff]
  %v6488 = vld [vmem:[%s6469 + $0x90] sm:$0xff]
  %v6489 = vld [vmem:[%s6469 + $0x98] sm:$0xff]
  %v6490 = vld [vmem:[%s6469 + $0xa0] sm:$0xff]
  %v6491 = vld [vmem:[%s6469 + $0xa8] sm:$0xff]
  %v6492 = vld [vmem:[%s6469 + $0xb0] sm:$0xff]
  %v6493 = vld [vmem:[%s6469 + $0xb8] sm:$0xff]
  %v6494 = vld [vmem:[%s6469 + $0xc0] sm:$0xff]
  %v6495 = vld [vmem:[%s6469 + $0xc8] sm:$0xff]
  %v6496 = vld [vmem:[%s6469 + $0xd0] sm:$0xff]
  %v6497 = vld [vmem:[%s6469 + $0xd8] sm:$0xff]
  %v6498 = vld [vmem:[%s6469 + $0xe0] sm:$0xff]
  %v6499 = vld [vmem:[%s6469 + $0xe8] sm:$0xff]
  %v6500 = vld [vmem:[%s6469 + $0xf0] sm:$0xff]
  %v6501 = vld [vmem:[%s6469 + $0xf8] sm:$0xff]
  %v6502 = vld [vmem:[%s6469 + $0x100] sm:$0xff]
  %v6503 = vld [vmem:[%s6469 + $0x108] sm:$0xff]
  %v6504 = vld [vmem:[%s6469 + $0x110] sm:$0xff]
  %v6505 = vld [vmem:[%s6469 + $0x118] sm:$0xff]
  %v6506 = vld [vmem:[%s6469 + $0x120] sm:$0xff]
  %v6507 = vld [vmem:[%s6469 + $0x128] sm:$0xff]
  %v6508 = vld [vmem:[%s6469 + $0x130] sm:$0xff]
  %v6509 = vld [vmem:[%s6469 + $0x138] sm:$0xff]
  %v6510 = vld [vmem:[%s6469 + $0x140] sm:$0xff]
  %v6511 = vld [vmem:[%s6469 + $0x148] sm:$0xff]
  %v6512 = vld [vmem:[%s6469 + $0x150] sm:$0xff]
  %v6513 = vld [vmem:[%s6469 + $0x158] sm:$0xff]
  %v6514 = vld [vmem:[%s6469 + $0x160] sm:$0xff]
  %v6515 = vld [vmem:[%s6469 + $0x168] sm:$0xff]
  %v6516 = vld [vmem:[%s6469 + $0x170] sm:$0xff]
  %v6517 = vld [vmem:[%s6469 + $0x178] sm:$0xff]
  %v6518 = vld [vmem:[%s6469 + $0x180] sm:$0xff]
  %v6519 = vld [vmem:[%s6469 + $0x188] sm:$0xff]
  %v6520 = vld [vmem:[%s6469 + $0x190] sm:$0xff]
  %v6521 = vld [vmem:[%s6469 + $0x198] sm:$0xff]
  %v6522 = vld [vmem:[%s6469 + $0x1a0] sm:$0xff]
  %v6523 = vld [vmem:[%s6469 + $0x1a8] sm:$0xff]
  %v6524 = vld [vmem:[%s6469 + $0x1b0] sm:$0xff]
  %v6525 = vld [vmem:[%s6469 + $0x1b8] sm:$0xff]
  %v6526 = vld [vmem:[%s6469 + $0x1c0] sm:$0xff]
  %v6527 = vld [vmem:[%s6469 + $0x1c8] sm:$0xff]
  %v6528 = vld [vmem:[%s6469 + $0x1d0] sm:$0xff]
  %v6529 = vld [vmem:[%s6469 + $0x1d8] sm:$0xff]
  %v6530 = vld [vmem:[%s6469 + $0x1e0] sm:$0xff]
  %v6531 = vld [vmem:[%s6469 + $0x1e8] sm:$0xff]
  %v6532 = vld [vmem:[%s6469 + $0x1f0] sm:$0xff]
  %v6533 = vld [vmem:[%s6469 + $0x1f8] sm:$0xff]
  %6534 = vrot.lane.b32.xlu0 %v5474, 126
  %v6535 = vpop.permute.xlu0 %6534
  %6536 = vrot.lane.b32.xlu0 %v5475, 126
  %v6537 = vpop.permute.xlu0 %6536
  %6538 = vrot.lane.b32.xlu0 %v5476, 126
  %v6539 = vpop.permute.xlu0 %6538
  %6540 = vrot.lane.b32.xlu0 %v5477, 126
  %v6541 = vpop.permute.xlu0 %6540
  %6542 = vrot.lane.b32.xlu0 %v5478, 126
  %v6543 = vpop.permute.xlu0 %6542
  %6544 = vrot.lane.b32.xlu0 %v5479, 126
  %v6545 = vpop.permute.xlu0 %6544
  %6546 = vrot.lane.b32.xlu0 %v5480, 126
  %v6547 = vpop.permute.xlu0 %6546
  %6548 = vrot.lane.b32.xlu0 %v5481, 126
  %v6549 = vpop.permute.xlu0 %6548
  %6550 = vrot.lane.b32.xlu0 %v5482, 126
  %v6551 = vpop.permute.xlu0 %6550
  %6552 = vrot.lane.b32.xlu0 %v5483, 126
  %v6553 = vpop.permute.xlu0 %6552
  %6554 = vrot.lane.b32.xlu0 %v5484, 126
  %v6555 = vpop.permute.xlu0 %6554
  %6556 = vrot.lane.b32.xlu0 %v5485, 126
  %v6557 = vpop.permute.xlu0 %6556
  %6558 = vrot.lane.b32.xlu0 %v5486, 126
  %v6559 = vpop.permute.xlu0 %6558
  %6560 = vrot.lane.b32.xlu0 %v5487, 126
  %v6561 = vpop.permute.xlu0 %6560
  %6562 = vrot.lane.b32.xlu0 %v5488, 126
  %v6563 = vpop.permute.xlu0 %6562
  %6564 = vrot.lane.b32.xlu0 %v5489, 126
  %v6565 = vpop.permute.xlu0 %6564
  %6566 = vrot.lane.b32.xlu0 %v5490, 126
  %v6567 = vpop.permute.xlu0 %6566
  %6568 = vrot.lane.b32.xlu0 %v5491, 126
  %v6569 = vpop.permute.xlu0 %6568
  %6570 = vrot.lane.b32.xlu0 %v5492, 126
  %v6571 = vpop.permute.xlu0 %6570
  %6572 = vrot.lane.b32.xlu0 %v5493, 126
  %v6573 = vpop.permute.xlu0 %6572
  %6574 = vrot.lane.b32.xlu0 %v5494, 126
  %v6575 = vpop.permute.xlu0 %6574
  %6576 = vrot.lane.b32.xlu0 %v5495, 126
  %v6577 = vpop.permute.xlu0 %6576
  %6578 = vrot.lane.b32.xlu0 %v5496, 126
  %v6579 = vpop.permute.xlu0 %6578
  %6580 = vrot.lane.b32.xlu0 %v5497, 126
  %v6581 = vpop.permute.xlu0 %6580
  %6582 = vrot.lane.b32.xlu0 %v5498, 126
  %v6583 = vpop.permute.xlu0 %6582
  %6584 = vrot.lane.b32.xlu0 %v5499, 126
  %v6585 = vpop.permute.xlu0 %6584
  %6586 = vrot.lane.b32.xlu0 %v5500, 126
  %v6587 = vpop.permute.xlu0 %6586
  %6588 = vrot.lane.b32.xlu0 %v5501, 126
  %v6589 = vpop.permute.xlu0 %6588
  %6590 = vrot.lane.b32.xlu0 %v5502, 126
  %v6591 = vpop.permute.xlu0 %6590
  %6592 = vrot.lane.b32.xlu0 %v5503, 126
  %v6593 = vpop.permute.xlu0 %6592
  %6594 = vrot.lane.b32.xlu0 %v5504, 126
  %v6595 = vpop.permute.xlu0 %6594
  %6596 = vrot.lane.b32.xlu0 %v5505, 126
  %v6597 = vpop.permute.xlu0 %6596
  %6598 = vrot.lane.b32.xlu0 %v5506, 126
  %v6599 = vpop.permute.xlu0 %6598
  %6600 = vrot.lane.b32.xlu0 %v5507, 126
  %v6601 = vpop.permute.xlu0 %6600
  %6602 = vrot.lane.b32.xlu0 %v5508, 126
  %v6603 = vpop.permute.xlu0 %6602
  %6604 = vrot.lane.b32.xlu0 %v5509, 126
  %v6605 = vpop.permute.xlu0 %6604
  %6606 = vrot.lane.b32.xlu0 %v5510, 126
  %v6607 = vpop.permute.xlu0 %6606
  %6608 = vrot.lane.b32.xlu0 %v5511, 126
  %v6609 = vpop.permute.xlu0 %6608
  %6610 = vrot.lane.b32.xlu0 %v5512, 126
  %v6611 = vpop.permute.xlu0 %6610
  %6612 = vrot.lane.b32.xlu0 %v5513, 126
  %v6613 = vpop.permute.xlu0 %6612
  %6614 = vrot.lane.b32.xlu0 %v5514, 126
  %v6615 = vpop.permute.xlu0 %6614
  %6616 = vrot.lane.b32.xlu0 %v5515, 126
  %v6617 = vpop.permute.xlu0 %6616
  %6618 = vrot.lane.b32.xlu0 %v5516, 126
  %v6619 = vpop.permute.xlu0 %6618
  %6620 = vrot.lane.b32.xlu0 %v5517, 126
  %v6621 = vpop.permute.xlu0 %6620
  %6622 = vrot.lane.b32.xlu0 %v5518, 126
  %v6623 = vpop.permute.xlu0 %6622
  %6624 = vrot.lane.b32.xlu0 %v5519, 126
  %v6625 = vpop.permute.xlu0 %6624
  %6626 = vrot.lane.b32.xlu0 %v5520, 126
  %v6627 = vpop.permute.xlu0 %6626
  %6628 = vrot.lane.b32.xlu0 %v5521, 126
  %v6629 = vpop.permute.xlu0 %6628
  %6630 = vrot.lane.b32.xlu0 %v5522, 126
  %v6631 = vpop.permute.xlu0 %6630
  %6632 = vrot.lane.b32.xlu0 %v5523, 126
  %v6633 = vpop.permute.xlu0 %6632
  %6634 = vrot.lane.b32.xlu0 %v5524, 126
  %v6635 = vpop.permute.xlu0 %6634
  %6636 = vrot.lane.b32.xlu0 %v5525, 126
  %v6637 = vpop.permute.xlu0 %6636
  %6638 = vrot.lane.b32.xlu0 %v5526, 126
  %v6639 = vpop.permute.xlu0 %6638
  %6640 = vrot.lane.b32.xlu0 %v5527, 126
  %v6641 = vpop.permute.xlu0 %6640
  %6642 = vrot.lane.b32.xlu0 %v5528, 126
  %v6643 = vpop.permute.xlu0 %6642
  %6644 = vrot.lane.b32.xlu0 %v5529, 126
  %v6645 = vpop.permute.xlu0 %6644
  %6646 = vrot.lane.b32.xlu0 %v5530, 126
  %v6647 = vpop.permute.xlu0 %6646
  %6648 = vrot.lane.b32.xlu0 %v5531, 126
  %v6649 = vpop.permute.xlu0 %6648
  %6650 = vrot.lane.b32.xlu0 %v5532, 126
  %v6651 = vpop.permute.xlu0 %6650
  %6652 = vrot.lane.b32.xlu0 %v5533, 126
  %v6653 = vpop.permute.xlu0 %6652
  %6654 = vrot.lane.b32.xlu0 %v5534, 126
  %v6655 = vpop.permute.xlu0 %6654
  %6656 = vrot.lane.b32.xlu0 %v5535, 126
  %v6657 = vpop.permute.xlu0 %6656
  %6658 = vrot.lane.b32.xlu0 %v5536, 126
  %v6659 = vpop.permute.xlu0 %6658
  %6660 = vrot.lane.b32.xlu0 %v5537, 126
  %v6661 = vpop.permute.xlu0 %6660
  %v6662 = vsel %vm917, %v6535, %v6537
  %v6663 = vsel %vm917, %v6539, %v6541
  %v6664 = vsel %vm917, %v6543, %v6545
  %v6665 = vsel %vm917, %v6547, %v6549
  %v6666 = vsel %vm917, %v6551, %v6553
  %v6667 = vsel %vm917, %v6555, %v6557
  %v6668 = vsel %vm917, %v6559, %v6561
  %v6669 = vsel %vm917, %v6563, %v6565
  %v6670 = vsel %vm917, %v6567, %v6569
  %v6671 = vsel %vm917, %v6571, %v6573
  %v6672 = vsel %vm917, %v6575, %v6577
  %v6673 = vsel %vm917, %v6579, %v6581
  %v6674 = vsel %vm917, %v6583, %v6585
  %v6675 = vsel %vm917, %v6587, %v6589
  %v6676 = vsel %vm917, %v6591, %v6593
  %v6677 = vsel %vm917, %v6595, %v6597
  %v6678 = vsel %vm917, %v6599, %v6601
  %v6679 = vsel %vm917, %v6603, %v6605
  %v6680 = vsel %vm917, %v6607, %v6609
  %v6681 = vsel %vm917, %v6611, %v6613
  %v6682 = vsel %vm917, %v6615, %v6617
  %v6683 = vsel %vm917, %v6619, %v6621
  %v6684 = vsel %vm917, %v6623, %v6625
  %v6685 = vsel %vm917, %v6627, %v6629
  %v6686 = vsel %vm917, %v6631, %v6633
  %v6687 = vsel %vm917, %v6635, %v6637
  %v6688 = vsel %vm917, %v6639, %v6641
  %v6689 = vsel %vm917, %v6643, %v6645
  %v6690 = vsel %vm917, %v6647, %v6649
  %v6691 = vsel %vm917, %v6651, %v6653
  %v6692 = vsel %vm917, %v6655, %v6657
  %v6693 = vsel %vm917, %v6659, %v6661
  %6758 = vmatprep.subr.mxu0 %v6537
  %6759 = vmatpush1.msra.mxu0 %v6662
  %6760 = vmatprep.subr.mxu0 %v6541
  %6761 = vmatpush1.msra.mxu0 %v6663
  %6762 = vmatprep.subr.mxu0 %v6545
  %6763 = vmatpush1.msra.mxu0 %v6664
  %6764 = vmatprep.subr.mxu0 %v6549
  %6765 = vmatpush1.msra.mxu0 %v6665
  %6766 = vmatprep.subr.mxu0 %v6553
  %6767 = vmatpush1.msra.mxu0 %v6666
  %6768 = vmatprep.subr.mxu0 %v6557
  %6769 = vmatpush1.msra.mxu0 %v6667
  %6770 = vmatprep.subr.mxu0 %v6561
  %6771 = vmatpush1.msra.mxu0 %v6668
  %6772 = vmatprep.subr.mxu0 %v6565
  %6773 = vmatpush1.msra.mxu0 %v6669
  %6774 = vmatprep.subr.mxu0 %v6569
  %6775 = vmatpush1.msra.mxu0 %v6670
  %6776 = vmatprep.subr.mxu0 %v6573
  %6777 = vmatpush1.msra.mxu0 %v6671
  %6778 = vmatprep.subr.mxu0 %v6577
  %6779 = vmatpush1.msra.mxu0 %v6672
  %6780 = vmatprep.subr.mxu0 %v6581
  %6781 = vmatpush1.msra.mxu0 %v6673
  %6782 = vmatprep.subr.mxu0 %v6585
  %6783 = vmatpush1.msra.mxu0 %v6674
  %6784 = vmatprep.subr.mxu0 %v6589
  %6785 = vmatpush1.msra.mxu0 %v6675
  %6786 = vmatprep.subr.mxu0 %v6593
  %6787 = vmatpush1.msra.mxu0 %v6676
  %6788 = vmatprep.subr.mxu0 %v6597
  %6789 = vmatpush1.msra.mxu0 %v6677
  %6790 = vmatprep.subr.mxu0 %v6601
  %6791 = vmatpush1.msra.mxu0 %v6678
  %6792 = vmatprep.subr.mxu0 %v6605
  %6793 = vmatpush1.msra.mxu0 %v6679
  %6794 = vmatprep.subr.mxu0 %v6609
  %6795 = vmatpush1.msra.mxu0 %v6680
  %6796 = vmatprep.subr.mxu0 %v6613
  %6797 = vmatpush1.msra.mxu0 %v6681
  %6798 = vmatprep.subr.mxu0 %v6617
  %6799 = vmatpush1.msra.mxu0 %v6682
  %6800 = vmatprep.subr.mxu0 %v6621
  %6801 = vmatpush1.msra.mxu0 %v6683
  %6802 = vmatprep.subr.mxu0 %v6625
  %6803 = vmatpush1.msra.mxu0 %v6684
  %6804 = vmatprep.subr.mxu0 %v6629
  %6805 = vmatpush1.msra.mxu0 %v6685
  %6806 = vmatprep.subr.mxu0 %v6633
  %6807 = vmatpush1.msra.mxu0 %v6686
  %6808 = vmatprep.subr.mxu0 %v6637
  %6809 = vmatpush1.msra.mxu0 %v6687
  %6810 = vmatprep.subr.mxu0 %v6641
  %6811 = vmatpush1.msra.mxu0 %v6688
  %6812 = vmatprep.subr.mxu0 %v6645
  %6813 = vmatpush1.msra.mxu0 %v6689
  %6814 = vmatprep.subr.mxu0 %v6649
  %6815 = vmatpush1.msra.mxu0 %v6690
  %6816 = vmatprep.subr.mxu0 %v6653
  %6817 = vmatpush1.msra.mxu0 %v6691
  %6818 = vmatprep.subr.mxu0 %v6657
  %6819 = vmatpush1.msra.mxu0 %v6692
  %6820 = vmatprep.subr.mxu0 %v6661
  %6821 = vmatpush1.msra.mxu0 %v6693
  %6822 = vmatprep.mubr.f32.mxu0 %v6471
  %6823 = vmatmul.mubr.f32.gmra.mrb[0].mxu0 %v6470
  %v6824 = vpop.f32.mrb[0].mxu0
  %v6825 = vadd.f32 0.0, %v6824
  %v6826 = vpop.f32.mrb[0].mxu0
  %v6827 = vadd.f32 0.0, %v6826
  %6828 = vmatprep.mubr.f32.mxu0 %v6473
  %6829 = vmatmul.mubr.f32.gmra.mrb[0].mxu0 %v6472
  %v6830 = vpop.f32.mrb[0].mxu0
  %v6831 = vadd.f32 0.0, %v6830
  %v6832 = vpop.f32.mrb[0].mxu0
  %v6833 = vadd.f32 0.0, %v6832
  %6834 = vmatprep.mubr.f32.mxu0 %v6475
  %6835 = vmatmul.mubr.f32.gmra.mrb[0].mxu0 %v6474
  %v6836 = vpop.f32.mrb[0].mxu0
  %v6837 = vadd.f32 0.0, %v6836
  %v6838 = vpop.f32.mrb[0].mxu0
  %v6839 = vadd.f32 0.0, %v6838
  %6840 = vmatprep.mubr.f32.mxu0 %v6477
  %6841 = vmatmul.mubr.f32.gmra.mrb[0].mxu0 %v6476
  %v6842 = vpop.f32.mrb[0].mxu0
  %v6843 = vadd.f32 0.0, %v6842
  %v6844 = vpop.f32.mrb[0].mxu0
  %v6845 = vadd.f32 0.0, %v6844
  %6846 = vmatprep.mubr.f32.mxu0 %v6479
  %6847 = vmatmul.mubr.f32.gmra.mrb[0].mxu0 %v6478
  %v6848 = vpop.f32.mrb[0].mxu0
  %v6849 = vadd.f32 0.0, %v6848
  %v6850 = vpop.f32.mrb[0].mxu0
  %v6851 = vadd.f32 0.0, %v6850
  %6852 = vmatprep.mubr.f32.mxu0 %v6481
  %6853 = vmatmul.mubr.f32.gmra.mrb[0].mxu0 %v6480
  %v6854 = vpop.f32.mrb[0].mxu0
  %v6855 = vadd.f32 0.0, %v6854
  %v6856 = vpop.f32.mrb[0].mxu0
  %v6857 = vadd.f32 0.0, %v6856
  %6858 = vmatprep.mubr.f32.mxu0 %v6483
  %6859 = vmatmul.mubr.f32.gmra.mrb[0].mxu0 %v6482
  %v6860 = vpop.f32.mrb[0].mxu0
  %v6861 = vadd.f32 0.0, %v6860
  %v6862 = vpop.f32.mrb[0].mxu0
  %v6863 = vadd.f32 0.0, %v6862
  %6864 = vmatprep.mubr.f32.mxu0 %v6485
  %6865 = vmatmul.mubr.f32.gmra.mrb[0].mxu0 %v6484
  %v6866 = vpop.f32.mrb[0].mxu0
  %v6867 = vadd.f32 0.0, %v6866
  %v6868 = vpop.f32.mrb[0].mxu0
  %v6869 = vadd.f32 0.0, %v6868
  %6870 = vmatprep.mubr.f32.mxu0 %v6487
  %6871 = vmatmul.mubr.f32.gmra.mrb[0].mxu0 %v6486
  %v6872 = vpop.f32.mrb[0].mxu0
  %v6873 = vadd.f32 0.0, %v6872
  %v6874 = vpop.f32.mrb[0].mxu0
  %v6875 = vadd.f32 0.0, %v6874
  %6876 = vmatprep.mubr.f32.mxu0 %v6489
  %6877 = vmatmul.mubr.f32.gmra.mrb[0].mxu0 %v6488
  %v6878 = vpop.f32.mrb[0].mxu0
  %v6879 = vadd.f32 0.0, %v6878
  %v6880 = vpop.f32.mrb[0].mxu0
  %v6881 = vadd.f32 0.0, %v6880
  %6882 = vmatprep.mubr.f32.mxu0 %v6491
  %6883 = vmatmul.mubr.f32.gmra.mrb[0].mxu0 %v6490
  %v6884 = vpop.f32.mrb[0].mxu0
  %v6885 = vadd.f32 0.0, %v6884
  %v6886 = vpop.f32.mrb[0].mxu0
  %v6887 = vadd.f32 0.0, %v6886
  %6888 = vmatprep.mubr.f32.mxu0 %v6493
  %6889 = vmatmul.mubr.f32.gmra.mrb[0].mxu0 %v6492
  %v6890 = vpop.f32.mrb[0].mxu0
  %v6891 = vadd.f32 0.0, %v6890
  %v6892 = vpop.f32.mrb[0].mxu0
  %v6893 = vadd.f32 0.0, %v6892
  %6894 = vmatprep.mubr.f32.mxu0 %v6495
  %6895 = vmatmul.mubr.f32.gmra.mrb[0].mxu0 %v6494
  %v6896 = vpop.f32.mrb[0].mxu0
  %v6897 = vadd.f32 0.0, %v6896
  %v6898 = vpop.f32.mrb[0].mxu0
  %v6899 = vadd.f32 0.0, %v6898
  %6900 = vmatprep.mubr.f32.mxu0 %v6497
  %6901 = vmatmul.mubr.f32.gmra.mrb[0].mxu0 %v6496
  %v6902 = vpop.f32.mrb[0].mxu0
  %v6903 = vadd.f32 0.0, %v6902
  %v6904 = vpop.f32.mrb[0].mxu0
  %v6905 = vadd.f32 0.0, %v6904
  %6906 = vmatprep.mubr.f32.mxu0 %v6499
  %6907 = vmatmul.mubr.f32.gmra.mrb[0].mxu0 %v6498
  %v6908 = vpop.f32.mrb[0].mxu0
  %v6909 = vadd.f32 0.0, %v6908
  %v6910 = vpop.f32.mrb[0].mxu0
  %v6911 = vadd.f32 0.0, %v6910
  %6912 = vmatprep.mubr.f32.mxu0 %v6501
  %6913 = vmatmul.mubr.f32.gmra.mrb[0].mxu0 %v6500
  %v6914 = vpop.f32.mrb[0].mxu0
  %v6915 = vadd.f32 0.0, %v6914
  %v6916 = vpop.f32.mrb[0].mxu0
  %v6917 = vadd.f32 0.0, %v6916
  %6918 = vmatprep.mubr.f32.mxu0 %v6503
  %6919 = vmatmul.mubr.f32.gmra.mrb[0].mxu0 %v6502
  %v6920 = vpop.f32.mrb[0].mxu0
  %v6921 = vadd.f32 0.0, %v6920
  %v6922 = vpop.f32.mrb[0].mxu0
  %v6923 = vadd.f32 0.0, %v6922
  %6924 = vmatprep.mubr.f32.mxu0 %v6505
  %6925 = vmatmul.mubr.f32.gmra.mrb[0].mxu0 %v6504
  %v6926 = vpop.f32.mrb[0].mxu0
  %v6927 = vadd.f32 0.0, %v6926
  %v6928 = vpop.f32.mrb[0].mxu0
  %v6929 = vadd.f32 0.0, %v6928
  %6930 = vmatprep.mubr.f32.mxu0 %v6507
  %6931 = vmatmul.mubr.f32.gmra.mrb[0].mxu0 %v6506
  %v6932 = vpop.f32.mrb[0].mxu0
  %v6933 = vadd.f32 0.0, %v6932
  %v6934 = vpop.f32.mrb[0].mxu0
  %v6935 = vadd.f32 0.0, %v6934
  %6936 = vmatprep.mubr.f32.mxu0 %v6509
  %6937 = vmatmul.mubr.f32.gmra.mrb[0].mxu0 %v6508
  %v6938 = vpop.f32.mrb[0].mxu0
  %v6939 = vadd.f32 0.0, %v6938
  %v6940 = vpop.f32.mrb[0].mxu0
  %v6941 = vadd.f32 0.0, %v6940
  %6942 = vmatprep.mubr.f32.mxu0 %v6511
  %6943 = vmatmul.mubr.f32.gmra.mrb[0].mxu0 %v6510
  %v6944 = vpop.f32.mrb[0].mxu0
  %v6945 = vadd.f32 0.0, %v6944
  %v6946 = vpop.f32.mrb[0].mxu0
  %v6947 = vadd.f32 0.0, %v6946
  %6948 = vmatprep.mubr.f32.mxu0 %v6513
  %6949 = vmatmul.mubr.f32.gmra.mrb[0].mxu0 %v6512
  %v6950 = vpop.f32.mrb[0].mxu0
  %v6951 = vadd.f32 0.0, %v6950
  %v6952 = vpop.f32.mrb[0].mxu0
  %v6953 = vadd.f32 0.0, %v6952
  %6954 = vmatprep.mubr.f32.mxu0 %v6515
  %6955 = vmatmul.mubr.f32.gmra.mrb[0].mxu0 %v6514
  %v6956 = vpop.f32.mrb[0].mxu0
  %v6957 = vadd.f32 0.0, %v6956
  %v6958 = vpop.f32.mrb[0].mxu0
  %v6959 = vadd.f32 0.0, %v6958
  %6960 = vmatprep.mubr.f32.mxu0 %v6517
  %6961 = vmatmul.mubr.f32.gmra.mrb[0].mxu0 %v6516
  %v6962 = vpop.f32.mrb[0].mxu0
  %v6963 = vadd.f32 0.0, %v6962
  %v6964 = vpop.f32.mrb[0].mxu0
  %v6965 = vadd.f32 0.0, %v6964
  %6966 = vmatprep.mubr.f32.mxu0 %v6519
  %6967 = vmatmul.mubr.f32.gmra.mrb[0].mxu0 %v6518
  %v6968 = vpop.f32.mrb[0].mxu0
  %v6969 = vadd.f32 0.0, %v6968
  %v6970 = vpop.f32.mrb[0].mxu0
  %v6971 = vadd.f32 0.0, %v6970
  %6972 = vmatprep.mubr.f32.mxu0 %v6521
  %6973 = vmatmul.mubr.f32.gmra.mrb[0].mxu0 %v6520
  %v6974 = vpop.f32.mrb[0].mxu0
  %v6975 = vadd.f32 0.0, %v6974
  %v6976 = vpop.f32.mrb[0].mxu0
  %v6977 = vadd.f32 0.0, %v6976
  %6978 = vmatprep.mubr.f32.mxu0 %v6523
  %6979 = vmatmul.mubr.f32.gmra.mrb[0].mxu0 %v6522
  %v6980 = vpop.f32.mrb[0].mxu0
  %v6981 = vadd.f32 0.0, %v6980
  %v6982 = vpop.f32.mrb[0].mxu0
  %v6983 = vadd.f32 0.0, %v6982
  %6984 = vmatprep.mubr.f32.mxu0 %v6525
  %6985 = vmatmul.mubr.f32.gmra.mrb[0].mxu0 %v6524
  %v6986 = vpop.f32.mrb[0].mxu0
  %v6987 = vadd.f32 0.0, %v6986
  %v6988 = vpop.f32.mrb[0].mxu0
  %v6989 = vadd.f32 0.0, %v6988
  %6990 = vmatprep.mubr.f32.mxu0 %v6527
  %6991 = vmatmul.mubr.f32.gmra.mrb[0].mxu0 %v6526
  %v6992 = vpop.f32.mrb[0].mxu0
  %v6993 = vadd.f32 0.0, %v6992
  %v6994 = vpop.f32.mrb[0].mxu0
  %v6995 = vadd.f32 0.0, %v6994
  %6996 = vmatprep.mubr.f32.mxu0 %v6529
  %6997 = vmatmul.mubr.f32.gmra.mrb[0].mxu0 %v6528
  %v6998 = vpop.f32.mrb[0].mxu0
  %v6999 = vadd.f32 0.0, %v6998
  %v7000 = vpop.f32.mrb[0].mxu0
  %v7001 = vadd.f32 0.0, %v7000
  %7002 = vmatprep.mubr.f32.mxu0 %v6531
  %7003 = vmatmul.mubr.f32.gmra.mrb[0].mxu0 %v6530
  %v7004 = vpop.f32.mrb[0].mxu0
  %v7005 = vadd.f32 0.0, %v7004
  %v7006 = vpop.f32.mrb[0].mxu0
  %v7007 = vadd.f32 0.0, %v7006
  %7008 = vmatprep.mubr.f32.mxu0 %v6533
  %7009 = vmatmul.mubr.f32.gmra.mrb[0].mxu0 %v6532
  %v7010 = vpop.f32.mrb[0].mxu0
  %v7011 = vadd.f32 0.0, %v7010
  %v7012 = vpop.f32.mrb[0].mxu0
  %v7013 = vadd.f32 0.0, %v7012
  %7014 = vdwg.mxu0
  %v7015 = vadd.f32 %v6279, %v6825
  %v7016 = vadd.f32 %v6281, %v6827
  %v7017 = vadd.f32 %v6285, %v6831
  %v7018 = vadd.f32 %v6287, %v6833
  %v7019 = vadd.f32 %v6291, %v6837
  %v7020 = vadd.f32 %v6293, %v6839
  %v7021 = vadd.f32 %v6297, %v6843
  %v7022 = vadd.f32 %v6299, %v6845
  %v7023 = vadd.f32 %v6303, %v6849
  %v7024 = vadd.f32 %v6305, %v6851
  %v7025 = vadd.f32 %v6309, %v6855
  %v7026 = vadd.f32 %v6311, %v6857
  %v7027 = vadd.f32 %v6315, %v6861
  %v7028 = vadd.f32 %v6317, %v6863
  %v7029 = vadd.f32 %v6321, %v6867
  %v7030 = vadd.f32 %v6323, %v6869
  %v7031 = vadd.f32 %v6327, %v6873
  %v7032 = vadd.f32 %v6329, %v6875
  %v7033 = vadd.f32 %v6333, %v6879
  %v7034 = vadd.f32 %v6335, %v6881
  %v7035 = vadd.f32 %v6339, %v6885
  %v7036 = vadd.f32 %v6341, %v6887
  %v7037 = vadd.f32 %v6345, %v6891
  %v7038 = vadd.f32 %v6347, %v6893
  %v7039 = vadd.f32 %v6351, %v6897
  %v7040 = vadd.f32 %v6353, %v6899
  %v7041 = vadd.f32 %v6357, %v6903
  %v7042 = vadd.f32 %v6359, %v6905
  %v7043 = vadd.f32 %v6363, %v6909
  %v7044 = vadd.f32 %v6365, %v6911
  %v7045 = vadd.f32 %v6369, %v6915
  %v7046 = vadd.f32 %v6371, %v6917
  %v7047 = vadd.f32 %v6375, %v6921
  %v7048 = vadd.f32 %v6377, %v6923
  %v7049 = vadd.f32 %v6381, %v6927
  %v7050 = vadd.f32 %v6383, %v6929
  %v7051 = vadd.f32 %v6387, %v6933
  %v7052 = vadd.f32 %v6389, %v6935
  %v7053 = vadd.f32 %v6393, %v6939
  %v7054 = vadd.f32 %v6395, %v6941
  %v7055 = vadd.f32 %v6399, %v6945
  %v7056 = vadd.f32 %v6401, %v6947
  %v7057 = vadd.f32 %v6405, %v6951
  %v7058 = vadd.f32 %v6407, %v6953
  %v7059 = vadd.f32 %v6411, %v6957
  %v7060 = vadd.f32 %v6413, %v6959
  %v7061 = vadd.f32 %v6417, %v6963
  %v7062 = vadd.f32 %v6419, %v6965
  %v7063 = vadd.f32 %v6423, %v6969
  %v7064 = vadd.f32 %v6425, %v6971
  %v7065 = vadd.f32 %v6429, %v6975
  %v7066 = vadd.f32 %v6431, %v6977
  %v7067 = vadd.f32 %v6435, %v6981
  %v7068 = vadd.f32 %v6437, %v6983
  %v7069 = vadd.f32 %v6441, %v6987
  %v7070 = vadd.f32 %v6443, %v6989
  %v7071 = vadd.f32 %v6447, %v6993
  %v7072 = vadd.f32 %v6449, %v6995
  %v7073 = vadd.f32 %v6453, %v6999
  %v7074 = vadd.f32 %v6455, %v7001
  %v7075 = vadd.f32 %v6459, %v7005
  %v7076 = vadd.f32 %v6461, %v7007
  %v7077 = vadd.f32 %v6465, %v7011
  %v7078 = vadd.f32 %v6467, %v7013
  %v7079 = vld [vmem:[%s10] sm:$0xff]
  %v7080 = vld [vmem:[%s10 + $0x8] sm:$0xff]
  %v7081 = vld [vmem:[%s10 + $0x10] sm:$0xff]
  %v7082 = vld [vmem:[%s10 + $0x18] sm:$0xff]
  %v7083 = vld [vmem:[%s10 + $0x20] sm:$0xff]
  %v7084 = vld [vmem:[%s10 + $0x28] sm:$0xff]
  %v7085 = vld [vmem:[%s10 + $0x30] sm:$0xff]
  %v7086 = vld [vmem:[%s10 + $0x38] sm:$0xff]
  %v7087 = vld [vmem:[%s10 + $0x40] sm:$0xff]
  %v7088 = vld [vmem:[%s10 + $0x48] sm:$0xff]
  %v7089 = vld [vmem:[%s10 + $0x50] sm:$0xff]
  %v7090 = vld [vmem:[%s10 + $0x58] sm:$0xff]
  %v7091 = vld [vmem:[%s10 + $0x60] sm:$0xff]
  %v7092 = vld [vmem:[%s10 + $0x68] sm:$0xff]
  %v7093 = vld [vmem:[%s10 + $0x70] sm:$0xff]
  %v7094 = vld [vmem:[%s10 + $0x78] sm:$0xff]
  %v7095 = vld [vmem:[%s10 + $0x80] sm:$0xff]
  %v7096 = vld [vmem:[%s10 + $0x88] sm:$0xff]
  %v7097 = vld [vmem:[%s10 + $0x90] sm:$0xff]
  %v7098 = vld [vmem:[%s10 + $0x98] sm:$0xff]
  %v7099 = vld [vmem:[%s10 + $0xa0] sm:$0xff]
  %v7100 = vld [vmem:[%s10 + $0xa8] sm:$0xff]
  %v7101 = vld [vmem:[%s10 + $0xb0] sm:$0xff]
  %v7102 = vld [vmem:[%s10 + $0xb8] sm:$0xff]
  %v7103 = vld [vmem:[%s10 + $0xc0] sm:$0xff]
  %v7104 = vld [vmem:[%s10 + $0xc8] sm:$0xff]
  %v7105 = vld [vmem:[%s10 + $0xd0] sm:$0xff]
  %v7106 = vld [vmem:[%s10 + $0xd8] sm:$0xff]
  %v7107 = vld [vmem:[%s10 + $0xe0] sm:$0xff]
  %v7108 = vld [vmem:[%s10 + $0xe8] sm:$0xff]
  %v7109 = vld [vmem:[%s10 + $0xf0] sm:$0xff]
  %v7110 = vld [vmem:[%s10 + $0xf8] sm:$0xff]
  %7112 = vset.pattern.permute.xlu0 0
  %7113 = vperm.xlu0 %7112, %v7079
  %v7114 = vpop.permute.xlu0 %7113
  %7117 = vset.pattern.permute.xlu0 0
  %7118 = vperm.xlu0 %7117, %v7080
  %v7119 = vpop.permute.xlu0 %7118
  %7122 = vset.pattern.permute.xlu0 0
  %7123 = vperm.xlu0 %7122, %v7081
  %v7124 = vpop.permute.xlu0 %7123
  %7127 = vset.pattern.permute.xlu0 0
  %7128 = vperm.xlu0 %7127, %v7082
  %v7129 = vpop.permute.xlu0 %7128
  %7132 = vset.pattern.permute.xlu0 0
  %7133 = vperm.xlu0 %7132, %v7083
  %v7134 = vpop.permute.xlu0 %7133
  %7137 = vset.pattern.permute.xlu0 0
  %7138 = vperm.xlu0 %7137, %v7084
  %v7139 = vpop.permute.xlu0 %7138
  %7142 = vset.pattern.permute.xlu0 0
  %7143 = vperm.xlu0 %7142, %v7085
  %v7144 = vpop.permute.xlu0 %7143
  %7147 = vset.pattern.permute.xlu0 0
  %7148 = vperm.xlu0 %7147, %v7086
  %v7149 = vpop.permute.xlu0 %7148
  %7152 = vset.pattern.permute.xlu0 0
  %7153 = vperm.xlu0 %7152, %v7087
  %v7154 = vpop.permute.xlu0 %7153
  %7157 = vset.pattern.permute.xlu0 0
  %7158 = vperm.xlu0 %7157, %v7088
  %v7159 = vpop.permute.xlu0 %7158
  %7162 = vset.pattern.permute.xlu0 0
  %7163 = vperm.xlu0 %7162, %v7089
  %v7164 = vpop.permute.xlu0 %7163
  %7167 = vset.pattern.permute.xlu0 0
  %7168 = vperm.xlu0 %7167, %v7090
  %v7169 = vpop.permute.xlu0 %7168
  %7172 = vset.pattern.permute.xlu0 0
  %7173 = vperm.xlu0 %7172, %v7091
  %v7174 = vpop.permute.xlu0 %7173
  %7177 = vset.pattern.permute.xlu0 0
  %7178 = vperm.xlu0 %7177, %v7092
  %v7179 = vpop.permute.xlu0 %7178
  %7182 = vset.pattern.permute.xlu0 0
  %7183 = vperm.xlu0 %7182, %v7093
  %v7184 = vpop.permute.xlu0 %7183
  %7187 = vset.pattern.permute.xlu0 0
  %7188 = vperm.xlu0 %7187, %v7094
  %v7189 = vpop.permute.xlu0 %7188
  %7192 = vset.pattern.permute.xlu0 0
  %7193 = vperm.xlu0 %7192, %v7095
  %v7194 = vpop.permute.xlu0 %7193
  %7197 = vset.pattern.permute.xlu0 0
  %7198 = vperm.xlu0 %7197, %v7096
  %v7199 = vpop.permute.xlu0 %7198
  %7202 = vset.pattern.permute.xlu0 0
  %7203 = vperm.xlu0 %7202, %v7097
  %v7204 = vpop.permute.xlu0 %7203
  %7207 = vset.pattern.permute.xlu0 0
  %7208 = vperm.xlu0 %7207, %v7098
  %v7209 = vpop.permute.xlu0 %7208
  %7212 = vset.pattern.permute.xlu0 0
  %7213 = vperm.xlu0 %7212, %v7099
  %v7214 = vpop.permute.xlu0 %7213
  %7217 = vset.pattern.permute.xlu0 0
  %7218 = vperm.xlu0 %7217, %v7100
  %v7219 = vpop.permute.xlu0 %7218
  %7222 = vset.pattern.permute.xlu0 0
  %7223 = vperm.xlu0 %7222, %v7101
  %v7224 = vpop.permute.xlu0 %7223
  %7227 = vset.pattern.permute.xlu0 0
  %7228 = vperm.xlu0 %7227, %v7102
  %v7229 = vpop.permute.xlu0 %7228
  %7232 = vset.pattern.permute.xlu0 0
  %7233 = vperm.xlu0 %7232, %v7103
  %v7234 = vpop.permute.xlu0 %7233
  %7237 = vset.pattern.permute.xlu0 0
  %7238 = vperm.xlu0 %7237, %v7104
  %v7239 = vpop.permute.xlu0 %7238
  %7242 = vset.pattern.permute.xlu0 0
  %7243 = vperm.xlu0 %7242, %v7105
  %v7244 = vpop.permute.xlu0 %7243
  %7247 = vset.pattern.permute.xlu0 0
  %7248 = vperm.xlu0 %7247, %v7106
  %v7249 = vpop.permute.xlu0 %7248
  %7252 = vset.pattern.permute.xlu0 0
  %7253 = vperm.xlu0 %7252, %v7107
  %v7254 = vpop.permute.xlu0 %7253
  %7257 = vset.pattern.permute.xlu0 0
  %7258 = vperm.xlu0 %7257, %v7108
  %v7259 = vpop.permute.xlu0 %7258
  %7262 = vset.pattern.permute.xlu0 0
  %7263 = vperm.xlu0 %7262, %v7109
  %v7264 = vpop.permute.xlu0 %7263
  %7267 = vset.pattern.permute.xlu0 0
  %7268 = vperm.xlu0 %7267, %v7110
  %v7269 = vpop.permute.xlu0 %7268
  %v7271 = vadd.f32 %v7015, %v7114
  %v7272 = vadd.f32 %v7016, %v7114
  %v7273 = vadd.f32 %v7017, %v7119
  %v7274 = vadd.f32 %v7018, %v7119
  %v7275 = vadd.f32 %v7019, %v7124
  %v7276 = vadd.f32 %v7020, %v7124
  %v7277 = vadd.f32 %v7021, %v7129
  %v7278 = vadd.f32 %v7022, %v7129
  %v7279 = vadd.f32 %v7023, %v7134
  %v7280 = vadd.f32 %v7024, %v7134
  %v7281 = vadd.f32 %v7025, %v7139
  %v7282 = vadd.f32 %v7026, %v7139
  %v7283 = vadd.f32 %v7027, %v7144
  %v7284 = vadd.f32 %v7028, %v7144
  %v7285 = vadd.f32 %v7029, %v7149
  %v7286 = vadd.f32 %v7030, %v7149
  %v7287 = vadd.f32 %v7031, %v7154
  %v7288 = vadd.f32 %v7032, %v7154
  %v7289 = vadd.f32 %v7033, %v7159
  %v7290 = vadd.f32 %v7034, %v7159
  %v7291 = vadd.f32 %v7035, %v7164
  %v7292 = vadd.f32 %v7036, %v7164
  %v7293 = vadd.f32 %v7037, %v7169
  %v7294 = vadd.f32 %v7038, %v7169
  %v7295 = vadd.f32 %v7039, %v7174
  %v7296 = vadd.f32 %v7040, %v7174
  %v7297 = vadd.f32 %v7041, %v7179
  %v7298 = vadd.f32 %v7042, %v7179
  %v7299 = vadd.f32 %v7043, %v7184
  %v7300 = vadd.f32 %v7044, %v7184
  %v7301 = vadd.f32 %v7045, %v7189
  %v7302 = vadd.f32 %v7046, %v7189
  %v7303 = vadd.f32 %v7047, %v7194
  %v7304 = vadd.f32 %v7048, %v7194
  %v7305 = vadd.f32 %v7049, %v7199
  %v7306 = vadd.f32 %v7050, %v7199
  %v7307 = vadd.f32 %v7051, %v7204
  %v7308 = vadd.f32 %v7052, %v7204
  %v7309 = vadd.f32 %v7053, %v7209
  %v7310 = vadd.f32 %v7054, %v7209
  %v7311 = vadd.f32 %v7055, %v7214
  %v7312 = vadd.f32 %v7056, %v7214
  %v7313 = vadd.f32 %v7057, %v7219
  %v7314 = vadd.f32 %v7058, %v7219
  %v7315 = vadd.f32 %v7059, %v7224
  %v7316 = vadd.f32 %v7060, %v7224
  %v7317 = vadd.f32 %v7061, %v7229
  %v7318 = vadd.f32 %v7062, %v7229
  %v7319 = vadd.f32 %v7063, %v7234
  %v7320 = vadd.f32 %v7064, %v7234
  %v7321 = vadd.f32 %v7065, %v7239
  %v7322 = vadd.f32 %v7066, %v7239
  %v7323 = vadd.f32 %v7067, %v7244
  %v7324 = vadd.f32 %v7068, %v7244
  %v7325 = vadd.f32 %v7069, %v7249
  %v7326 = vadd.f32 %v7070, %v7249
  %v7327 = vadd.f32 %v7071, %v7254
  %v7328 = vadd.f32 %v7072, %v7254
  %v7329 = vadd.f32 %v7073, %v7259
  %v7330 = vadd.f32 %v7074, %v7259
  %v7331 = vadd.f32 %v7075, %v7264
  %v7332 = vadd.f32 %v7076, %v7264
  %v7333 = vadd.f32 %v7077, %v7269
  %v7334 = vadd.f32 %v7078, %v7269
  %v7335 = vadd.f32 %v7271, %v7273
  %v7336 = vadd.f32 %v7335, %v7275
  %v7337 = vadd.f32 %v7336, %v7277
  %v7338 = vadd.f32 %v7337, %v7279
  %v7339 = vadd.f32 %v7338, %v7281
  %v7340 = vadd.f32 %v7339, %v7283
  %v7341 = vadd.f32 %v7340, %v7285
  %v7342 = vadd.f32 %v7341, %v7287
  %v7343 = vadd.f32 %v7342, %v7289
  %v7344 = vadd.f32 %v7343, %v7291
  %v7345 = vadd.f32 %v7344, %v7293
  %v7346 = vadd.f32 %v7345, %v7295
  %v7347 = vadd.f32 %v7346, %v7297
  %v7348 = vadd.f32 %v7347, %v7299
  %v7349 = vadd.f32 %v7348, %v7301
  %v7350 = vadd.f32 %v7349, %v7303
  %v7351 = vadd.f32 %v7350, %v7305
  %v7352 = vadd.f32 %v7351, %v7307
  %v7353 = vadd.f32 %v7352, %v7309
  %v7354 = vadd.f32 %v7353, %v7311
  %v7355 = vadd.f32 %v7354, %v7313
  %v7356 = vadd.f32 %v7355, %v7315
  %v7357 = vadd.f32 %v7356, %v7317
  %v7358 = vadd.f32 %v7357, %v7319
  %v7359 = vadd.f32 %v7358, %v7321
  %v7360 = vadd.f32 %v7359, %v7323
  %v7361 = vadd.f32 %v7360, %v7325
  %v7362 = vadd.f32 %v7361, %v7327
  %v7363 = vadd.f32 %v7362, %v7329
  %v7364 = vadd.f32 %v7363, %v7331
  %v7365 = vadd.f32 %v7364, %v7333
  %v7366 = vrot.slane %v7365, 4
  %v7367 = vadd.f32 %v7365, %v7366
  %v7368 = vrot.slane %v7367, 2
  %v7369 = vadd.f32 %v7367, %v7368
  %v7370 = vrot.slane %v7369, 1
  %v7371 = vadd.f32 %v7369, %v7370
  %vm7372 = vcmask 15360
  %v7373 = vsel %vm7372, %v7272, 0.0
  %v7374 = vsel %vm7372, %v7274, 0.0
  %v7375 = vadd.f32 %v7373, %v7374
  %v7376 = vsel %vm7372, %v7276, 0.0
  %v7377 = vadd.f32 %v7375, %v7376
  %v7378 = vsel %vm7372, %v7278, 0.0
  %v7379 = vadd.f32 %v7377, %v7378
  %v7380 = vsel %vm7372, %v7280, 0.0
  %v7381 = vadd.f32 %v7379, %v7380
  %v7382 = vsel %vm7372, %v7282, 0.0
  %v7383 = vadd.f32 %v7381, %v7382
  %v7384 = vsel %vm7372, %v7284, 0.0
  %v7385 = vadd.f32 %v7383, %v7384
  %v7386 = vsel %vm7372, %v7286, 0.0
  %v7387 = vadd.f32 %v7385, %v7386
  %v7388 = vsel %vm7372, %v7288, 0.0
  %v7389 = vadd.f32 %v7387, %v7388
  %v7390 = vsel %vm7372, %v7290, 0.0
  %v7391 = vadd.f32 %v7389, %v7390
  %v7392 = vsel %vm7372, %v7292, 0.0
  %v7393 = vadd.f32 %v7391, %v7392
  %v7394 = vsel %vm7372, %v7294, 0.0
  %v7395 = vadd.f32 %v7393, %v7394
  %v7396 = vsel %vm7372, %v7296, 0.0
  %v7397 = vadd.f32 %v7395, %v7396
  %v7398 = vsel %vm7372, %v7298, 0.0
  %v7399 = vadd.f32 %v7397, %v7398
  %v7400 = vsel %vm7372, %v7300, 0.0
  %v7401 = vadd.f32 %v7399, %v7400
  %v7402 = vsel %vm7372, %v7302, 0.0
  %v7403 = vadd.f32 %v7401, %v7402
  %v7404 = vsel %vm7372, %v7304, 0.0
  %v7405 = vadd.f32 %v7403, %v7404
  %v7406 = vsel %vm7372, %v7306, 0.0
  %v7407 = vadd.f32 %v7405, %v7406
  %v7408 = vsel %vm7372, %v7308, 0.0
  %v7409 = vadd.f32 %v7407, %v7408
  %v7410 = vsel %vm7372, %v7310, 0.0
  %v7411 = vadd.f32 %v7409, %v7410
  %v7412 = vsel %vm7372, %v7312, 0.0
  %v7413 = vadd.f32 %v7411, %v7412
  %v7414 = vsel %vm7372, %v7314, 0.0
  %v7415 = vadd.f32 %v7413, %v7414
  %v7416 = vsel %vm7372, %v7316, 0.0
  %v7417 = vadd.f32 %v7415, %v7416
  %v7418 = vsel %vm7372, %v7318, 0.0
  %v7419 = vadd.f32 %v7417, %v7418
  %v7420 = vsel %vm7372, %v7320, 0.0
  %v7421 = vadd.f32 %v7419, %v7420
  %v7422 = vsel %vm7372, %v7322, 0.0
  %v7423 = vadd.f32 %v7421, %v7422
  %v7424 = vsel %vm7372, %v7324, 0.0
  %v7425 = vadd.f32 %v7423, %v7424
  %v7426 = vsel %vm7372, %v7326, 0.0
  %v7427 = vadd.f32 %v7425, %v7426
  %v7428 = vsel %vm7372, %v7328, 0.0
  %v7429 = vadd.f32 %v7427, %v7428
  %v7430 = vsel %vm7372, %v7330, 0.0
  %v7431 = vadd.f32 %v7429, %v7430
  %v7432 = vsel %vm7372, %v7332, 0.0
  %v7433 = vadd.f32 %v7431, %v7432
  %v7434 = vsel %vm7372, %v7334, 0.0
  %v7435 = vadd.f32 %v7433, %v7434
  %v7436 = vrot.slane %v7435, 4
  %v7437 = vadd.f32 %v7435, %v7436
  %v7438 = vrot.slane %v7437, 2
  %v7439 = vadd.f32 %v7437, %v7438
  %v7440 = vrot.slane %v7439, 1
  %v7441 = vadd.f32 %v7439, %v7440
  %v7442 = vmul.f32 %v7371, %v1710
  %v7443 = vmul.f32 %v7441, %v1710
  %v7444 = vsub.f32 %v7271, %v7442
  %v7445 = vsub.f32 %v7272, %v7443
  %v7446 = vsub.f32 %v7273, %v7442
  %v7447 = vsub.f32 %v7274, %v7443
  %v7448 = vsub.f32 %v7275, %v7442
  %v7449 = vsub.f32 %v7276, %v7443
  %v7450 = vsub.f32 %v7277, %v7442
  %v7451 = vsub.f32 %v7278, %v7443
  %v7452 = vsub.f32 %v7279, %v7442
  %v7453 = vsub.f32 %v7280, %v7443
  %v7454 = vsub.f32 %v7281, %v7442
  %v7455 = vsub.f32 %v7282, %v7443
  %v7456 = vsub.f32 %v7283, %v7442
  %v7457 = vsub.f32 %v7284, %v7443
  %v7458 = vsub.f32 %v7285, %v7442
  %v7459 = vsub.f32 %v7286, %v7443
  %v7460 = vsub.f32 %v7287, %v7442
  %v7461 = vsub.f32 %v7288, %v7443
  %v7462 = vsub.f32 %v7289, %v7442
  %v7463 = vsub.f32 %v7290, %v7443
  %v7464 = vsub.f32 %v7291, %v7442
  %v7465 = vsub.f32 %v7292, %v7443
  %v7466 = vsub.f32 %v7293, %v7442
  %v7467 = vsub.f32 %v7294, %v7443
  %v7468 = vsub.f32 %v7295, %v7442
  %v7469 = vsub.f32 %v7296, %v7443
  %v7470 = vsub.f32 %v7297, %v7442
  %v7471 = vsub.f32 %v7298, %v7443
  %v7472 = vsub.f32 %v7299, %v7442
  %v7473 = vsub.f32 %v7300, %v7443
  %v7474 = vsub.f32 %v7301, %v7442
  %v7475 = vsub.f32 %v7302, %v7443
  %v7476 = vsub.f32 %v7303, %v7442
  %v7477 = vsub.f32 %v7304, %v7443
  %v7478 = vsub.f32 %v7305, %v7442
  %v7479 = vsub.f32 %v7306, %v7443
  %v7480 = vsub.f32 %v7307, %v7442
  %v7481 = vsub.f32 %v7308, %v7443
  %v7482 = vsub.f32 %v7309, %v7442
  %v7483 = vsub.f32 %v7310, %v7443
  %v7484 = vsub.f32 %v7311, %v7442
  %v7485 = vsub.f32 %v7312, %v7443
  %v7486 = vsub.f32 %v7313, %v7442
  %v7487 = vsub.f32 %v7314, %v7443
  %v7488 = vsub.f32 %v7315, %v7442
  %v7489 = vsub.f32 %v7316, %v7443
  %v7490 = vsub.f32 %v7317, %v7442
  %v7491 = vsub.f32 %v7318, %v7443
  %v7492 = vsub.f32 %v7319, %v7442
  %v7493 = vsub.f32 %v7320, %v7443
  %v7494 = vsub.f32 %v7321, %v7442
  %v7495 = vsub.f32 %v7322, %v7443
  %v7496 = vsub.f32 %v7323, %v7442
  %v7497 = vsub.f32 %v7324, %v7443
  %v7498 = vsub.f32 %v7325, %v7442
  %v7499 = vsub.f32 %v7326, %v7443
  %v7500 = vsub.f32 %v7327, %v7442
  %v7501 = vsub.f32 %v7328, %v7443
  %v7502 = vsub.f32 %v7329, %v7442
  %v7503 = vsub.f32 %v7330, %v7443
  %v7504 = vsub.f32 %v7331, %v7442
  %v7505 = vsub.f32 %v7332, %v7443
  %v7506 = vsub.f32 %v7333, %v7442
  %v7507 = vsub.f32 %v7334, %v7443
  %v7508 = vmul.f32 %v7444, %v7444
  %v7509 = vmul.f32 %v7445, %v7445
  %v7510 = vmul.f32 %v7446, %v7446
  %v7511 = vmul.f32 %v7447, %v7447
  %v7512 = vmul.f32 %v7448, %v7448
  %v7513 = vmul.f32 %v7449, %v7449
  %v7514 = vmul.f32 %v7450, %v7450
  %v7515 = vmul.f32 %v7451, %v7451
  %v7516 = vmul.f32 %v7452, %v7452
  %v7517 = vmul.f32 %v7453, %v7453
  %v7518 = vmul.f32 %v7454, %v7454
  %v7519 = vmul.f32 %v7455, %v7455
  %v7520 = vmul.f32 %v7456, %v7456
  %v7521 = vmul.f32 %v7457, %v7457
  %v7522 = vmul.f32 %v7458, %v7458
  %v7523 = vmul.f32 %v7459, %v7459
  %v7524 = vmul.f32 %v7460, %v7460
  %v7525 = vmul.f32 %v7461, %v7461
  %v7526 = vmul.f32 %v7462, %v7462
  %v7527 = vmul.f32 %v7463, %v7463
  %v7528 = vmul.f32 %v7464, %v7464
  %v7529 = vmul.f32 %v7465, %v7465
  %v7530 = vmul.f32 %v7466, %v7466
  %v7531 = vmul.f32 %v7467, %v7467
  %v7532 = vmul.f32 %v7468, %v7468
  %v7533 = vmul.f32 %v7469, %v7469
  %v7534 = vmul.f32 %v7470, %v7470
  %v7535 = vmul.f32 %v7471, %v7471
  %v7536 = vmul.f32 %v7472, %v7472
  %v7537 = vmul.f32 %v7473, %v7473
  %v7538 = vmul.f32 %v7474, %v7474
  %v7539 = vmul.f32 %v7475, %v7475
  %v7540 = vmul.f32 %v7476, %v7476
  %v7541 = vmul.f32 %v7477, %v7477
  %v7542 = vmul.f32 %v7478, %v7478
  %v7543 = vmul.f32 %v7479, %v7479
  %v7544 = vmul.f32 %v7480, %v7480
  %v7545 = vmul.f32 %v7481, %v7481
  %v7546 = vmul.f32 %v7482, %v7482
  %v7547 = vmul.f32 %v7483, %v7483
  %v7548 = vmul.f32 %v7484, %v7484
  %v7549 = vmul.f32 %v7485, %v7485
  %v7550 = vmul.f32 %v7486, %v7486
  %v7551 = vmul.f32 %v7487, %v7487
  %v7552 = vmul.f32 %v7488, %v7488
  %v7553 = vmul.f32 %v7489, %v7489
  %v7554 = vmul.f32 %v7490, %v7490
  %v7555 = vmul.f32 %v7491, %v7491
  %v7556 = vmul.f32 %v7492, %v7492
  %v7557 = vmul.f32 %v7493, %v7493
  %v7558 = vmul.f32 %v7494, %v7494
  %v7559 = vmul.f32 %v7495, %v7495
  %v7560 = vmul.f32 %v7496, %v7496
  %v7561 = vmul.f32 %v7497, %v7497
  %v7562 = vmul.f32 %v7498, %v7498
  %v7563 = vmul.f32 %v7499, %v7499
  %v7564 = vmul.f32 %v7500, %v7500
  %v7565 = vmul.f32 %v7501, %v7501
  %v7566 = vmul.f32 %v7502, %v7502
  %v7567 = vmul.f32 %v7503, %v7503
  %v7568 = vmul.f32 %v7504, %v7504
  %v7569 = vmul.f32 %v7505, %v7505
  %v7570 = vmul.f32 %v7506, %v7506
  %v7571 = vmul.f32 %v7507, %v7507
  %v7572 = vadd.f32 %v7508, %v7510
  %v7573 = vadd.f32 %v7572, %v7512
  %v7574 = vadd.f32 %v7573, %v7514
  %v7575 = vadd.f32 %v7574, %v7516
  %v7576 = vadd.f32 %v7575, %v7518
  %v7577 = vadd.f32 %v7576, %v7520
  %v7578 = vadd.f32 %v7577, %v7522
  %v7579 = vadd.f32 %v7578, %v7524
  %v7580 = vadd.f32 %v7579, %v7526
  %v7581 = vadd.f32 %v7580, %v7528
  %v7582 = vadd.f32 %v7581, %v7530
  %v7583 = vadd.f32 %v7582, %v7532
  %v7584 = vadd.f32 %v7583, %v7534
  %v7585 = vadd.f32 %v7584, %v7536
  %v7586 = vadd.f32 %v7585, %v7538
  %v7587 = vadd.f32 %v7586, %v7540
  %v7588 = vadd.f32 %v7587, %v7542
  %v7589 = vadd.f32 %v7588, %v7544
  %v7590 = vadd.f32 %v7589, %v7546
  %v7591 = vadd.f32 %v7590, %v7548
  %v7592 = vadd.f32 %v7591, %v7550
  %v7593 = vadd.f32 %v7592, %v7552
  %v7594 = vadd.f32 %v7593, %v7554
  %v7595 = vadd.f32 %v7594, %v7556
  %v7596 = vadd.f32 %v7595, %v7558
  %v7597 = vadd.f32 %v7596, %v7560
  %v7598 = vadd.f32 %v7597, %v7562
  %v7599 = vadd.f32 %v7598, %v7564
  %v7600 = vadd.f32 %v7599, %v7566
  %v7601 = vadd.f32 %v7600, %v7568
  %v7602 = vadd.f32 %v7601, %v7570
  %v7603 = vrot.slane %v7602, 4
  %v7604 = vadd.f32 %v7602, %v7603
  %v7605 = vrot.slane %v7604, 2
  %v7606 = vadd.f32 %v7604, %v7605
  %v7607 = vrot.slane %v7606, 1
  %v7608 = vadd.f32 %v7606, %v7607
  %v7609 = vsel %vm7372, %v7509, 0.0
  %v7610 = vsel %vm7372, %v7511, 0.0
  %v7611 = vadd.f32 %v7609, %v7610
  %v7612 = vsel %vm7372, %v7513, 0.0
  %v7613 = vadd.f32 %v7611, %v7612
  %v7614 = vsel %vm7372, %v7515, 0.0
  %v7615 = vadd.f32 %v7613, %v7614
  %v7616 = vsel %vm7372, %v7517, 0.0
  %v7617 = vadd.f32 %v7615, %v7616
  %v7618 = vsel %vm7372, %v7519, 0.0
  %v7619 = vadd.f32 %v7617, %v7618
  %v7620 = vsel %vm7372, %v7521, 0.0
  %v7621 = vadd.f32 %v7619, %v7620
  %v7622 = vsel %vm7372, %v7523, 0.0
  %v7623 = vadd.f32 %v7621, %v7622
  %v7624 = vsel %vm7372, %v7525, 0.0
  %v7625 = vadd.f32 %v7623, %v7624
  %v7626 = vsel %vm7372, %v7527, 0.0
  %v7627 = vadd.f32 %v7625, %v7626
  %v7628 = vsel %vm7372, %v7529, 0.0
  %v7629 = vadd.f32 %v7627, %v7628
  %v7630 = vsel %vm7372, %v7531, 0.0
  %v7631 = vadd.f32 %v7629, %v7630
  %v7632 = vsel %vm7372, %v7533, 0.0
  %v7633 = vadd.f32 %v7631, %v7632
  %v7634 = vsel %vm7372, %v7535, 0.0
  %v7635 = vadd.f32 %v7633, %v7634
  %v7636 = vsel %vm7372, %v7537, 0.0
  %v7637 = vadd.f32 %v7635, %v7636
  %v7638 = vsel %vm7372, %v7539, 0.0
  %v7639 = vadd.f32 %v7637, %v7638
  %v7640 = vsel %vm7372, %v7541, 0.0
  %v7641 = vadd.f32 %v7639, %v7640
  %v7642 = vsel %vm7372, %v7543, 0.0
  %v7643 = vadd.f32 %v7641, %v7642
  %v7644 = vsel %vm7372, %v7545, 0.0
  %v7645 = vadd.f32 %v7643, %v7644
  %v7646 = vsel %vm7372, %v7547, 0.0
  %v7647 = vadd.f32 %v7645, %v7646
  %v7648 = vsel %vm7372, %v7549, 0.0
  %v7649 = vadd.f32 %v7647, %v7648
  %v7650 = vsel %vm7372, %v7551, 0.0
  %v7651 = vadd.f32 %v7649, %v7650
  %v7652 = vsel %vm7372, %v7553, 0.0
  %v7653 = vadd.f32 %v7651, %v7652
  %v7654 = vsel %vm7372, %v7555, 0.0
  %v7655 = vadd.f32 %v7653, %v7654
  %v7656 = vsel %vm7372, %v7557, 0.0
  %v7657 = vadd.f32 %v7655, %v7656
  %v7658 = vsel %vm7372, %v7559, 0.0
  %v7659 = vadd.f32 %v7657, %v7658
  %v7660 = vsel %vm7372, %v7561, 0.0
  %v7661 = vadd.f32 %v7659, %v7660
  %v7662 = vsel %vm7372, %v7563, 0.0
  %v7663 = vadd.f32 %v7661, %v7662
  %v7664 = vsel %vm7372, %v7565, 0.0
  %v7665 = vadd.f32 %v7663, %v7664
  %v7666 = vsel %vm7372, %v7567, 0.0
  %v7667 = vadd.f32 %v7665, %v7666
  %v7668 = vsel %vm7372, %v7569, 0.0
  %v7669 = vadd.f32 %v7667, %v7668
  %v7670 = vsel %vm7372, %v7571, 0.0
  %v7671 = vadd.f32 %v7669, %v7670
  %v7672 = vrot.slane %v7671, 4
  %v7673 = vadd.f32 %v7671, %v7672
  %v7674 = vrot.slane %v7673, 2
  %v7675 = vadd.f32 %v7673, %v7674
  %v7676 = vrot.slane %v7675, 1
  %v7677 = vadd.f32 %v7675, %v7676
  %v7678 = vmul.f32 %v7608, %v1710
  %v7679 = vmul.f32 %v7677, %v1710
  %v7680 = vadd.f32 %v7678, 1e-05
  %v7681 = vadd.f32 %v7679, 1e-05
  %v7682 = vrsqrt.pop %v7680
  %v7683 = vrsqrt.pop %v7681
  %v7684 = vmul.f32 %v7444, %v7682
  %v7685 = vmul.f32 %v7445, %v7683
  %v7686 = vmul.f32 %v7446, %v7682
  %v7687 = vmul.f32 %v7447, %v7683
  %v7688 = vmul.f32 %v7448, %v7682
  %v7689 = vmul.f32 %v7449, %v7683
  %v7690 = vmul.f32 %v7450, %v7682
  %v7691 = vmul.f32 %v7451, %v7683
  %v7692 = vmul.f32 %v7452, %v7682
  %v7693 = vmul.f32 %v7453, %v7683
  %v7694 = vmul.f32 %v7454, %v7682
  %v7695 = vmul.f32 %v7455, %v7683
  %v7696 = vmul.f32 %v7456, %v7682
  %v7697 = vmul.f32 %v7457, %v7683
  %v7698 = vmul.f32 %v7458, %v7682
  %v7699 = vmul.f32 %v7459, %v7683
  %v7700 = vmul.f32 %v7460, %v7682
  %v7701 = vmul.f32 %v7461, %v7683
  %v7702 = vmul.f32 %v7462, %v7682
  %v7703 = vmul.f32 %v7463, %v7683
  %v7704 = vmul.f32 %v7464, %v7682
  %v7705 = vmul.f32 %v7465, %v7683
  %v7706 = vmul.f32 %v7466, %v7682
  %v7707 = vmul.f32 %v7467, %v7683
  %v7708 = vmul.f32 %v7468, %v7682
  %v7709 = vmul.f32 %v7469, %v7683
  %v7710 = vmul.f32 %v7470, %v7682
  %v7711 = vmul.f32 %v7471, %v7683
  %v7712 = vmul.f32 %v7472, %v7682
  %v7713 = vmul.f32 %v7473, %v7683
  %v7714 = vmul.f32 %v7474, %v7682
  %v7715 = vmul.f32 %v7475, %v7683
  %v7716 = vmul.f32 %v7476, %v7682
  %v7717 = vmul.f32 %v7477, %v7683
  %v7718 = vmul.f32 %v7478, %v7682
  %v7719 = vmul.f32 %v7479, %v7683
  %v7720 = vmul.f32 %v7480, %v7682
  %v7721 = vmul.f32 %v7481, %v7683
  %v7722 = vmul.f32 %v7482, %v7682
  %v7723 = vmul.f32 %v7483, %v7683
  %v7724 = vmul.f32 %v7484, %v7682
  %v7725 = vmul.f32 %v7485, %v7683
  %v7726 = vmul.f32 %v7486, %v7682
  %v7727 = vmul.f32 %v7487, %v7683
  %v7728 = vmul.f32 %v7488, %v7682
  %v7729 = vmul.f32 %v7489, %v7683
  %v7730 = vmul.f32 %v7490, %v7682
  %v7731 = vmul.f32 %v7491, %v7683
  %v7732 = vmul.f32 %v7492, %v7682
  %v7733 = vmul.f32 %v7493, %v7683
  %v7734 = vmul.f32 %v7494, %v7682
  %v7735 = vmul.f32 %v7495, %v7683
  %v7736 = vmul.f32 %v7496, %v7682
  %v7737 = vmul.f32 %v7497, %v7683
  %v7738 = vmul.f32 %v7498, %v7682
  %v7739 = vmul.f32 %v7499, %v7683
  %v7740 = vmul.f32 %v7500, %v7682
  %v7741 = vmul.f32 %v7501, %v7683
  %v7742 = vmul.f32 %v7502, %v7682
  %v7743 = vmul.f32 %v7503, %v7683
  %v7744 = vmul.f32 %v7504, %v7682
  %v7745 = vmul.f32 %v7505, %v7683
  %v7746 = vmul.f32 %v7506, %v7682
  %v7747 = vmul.f32 %v7507, %v7683
  %v7748 = vld [vmem:[%s11] sm:$0xff]
  %v7749 = vld [vmem:[%s11 + $0x8] sm:$0xff]
  %v7750 = vld [vmem:[%s11 + $0x10] sm:$0xff]
  %v7751 = vld [vmem:[%s11 + $0x18] sm:$0xff]
  %v7752 = vld [vmem:[%s11 + $0x20] sm:$0xff]
  %v7753 = vld [vmem:[%s11 + $0x28] sm:$0xff]
  %v7754 = vld [vmem:[%s11 + $0x30] sm:$0xff]
  %v7755 = vld [vmem:[%s11 + $0x38] sm:$0xff]
  %v7756 = vld [vmem:[%s11 + $0x40] sm:$0xff]
  %v7757 = vld [vmem:[%s11 + $0x48] sm:$0xff]
  %v7758 = vld [vmem:[%s11 + $0x50] sm:$0xff]
  %v7759 = vld [vmem:[%s11 + $0x58] sm:$0xff]
  %v7760 = vld [vmem:[%s11 + $0x60] sm:$0xff]
  %v7761 = vld [vmem:[%s11 + $0x68] sm:$0xff]
  %v7762 = vld [vmem:[%s11 + $0x70] sm:$0xff]
  %v7763 = vld [vmem:[%s11 + $0x78] sm:$0xff]
  %v7764 = vld [vmem:[%s11 + $0x80] sm:$0xff]
  %v7765 = vld [vmem:[%s11 + $0x88] sm:$0xff]
  %v7766 = vld [vmem:[%s11 + $0x90] sm:$0xff]
  %v7767 = vld [vmem:[%s11 + $0x98] sm:$0xff]
  %v7768 = vld [vmem:[%s11 + $0xa0] sm:$0xff]
  %v7769 = vld [vmem:[%s11 + $0xa8] sm:$0xff]
  %v7770 = vld [vmem:[%s11 + $0xb0] sm:$0xff]
  %v7771 = vld [vmem:[%s11 + $0xb8] sm:$0xff]
  %v7772 = vld [vmem:[%s11 + $0xc0] sm:$0xff]
  %v7773 = vld [vmem:[%s11 + $0xc8] sm:$0xff]
  %v7774 = vld [vmem:[%s11 + $0xd0] sm:$0xff]
  %v7775 = vld [vmem:[%s11 + $0xd8] sm:$0xff]
  %v7776 = vld [vmem:[%s11 + $0xe0] sm:$0xff]
  %v7777 = vld [vmem:[%s11 + $0xe8] sm:$0xff]
  %v7778 = vld [vmem:[%s11 + $0xf0] sm:$0xff]
  %v7779 = vld [vmem:[%s11 + $0xf8] sm:$0xff]
  %7781 = vset.pattern.permute.xlu0 0
  %7782 = vperm.xlu0 %7781, %v7748
  %v7783 = vpop.permute.xlu0 %7782
  %7786 = vset.pattern.permute.xlu0 0
  %7787 = vperm.xlu0 %7786, %v7749
  %v7788 = vpop.permute.xlu0 %7787
  %7791 = vset.pattern.permute.xlu0 0
  %7792 = vperm.xlu0 %7791, %v7750
  %v7793 = vpop.permute.xlu0 %7792
  %7796 = vset.pattern.permute.xlu0 0
  %7797 = vperm.xlu0 %7796, %v7751
  %v7798 = vpop.permute.xlu0 %7797
  %7801 = vset.pattern.permute.xlu0 0
  %7802 = vperm.xlu0 %7801, %v7752
  %v7803 = vpop.permute.xlu0 %7802
  %7806 = vset.pattern.permute.xlu0 0
  %7807 = vperm.xlu0 %7806, %v7753
  %v7808 = vpop.permute.xlu0 %7807
  %7811 = vset.pattern.permute.xlu0 0
  %7812 = vperm.xlu0 %7811, %v7754
  %v7813 = vpop.permute.xlu0 %7812
  %7816 = vset.pattern.permute.xlu0 0
  %7817 = vperm.xlu0 %7816, %v7755
  %v7818 = vpop.permute.xlu0 %7817
  %7821 = vset.pattern.permute.xlu0 0
  %7822 = vperm.xlu0 %7821, %v7756
  %v7823 = vpop.permute.xlu0 %7822
  %7826 = vset.pattern.permute.xlu0 0
  %7827 = vperm.xlu0 %7826, %v7757
  %v7828 = vpop.permute.xlu0 %7827
  %7831 = vset.pattern.permute.xlu0 0
  %7832 = vperm.xlu0 %7831, %v7758
  %v7833 = vpop.permute.xlu0 %7832
  %7836 = vset.pattern.permute.xlu0 0
  %7837 = vperm.xlu0 %7836, %v7759
  %v7838 = vpop.permute.xlu0 %7837
  %7841 = vset.pattern.permute.xlu0 0
  %7842 = vperm.xlu0 %7841, %v7760
  %v7843 = vpop.permute.xlu0 %7842
  %7846 = vset.pattern.permute.xlu0 0
  %7847 = vperm.xlu0 %7846, %v7761
  %v7848 = vpop.permute.xlu0 %7847
  %7851 = vset.pattern.permute.xlu0 0
  %7852 = vperm.xlu0 %7851, %v7762
  %v7853 = vpop.permute.xlu0 %7852
  %7856 = vset.pattern.permute.xlu0 0
  %7857 = vperm.xlu0 %7856, %v7763
  %v7858 = vpop.permute.xlu0 %7857
  %7861 = vset.pattern.permute.xlu0 0
  %7862 = vperm.xlu0 %7861, %v7764
  %v7863 = vpop.permute.xlu0 %7862
  %7866 = vset.pattern.permute.xlu0 0
  %7867 = vperm.xlu0 %7866, %v7765
  %v7868 = vpop.permute.xlu0 %7867
  %7871 = vset.pattern.permute.xlu0 0
  %7872 = vperm.xlu0 %7871, %v7766
  %v7873 = vpop.permute.xlu0 %7872
  %7876 = vset.pattern.permute.xlu0 0
  %7877 = vperm.xlu0 %7876, %v7767
  %v7878 = vpop.permute.xlu0 %7877
  %7881 = vset.pattern.permute.xlu0 0
  %7882 = vperm.xlu0 %7881, %v7768
  %v7883 = vpop.permute.xlu0 %7882
  %7886 = vset.pattern.permute.xlu0 0
  %7887 = vperm.xlu0 %7886, %v7769
  %v7888 = vpop.permute.xlu0 %7887
  %7891 = vset.pattern.permute.xlu0 0
  %7892 = vperm.xlu0 %7891, %v7770
  %v7893 = vpop.permute.xlu0 %7892
  %7896 = vset.pattern.permute.xlu0 0
  %7897 = vperm.xlu0 %7896, %v7771
  %v7898 = vpop.permute.xlu0 %7897
  %7901 = vset.pattern.permute.xlu0 0
  %7902 = vperm.xlu0 %7901, %v7772
  %v7903 = vpop.permute.xlu0 %7902
  %7906 = vset.pattern.permute.xlu0 0
  %7907 = vperm.xlu0 %7906, %v7773
  %v7908 = vpop.permute.xlu0 %7907
  %7911 = vset.pattern.permute.xlu0 0
  %7912 = vperm.xlu0 %7911, %v7774
  %v7913 = vpop.permute.xlu0 %7912
  %7916 = vset.pattern.permute.xlu0 0
  %7917 = vperm.xlu0 %7916, %v7775
  %v7918 = vpop.permute.xlu0 %7917
  %7921 = vset.pattern.permute.xlu0 0
  %7922 = vperm.xlu0 %7921, %v7776
  %v7923 = vpop.permute.xlu0 %7922
  %7926 = vset.pattern.permute.xlu0 0
  %7927 = vperm.xlu0 %7926, %v7777
  %v7928 = vpop.permute.xlu0 %7927
  %7931 = vset.pattern.permute.xlu0 0
  %7932 = vperm.xlu0 %7931, %v7778
  %v7933 = vpop.permute.xlu0 %7932
  %7936 = vset.pattern.permute.xlu0 0
  %7937 = vperm.xlu0 %7936, %v7779
  %v7938 = vpop.permute.xlu0 %7937
  %v7940 = vmul.f32 %v7684, %v7783
  %v7941 = vmul.f32 %v7685, %v7783
  %v7942 = vmul.f32 %v7686, %v7788
  %v7943 = vmul.f32 %v7687, %v7788
  %v7944 = vmul.f32 %v7688, %v7793
  %v7945 = vmul.f32 %v7689, %v7793
  %v7946 = vmul.f32 %v7690, %v7798
  %v7947 = vmul.f32 %v7691, %v7798
  %v7948 = vmul.f32 %v7692, %v7803
  %v7949 = vmul.f32 %v7693, %v7803
  %v7950 = vmul.f32 %v7694, %v7808
  %v7951 = vmul.f32 %v7695, %v7808
  %v7952 = vmul.f32 %v7696, %v7813
  %v7953 = vmul.f32 %v7697, %v7813
  %v7954 = vmul.f32 %v7698, %v7818
  %v7955 = vmul.f32 %v7699, %v7818
  %v7956 = vmul.f32 %v7700, %v7823
  %v7957 = vmul.f32 %v7701, %v7823
  %v7958 = vmul.f32 %v7702, %v7828
  %v7959 = vmul.f32 %v7703, %v7828
  %v7960 = vmul.f32 %v7704, %v7833
  %v7961 = vmul.f32 %v7705, %v7833
  %v7962 = vmul.f32 %v7706, %v7838
  %v7963 = vmul.f32 %v7707, %v7838
  %v7964 = vmul.f32 %v7708, %v7843
  %v7965 = vmul.f32 %v7709, %v7843
  %v7966 = vmul.f32 %v7710, %v7848
  %v7967 = vmul.f32 %v7711, %v7848
  %v7968 = vmul.f32 %v7712, %v7853
  %v7969 = vmul.f32 %v7713, %v7853
  %v7970 = vmul.f32 %v7714, %v7858
  %v7971 = vmul.f32 %v7715, %v7858
  %v7972 = vmul.f32 %v7716, %v7863
  %v7973 = vmul.f32 %v7717, %v7863
  %v7974 = vmul.f32 %v7718, %v7868
  %v7975 = vmul.f32 %v7719, %v7868
  %v7976 = vmul.f32 %v7720, %v7873
  %v7977 = vmul.f32 %v7721, %v7873
  %v7978 = vmul.f32 %v7722, %v7878
  %v7979 = vmul.f32 %v7723, %v7878
  %v7980 = vmul.f32 %v7724, %v7883
  %v7981 = vmul.f32 %v7725, %v7883
  %v7982 = vmul.f32 %v7726, %v7888
  %v7983 = vmul.f32 %v7727, %v7888
  %v7984 = vmul.f32 %v7728, %v7893
  %v7985 = vmul.f32 %v7729, %v7893
  %v7986 = vmul.f32 %v7730, %v7898
  %v7987 = vmul.f32 %v7731, %v7898
  %v7988 = vmul.f32 %v7732, %v7903
  %v7989 = vmul.f32 %v7733, %v7903
  %v7990 = vmul.f32 %v7734, %v7908
  %v7991 = vmul.f32 %v7735, %v7908
  %v7992 = vmul.f32 %v7736, %v7913
  %v7993 = vmul.f32 %v7737, %v7913
  %v7994 = vmul.f32 %v7738, %v7918
  %v7995 = vmul.f32 %v7739, %v7918
  %v7996 = vmul.f32 %v7740, %v7923
  %v7997 = vmul.f32 %v7741, %v7923
  %v7998 = vmul.f32 %v7742, %v7928
  %v7999 = vmul.f32 %v7743, %v7928
  %v8000 = vmul.f32 %v7744, %v7933
  %v8001 = vmul.f32 %v7745, %v7933
  %v8002 = vmul.f32 %v7746, %v7938
  %v8003 = vmul.f32 %v7747, %v7938
  %v8004 = vld [vmem:[%s12] sm:$0xff]
  %v8005 = vld [vmem:[%s12 + $0x8] sm:$0xff]
  %v8006 = vld [vmem:[%s12 + $0x10] sm:$0xff]
  %v8007 = vld [vmem:[%s12 + $0x18] sm:$0xff]
  %v8008 = vld [vmem:[%s12 + $0x20] sm:$0xff]
  %v8009 = vld [vmem:[%s12 + $0x28] sm:$0xff]
  %v8010 = vld [vmem:[%s12 + $0x30] sm:$0xff]
  %v8011 = vld [vmem:[%s12 + $0x38] sm:$0xff]
  %v8012 = vld [vmem:[%s12 + $0x40] sm:$0xff]
  %v8013 = vld [vmem:[%s12 + $0x48] sm:$0xff]
  %v8014 = vld [vmem:[%s12 + $0x50] sm:$0xff]
  %v8015 = vld [vmem:[%s12 + $0x58] sm:$0xff]
  %v8016 = vld [vmem:[%s12 + $0x60] sm:$0xff]
  %v8017 = vld [vmem:[%s12 + $0x68] sm:$0xff]
  %v8018 = vld [vmem:[%s12 + $0x70] sm:$0xff]
  %v8019 = vld [vmem:[%s12 + $0x78] sm:$0xff]
  %v8020 = vld [vmem:[%s12 + $0x80] sm:$0xff]
  %v8021 = vld [vmem:[%s12 + $0x88] sm:$0xff]
  %v8022 = vld [vmem:[%s12 + $0x90] sm:$0xff]
  %v8023 = vld [vmem:[%s12 + $0x98] sm:$0xff]
  %v8024 = vld [vmem:[%s12 + $0xa0] sm:$0xff]
  %v8025 = vld [vmem:[%s12 + $0xa8] sm:$0xff]
  %v8026 = vld [vmem:[%s12 + $0xb0] sm:$0xff]
  %v8027 = vld [vmem:[%s12 + $0xb8] sm:$0xff]
  %v8028 = vld [vmem:[%s12 + $0xc0] sm:$0xff]
  %v8029 = vld [vmem:[%s12 + $0xc8] sm:$0xff]
  %v8030 = vld [vmem:[%s12 + $0xd0] sm:$0xff]
  %v8031 = vld [vmem:[%s12 + $0xd8] sm:$0xff]
  %v8032 = vld [vmem:[%s12 + $0xe0] sm:$0xff]
  %v8033 = vld [vmem:[%s12 + $0xe8] sm:$0xff]
  %v8034 = vld [vmem:[%s12 + $0xf0] sm:$0xff]
  %v8035 = vld [vmem:[%s12 + $0xf8] sm:$0xff]
  %8037 = vset.pattern.permute.xlu0 0
  %8038 = vperm.xlu0 %8037, %v8004
  %v8039 = vpop.permute.xlu0 %8038
  %8042 = vset.pattern.permute.xlu0 0
  %8043 = vperm.xlu0 %8042, %v8005
  %v8044 = vpop.permute.xlu0 %8043
  %8047 = vset.pattern.permute.xlu0 0
  %8048 = vperm.xlu0 %8047, %v8006
  %v8049 = vpop.permute.xlu0 %8048
  %8052 = vset.pattern.permute.xlu0 0
  %8053 = vperm.xlu0 %8052, %v8007
  %v8054 = vpop.permute.xlu0 %8053
  %8057 = vset.pattern.permute.xlu0 0
  %8058 = vperm.xlu0 %8057, %v8008
  %v8059 = vpop.permute.xlu0 %8058
  %8062 = vset.pattern.permute.xlu0 0
  %8063 = vperm.xlu0 %8062, %v8009
  %v8064 = vpop.permute.xlu0 %8063
  %8067 = vset.pattern.permute.xlu0 0
  %8068 = vperm.xlu0 %8067, %v8010
  %v8069 = vpop.permute.xlu0 %8068
  %8072 = vset.pattern.permute.xlu0 0
  %8073 = vperm.xlu0 %8072, %v8011
  %v8074 = vpop.permute.xlu0 %8073
  %8077 = vset.pattern.permute.xlu0 0
  %8078 = vperm.xlu0 %8077, %v8012
  %v8079 = vpop.permute.xlu0 %8078
  %8082 = vset.pattern.permute.xlu0 0
  %8083 = vperm.xlu0 %8082, %v8013
  %v8084 = vpop.permute.xlu0 %8083
  %8087 = vset.pattern.permute.xlu0 0
  %8088 = vperm.xlu0 %8087, %v8014
  %v8089 = vpop.permute.xlu0 %8088
  %8092 = vset.pattern.permute.xlu0 0
  %8093 = vperm.xlu0 %8092, %v8015
  %v8094 = vpop.permute.xlu0 %8093
  %8097 = vset.pattern.permute.xlu0 0
  %8098 = vperm.xlu0 %8097, %v8016
  %v8099 = vpop.permute.xlu0 %8098
  %8102 = vset.pattern.permute.xlu0 0
  %8103 = vperm.xlu0 %8102, %v8017
  %v8104 = vpop.permute.xlu0 %8103
  %8107 = vset.pattern.permute.xlu0 0
  %8108 = vperm.xlu0 %8107, %v8018
  %v8109 = vpop.permute.xlu0 %8108
  %8112 = vset.pattern.permute.xlu0 0
  %8113 = vperm.xlu0 %8112, %v8019
  %v8114 = vpop.permute.xlu0 %8113
  %8117 = vset.pattern.permute.xlu0 0
  %8118 = vperm.xlu0 %8117, %v8020
  %v8119 = vpop.permute.xlu0 %8118
  %8122 = vset.pattern.permute.xlu0 0
  %8123 = vperm.xlu0 %8122, %v8021
  %v8124 = vpop.permute.xlu0 %8123
  %8127 = vset.pattern.permute.xlu0 0
  %8128 = vperm.xlu0 %8127, %v8022
  %v8129 = vpop.permute.xlu0 %8128
  %8132 = vset.pattern.permute.xlu0 0
  %8133 = vperm.xlu0 %8132, %v8023
  %v8134 = vpop.permute.xlu0 %8133
  %8137 = vset.pattern.permute.xlu0 0
  %8138 = vperm.xlu0 %8137, %v8024
  %v8139 = vpop.permute.xlu0 %8138
  %8142 = vset.pattern.permute.xlu0 0
  %8143 = vperm.xlu0 %8142, %v8025
  %v8144 = vpop.permute.xlu0 %8143
  %8147 = vset.pattern.permute.xlu0 0
  %8148 = vperm.xlu0 %8147, %v8026
  %v8149 = vpop.permute.xlu0 %8148
  %8152 = vset.pattern.permute.xlu0 0
  %8153 = vperm.xlu0 %8152, %v8027
  %v8154 = vpop.permute.xlu0 %8153
  %8157 = vset.pattern.permute.xlu0 0
  %8158 = vperm.xlu0 %8157, %v8028
  %v8159 = vpop.permute.xlu0 %8158
  %8162 = vset.pattern.permute.xlu0 0
  %8163 = vperm.xlu0 %8162, %v8029
  %v8164 = vpop.permute.xlu0 %8163
  %8167 = vset.pattern.permute.xlu0 0
  %8168 = vperm.xlu0 %8167, %v8030
  %v8169 = vpop.permute.xlu0 %8168
  %8172 = vset.pattern.permute.xlu0 0
  %8173 = vperm.xlu0 %8172, %v8031
  %v8174 = vpop.permute.xlu0 %8173
  %8177 = vset.pattern.permute.xlu0 0
  %8178 = vperm.xlu0 %8177, %v8032
  %v8179 = vpop.permute.xlu0 %8178
  %8182 = vset.pattern.permute.xlu0 0
  %8183 = vperm.xlu0 %8182, %v8033
  %v8184 = vpop.permute.xlu0 %8183
  %8187 = vset.pattern.permute.xlu0 0
  %8188 = vperm.xlu0 %8187, %v8034
  %v8189 = vpop.permute.xlu0 %8188
  %8192 = vset.pattern.permute.xlu0 0
  %8193 = vperm.xlu0 %8192, %v8035
  %v8194 = vpop.permute.xlu0 %8193
  %v8196 = vadd.f32 %v7940, %v8039
  %v8197 = vadd.f32 %v7941, %v8039
  %v8198 = vadd.f32 %v7942, %v8044
  %v8199 = vadd.f32 %v7943, %v8044
  %v8200 = vadd.f32 %v7944, %v8049
  %v8201 = vadd.f32 %v7945, %v8049
  %v8202 = vadd.f32 %v7946, %v8054
  %v8203 = vadd.f32 %v7947, %v8054
  %v8204 = vadd.f32 %v7948, %v8059
  %v8205 = vadd.f32 %v7949, %v8059
  %v8206 = vadd.f32 %v7950, %v8064
  %v8207 = vadd.f32 %v7951, %v8064
  %v8208 = vadd.f32 %v7952, %v8069
  %v8209 = vadd.f32 %v7953, %v8069
  %v8210 = vadd.f32 %v7954, %v8074
  %v8211 = vadd.f32 %v7955, %v8074
  %v8212 = vadd.f32 %v7956, %v8079
  %v8213 = vadd.f32 %v7957, %v8079
  %v8214 = vadd.f32 %v7958, %v8084
  %v8215 = vadd.f32 %v7959, %v8084
  %v8216 = vadd.f32 %v7960, %v8089
  %v8217 = vadd.f32 %v7961, %v8089
  %v8218 = vadd.f32 %v7962, %v8094
  %v8219 = vadd.f32 %v7963, %v8094
  %v8220 = vadd.f32 %v7964, %v8099
  %v8221 = vadd.f32 %v7965, %v8099
  %v8222 = vadd.f32 %v7966, %v8104
  %v8223 = vadd.f32 %v7967, %v8104
  %v8224 = vadd.f32 %v7968, %v8109
  %v8225 = vadd.f32 %v7969, %v8109
  %v8226 = vadd.f32 %v7970, %v8114
  %v8227 = vadd.f32 %v7971, %v8114
  %v8228 = vadd.f32 %v7972, %v8119
  %v8229 = vadd.f32 %v7973, %v8119
  %v8230 = vadd.f32 %v7974, %v8124
  %v8231 = vadd.f32 %v7975, %v8124
  %v8232 = vadd.f32 %v7976, %v8129
  %v8233 = vadd.f32 %v7977, %v8129
  %v8234 = vadd.f32 %v7978, %v8134
  %v8235 = vadd.f32 %v7979, %v8134
  %v8236 = vadd.f32 %v7980, %v8139
  %v8237 = vadd.f32 %v7981, %v8139
  %v8238 = vadd.f32 %v7982, %v8144
  %v8239 = vadd.f32 %v7983, %v8144
  %v8240 = vadd.f32 %v7984, %v8149
  %v8241 = vadd.f32 %v7985, %v8149
  %v8242 = vadd.f32 %v7986, %v8154
  %v8243 = vadd.f32 %v7987, %v8154
  %v8244 = vadd.f32 %v7988, %v8159
  %v8245 = vadd.f32 %v7989, %v8159
  %v8246 = vadd.f32 %v7990, %v8164
  %v8247 = vadd.f32 %v7991, %v8164
  %v8248 = vadd.f32 %v7992, %v8169
  %v8249 = vadd.f32 %v7993, %v8169
  %v8250 = vadd.f32 %v7994, %v8174
  %v8251 = vadd.f32 %v7995, %v8174
  %v8252 = vadd.f32 %v7996, %v8179
  %v8253 = vadd.f32 %v7997, %v8179
  %v8254 = vadd.f32 %v7998, %v8184
  %v8255 = vadd.f32 %v7999, %v8184
  %v8256 = vadd.f32 %v8000, %v8189
  %v8257 = vadd.f32 %v8001, %v8189
  %v8258 = vadd.f32 %v8002, %v8194
  %v8259 = vadd.f32 %v8003, %v8194
  %v8260 = vmax.f32 %v8196, 0.0
  %v8261 = vmax.f32 %v8197, 0.0
  %v8262 = vmax.f32 %v8198, 0.0
  %v8263 = vmax.f32 %v8199, 0.0
  %v8264 = vmax.f32 %v8200, 0.0
  %v8265 = vmax.f32 %v8201, 0.0
  %v8266 = vmax.f32 %v8202, 0.0
  %v8267 = vmax.f32 %v8203, 0.0
  %v8268 = vmax.f32 %v8204, 0.0
  %v8269 = vmax.f32 %v8205, 0.0
  %v8270 = vmax.f32 %v8206, 0.0
  %v8271 = vmax.f32 %v8207, 0.0
  %v8272 = vmax.f32 %v8208, 0.0
  %v8273 = vmax.f32 %v8209, 0.0
  %v8274 = vmax.f32 %v8210, 0.0
  %v8275 = vmax.f32 %v8211, 0.0
  %v8276 = vmax.f32 %v8212, 0.0
  %v8277 = vmax.f32 %v8213, 0.0
  %v8278 = vmax.f32 %v8214, 0.0
  %v8279 = vmax.f32 %v8215, 0.0
  %v8280 = vmax.f32 %v8216, 0.0
  %v8281 = vmax.f32 %v8217, 0.0
  %v8282 = vmax.f32 %v8218, 0.0
  %v8283 = vmax.f32 %v8219, 0.0
  %v8284 = vmax.f32 %v8220, 0.0
  %v8285 = vmax.f32 %v8221, 0.0
  %v8286 = vmax.f32 %v8222, 0.0
  %v8287 = vmax.f32 %v8223, 0.0
  %v8288 = vmax.f32 %v8224, 0.0
  %v8289 = vmax.f32 %v8225, 0.0
  %v8290 = vmax.f32 %v8226, 0.0
  %v8291 = vmax.f32 %v8227, 0.0
  %v8292 = vmax.f32 %v8228, 0.0
  %v8293 = vmax.f32 %v8229, 0.0
  %v8294 = vmax.f32 %v8230, 0.0
  %v8295 = vmax.f32 %v8231, 0.0
  %v8296 = vmax.f32 %v8232, 0.0
  %v8297 = vmax.f32 %v8233, 0.0
  %v8298 = vmax.f32 %v8234, 0.0
  %v8299 = vmax.f32 %v8235, 0.0
  %v8300 = vmax.f32 %v8236, 0.0
  %v8301 = vmax.f32 %v8237, 0.0
  %v8302 = vmax.f32 %v8238, 0.0
  %v8303 = vmax.f32 %v8239, 0.0
  %v8304 = vmax.f32 %v8240, 0.0
  %v8305 = vmax.f32 %v8241, 0.0
  %v8306 = vmax.f32 %v8242, 0.0
  %v8307 = vmax.f32 %v8243, 0.0
  %v8308 = vmax.f32 %v8244, 0.0
  %v8309 = vmax.f32 %v8245, 0.0
  %v8310 = vmax.f32 %v8246, 0.0
  %v8311 = vmax.f32 %v8247, 0.0
  %v8312 = vmax.f32 %v8248, 0.0
  %v8313 = vmax.f32 %v8249, 0.0
  %v8314 = vmax.f32 %v8250, 0.0
  %v8315 = vmax.f32 %v8251, 0.0
  %v8316 = vmax.f32 %v8252, 0.0
  %v8317 = vmax.f32 %v8253, 0.0
  %v8318 = vmax.f32 %v8254, 0.0
  %v8319 = vmax.f32 %v8255, 0.0
  %v8320 = vmax.f32 %v8256, 0.0
  %v8321 = vmax.f32 %v8257, 0.0
  %v8322 = vmax.f32 %v8258, 0.0
  %v8323 = vmax.f32 %v8259, 0.0
  %s8324 = sadd.s32 %s50, 4294967295
  %v8325 = vstv %s8324
  %v8326 = vadd.s32 %v8325, %v2595
  %v8327 = vadd.s32 %v8325, %v2596
  %vm8328 = vcmp.ge.s32.totalorder %v8326, 0
  %vm8329 = vcmp.ge.s32.totalorder %v8327, 0
  %vm8330 = vcmp.lt.s32.totalorder %v8326, 16
  %vm8331 = vcmp.lt.s32.totalorder %v8327, 16
  %vm8332 = vmand %vm8328, %vm8330
  %vm8333 = vmand %vm8329, %vm8331
  %v8334 = vsel %vm8332, 1, 0
  %v8335 = vsel %vm8333, 1, 0
  %vm8336 = vcmp.eq.s32.totalorder %v8334, 1
  %vm8337 = vcmp.eq.s32.totalorder %v8335, 1
  %v8338 = vsel %vm8336, %v8260, 0.0
  %v8339 = vsel %vm8337, %v8261, 0.0
  %v8340 = vsel %vm8336, %v8262, 0.0
  %v8341 = vsel %vm8337, %v8263, 0.0
  %v8342 = vsel %vm8336, %v8264, 0.0
  %v8343 = vsel %vm8337, %v8265, 0.0
  %v8344 = vsel %vm8336, %v8266, 0.0
  %v8345 = vsel %vm8337, %v8267, 0.0
  %v8346 = vsel %vm8336, %v8268, 0.0
  %v8347 = vsel %vm8337, %v8269, 0.0
  %v8348 = vsel %vm8336, %v8270, 0.0
  %v8349 = vsel %vm8337, %v8271, 0.0
  %v8350 = vsel %vm8336, %v8272, 0.0
  %v8351 = vsel %vm8337, %v8273, 0.0
  %v8352 = vsel %vm8336, %v8274, 0.0
  %v8353 = vsel %vm8337, %v8275, 0.0
  %v8354 = vsel %vm8336, %v8276, 0.0
  %v8355 = vsel %vm8337, %v8277, 0.0
  %v8356 = vsel %vm8336, %v8278, 0.0
  %v8357 = vsel %vm8337, %v8279, 0.0
  %v8358 = vsel %vm8336, %v8280, 0.0
  %v8359 = vsel %vm8337, %v8281, 0.0
  %v8360 = vsel %vm8336, %v8282, 0.0
  %v8361 = vsel %vm8337, %v8283, 0.0
  %v8362 = vsel %vm8336, %v8284, 0.0
  %v8363 = vsel %vm8337, %v8285, 0.0
  %v8364 = vsel %vm8336, %v8286, 0.0
  %v8365 = vsel %vm8337, %v8287, 0.0
  %v8366 = vsel %vm8336, %v8288, 0.0
  %v8367 = vsel %vm8337, %v8289, 0.0
  %v8368 = vsel %vm8336, %v8290, 0.0
  %v8369 = vsel %vm8337, %v8291, 0.0
  %v8370 = vsel %vm8336, %v8292, 0.0
  %v8371 = vsel %vm8337, %v8293, 0.0
  %v8372 = vsel %vm8336, %v8294, 0.0
  %v8373 = vsel %vm8337, %v8295, 0.0
  %v8374 = vsel %vm8336, %v8296, 0.0
  %v8375 = vsel %vm8337, %v8297, 0.0
  %v8376 = vsel %vm8336, %v8298, 0.0
  %v8377 = vsel %vm8337, %v8299, 0.0
  %v8378 = vsel %vm8336, %v8300, 0.0
  %v8379 = vsel %vm8337, %v8301, 0.0
  %v8380 = vsel %vm8336, %v8302, 0.0
  %v8381 = vsel %vm8337, %v8303, 0.0
  %v8382 = vsel %vm8336, %v8304, 0.0
  %v8383 = vsel %vm8337, %v8305, 0.0
  %v8384 = vsel %vm8336, %v8306, 0.0
  %v8385 = vsel %vm8337, %v8307, 0.0
  %v8386 = vsel %vm8336, %v8308, 0.0
  %v8387 = vsel %vm8337, %v8309, 0.0
  %v8388 = vsel %vm8336, %v8310, 0.0
  %v8389 = vsel %vm8337, %v8311, 0.0
  %v8390 = vsel %vm8336, %v8312, 0.0
  %v8391 = vsel %vm8337, %v8313, 0.0
  %v8392 = vsel %vm8336, %v8314, 0.0
  %v8393 = vsel %vm8337, %v8315, 0.0
  %v8394 = vsel %vm8336, %v8316, 0.0
  %v8395 = vsel %vm8337, %v8317, 0.0
  %v8396 = vsel %vm8336, %v8318, 0.0
  %v8397 = vsel %vm8337, %v8319, 0.0
  %v8398 = vsel %vm8336, %v8320, 0.0
  %v8399 = vsel %vm8337, %v8321, 0.0
  %v8400 = vsel %vm8336, %v8322, 0.0
  %v8401 = vsel %vm8337, %v8323, 0.0
  %v8402 = vld [vmem:[%s13] sm:$0xff]
  %v8403 = vld [vmem:[%s13 + $0x8] sm:$0xff]
  %s8404 = scalar_lea.vmem %s13, 16
  %v8405 = vld [vmem:[%s8404] sm:$0xff]
  %v8406 = vld [vmem:[%s8404 + $0x8] sm:$0xff]
  %8471 = vrot.lane.b32.xlu0 %v8338, 127
  %v8472 = vpop.permute.xlu0 %8471
  %8473 = vrot.lane.b32.xlu0 %v8339, 127
  %v8474 = vpop.permute.xlu0 %8473
  %8475 = vrot.lane.b32.xlu0 %v8340, 127
  %v8476 = vpop.permute.xlu0 %8475
  %8477 = vrot.lane.b32.xlu0 %v8341, 127
  %v8478 = vpop.permute.xlu0 %8477
  %8479 = vrot.lane.b32.xlu0 %v8342, 127
  %v8480 = vpop.permute.xlu0 %8479
  %8481 = vrot.lane.b32.xlu0 %v8343, 127
  %v8482 = vpop.permute.xlu0 %8481
  %8483 = vrot.lane.b32.xlu0 %v8344, 127
  %v8484 = vpop.permute.xlu0 %8483
  %8485 = vrot.lane.b32.xlu0 %v8345, 127
  %v8486 = vpop.permute.xlu0 %8485
  %8487 = vrot.lane.b32.xlu0 %v8346, 127
  %v8488 = vpop.permute.xlu0 %8487
  %8489 = vrot.lane.b32.xlu0 %v8347, 127
  %v8490 = vpop.permute.xlu0 %8489
  %8491 = vrot.lane.b32.xlu0 %v8348, 127
  %v8492 = vpop.permute.xlu0 %8491
  %8493 = vrot.lane.b32.xlu0 %v8349, 127
  %v8494 = vpop.permute.xlu0 %8493
  %8495 = vrot.lane.b32.xlu0 %v8350, 127
  %v8496 = vpop.permute.xlu0 %8495
  %8497 = vrot.lane.b32.xlu0 %v8351, 127
  %v8498 = vpop.permute.xlu0 %8497
  %8499 = vrot.lane.b32.xlu0 %v8352, 127
  %v8500 = vpop.permute.xlu0 %8499
  %8501 = vrot.lane.b32.xlu0 %v8353, 127
  %v8502 = vpop.permute.xlu0 %8501
  %8503 = vrot.lane.b32.xlu0 %v8354, 127
  %v8504 = vpop.permute.xlu0 %8503
  %8505 = vrot.lane.b32.xlu0 %v8355, 127
  %v8506 = vpop.permute.xlu0 %8505
  %8507 = vrot.lane.b32.xlu0 %v8356, 127
  %v8508 = vpop.permute.xlu0 %8507
  %8509 = vrot.lane.b32.xlu0 %v8357, 127
  %v8510 = vpop.permute.xlu0 %8509
  %8511 = vrot.lane.b32.xlu0 %v8358, 127
  %v8512 = vpop.permute.xlu0 %8511
  %8513 = vrot.lane.b32.xlu0 %v8359, 127
  %v8514 = vpop.permute.xlu0 %8513
  %8515 = vrot.lane.b32.xlu0 %v8360, 127
  %v8516 = vpop.permute.xlu0 %8515
  %8517 = vrot.lane.b32.xlu0 %v8361, 127
  %v8518 = vpop.permute.xlu0 %8517
  %8519 = vrot.lane.b32.xlu0 %v8362, 127
  %v8520 = vpop.permute.xlu0 %8519
  %8521 = vrot.lane.b32.xlu0 %v8363, 127
  %v8522 = vpop.permute.xlu0 %8521
  %8523 = vrot.lane.b32.xlu0 %v8364, 127
  %v8524 = vpop.permute.xlu0 %8523
  %8525 = vrot.lane.b32.xlu0 %v8365, 127
  %v8526 = vpop.permute.xlu0 %8525
  %8527 = vrot.lane.b32.xlu0 %v8366, 127
  %v8528 = vpop.permute.xlu0 %8527
  %8529 = vrot.lane.b32.xlu0 %v8367, 127
  %v8530 = vpop.permute.xlu0 %8529
  %8531 = vrot.lane.b32.xlu0 %v8368, 127
  %v8532 = vpop.permute.xlu0 %8531
  %8533 = vrot.lane.b32.xlu0 %v8369, 127
  %v8534 = vpop.permute.xlu0 %8533
  %8535 = vrot.lane.b32.xlu0 %v8370, 127
  %v8536 = vpop.permute.xlu0 %8535
  %8537 = vrot.lane.b32.xlu0 %v8371, 127
  %v8538 = vpop.permute.xlu0 %8537
  %8539 = vrot.lane.b32.xlu0 %v8372, 127
  %v8540 = vpop.permute.xlu0 %8539
  %8541 = vrot.lane.b32.xlu0 %v8373, 127
  %v8542 = vpop.permute.xlu0 %8541
  %8543 = vrot.lane.b32.xlu0 %v8374, 127
  %v8544 = vpop.permute.xlu0 %8543
  %8545 = vrot.lane.b32.xlu0 %v8375, 127
  %v8546 = vpop.permute.xlu0 %8545
  %8547 = vrot.lane.b32.xlu0 %v8376, 127
  %v8548 = vpop.permute.xlu0 %8547
  %8549 = vrot.lane.b32.xlu0 %v8377, 127
  %v8550 = vpop.permute.xlu0 %8549
  %8551 = vrot.lane.b32.xlu0 %v8378, 127
  %v8552 = vpop.permute.xlu0 %8551
  %8553 = vrot.lane.b32.xlu0 %v8379, 127
  %v8554 = vpop.permute.xlu0 %8553
  %8555 = vrot.lane.b32.xlu0 %v8380, 127
  %v8556 = vpop.permute.xlu0 %8555
  %8557 = vrot.lane.b32.xlu0 %v8381, 127
  %v8558 = vpop.permute.xlu0 %8557
  %8559 = vrot.lane.b32.xlu0 %v8382, 127
  %v8560 = vpop.permute.xlu0 %8559
  %8561 = vrot.lane.b32.xlu0 %v8383, 127
  %v8562 = vpop.permute.xlu0 %8561
  %8563 = vrot.lane.b32.xlu0 %v8384, 127
  %v8564 = vpop.permute.xlu0 %8563
  %8565 = vrot.lane.b32.xlu0 %v8385, 127
  %v8566 = vpop.permute.xlu0 %8565
  %8567 = vrot.lane.b32.xlu0 %v8386, 127
  %v8568 = vpop.permute.xlu0 %8567
  %8569 = vrot.lane.b32.xlu0 %v8387, 127
  %v8570 = vpop.permute.xlu0 %8569
  %8571 = vrot.lane.b32.xlu0 %v8388, 127
  %v8572 = vpop.permute.xlu0 %8571
  %8573 = vrot.lane.b32.xlu0 %v8389, 127
  %v8574 = vpop.permute.xlu0 %8573
  %8575 = vrot.lane.b32.xlu0 %v8390, 127
  %v8576 = vpop.permute.xlu0 %8575
  %8577 = vrot.lane.b32.xlu0 %v8391, 127
  %v8578 = vpop.permute.xlu0 %8577
  %8579 = vrot.lane.b32.xlu0 %v8392, 127
  %v8580 = vpop.permute.xlu0 %8579
  %8581 = vrot.lane.b32.xlu0 %v8393, 127
  %v8582 = vpop.permute.xlu0 %8581
  %8583 = vrot.lane.b32.xlu0 %v8394, 127
  %v8584 = vpop.permute.xlu0 %8583
  %8585 = vrot.lane.b32.xlu0 %v8395, 127
  %v8586 = vpop.permute.xlu0 %8585
  %8587 = vrot.lane.b32.xlu0 %v8396, 127
  %v8588 = vpop.permute.xlu0 %8587
  %8589 = vrot.lane.b32.xlu0 %v8397, 127
  %v8590 = vpop.permute.xlu0 %8589
  %8591 = vrot.lane.b32.xlu0 %v8398, 127
  %v8592 = vpop.permute.xlu0 %8591
  %8593 = vrot.lane.b32.xlu0 %v8399, 127
  %v8594 = vpop.permute.xlu0 %8593
  %8595 = vrot.lane.b32.xlu0 %v8400, 127
  %v8596 = vpop.permute.xlu0 %8595
  %8597 = vrot.lane.b32.xlu0 %v8401, 127
  %v8598 = vpop.permute.xlu0 %8597
  %v8599 = vsel %vm148, %v8472, %v8474
  %v8600 = vsel %vm148, %v8476, %v8478
  %v8601 = vsel %vm148, %v8480, %v8482
  %v8602 = vsel %vm148, %v8484, %v8486
  %v8603 = vsel %vm148, %v8488, %v8490
  %v8604 = vsel %vm148, %v8492, %v8494
  %v8605 = vsel %vm148, %v8496, %v8498
  %v8606 = vsel %vm148, %v8500, %v8502
  %v8607 = vsel %vm148, %v8504, %v8506
  %v8608 = vsel %vm148, %v8508, %v8510
  %v8609 = vsel %vm148, %v8512, %v8514
  %v8610 = vsel %vm148, %v8516, %v8518
  %v8611 = vsel %vm148, %v8520, %v8522
  %v8612 = vsel %vm148, %v8524, %v8526
  %v8613 = vsel %vm148, %v8528, %v8530
  %v8614 = vsel %vm148, %v8532, %v8534
  %v8615 = vsel %vm148, %v8536, %v8538
  %v8616 = vsel %vm148, %v8540, %v8542
  %v8617 = vsel %vm148, %v8544, %v8546
  %v8618 = vsel %vm148, %v8548, %v8550
  %v8619 = vsel %vm148, %v8552, %v8554
  %v8620 = vsel %vm148, %v8556, %v8558
  %v8621 = vsel %vm148, %v8560, %v8562
  %v8622 = vsel %vm148, %v8564, %v8566
  %v8623 = vsel %vm148, %v8568, %v8570
  %v8624 = vsel %vm148, %v8572, %v8574
  %v8625 = vsel %vm148, %v8576, %v8578
  %v8626 = vsel %vm148, %v8580, %v8582
  %v8627 = vsel %vm148, %v8584, %v8586
  %v8628 = vsel %vm148, %v8588, %v8590
  %v8629 = vsel %vm148, %v8592, %v8594
  %v8630 = vsel %vm148, %v8596, %v8598
  %8663 = vmatprep.subr.mxu0 0.0
  %8664 = vmatpush1.msra.mxu0 %v8599
  %8665 = vmatprep.subr.mxu0 0.0
  %8666 = vmatpush1.msra.mxu0 %v8600
  %8667 = vmatprep.subr.mxu0 0.0
  %8668 = vmatpush1.msra.mxu0 %v8601
  %8669 = vmatprep.subr.mxu0 0.0
  %8670 = vmatpush1.msra.mxu0 %v8602
  %8671 = vmatprep.subr.mxu0 0.0
  %8672 = vmatpush1.msra.mxu0 %v8603
  %8673 = vmatprep.subr.mxu0 0.0
  %8674 = vmatpush1.msra.mxu0 %v8604
  %8675 = vmatprep.subr.mxu0 0.0
  %8676 = vmatpush1.msra.mxu0 %v8605
  %8677 = vmatprep.subr.mxu0 0.0
  %8678 = vmatpush1.msra.mxu0 %v8606
  %8679 = vmatprep.subr.mxu0 0.0
  %8680 = vmatpush1.msra.mxu0 %v8607
  %8681 = vmatprep.subr.mxu0 0.0
  %8682 = vmatpush1.msra.mxu0 %v8608
  %8683 = vmatprep.subr.mxu0 0.0
  %8684 = vmatpush1.msra.mxu0 %v8609
  %8685 = vmatprep.subr.mxu0 0.0
  %8686 = vmatpush1.msra.mxu0 %v8610
  %8687 = vmatprep.subr.mxu0 0.0
  %8688 = vmatpush1.msra.mxu0 %v8611
  %8689 = vmatprep.subr.mxu0 0.0
  %8690 = vmatpush1.msra.mxu0 %v8612
  %8691 = vmatprep.subr.mxu0 0.0
  %8692 = vmatpush1.msra.mxu0 %v8613
  %8693 = vmatprep.subr.mxu0 0.0
  %8694 = vmatpush1.msra.mxu0 %v8614
  %8695 = vmatprep.subr.mxu0 0.0
  %8696 = vmatpush1.msra.mxu0 %v8615
  %8697 = vmatprep.subr.mxu0 0.0
  %8698 = vmatpush1.msra.mxu0 %v8616
  %8699 = vmatprep.subr.mxu0 0.0
  %8700 = vmatpush1.msra.mxu0 %v8617
  %8701 = vmatprep.subr.mxu0 0.0
  %8702 = vmatpush1.msra.mxu0 %v8618
  %8703 = vmatprep.subr.mxu0 0.0
  %8704 = vmatpush1.msra.mxu0 %v8619
  %8705 = vmatprep.subr.mxu0 0.0
  %8706 = vmatpush1.msra.mxu0 %v8620
  %8707 = vmatprep.subr.mxu0 0.0
  %8708 = vmatpush1.msra.mxu0 %v8621
  %8709 = vmatprep.subr.mxu0 0.0
  %8710 = vmatpush1.msra.mxu0 %v8622
  %8711 = vmatprep.subr.mxu0 0.0
  %8712 = vmatpush1.msra.mxu0 %v8623
  %8713 = vmatprep.subr.mxu0 0.0
  %8714 = vmatpush1.msra.mxu0 %v8624
  %8715 = vmatprep.subr.mxu0 0.0
  %8716 = vmatpush1.msra.mxu0 %v8625
  %8717 = vmatprep.subr.mxu0 0.0
  %8718 = vmatpush1.msra.mxu0 %v8626
  %8719 = vmatprep.subr.mxu0 0.0
  %8720 = vmatpush1.msra.mxu0 %v8627
  %8721 = vmatprep.subr.mxu0 0.0
  %8722 = vmatpush1.msra.mxu0 %v8628
  %8723 = vmatprep.subr.mxu0 0.0
  %8724 = vmatpush1.msra.mxu0 %v8629
  %8725 = vmatprep.subr.mxu0 0.0
  %8726 = vmatpush1.msra.mxu0 %v8630
  %8727 = vmatprep.mubr.f32.mxu0 %v8406
  %8728 = vmatmul.mubr.f32.gmra.mrb[0].mxu0 %v8405
  %v8729 = vpop.f32.mrb[0].mxu0
  %v8730 = vadd.f32 0.0, %v8729
  %v8731 = vpop.f32.mrb[0].mxu0
  %8732 = vdwg.mxu0
  %8733 = vmatprep.subr.mxu0 0.0
  %8734 = vmatpush1.msra.mxu0 %v8338
  %8735 = vmatprep.subr.mxu0 0.0
  %8736 = vmatpush1.msra.mxu0 %v8340
  %8737 = vmatprep.subr.mxu0 0.0
  %8738 = vmatpush1.msra.mxu0 %v8342
  %8739 = vmatprep.subr.mxu0 0.0
  %8740 = vmatpush1.msra.mxu0 %v8344
  %8741 = vmatprep.subr.mxu0 0.0
  %8742 = vmatpush1.msra.mxu0 %v8346
  %8743 = vmatprep.subr.mxu0 0.0
  %8744 = vmatpush1.msra.mxu0 %v8348
  %8745 = vmatprep.subr.mxu0 0.0
  %8746 = vmatpush1.msra.mxu0 %v8350
  %8747 = vmatprep.subr.mxu0 0.0
  %8748 = vmatpush1.msra.mxu0 %v8352
  %8749 = vmatprep.subr.mxu0 0.0
  %8750 = vmatpush1.msra.mxu0 %v8354
  %8751 = vmatprep.subr.mxu0 0.0
  %8752 = vmatpush1.msra.mxu0 %v8356
  %8753 = vmatprep.subr.mxu0 0.0
  %8754 = vmatpush1.msra.mxu0 %v8358
  %8755 = vmatprep.subr.mxu0 0.0
  %8756 = vmatpush1.msra.mxu0 %v8360
  %8757 = vmatprep.subr.mxu0 0.0
  %8758 = vmatpush1.msra.mxu0 %v8362
  %8759 = vmatprep.subr.mxu0 0.0
  %8760 = vmatpush1.msra.mxu0 %v8364
  %8761 = vmatprep.subr.mxu0 0.0
  %8762 = vmatpush1.msra.mxu0 %v8366
  %8763 = vmatprep.subr.mxu0 0.0
  %8764 = vmatpush1.msra.mxu0 %v8368
  %8765 = vmatprep.subr.mxu0 0.0
  %8766 = vmatpush1.msra.mxu0 %v8370
  %8767 = vmatprep.subr.mxu0 0.0
  %8768 = vmatpush1.msra.mxu0 %v8372
  %8769 = vmatprep.subr.mxu0 0.0
  %8770 = vmatpush1.msra.mxu0 %v8374
  %8771 = vmatprep.subr.mxu0 0.0
  %8772 = vmatpush1.msra.mxu0 %v8376
  %8773 = vmatprep.subr.mxu0 0.0
  %8774 = vmatpush1.msra.mxu0 %v8378
  %8775 = vmatprep.subr.mxu0 0.0
  %8776 = vmatpush1.msra.mxu0 %v8380
  %8777 = vmatprep.subr.mxu0 0.0
  %8778 = vmatpush1.msra.mxu0 %v8382
  %8779 = vmatprep.subr.mxu0 0.0
  %8780 = vmatpush1.msra.mxu0 %v8384
  %8781 = vmatprep.subr.mxu0 0.0
  %8782 = vmatpush1.msra.mxu0 %v8386
  %8783 = vmatprep.subr.mxu0 0.0
  %8784 = vmatpush1.msra.mxu0 %v8388
  %8785 = vmatprep.subr.mxu0 0.0
  %8786 = vmatpush1.msra.mxu0 %v8390
  %8787 = vmatprep.subr.mxu0 0.0
  %8788 = vmatpush1.msra.mxu0 %v8392
  %8789 = vmatprep.subr.mxu0 0.0
  %8790 = vmatpush1.msra.mxu0 %v8394
  %8791 = vmatprep.subr.mxu0 0.0
  %8792 = vmatpush1.msra.mxu0 %v8396
  %8793 = vmatprep.subr.mxu0 0.0
  %8794 = vmatpush1.msra.mxu0 %v8398
  %8795 = vmatprep.subr.mxu0 0.0
  %8796 = vmatpush1.msra.mxu0 %v8400
  %8797 = vmatprep.mubr.f32.mxu0 %v8403
  %8798 = vmatmul.mubr.f32.gmra.mrb[0].mxu0 %v8402
  %v8799 = vpop.f32.mrb[0].mxu0
  %v8800 = vadd.f32 %v8730, %v8799
  %v8801 = vpop.f32.mrb[0].mxu0
  %8802 = vdwg.mxu0
  %s8803 = scalar_lea.vmem %s13, 32
  %v8804 = vld [vmem:[%s8803] sm:$0xff]
  %v8805 = vld [vmem:[%s8803 + $0x8] sm:$0xff]
  %8806 = vrot.lane.b32.xlu0 %v8338, 126
  %v8807 = vpop.permute.xlu0 %8806
  %8808 = vrot.lane.b32.xlu0 %v8339, 126
  %v8809 = vpop.permute.xlu0 %8808
  %8810 = vrot.lane.b32.xlu0 %v8340, 126
  %v8811 = vpop.permute.xlu0 %8810
  %8812 = vrot.lane.b32.xlu0 %v8341, 126
  %v8813 = vpop.permute.xlu0 %8812
  %8814 = vrot.lane.b32.xlu0 %v8342, 126
  %v8815 = vpop.permute.xlu0 %8814
  %8816 = vrot.lane.b32.xlu0 %v8343, 126
  %v8817 = vpop.permute.xlu0 %8816
  %8818 = vrot.lane.b32.xlu0 %v8344, 126
  %v8819 = vpop.permute.xlu0 %8818
  %8820 = vrot.lane.b32.xlu0 %v8345, 126
  %v8821 = vpop.permute.xlu0 %8820
  %8822 = vrot.lane.b32.xlu0 %v8346, 126
  %v8823 = vpop.permute.xlu0 %8822
  %8824 = vrot.lane.b32.xlu0 %v8347, 126
  %v8825 = vpop.permute.xlu0 %8824
  %8826 = vrot.lane.b32.xlu0 %v8348, 126
  %v8827 = vpop.permute.xlu0 %8826
  %8828 = vrot.lane.b32.xlu0 %v8349, 126
  %v8829 = vpop.permute.xlu0 %8828
  %8830 = vrot.lane.b32.xlu0 %v8350, 126
  %v8831 = vpop.permute.xlu0 %8830
  %8832 = vrot.lane.b32.xlu0 %v8351, 126
  %v8833 = vpop.permute.xlu0 %8832
  %8834 = vrot.lane.b32.xlu0 %v8352, 126
  %v8835 = vpop.permute.xlu0 %8834
  %8836 = vrot.lane.b32.xlu0 %v8353, 126
  %v8837 = vpop.permute.xlu0 %8836
  %8838 = vrot.lane.b32.xlu0 %v8354, 126
  %v8839 = vpop.permute.xlu0 %8838
  %8840 = vrot.lane.b32.xlu0 %v8355, 126
  %v8841 = vpop.permute.xlu0 %8840
  %8842 = vrot.lane.b32.xlu0 %v8356, 126
  %v8843 = vpop.permute.xlu0 %8842
  %8844 = vrot.lane.b32.xlu0 %v8357, 126
  %v8845 = vpop.permute.xlu0 %8844
  %8846 = vrot.lane.b32.xlu0 %v8358, 126
  %v8847 = vpop.permute.xlu0 %8846
  %8848 = vrot.lane.b32.xlu0 %v8359, 126
  %v8849 = vpop.permute.xlu0 %8848
  %8850 = vrot.lane.b32.xlu0 %v8360, 126
  %v8851 = vpop.permute.xlu0 %8850
  %8852 = vrot.lane.b32.xlu0 %v8361, 126
  %v8853 = vpop.permute.xlu0 %8852
  %8854 = vrot.lane.b32.xlu0 %v8362, 126
  %v8855 = vpop.permute.xlu0 %8854
  %8856 = vrot.lane.b32.xlu0 %v8363, 126
  %v8857 = vpop.permute.xlu0 %8856
  %8858 = vrot.lane.b32.xlu0 %v8364, 126
  %v8859 = vpop.permute.xlu0 %8858
  %8860 = vrot.lane.b32.xlu0 %v8365, 126
  %v8861 = vpop.permute.xlu0 %8860
  %8862 = vrot.lane.b32.xlu0 %v8366, 126
  %v8863 = vpop.permute.xlu0 %8862
  %8864 = vrot.lane.b32.xlu0 %v8367, 126
  %v8865 = vpop.permute.xlu0 %8864
  %8866 = vrot.lane.b32.xlu0 %v8368, 126
  %v8867 = vpop.permute.xlu0 %8866
  %8868 = vrot.lane.b32.xlu0 %v8369, 126
  %v8869 = vpop.permute.xlu0 %8868
  %8870 = vrot.lane.b32.xlu0 %v8370, 126
  %v8871 = vpop.permute.xlu0 %8870
  %8872 = vrot.lane.b32.xlu0 %v8371, 126
  %v8873 = vpop.permute.xlu0 %8872
  %8874 = vrot.lane.b32.xlu0 %v8372, 126
  %v8875 = vpop.permute.xlu0 %8874
  %8876 = vrot.lane.b32.xlu0 %v8373, 126
  %v8877 = vpop.permute.xlu0 %8876
  %8878 = vrot.lane.b32.xlu0 %v8374, 126
  %v8879 = vpop.permute.xlu0 %8878
  %8880 = vrot.lane.b32.xlu0 %v8375, 126
  %v8881 = vpop.permute.xlu0 %8880
  %8882 = vrot.lane.b32.xlu0 %v8376, 126
  %v8883 = vpop.permute.xlu0 %8882
  %8884 = vrot.lane.b32.xlu0 %v8377, 126
  %v8885 = vpop.permute.xlu0 %8884
  %8886 = vrot.lane.b32.xlu0 %v8378, 126
  %v8887 = vpop.permute.xlu0 %8886
  %8888 = vrot.lane.b32.xlu0 %v8379, 126
  %v8889 = vpop.permute.xlu0 %8888
  %8890 = vrot.lane.b32.xlu0 %v8380, 126
  %v8891 = vpop.permute.xlu0 %8890
  %8892 = vrot.lane.b32.xlu0 %v8381, 126
  %v8893 = vpop.permute.xlu0 %8892
  %8894 = vrot.lane.b32.xlu0 %v8382, 126
  %v8895 = vpop.permute.xlu0 %8894
  %8896 = vrot.lane.b32.xlu0 %v8383, 126
  %v8897 = vpop.permute.xlu0 %8896
  %8898 = vrot.lane.b32.xlu0 %v8384, 126
  %v8899 = vpop.permute.xlu0 %8898
  %8900 = vrot.lane.b32.xlu0 %v8385, 126
  %v8901 = vpop.permute.xlu0 %8900
  %8902 = vrot.lane.b32.xlu0 %v8386, 126
  %v8903 = vpop.permute.xlu0 %8902
  %8904 = vrot.lane.b32.xlu0 %v8387, 126
  %v8905 = vpop.permute.xlu0 %8904
  %8906 = vrot.lane.b32.xlu0 %v8388, 126
  %v8907 = vpop.permute.xlu0 %8906
  %8908 = vrot.lane.b32.xlu0 %v8389, 126
  %v8909 = vpop.permute.xlu0 %8908
  %8910 = vrot.lane.b32.xlu0 %v8390, 126
  %v8911 = vpop.permute.xlu0 %8910
  %8912 = vrot.lane.b32.xlu0 %v8391, 126
  %v8913 = vpop.permute.xlu0 %8912
  %8914 = vrot.lane.b32.xlu0 %v8392, 126
  %v8915 = vpop.permute.xlu0 %8914
  %8916 = vrot.lane.b32.xlu0 %v8393, 126
  %v8917 = vpop.permute.xlu0 %8916
  %8918 = vrot.lane.b32.xlu0 %v8394, 126
  %v8919 = vpop.permute.xlu0 %8918
  %8920 = vrot.lane.b32.xlu0 %v8395, 126
  %v8921 = vpop.permute.xlu0 %8920
  %8922 = vrot.lane.b32.xlu0 %v8396, 126
  %v8923 = vpop.permute.xlu0 %8922
  %8924 = vrot.lane.b32.xlu0 %v8397, 126
  %v8925 = vpop.permute.xlu0 %8924
  %8926 = vrot.lane.b32.xlu0 %v8398, 126
  %v8927 = vpop.permute.xlu0 %8926
  %8928 = vrot.lane.b32.xlu0 %v8399, 126
  %v8929 = vpop.permute.xlu0 %8928
  %8930 = vrot.lane.b32.xlu0 %v8400, 126
  %v8931 = vpop.permute.xlu0 %8930
  %8932 = vrot.lane.b32.xlu0 %v8401, 126
  %v8933 = vpop.permute.xlu0 %8932
  %v8934 = vsel %vm917, %v8807, %v8809
  %v8935 = vsel %vm917, %v8811, %v8813
  %v8936 = vsel %vm917, %v8815, %v8817
  %v8937 = vsel %vm917, %v8819, %v8821
  %v8938 = vsel %vm917, %v8823, %v8825
  %v8939 = vsel %vm917, %v8827, %v8829
  %v8940 = vsel %vm917, %v8831, %v8833
  %v8941 = vsel %vm917, %v8835, %v8837
  %v8942 = vsel %vm917, %v8839, %v8841
  %v8943 = vsel %vm917, %v8843, %v8845
  %v8944 = vsel %vm917, %v8847, %v8849
  %v8945 = vsel %vm917, %v8851, %v8853
  %v8946 = vsel %vm917, %v8855, %v8857
  %v8947 = vsel %vm917, %v8859, %v8861
  %v8948 = vsel %vm917, %v8863, %v8865
  %v8949 = vsel %vm917, %v8867, %v8869
  %v8950 = vsel %vm917, %v8871, %v8873
  %v8951 = vsel %vm917, %v8875, %v8877
  %v8952 = vsel %vm917, %v8879, %v8881
  %v8953 = vsel %vm917, %v8883, %v8885
  %v8954 = vsel %vm917, %v8887, %v8889
  %v8955 = vsel %vm917, %v8891, %v8893
  %v8956 = vsel %vm917, %v8895, %v8897
  %v8957 = vsel %vm917, %v8899, %v8901
  %v8958 = vsel %vm917, %v8903, %v8905
  %v8959 = vsel %vm917, %v8907, %v8909
  %v8960 = vsel %vm917, %v8911, %v8913
  %v8961 = vsel %vm917, %v8915, %v8917
  %v8962 = vsel %vm917, %v8919, %v8921
  %v8963 = vsel %vm917, %v8923, %v8925
  %v8964 = vsel %vm917, %v8927, %v8929
  %v8965 = vsel %vm917, %v8931, %v8933
  %8998 = vmatprep.subr.mxu0 0.0
  %8999 = vmatpush1.msra.mxu0 %v8934
  %9000 = vmatprep.subr.mxu0 0.0
  %9001 = vmatpush1.msra.mxu0 %v8935
  %9002 = vmatprep.subr.mxu0 0.0
  %9003 = vmatpush1.msra.mxu0 %v8936
  %9004 = vmatprep.subr.mxu0 0.0
  %9005 = vmatpush1.msra.mxu0 %v8937
  %9006 = vmatprep.subr.mxu0 0.0
  %9007 = vmatpush1.msra.mxu0 %v8938
  %9008 = vmatprep.subr.mxu0 0.0
  %9009 = vmatpush1.msra.mxu0 %v8939
  %9010 = vmatprep.subr.mxu0 0.0
  %9011 = vmatpush1.msra.mxu0 %v8940
  %9012 = vmatprep.subr.mxu0 0.0
  %9013 = vmatpush1.msra.mxu0 %v8941
  %9014 = vmatprep.subr.mxu0 0.0
  %9015 = vmatpush1.msra.mxu0 %v8942
  %9016 = vmatprep.subr.mxu0 0.0
  %9017 = vmatpush1.msra.mxu0 %v8943
  %9018 = vmatprep.subr.mxu0 0.0
  %9019 = vmatpush1.msra.mxu0 %v8944
  %9020 = vmatprep.subr.mxu0 0.0
  %9021 = vmatpush1.msra.mxu0 %v8945
  %9022 = vmatprep.subr.mxu0 0.0
  %9023 = vmatpush1.msra.mxu0 %v8946
  %9024 = vmatprep.subr.mxu0 0.0
  %9025 = vmatpush1.msra.mxu0 %v8947
  %9026 = vmatprep.subr.mxu0 0.0
  %9027 = vmatpush1.msra.mxu0 %v8948
  %9028 = vmatprep.subr.mxu0 0.0
  %9029 = vmatpush1.msra.mxu0 %v8949
  %9030 = vmatprep.subr.mxu0 0.0
  %9031 = vmatpush1.msra.mxu0 %v8950
  %9032 = vmatprep.subr.mxu0 0.0
  %9033 = vmatpush1.msra.mxu0 %v8951
  %9034 = vmatprep.subr.mxu0 0.0
  %9035 = vmatpush1.msra.mxu0 %v8952
  %9036 = vmatprep.subr.mxu0 0.0
  %9037 = vmatpush1.msra.mxu0 %v8953
  %9038 = vmatprep.subr.mxu0 0.0
  %9039 = vmatpush1.msra.mxu0 %v8954
  %9040 = vmatprep.subr.mxu0 0.0
  %9041 = vmatpush1.msra.mxu0 %v8955
  %9042 = vmatprep.subr.mxu0 0.0
  %9043 = vmatpush1.msra.mxu0 %v8956
  %9044 = vmatprep.subr.mxu0 0.0
  %9045 = vmatpush1.msra.mxu0 %v8957
  %9046 = vmatprep.subr.mxu0 0.0
  %9047 = vmatpush1.msra.mxu0 %v8958
  %9048 = vmatprep.subr.mxu0 0.0
  %9049 = vmatpush1.msra.mxu0 %v8959
  %9050 = vmatprep.subr.mxu0 0.0
  %9051 = vmatpush1.msra.mxu0 %v8960
  %9052 = vmatprep.subr.mxu0 0.0
  %9053 = vmatpush1.msra.mxu0 %v8961
  %9054 = vmatprep.subr.mxu0 0.0
  %9055 = vmatpush1.msra.mxu0 %v8962
  %9056 = vmatprep.subr.mxu0 0.0
  %9057 = vmatpush1.msra.mxu0 %v8963
  %9058 = vmatprep.subr.mxu0 0.0
  %9059 = vmatpush1.msra.mxu0 %v8964
  %9060 = vmatprep.subr.mxu0 0.0
  %9061 = vmatpush1.msra.mxu0 %v8965
  %9062 = vmatprep.mubr.f32.mxu0 %v8805
  %9063 = vmatmul.mubr.f32.gmra.mrb[0].mxu0 %v8804
  %v9064 = vpop.f32.mrb[0].mxu0
  %v9065 = vadd.f32 0.0, %v9064
  %v9066 = vpop.f32.mrb[0].mxu0
  %9067 = vdwg.mxu0
  %v9068 = vadd.f32 %v8800, %v9065
  %v9069 = vld [vmem:[%s14] sm:$0xff]
  %9071 = vset.pattern.permute.xlu0 0
  %9072 = vperm.xlu0 %9071, %v9069
  %v9073 = vpop.permute.xlu0 %9072
  %v9075 = vadd.f32 %v9068, %v9073
  %v9076 = vmax.f32 %v9075, 0.0
  %9077 = vst [vmem:[%s15] sm:$0xff] %v9076
  // Predicated region
  $region62: #{head_forward.1} parent=0 // pred_check
    _
  $region63: #{head_forward.1} parent=0 // pred_check_branch
    %9079 = sbr.rel (0) target = $region65
  $region64: #{head_forward.1} parent=0 // pred_region
    _
  $region65: #{head_forward.1} parent=0 // pred_fallthru
    _
  // Predicated region
  $region66: #{head_forward.1} parent=0 // pred_check
    _
  $region67: #{head_forward.1} parent=0 // pred_check_branch
    %9081 = sbr.rel (0) target = $region69
  $region68: #{head_forward.1} parent=0 // pred_region
    _
  $region69: #{head_forward.1} parent=0 // pred_fallthru
    _

</llo_original>
